<compile_context>
chip_gen: v6e
topology: v6e:2x2x1
jax: 0.10.0
libtpu: 0.0.40
codegen_flags: <defaults>
</compile_context>

<pallas_src>
import functools

import jax
import jax.numpy as jnp
from jax import lax
from jax.experimental import pallas as pl
from jax.experimental.pallas import tpu as pltpu


# ----------------------------- in-kernel helpers -----------------------------

def _gelu_tanh(x):
    # tanh-approximate GELU: 0.5*x*(1+tanh(sqrt(2/pi)*(x+0.044715*x^3))).
    # tanh runs on the EUP (free slot here), vs ~10 VALU FMAs for polynomial erf.
    c = 0.7978845608028654
    return 0.5 * x * (1.0 + jnp.tanh(c * (x + 0.044715 * x * x * x)))


def _layernorm(x, g, b):
    # x: (n, d) f32; g/b: (1, d). Biased variance, eps=1e-5 (PyTorch LayerNorm).
    mean = jnp.mean(x, axis=-1, keepdims=True)
    var = jnp.mean(jnp.square(x - mean), axis=-1, keepdims=True)
    return (x - mean) * lax.rsqrt(var + 1e-5) * g + b


# ----------------------------- fused transformer kernel -----------------------------

def transformer_kernel(tok_ref, shift_ref, poscls_ref,
                       ln1g_ref, ln1b_ref, wqkv_ref, wo_ref, bo_ref,
                       ln2g_ref, ln2b_ref, w1_ref, b1_ref, w2_ref, b2_ref,
                       o_ref, *, depth, heads, dim_head, cls_only):
    # --- prologue: x = concat([cls, tokens]) + pos, expressed as one tiny MXU matmul ---
    # shift is (n, n_tok) with shift[i+1, i] = 1; poscls is pos with cls added to row 0.
    tokens = tok_ref[0].astype(jnp.float32)                                   # (n_tok, d)
    x = jnp.dot(shift_ref[...], tokens,
                preferred_element_type=jnp.float32) + poscls_ref[...]         # (n, d)

    n, d = x.shape
    inner = heads * dim_head

    for l in range(depth):                      # static unroll (depth is tiny)
        # ---- PreNorm + Attention + residual ----
        xn = _layernorm(x, ln1g_ref[l], ln1b_ref[l])
        # single fused QKV projection (scale already folded into the Q columns)
        qkv = jnp.dot(xn, wqkv_ref[l], preferred_element_type=jnp.float32)    # (n, 3*inner)
        attn_out = jnp.zeros((n, d), jnp.float32)
        for h in range(heads):                  # static per-head lane slices of qkv
            q = qkv[:, h * dim_head:(h + 1) * dim_head]                       # (n, dh)
            k = qkv[:, inner + h * dim_head: inner + (h + 1) * dim_head]      # (n, dh)
            v = qkv[:, 2 * inner + h * dim_head: 2 * inner + (h + 1) * dim_head]
            dots = lax.dot_general(q, k, (((1,), (1,)), ((), ())),
                                   preferred_element_type=jnp.float32)        # (n, n)
            dots = dots - jnp.max(dots, axis=-1, keepdims=True)
            e = jnp.exp(dots)
            inv = pl.reciprocal(jnp.sum(e, axis=-1, keepdims=True), approx=True)
            head_out = jnp.dot(e * inv, v, preferred_element_type=jnp.float32)  # (n, dh)
            # accumulate the output projection per head (no lane-axis concat)
            attn_out = attn_out + jnp.dot(head_out, wo_ref[l, h],
                                          preferred_element_type=jnp.float32)   # (n, d)
        x = x + attn_out + bo_ref[l]

        # ---- PreNorm + MLP(GELU) + residual ----
        xn = _layernorm(x, ln2g_ref[l], ln2b_ref[l])
        h1 = jnp.dot(xn, w1_ref[l], preferred_element_type=jnp.float32) + b1_ref[l]
        h1 = _gelu_tanh(h1)
        x = x + jnp.dot(h1, w2_ref[l], preferred_element_type=jnp.float32) + b2_ref[l]

    if cls_only:
        o_ref[0] = x[0:1, :].astype(o_ref.dtype)   # only the class token row
    else:
        o_ref[0] = x.astype(o_ref.dtype)


def _resident_spec(w):
    nd = w.ndim
    # same block every grid step -> fetched once, stays VMEM-resident
    return pl.BlockSpec(w.shape, lambda b: (0,) * nd)


def pallas_transformer(tokens, shift, poscls, p, *, heads, dim_head, cls_only):
    """Whole transformer branch (cls+pos prologue, all layers) in ONE pallas_call."""
    bsz, n_tok, d = tokens.shape
    n = n_tok + 1
    depth = p["wqkv"].shape[0]
    inner = heads * dim_head
    mlp_dim = p["w1"].shape[-1]

    weights = [p["ln1_g"], p["ln1_b"], p["wqkv"], p["wo"], p["bo"],
               p["ln2_g"], p["ln2_b"], p["w1"], p["b1"], p["w2"], p["b2"]]

    out_rows = 1 if cls_only else n
    out_shape = jax.ShapeDtypeStruct((bsz, out_rows, d), tokens.dtype)

    # advisory cost hint for XLA's scheduler
    flops_per_layer = (2 * n * d * 3 * inner     # fused qkv projection
                       + 4 * n * n * inner       # scores + attn@v
                       + 2 * n * inner * d       # per-head output projection (summed)
                       + 4 * n * d * mlp_dim)    # MLP
    flops = bsz * (depth * flops_per_layer + 2 * n * n_tok * d)
    transcendentals = bsz * depth * (heads * n * n + n * mlp_dim)
    bytes_accessed = (tokens.size + bsz * out_rows * d + shift.size + poscls.size
                      + sum(int(w.size) for w in weights)) * 4

    kern = functools.partial(transformer_kernel, depth=depth, heads=heads,
                             dim_head=dim_head, cls_only=cls_only)
    return pl.pallas_call(
        kern,
        out_shape=out_shape,
        grid=(bsz,),
        in_specs=[pl.BlockSpec((1, n_tok, d), lambda b: (b, 0, 0)),
                  _resident_spec(shift),
                  _resident_spec(poscls)]
                 + [_resident_spec(w) for w in weights],
        out_specs=pl.BlockSpec((1, out_rows, d), lambda b: (b, 0, 0)),
        compiler_params=pltpu.CompilerParams(dimension_semantics=("parallel",)),
        cost_estimate=pl.CostEstimate(flops=flops, transcendentals=transcendentals,
                                      bytes_accessed=bytes_accessed),
    )(tokens, shift, poscls, *weights)


# ----------------------------- Model (thin glue in JAX) -----------------------------

def vit_forward(params, x, *, heads, dim_head):
    # branch 1: (num_patches+1) tokens, feature dim = D
    x1_full = pallas_transformer(x, params["shift0"], params["poscls0"], params["t0"],
                                 heads=heads, dim_head=dim_head, cls_only=False)
    x1_class = x1_full[:, 0]                          # (b, D)
    x1 = jnp.transpose(x1_full[:, 1:], (0, 2, 1))     # (b, D, N) -- tiny XLA glue
    # branch 2: (D+1) tokens, feature dim = N; only the class row is written back
    x2_cls = pallas_transformer(x1, params["shift1"], params["poscls1"], params["t1"],
                                heads=heads, dim_head=dim_head, cls_only=True)
    x2_class = x2_cls[:, 0]                           # (b, N)
    # NOTE: ViT.forward never applies mlp_head / pooling; it returns the concat.
    return jnp.concatenate([x1_class, x2_class], axis=-1)   # (b, D+N)


def init_transformer_params(key, dim, depth, heads, dim_head, mlp_dim):
    # PyTorch mapping: wqkv = to_qkv.weight.T (dim, 3*inner) with the Q columns
    # pre-multiplied by dim_head**-0.5; wo = to_out[0].weight.T reshaped to
    # (heads, dim_head, dim); bo = to_out[0].bias.
    inner = heads * dim_head
    kqkv, ko, k1, k2 = jax.random.split(key, 4)
    s = 0.02
    scale = float(dim_head) ** -0.5
    wqkv = (s * jax.random.normal(kqkv, (depth, dim, 3 * inner))).astype(jnp.float32)
    wqkv = wqkv.at[:, :, :inner].multiply(scale)   # one-time scale folding
    wo = (s * jax.random.normal(ko, (depth, heads, dim_head, dim))).astype(jnp.float32)
    return dict(
        ln1_g=jnp.ones((depth, 1, dim), jnp.float32),
        ln1_b=jnp.zeros((depth, 1, dim), jnp.float32),
        wqkv=wqkv,
        wo=wo,
        bo=jnp.zeros((depth, 1, dim), jnp.float32),
        ln2_g=jnp.ones((depth, 1, dim), jnp.float32),
        ln2_b=jnp.zeros((depth, 1, dim), jnp.float32),
        w1=(s * jax.random.normal(k1, (depth, dim, mlp_dim))).astype(jnp.float32),
        b1=jnp.zeros((depth, 1, mlp_dim), jnp.float32),
        w2=(s * jax.random.normal(k2, (depth, mlp_dim, dim))).astype(jnp.float32),
        b2=jnp.zeros((depth, 1, dim), jnp.float32),
    )


def prepare_vit_params(raw):
    """One-time parameter preprocessing (NOT per-forward): fold each cls token into
    row 0 of its positional embedding and build the constant token shift matrices used
    by the fused kernel prologue (x = shift @ tokens + poscls)."""
    p = dict(raw)
    n_tok0 = raw["pos_embedding"].shape[1] - 1     # num_patches
    n_tok1 = raw["pos_embedding1"].shape[1] - 1    # dim
    p["poscls0"] = raw["pos_embedding"][0].at[0].add(raw["cls_token"][0, 0])    # (N+1, D)
    p["shift0"] = jnp.eye(n_tok0 + 1, n_tok0, k=-1, dtype=jnp.float32)          # (N+1, N)
    p["poscls1"] = raw["pos_embedding1"][0].at[0].add(raw["cls_token1"][0, 0])  # (D+1, N)
    p["shift1"] = jnp.eye(n_tok1 + 1, n_tok1, k=-1, dtype=jnp.float32)          # (D+1, D)
    return p


if __name__ == "__main__":
    # ViT(image_size=16, patch_size=4, num_classes=10, dim=32, depth=2, heads=2,
    #     mlp_dim=64, dim_head=16)  -> num_patches = 16
    IMAGE_SIZE, PATCH_SIZE = 16, 4
    NUM_PATCHES = (IMAGE_SIZE // PATCH_SIZE) ** 2   # 16
    DIM, DEPTH, HEADS, DIM_HEAD, MLP_DIM = 32, 2, 2, 16, 64
    BATCH = 2    # multiple of 2 so both v7x TensorCores get a batch element

    key = jax.random.PRNGKey(0)
    key, kx, kp0, kp1, kc0, kc1, kt0, kt1 = jax.random.split(key, 8)
    raw_params = dict(
        pos_embedding=jax.random.normal(kp0, (1, NUM_PATCHES + 1, DIM), jnp.float32),
        pos_embedding1=jax.random.normal(kp1, (1, DIM + 1, NUM_PATCHES), jnp.float32),
        cls_token=jax.random.normal(kc0, (1, 1, DIM), jnp.float32),
        cls_token1=jax.random.normal(kc1, (1, 1, NUM_PATCHES), jnp.float32),
        t0=init_transformer_params(kt0, DIM, DEPTH, HEADS, DIM_HEAD, MLP_DIM),
        t1=init_transformer_params(kt1, NUM_PATCHES, DEPTH, HEADS, DIM_HEAD, MLP_DIM),
    )
    params = prepare_vit_params(raw_params)

    # forward() consumes already-embedded tokens: (batch, num_patches, dim)
    x = jax.random.normal(kx, (BATCH, NUM_PATCHES, DIM), jnp.float32)

    fwd = jax.jit(functools.partial(vit_forward, heads=HEADS, dim_head=DIM_HEAD))
    out = jax.block_until_ready(fwd(params, x))
    assert out.shape == (BATCH, DIM + NUM_PATCHES), out.shape
    print("KERNEL_OK")
</pallas_src>

<mosaic_0001>
module attributes {stable_mosaic.version = 11 : i64} {
  func.func @transformer_kernel(%arg0: i32, %arg1: memref<1x32x16xf32, #tpu.memory_space<vmem>>, %arg2: memref<33x32xf32, #tpu.memory_space<vmem>>, %arg3: memref<33x16xf32, #tpu.memory_space<vmem>>, %arg4: memref<2x1x16xf32, #tpu.memory_space<vmem>>, %arg5: memref<2x1x16xf32, #tpu.memory_space<vmem>>, %arg6: memref<2x16x96xf32, #tpu.memory_space<vmem>>, %arg7: memref<2x2x16x16xf32, #tpu.memory_space<vmem>>, %arg8: memref<2x1x16xf32, #tpu.memory_space<vmem>>, %arg9: memref<2x1x16xf32, #tpu.memory_space<vmem>>, %arg10: memref<2x1x16xf32, #tpu.memory_space<vmem>>, %arg11: memref<2x16x64xf32, #tpu.memory_space<vmem>>, %arg12: memref<2x1x64xf32, #tpu.memory_space<vmem>>, %arg13: memref<2x64x16xf32, #tpu.memory_space<vmem>>, %arg14: memref<2x1x16xf32, #tpu.memory_space<vmem>>, %arg15: memref<1x1x16xf32, #tpu.memory_space<vmem>>) attributes {dimension_semantics = [#tpu.dimension_semantics<parallel>], iteration_bounds = array<i64: 2>, scalar_prefetch = 0 : i64, scratch_operands = 0 : i64, tpu.core_type = #tpu.core_type<tc>, window_params = [{transform_indices = @transform_0, window_bounds = array<i64: 1, 32, 16>}, {pipeline_mode = #tpu.pipeline_mode<synchronous>, transform_indices = @transform_1, window_bounds = array<i64: 33, 32>}, {pipeline_mode = #tpu.pipeline_mode<synchronous>, transform_indices = @transform_2, window_bounds = array<i64: 33, 16>}, {pipeline_mode = #tpu.pipeline_mode<synchronous>, transform_indices = @transform_3, window_bounds = array<i64: 2, 1, 16>}, {pipeline_mode = #tpu.pipeline_mode<synchronous>, transform_indices = @transform_4, window_bounds = array<i64: 2, 1, 16>}, {pipeline_mode = #tpu.pipeline_mode<synchronous>, transform_indices = @transform_5, window_bounds = array<i64: 2, 16, 96>}, {pipeline_mode = #tpu.pipeline_mode<synchronous>, transform_indices = @transform_6, window_bounds = array<i64: 2, 2, 16, 16>}, {pipeline_mode = #tpu.pipeline_mode<synchronous>, transform_indices = @transform_7, window_bounds = array<i64: 2, 1, 16>}, {pipeline_mode = #tpu.pipeline_mode<synchronous>, transform_indices = @transform_8, window_bounds = array<i64: 2, 1, 16>}, {pipeline_mode = #tpu.pipeline_mode<synchronous>, transform_indices = @transform_9, window_bounds = array<i64: 2, 1, 16>}, {pipeline_mode = #tpu.pipeline_mode<synchronous>, transform_indices = @transform_10, window_bounds = array<i64: 2, 16, 64>}, {pipeline_mode = #tpu.pipeline_mode<synchronous>, transform_indices = @transform_11, window_bounds = array<i64: 2, 1, 64>}, {pipeline_mode = #tpu.pipeline_mode<synchronous>, transform_indices = @transform_12, window_bounds = array<i64: 2, 64, 16>}, {pipeline_mode = #tpu.pipeline_mode<synchronous>, transform_indices = @transform_13, window_bounds = array<i64: 2, 1, 16>}, {transform_indices = @transform_14, window_bounds = array<i64: 1, 1, 16>}]} {
    %c0 = arith.constant 0 : index
    %c0_0 = arith.constant 0 : index
    %c0_1 = arith.constant 0 : index
    %0 = vector.load %arg1[%c0, %c0_0, %c0_1] : memref<1x32x16xf32, #tpu.memory_space<vmem>>, vector<1x32x16xf32>
    %1 = vector.shape_cast %0 : vector<1x32x16xf32> to vector<32x16xf32>
    %c0_2 = arith.constant 0 : index
    %c0_3 = arith.constant 0 : index
    %2 = vector.load %arg2[%c0_2, %c0_3] : memref<33x32xf32, #tpu.memory_space<vmem>>, vector<33x32xf32>
    %cst = arith.constant dense<0.000000e+00> : vector<33x16xf32>
    %3 = tpu.matmul %2, %1, %cst {dimension_numbers = #tpu.dot_dimension_numbers<[1], [0], [0], [1], [0, 0, 1, 1], [], []>} : vector<33x32xf32>, vector<32x16xf32>, vector<33x16xf32> -> vector<33x16xf32>
    %c0_4 = arith.constant 0 : index
    %c0_5 = arith.constant 0 : index
    %4 = vector.load %arg3[%c0_4, %c0_5] : memref<33x16xf32, #tpu.memory_space<vmem>>, vector<33x16xf32>
    %5 = arith.addf %3, %4 : vector<33x16xf32>
    %c0_6 = arith.constant 0 : index
    %c0_7 = arith.constant 0 : index
    %c0_8 = arith.constant 0 : index
    %6 = vector.load %arg4[%c0_6, %c0_7, %c0_8] : memref<2x1x16xf32, #tpu.memory_space<vmem>>, vector<1x1x16xf32>
    %7 = vector.shape_cast %6 : vector<1x1x16xf32> to vector<1x16xf32>
    %c0_9 = arith.constant 0 : index
    %c0_10 = arith.constant 0 : index
    %c0_11 = arith.constant 0 : index
    %8 = vector.load %arg5[%c0_9, %c0_10, %c0_11] : memref<2x1x16xf32, #tpu.memory_space<vmem>>, vector<1x1x16xf32>
    %9 = vector.shape_cast %8 : vector<1x1x16xf32> to vector<1x16xf32>
    %cst_12 = arith.constant dense<0.000000e+00> : vector<33xf32>
    %10 = vector.multi_reduction <add>, %5, %cst_12 [1] : vector<33x16xf32> to vector<33xf32>
    %11 = vector.shape_cast %10 : vector<33xf32> to vector<33x1xf32>
    %cst_13 = arith.constant 1.600000e+01 : f32
    %12 = vector.broadcast %cst_13 : f32 to vector<33x1xf32>
    %13 = arith.divf %11, %12 : vector<33x1xf32>
    %14 = vector.broadcast %13 : vector<33x1xf32> to vector<33x16xf32>
    %15 = arith.subf %5, %14 : vector<33x16xf32>
    %16 = arith.mulf %15, %15 : vector<33x16xf32>
    %cst_14 = arith.constant dense<0.000000e+00> : vector<33xf32>
    %17 = vector.multi_reduction <add>, %16, %cst_14 [1] : vector<33x16xf32> to vector<33xf32>
    %18 = vector.shape_cast %17 : vector<33xf32> to vector<33x1xf32>
    %cst_15 = arith.constant 1.600000e+01 : f32
    %19 = vector.broadcast %cst_15 : f32 to vector<33x1xf32>
    %20 = arith.divf %18, %19 : vector<33x1xf32>
    %21 = vector.broadcast %13 : vector<33x1xf32> to vector<33x16xf32>
    %22 = arith.subf %5, %21 : vector<33x16xf32>
    %cst_16 = arith.constant 9.99999974E-6 : f32
    %23 = vector.broadcast %cst_16 : f32 to vector<33x1xf32>
    %24 = arith.addf %20, %23 : vector<33x1xf32>
    %25 = math.rsqrt %24 : vector<33x1xf32>
    %26 = vector.broadcast %25 : vector<33x1xf32> to vector<33x16xf32>
    %27 = arith.mulf %22, %26 : vector<33x16xf32>
    %28 = vector.broadcast %7 : vector<1x16xf32> to vector<33x16xf32>
    %29 = arith.mulf %27, %28 : vector<33x16xf32>
    %30 = vector.broadcast %9 : vector<1x16xf32> to vector<33x16xf32>
    %31 = arith.addf %29, %30 : vector<33x16xf32>
    %c0_17 = arith.constant 0 : index
    %c0_18 = arith.constant 0 : index
    %c0_19 = arith.constant 0 : index
    %32 = vector.load %arg6[%c0_17, %c0_18, %c0_19] : memref<2x16x96xf32, #tpu.memory_space<vmem>>, vector<1x16x96xf32>
    %33 = vector.shape_cast %32 : vector<1x16x96xf32> to vector<16x96xf32>
    %cst_20 = arith.constant dense<0.000000e+00> : vector<33x96xf32>
    %34 = tpu.matmul %31, %33, %cst_20 {dimension_numbers = #tpu.dot_dimension_numbers<[1], [0], [0], [1], [0, 0, 1, 1], [], []>} : vector<33x16xf32>, vector<16x96xf32>, vector<33x96xf32> -> vector<33x96xf32>
    %cst_21 = arith.constant 0.000000e+00 : f32
    %35 = vector.broadcast %cst_21 : f32 to vector<33x16xf32>
    %36 = vector.extract_strided_slice %34 {offsets = [0, 0], sizes = [33, 16], strides = [1, 1]} : vector<33x96xf32> to vector<33x16xf32>
    %37 = vector.extract_strided_slice %34 {offsets = [0, 32], sizes = [33, 16], strides = [1, 1]} : vector<33x96xf32> to vector<33x16xf32>
    %38 = vector.extract_strided_slice %34 {offsets = [0, 64], sizes = [33, 16], strides = [1, 1]} : vector<33x96xf32> to vector<33x16xf32>
    %cst_22 = arith.constant dense<0.000000e+00> : vector<33x33xf32>
    %39 = tpu.matmul %36, %37, %cst_22 {dimension_numbers = #tpu.dot_dimension_numbers<[1], [1], [0], [0], [0, 0, 1, 0], [], []>} : vector<33x16xf32>, vector<33x16xf32>, vector<33x33xf32> -> vector<33x33xf32>
    %cst_23 = arith.constant dense<0xFF800000> : vector<33xf32>
    %40 = vector.multi_reduction <maximumf>, %39, %cst_23 [1] : vector<33x33xf32> to vector<33xf32>
    %41 = vector.shape_cast %40 : vector<33xf32> to vector<33x1xf32>
    %42 = vector.broadcast %41 : vector<33x1xf32> to vector<33x33xf32>
    %43 = arith.subf %39, %42 : vector<33x33xf32>
    %44 = math.exp %43 : vector<33x33xf32>
    %cst_24 = arith.constant dense<0.000000e+00> : vector<33xf32>
    %45 = vector.multi_reduction <add>, %44, %cst_24 [1] : vector<33x33xf32> to vector<33xf32>
    %46 = vector.shape_cast %45 : vector<33xf32> to vector<33x1xf32>
    %47 = tpu.reciprocal %46 {approx = true} : vector<33x1xf32> -> vector<33x1xf32>
    %48 = vector.broadcast %47 : vector<33x1xf32> to vector<33x33xf32>
    %49 = arith.mulf %44, %48 : vector<33x33xf32>
    %cst_25 = arith.constant dense<0.000000e+00> : vector<33x16xf32>
    %50 = tpu.matmul %49, %38, %cst_25 {dimension_numbers = #tpu.dot_dimension_numbers<[1], [0], [0], [1], [0, 0, 1, 1], [], []>} : vector<33x33xf32>, vector<33x16xf32>, vector<33x16xf32> -> vector<33x16xf32>
    %c0_26 = arith.constant 0 : index
    %c0_27 = arith.constant 0 : index
    %c0_28 = arith.constant 0 : index
    %c0_29 = arith.constant 0 : index
    %51 = vector.load %arg7[%c0_26, %c0_27, %c0_28, %c0_29] : memref<2x2x16x16xf32, #tpu.memory_space<vmem>>, vector<1x1x16x16xf32>
    %52 = vector.shape_cast %51 : vector<1x1x16x16xf32> to vector<16x16xf32>
    %cst_30 = arith.constant dense<0.000000e+00> : vector<33x16xf32>
    %53 = tpu.matmul %50, %52, %cst_30 {dimension_numbers = #tpu.dot_dimension_numbers<[1], [0], [0], [1], [0, 0, 1, 1], [], []>} : vector<33x16xf32>, vector<16x16xf32>, vector<33x16xf32> -> vector<33x16xf32>
    %54 = arith.addf %35, %53 : vector<33x16xf32>
    %55 = vector.extract_strided_slice %34 {offsets = [0, 16], sizes = [33, 16], strides = [1, 1]} : vector<33x96xf32> to vector<33x16xf32>
    %56 = vector.extract_strided_slice %34 {offsets = [0, 48], sizes = [33, 16], strides = [1, 1]} : vector<33x96xf32> to vector<33x16xf32>
    %57 = vector.extract_strided_slice %34 {offsets = [0, 80], sizes = [33, 16], strides = [1, 1]} : vector<33x96xf32> to vector<33x16xf32>
    %cst_31 = arith.constant dense<0.000000e+00> : vector<33x33xf32>
    %58 = tpu.matmul %55, %56, %cst_31 {dimension_numbers = #tpu.dot_dimension_numbers<[1], [1], [0], [0], [0, 0, 1, 0], [], []>} : vector<33x16xf32>, vector<33x16xf32>, vector<33x33xf32> -> vector<33x33xf32>
    %cst_32 = arith.constant dense<0xFF800000> : vector<33xf32>
    %59 = vector.multi_reduction <maximumf>, %58, %cst_32 [1] : vector<33x33xf32> to vector<33xf32>
    %60 = vector.shape_cast %59 : vector<33xf32> to vector<33x1xf32>
    %61 = vector.broadcast %60 : vector<33x1xf32> to vector<33x33xf32>
    %62 = arith.subf %58, %61 : vector<33x33xf32>
    %63 = math.exp %62 : vector<33x33xf32>
    %cst_33 = arith.constant dense<0.000000e+00> : vector<33xf32>
    %64 = vector.multi_reduction <add>, %63, %cst_33 [1] : vector<33x33xf32> to vector<33xf32>
    %65 = vector.shape_cast %64 : vector<33xf32> to vector<33x1xf32>
    %66 = tpu.reciprocal %65 {approx = true} : vector<33x1xf32> -> vector<33x1xf32>
    %67 = vector.broadcast %66 : vector<33x1xf32> to vector<33x33xf32>
    %68 = arith.mulf %63, %67 : vector<33x33xf32>
    %cst_34 = arith.constant dense<0.000000e+00> : vector<33x16xf32>
    %69 = tpu.matmul %68, %57, %cst_34 {dimension_numbers = #tpu.dot_dimension_numbers<[1], [0], [0], [1], [0, 0, 1, 1], [], []>} : vector<33x33xf32>, vector<33x16xf32>, vector<33x16xf32> -> vector<33x16xf32>
    %c0_35 = arith.constant 0 : index
    %c1 = arith.constant 1 : index
    %c0_36 = arith.constant 0 : index
    %c0_37 = arith.constant 0 : index
    %70 = vector.load %arg7[%c0_35, %c1, %c0_36, %c0_37] : memref<2x2x16x16xf32, #tpu.memory_space<vmem>>, vector<1x1x16x16xf32>
    %71 = vector.shape_cast %70 : vector<1x1x16x16xf32> to vector<16x16xf32>
    %cst_38 = arith.constant dense<0.000000e+00> : vector<33x16xf32>
    %72 = tpu.matmul %69, %71, %cst_38 {dimension_numbers = #tpu.dot_dimension_numbers<[1], [0], [0], [1], [0, 0, 1, 1], [], []>} : vector<33x16xf32>, vector<16x16xf32>, vector<33x16xf32> -> vector<33x16xf32>
    %73 = arith.addf %54, %72 : vector<33x16xf32>
    %74 = arith.addf %5, %73 : vector<33x16xf32>
    %c0_39 = arith.constant 0 : index
    %c0_40 = arith.constant 0 : index
    %c0_41 = arith.constant 0 : index
    %75 = vector.load %arg8[%c0_39, %c0_40, %c0_41] : memref<2x1x16xf32, #tpu.memory_space<vmem>>, vector<1x1x16xf32>
    %76 = vector.shape_cast %75 : vector<1x1x16xf32> to vector<1x16xf32>
    %77 = vector.broadcast %76 : vector<1x16xf32> to vector<33x16xf32>
    %78 = arith.addf %74, %77 : vector<33x16xf32>
    %c0_42 = arith.constant 0 : index
    %c0_43 = arith.constant 0 : index
    %c0_44 = arith.constant 0 : index
    %79 = vector.load %arg9[%c0_42, %c0_43, %c0_44] : memref<2x1x16xf32, #tpu.memory_space<vmem>>, vector<1x1x16xf32>
    %80 = vector.shape_cast %79 : vector<1x1x16xf32> to vector<1x16xf32>
    %c0_45 = arith.constant 0 : index
    %c0_46 = arith.constant 0 : index
    %c0_47 = arith.constant 0 : index
    %81 = vector.load %arg10[%c0_45, %c0_46, %c0_47] : memref<2x1x16xf32, #tpu.memory_space<vmem>>, vector<1x1x16xf32>
    %82 = vector.shape_cast %81 : vector<1x1x16xf32> to vector<1x16xf32>
    %cst_48 = arith.constant dense<0.000000e+00> : vector<33xf32>
    %83 = vector.multi_reduction <add>, %78, %cst_48 [1] : vector<33x16xf32> to vector<33xf32>
    %84 = vector.shape_cast %83 : vector<33xf32> to vector<33x1xf32>
    %cst_49 = arith.constant 1.600000e+01 : f32
    %85 = vector.broadcast %cst_49 : f32 to vector<33x1xf32>
    %86 = arith.divf %84, %85 : vector<33x1xf32>
    %87 = vector.broadcast %86 : vector<33x1xf32> to vector<33x16xf32>
    %88 = arith.subf %78, %87 : vector<33x16xf32>
    %89 = arith.mulf %88, %88 : vector<33x16xf32>
    %cst_50 = arith.constant dense<0.000000e+00> : vector<33xf32>
    %90 = vector.multi_reduction <add>, %89, %cst_50 [1] : vector<33x16xf32> to vector<33xf32>
    %91 = vector.shape_cast %90 : vector<33xf32> to vector<33x1xf32>
    %cst_51 = arith.constant 1.600000e+01 : f32
    %92 = vector.broadcast %cst_51 : f32 to vector<33x1xf32>
    %93 = arith.divf %91, %92 : vector<33x1xf32>
    %94 = vector.broadcast %86 : vector<33x1xf32> to vector<33x16xf32>
    %95 = arith.subf %78, %94 : vector<33x16xf32>
    %cst_52 = arith.constant 9.99999974E-6 : f32
    %96 = vector.broadcast %cst_52 : f32 to vector<33x1xf32>
    %97 = arith.addf %93, %96 : vector<33x1xf32>
    %98 = math.rsqrt %97 : vector<33x1xf32>
    %99 = vector.broadcast %98 : vector<33x1xf32> to vector<33x16xf32>
    %100 = arith.mulf %95, %99 : vector<33x16xf32>
    %101 = vector.broadcast %80 : vector<1x16xf32> to vector<33x16xf32>
    %102 = arith.mulf %100, %101 : vector<33x16xf32>
    %103 = vector.broadcast %82 : vector<1x16xf32> to vector<33x16xf32>
    %104 = arith.addf %102, %103 : vector<33x16xf32>
    %c0_53 = arith.constant 0 : index
    %c0_54 = arith.constant 0 : index
    %c0_55 = arith.constant 0 : index
    %105 = vector.load %arg11[%c0_53, %c0_54, %c0_55] : memref<2x16x64xf32, #tpu.memory_space<vmem>>, vector<1x16x64xf32>
    %106 = vector.shape_cast %105 : vector<1x16x64xf32> to vector<16x64xf32>
    %cst_56 = arith.constant dense<0.000000e+00> : vector<33x64xf32>
    %107 = tpu.matmul %104, %106, %cst_56 {dimension_numbers = #tpu.dot_dimension_numbers<[1], [0], [0], [1], [0, 0, 1, 1], [], []>} : vector<33x16xf32>, vector<16x64xf32>, vector<33x64xf32> -> vector<33x64xf32>
    %c0_57 = arith.constant 0 : index
    %c0_58 = arith.constant 0 : index
    %c0_59 = arith.constant 0 : index
    %108 = vector.load %arg12[%c0_57, %c0_58, %c0_59] : memref<2x1x64xf32, #tpu.memory_space<vmem>>, vector<1x1x64xf32>
    %109 = vector.shape_cast %108 : vector<1x1x64xf32> to vector<1x64xf32>
    %110 = vector.broadcast %109 : vector<1x64xf32> to vector<33x64xf32>
    %111 = arith.addf %107, %110 : vector<33x64xf32>
    %cst_60 = arith.constant 5.000000e-01 : f32
    %112 = vector.broadcast %cst_60 : f32 to vector<33x64xf32>
    %113 = arith.mulf %112, %111 : vector<33x64xf32>
    %cst_61 = arith.constant 4.471500e-02 : f32
    %114 = vector.broadcast %cst_61 : f32 to vector<33x64xf32>
    %115 = arith.mulf %114, %111 : vector<33x64xf32>
    %116 = arith.mulf %115, %111 : vector<33x64xf32>
    %117 = arith.mulf %116, %111 : vector<33x64xf32>
    %118 = arith.addf %111, %117 : vector<33x64xf32>
    %cst_62 = arith.constant 0.797884583 : f32
    %119 = vector.broadcast %cst_62 : f32 to vector<33x64xf32>
    %120 = arith.mulf %119, %118 : vector<33x64xf32>
    %121 = math.tanh %120 : vector<33x64xf32>
    %cst_63 = arith.constant 1.000000e+00 : f32
    %122 = vector.broadcast %cst_63 : f32 to vector<33x64xf32>
    %123 = arith.addf %122, %121 : vector<33x64xf32>
    %124 = arith.mulf %113, %123 : vector<33x64xf32>
    %c0_64 = arith.constant 0 : index
    %c0_65 = arith.constant 0 : index
    %c0_66 = arith.constant 0 : index
    %125 = vector.load %arg13[%c0_64, %c0_65, %c0_66] : memref<2x64x16xf32, #tpu.memory_space<vmem>>, vector<1x64x16xf32>
    %126 = vector.shape_cast %125 : vector<1x64x16xf32> to vector<64x16xf32>
    %cst_67 = arith.constant dense<0.000000e+00> : vector<33x16xf32>
    %127 = tpu.matmul %124, %126, %cst_67 {dimension_numbers = #tpu.dot_dimension_numbers<[1], [0], [0], [1], [0, 0, 1, 1], [], []>} : vector<33x64xf32>, vector<64x16xf32>, vector<33x16xf32> -> vector<33x16xf32>
    %128 = arith.addf %78, %127 : vector<33x16xf32>
    %c0_68 = arith.constant 0 : index
    %c0_69 = arith.constant 0 : index
    %c0_70 = arith.constant 0 : index
    %129 = vector.load %arg14[%c0_68, %c0_69, %c0_70] : memref<2x1x16xf32, #tpu.memory_space<vmem>>, vector<1x1x16xf32>
    %130 = vector.shape_cast %129 : vector<1x1x16xf32> to vector<1x16xf32>
    %131 = vector.broadcast %130 : vector<1x16xf32> to vector<33x16xf32>
    %132 = arith.addf %128, %131 : vector<33x16xf32>
    %c1_71 = arith.constant 1 : index
    %c0_72 = arith.constant 0 : index
    %c0_73 = arith.constant 0 : index
    %133 = vector.load %arg4[%c1_71, %c0_72, %c0_73] : memref<2x1x16xf32, #tpu.memory_space<vmem>>, vector<1x1x16xf32>
    %134 = vector.shape_cast %133 : vector<1x1x16xf32> to vector<1x16xf32>
    %c1_74 = arith.constant 1 : index
    %c0_75 = arith.constant 0 : index
    %c0_76 = arith.constant 0 : index
    %135 = vector.load %arg5[%c1_74, %c0_75, %c0_76] : memref<2x1x16xf32, #tpu.memory_space<vmem>>, vector<1x1x16xf32>
    %136 = vector.shape_cast %135 : vector<1x1x16xf32> to vector<1x16xf32>
    %cst_77 = arith.constant dense<0.000000e+00> : vector<33xf32>
    %137 = vector.multi_reduction <add>, %132, %cst_77 [1] : vector<33x16xf32> to vector<33xf32>
    %138 = vector.shape_cast %137 : vector<33xf32> to vector<33x1xf32>
    %cst_78 = arith.constant 1.600000e+01 : f32
    %139 = vector.broadcast %cst_78 : f32 to vector<33x1xf32>
    %140 = arith.divf %138, %139 : vector<33x1xf32>
    %141 = vector.broadcast %140 : vector<33x1xf32> to vector<33x16xf32>
    %142 = arith.subf %132, %141 : vector<33x16xf32>
    %143 = arith.mulf %142, %142 : vector<33x16xf32>
    %cst_79 = arith.constant dense<0.000000e+00> : vector<33xf32>
    %144 = vector.multi_reduction <add>, %143, %cst_79 [1] : vector<33x16xf32> to vector<33xf32>
    %145 = vector.shape_cast %144 : vector<33xf32> to vector<33x1xf32>
    %cst_80 = arith.constant 1.600000e+01 : f32
    %146 = vector.broadcast %cst_80 : f32 to vector<33x1xf32>
    %147 = arith.divf %145, %146 : vector<33x1xf32>
    %148 = vector.broadcast %140 : vector<33x1xf32> to vector<33x16xf32>
    %149 = arith.subf %132, %148 : vector<33x16xf32>
    %cst_81 = arith.constant 9.99999974E-6 : f32
    %150 = vector.broadcast %cst_81 : f32 to vector<33x1xf32>
    %151 = arith.addf %147, %150 : vector<33x1xf32>
    %152 = math.rsqrt %151 : vector<33x1xf32>
    %153 = vector.broadcast %152 : vector<33x1xf32> to vector<33x16xf32>
    %154 = arith.mulf %149, %153 : vector<33x16xf32>
    %155 = vector.broadcast %134 : vector<1x16xf32> to vector<33x16xf32>
    %156 = arith.mulf %154, %155 : vector<33x16xf32>
    %157 = vector.broadcast %136 : vector<1x16xf32> to vector<33x16xf32>
    %158 = arith.addf %156, %157 : vector<33x16xf32>
    %c1_82 = arith.constant 1 : index
    %c0_83 = arith.constant 0 : index
    %c0_84 = arith.constant 0 : index
    %159 = vector.load %arg6[%c1_82, %c0_83, %c0_84] : memref<2x16x96xf32, #tpu.memory_space<vmem>>, vector<1x16x96xf32>
    %160 = vector.shape_cast %159 : vector<1x16x96xf32> to vector<16x96xf32>
    %cst_85 = arith.constant dense<0.000000e+00> : vector<33x96xf32>
    %161 = tpu.matmul %158, %160, %cst_85 {dimension_numbers = #tpu.dot_dimension_numbers<[1], [0], [0], [1], [0, 0, 1, 1], [], []>} : vector<33x16xf32>, vector<16x96xf32>, vector<33x96xf32> -> vector<33x96xf32>
    %cst_86 = arith.constant 0.000000e+00 : f32
    %162 = vector.broadcast %cst_86 : f32 to vector<33x16xf32>
    %163 = vector.extract_strided_slice %161 {offsets = [0, 0], sizes = [33, 16], strides = [1, 1]} : vector<33x96xf32> to vector<33x16xf32>
    %164 = vector.extract_strided_slice %161 {offsets = [0, 32], sizes = [33, 16], strides = [1, 1]} : vector<33x96xf32> to vector<33x16xf32>
    %165 = vector.extract_strided_slice %161 {offsets = [0, 64], sizes = [33, 16], strides = [1, 1]} : vector<33x96xf32> to vector<33x16xf32>
    %cst_87 = arith.constant dense<0.000000e+00> : vector<33x33xf32>
    %166 = tpu.matmul %163, %164, %cst_87 {dimension_numbers = #tpu.dot_dimension_numbers<[1], [1], [0], [0], [0, 0, 1, 0], [], []>} : vector<33x16xf32>, vector<33x16xf32>, vector<33x33xf32> -> vector<33x33xf32>
    %cst_88 = arith.constant dense<0xFF800000> : vector<33xf32>
    %167 = vector.multi_reduction <maximumf>, %166, %cst_88 [1] : vector<33x33xf32> to vector<33xf32>
    %168 = vector.shape_cast %167 : vector<33xf32> to vector<33x1xf32>
    %169 = vector.broadcast %168 : vector<33x1xf32> to vector<33x33xf32>
    %170 = arith.subf %166, %169 : vector<33x33xf32>
    %171 = math.exp %170 : vector<33x33xf32>
    %cst_89 = arith.constant dense<0.000000e+00> : vector<33xf32>
    %172 = vector.multi_reduction <add>, %171, %cst_89 [1] : vector<33x33xf32> to vector<33xf32>
    %173 = vector.shape_cast %172 : vector<33xf32> to vector<33x1xf32>
    %174 = tpu.reciprocal %173 {approx = true} : vector<33x1xf32> -> vector<33x1xf32>
    %175 = vector.broadcast %174 : vector<33x1xf32> to vector<33x33xf32>
    %176 = arith.mulf %171, %175 : vector<33x33xf32>
    %cst_90 = arith.constant dense<0.000000e+00> : vector<33x16xf32>
    %177 = tpu.matmul %176, %165, %cst_90 {dimension_numbers = #tpu.dot_dimension_numbers<[1], [0], [0], [1], [0, 0, 1, 1], [], []>} : vector<33x33xf32>, vector<33x16xf32>, vector<33x16xf32> -> vector<33x16xf32>
    %c1_91 = arith.constant 1 : index
    %c0_92 = arith.constant 0 : index
    %c0_93 = arith.constant 0 : index
    %c0_94 = arith.constant 0 : index
    %178 = vector.load %arg7[%c1_91, %c0_92, %c0_93, %c0_94] : memref<2x2x16x16xf32, #tpu.memory_space<vmem>>, vector<1x1x16x16xf32>
    %179 = vector.shape_cast %178 : vector<1x1x16x16xf32> to vector<16x16xf32>
    %cst_95 = arith.constant dense<0.000000e+00> : vector<33x16xf32>
    %180 = tpu.matmul %177, %179, %cst_95 {dimension_numbers = #tpu.dot_dimension_numbers<[1], [0], [0], [1], [0, 0, 1, 1], [], []>} : vector<33x16xf32>, vector<16x16xf32>, vector<33x16xf32> -> vector<33x16xf32>
    %181 = arith.addf %162, %180 : vector<33x16xf32>
    %182 = vector.extract_strided_slice %161 {offsets = [0, 16], sizes = [33, 16], strides = [1, 1]} : vector<33x96xf32> to vector<33x16xf32>
    %183 = vector.extract_strided_slice %161 {offsets = [0, 48], sizes = [33, 16], strides = [1, 1]} : vector<33x96xf32> to vector<33x16xf32>
    %184 = vector.extract_strided_slice %161 {offsets = [0, 80], sizes = [33, 16], strides = [1, 1]} : vector<33x96xf32> to vector<33x16xf32>
    %cst_96 = arith.constant dense<0.000000e+00> : vector<33x33xf32>
    %185 = tpu.matmul %182, %183, %cst_96 {dimension_numbers = #tpu.dot_dimension_numbers<[1], [1], [0], [0], [0, 0, 1, 0], [], []>} : vector<33x16xf32>, vector<33x16xf32>, vector<33x33xf32> -> vector<33x33xf32>
    %cst_97 = arith.constant dense<0xFF800000> : vector<33xf32>
    %186 = vector.multi_reduction <maximumf>, %185, %cst_97 [1] : vector<33x33xf32> to vector<33xf32>
    %187 = vector.shape_cast %186 : vector<33xf32> to vector<33x1xf32>
    %188 = vector.broadcast %187 : vector<33x1xf32> to vector<33x33xf32>
    %189 = arith.subf %185, %188 : vector<33x33xf32>
    %190 = math.exp %189 : vector<33x33xf32>
    %cst_98 = arith.constant dense<0.000000e+00> : vector<33xf32>
    %191 = vector.multi_reduction <add>, %190, %cst_98 [1] : vector<33x33xf32> to vector<33xf32>
    %192 = vector.shape_cast %191 : vector<33xf32> to vector<33x1xf32>
    %193 = tpu.reciprocal %192 {approx = true} : vector<33x1xf32> -> vector<33x1xf32>
    %194 = vector.broadcast %193 : vector<33x1xf32> to vector<33x33xf32>
    %195 = arith.mulf %190, %194 : vector<33x33xf32>
    %cst_99 = arith.constant dense<0.000000e+00> : vector<33x16xf32>
    %196 = tpu.matmul %195, %184, %cst_99 {dimension_numbers = #tpu.dot_dimension_numbers<[1], [0], [0], [1], [0, 0, 1, 1], [], []>} : vector<33x33xf32>, vector<33x16xf32>, vector<33x16xf32> -> vector<33x16xf32>
    %c1_100 = arith.constant 1 : index
    %c1_101 = arith.constant 1 : index
    %c0_102 = arith.constant 0 : index
    %c0_103 = arith.constant 0 : index
    %197 = vector.load %arg7[%c1_100, %c1_101, %c0_102, %c0_103] : memref<2x2x16x16xf32, #tpu.memory_space<vmem>>, vector<1x1x16x16xf32>
    %198 = vector.shape_cast %197 : vector<1x1x16x16xf32> to vector<16x16xf32>
    %cst_104 = arith.constant dense<0.000000e+00> : vector<33x16xf32>
    %199 = tpu.matmul %196, %198, %cst_104 {dimension_numbers = #tpu.dot_dimension_numbers<[1], [0], [0], [1], [0, 0, 1, 1], [], []>} : vector<33x16xf32>, vector<16x16xf32>, vector<33x16xf32> -> vector<33x16xf32>
    %200 = arith.addf %181, %199 : vector<33x16xf32>
    %201 = arith.addf %132, %200 : vector<33x16xf32>
    %c1_105 = arith.constant 1 : index
    %c0_106 = arith.constant 0 : index
    %c0_107 = arith.constant 0 : index
    %202 = vector.load %arg8[%c1_105, %c0_106, %c0_107] : memref<2x1x16xf32, #tpu.memory_space<vmem>>, vector<1x1x16xf32>
    %203 = vector.shape_cast %202 : vector<1x1x16xf32> to vector<1x16xf32>
    %204 = vector.broadcast %203 : vector<1x16xf32> to vector<33x16xf32>
    %205 = arith.addf %201, %204 : vector<33x16xf32>
    %c1_108 = arith.constant 1 : index
    %c0_109 = arith.constant 0 : index
    %c0_110 = arith.constant 0 : index
    %206 = vector.load %arg9[%c1_108, %c0_109, %c0_110] : memref<2x1x16xf32, #tpu.memory_space<vmem>>, vector<1x1x16xf32>
    %207 = vector.shape_cast %206 : vector<1x1x16xf32> to vector<1x16xf32>
    %c1_111 = arith.constant 1 : index
    %c0_112 = arith.constant 0 : index
    %c0_113 = arith.constant 0 : index
    %208 = vector.load %arg10[%c1_111, %c0_112, %c0_113] : memref<2x1x16xf32, #tpu.memory_space<vmem>>, vector<1x1x16xf32>
    %209 = vector.shape_cast %208 : vector<1x1x16xf32> to vector<1x16xf32>
    %cst_114 = arith.constant dense<0.000000e+00> : vector<33xf32>
    %210 = vector.multi_reduction <add>, %205, %cst_114 [1] : vector<33x16xf32> to vector<33xf32>
    %211 = vector.shape_cast %210 : vector<33xf32> to vector<33x1xf32>
    %cst_115 = arith.constant 1.600000e+01 : f32
    %212 = vector.broadcast %cst_115 : f32 to vector<33x1xf32>
    %213 = arith.divf %211, %212 : vector<33x1xf32>
    %214 = vector.broadcast %213 : vector<33x1xf32> to vector<33x16xf32>
    %215 = arith.subf %205, %214 : vector<33x16xf32>
    %216 = arith.mulf %215, %215 : vector<33x16xf32>
    %cst_116 = arith.constant dense<0.000000e+00> : vector<33xf32>
    %217 = vector.multi_reduction <add>, %216, %cst_116 [1] : vector<33x16xf32> to vector<33xf32>
    %218 = vector.shape_cast %217 : vector<33xf32> to vector<33x1xf32>
    %cst_117 = arith.constant 1.600000e+01 : f32
    %219 = vector.broadcast %cst_117 : f32 to vector<33x1xf32>
    %220 = arith.divf %218, %219 : vector<33x1xf32>
    %221 = vector.broadcast %213 : vector<33x1xf32> to vector<33x16xf32>
    %222 = arith.subf %205, %221 : vector<33x16xf32>
    %cst_118 = arith.constant 9.99999974E-6 : f32
    %223 = vector.broadcast %cst_118 : f32 to vector<33x1xf32>
    %224 = arith.addf %220, %223 : vector<33x1xf32>
    %225 = math.rsqrt %224 : vector<33x1xf32>
    %226 = vector.broadcast %225 : vector<33x1xf32> to vector<33x16xf32>
    %227 = arith.mulf %222, %226 : vector<33x16xf32>
    %228 = vector.broadcast %207 : vector<1x16xf32> to vector<33x16xf32>
    %229 = arith.mulf %227, %228 : vector<33x16xf32>
    %230 = vector.broadcast %209 : vector<1x16xf32> to vector<33x16xf32>
    %231 = arith.addf %229, %230 : vector<33x16xf32>
    %c1_119 = arith.constant 1 : index
    %c0_120 = arith.constant 0 : index
    %c0_121 = arith.constant 0 : index
    %232 = vector.load %arg11[%c1_119, %c0_120, %c0_121] : memref<2x16x64xf32, #tpu.memory_space<vmem>>, vector<1x16x64xf32>
    %233 = vector.shape_cast %232 : vector<1x16x64xf32> to vector<16x64xf32>
    %cst_122 = arith.constant dense<0.000000e+00> : vector<33x64xf32>
    %234 = tpu.matmul %231, %233, %cst_122 {dimension_numbers = #tpu.dot_dimension_numbers<[1], [0], [0], [1], [0, 0, 1, 1], [], []>} : vector<33x16xf32>, vector<16x64xf32>, vector<33x64xf32> -> vector<33x64xf32>
    %c1_123 = arith.constant 1 : index
    %c0_124 = arith.constant 0 : index
    %c0_125 = arith.constant 0 : index
    %235 = vector.load %arg12[%c1_123, %c0_124, %c0_125] : memref<2x1x64xf32, #tpu.memory_space<vmem>>, vector<1x1x64xf32>
    %236 = vector.shape_cast %235 : vector<1x1x64xf32> to vector<1x64xf32>
    %237 = vector.broadcast %236 : vector<1x64xf32> to vector<33x64xf32>
    %238 = arith.addf %234, %237 : vector<33x64xf32>
    %cst_126 = arith.constant 5.000000e-01 : f32
    %239 = vector.broadcast %cst_126 : f32 to vector<33x64xf32>
    %240 = arith.mulf %239, %238 : vector<33x64xf32>
    %cst_127 = arith.constant 4.471500e-02 : f32
    %241 = vector.broadcast %cst_127 : f32 to vector<33x64xf32>
    %242 = arith.mulf %241, %238 : vector<33x64xf32>
    %243 = arith.mulf %242, %238 : vector<33x64xf32>
    %244 = arith.mulf %243, %238 : vector<33x64xf32>
    %245 = arith.addf %238, %244 : vector<33x64xf32>
    %cst_128 = arith.constant 0.797884583 : f32
    %246 = vector.broadcast %cst_128 : f32 to vector<33x64xf32>
    %247 = arith.mulf %246, %245 : vector<33x64xf32>
    %248 = math.tanh %247 : vector<33x64xf32>
    %cst_129 = arith.constant 1.000000e+00 : f32
    %249 = vector.broadcast %cst_129 : f32 to vector<33x64xf32>
    %250 = arith.addf %249, %248 : vector<33x64xf32>
    %251 = arith.mulf %240, %250 : vector<33x64xf32>
    %c1_130 = arith.constant 1 : index
    %c0_131 = arith.constant 0 : index
    %c0_132 = arith.constant 0 : index
    %252 = vector.load %arg13[%c1_130, %c0_131, %c0_132] : memref<2x64x16xf32, #tpu.memory_space<vmem>>, vector<1x64x16xf32>
    %253 = vector.shape_cast %252 : vector<1x64x16xf32> to vector<64x16xf32>
    %cst_133 = arith.constant dense<0.000000e+00> : vector<33x16xf32>
    %254 = tpu.matmul %251, %253, %cst_133 {dimension_numbers = #tpu.dot_dimension_numbers<[1], [0], [0], [1], [0, 0, 1, 1], [], []>} : vector<33x64xf32>, vector<64x16xf32>, vector<33x16xf32> -> vector<33x16xf32>
    %255 = arith.addf %205, %254 : vector<33x16xf32>
    %c1_134 = arith.constant 1 : index
    %c0_135 = arith.constant 0 : index
    %c0_136 = arith.constant 0 : index
    %256 = vector.load %arg14[%c1_134, %c0_135, %c0_136] : memref<2x1x16xf32, #tpu.memory_space<vmem>>, vector<1x1x16xf32>
    %257 = vector.shape_cast %256 : vector<1x1x16xf32> to vector<1x16xf32>
    %258 = vector.broadcast %257 : vector<1x16xf32> to vector<33x16xf32>
    %259 = arith.addf %255, %258 : vector<33x16xf32>
    %260 = vector.extract_strided_slice %259 {offsets = [0, 0], sizes = [1, 16], strides = [1, 1]} : vector<33x16xf32> to vector<1x16xf32>
    %c0_137 = arith.constant 0 : index
    %c0_138 = arith.constant 0 : index
    %c0_139 = arith.constant 0 : index
    %261 = vector.load %arg15[%c0_137, %c0_138, %c0_139] : memref<1x1x16xf32, #tpu.memory_space<vmem>>, vector<1x1x16xf32>
    %262 = vector.shape_cast %261 : vector<1x1x16xf32> to vector<1x16xf32>
    %263 = vector.shape_cast %260 : vector<1x16xf32> to vector<1x1x16xf32>
    tpu.vector_store %arg15[%c0_137, %c0_138, %c0_139], %263 {strides = array<i32>} : memref<1x1x16xf32, #tpu.memory_space<vmem>>, vector<1x1x16xf32>,
    return
  }
  func.func @transform_0(%arg0: i32) -> (i32, i32, i32) {
    %c0_i32 = arith.constant 0 : i32
    %c0_i32_0 = arith.constant 0 : i32
    %c0_i32_1 = arith.constant 0 : i32
    return %arg0, %c0_i32, %c0_i32_0 : i32, i32, i32
  }
  func.func @transform_1(%arg0: i32) -> (i32, i32) {
    %c0_i32 = arith.constant 0 : i32
    %c0_i32_0 = arith.constant 0 : i32
    %c0_i32_1 = arith.constant 0 : i32
    return %c0_i32, %c0_i32_0 : i32, i32
  }
  func.func @transform_2(%arg0: i32) -> (i32, i32) {
    %c0_i32 = arith.constant 0 : i32
    %c0_i32_0 = arith.constant 0 : i32
    %c0_i32_1 = arith.constant 0 : i32
    return %c0_i32, %c0_i32_0 : i32, i32
  }
  func.func @transform_3(%arg0: i32) -> (i32, i32, i32) {
    %c0_i32 = arith.constant 0 : i32
    %c0_i32_0 = arith.constant 0 : i32
    %c0_i32_1 = arith.constant 0 : i32
    %c0_i32_2 = arith.constant 0 : i32
    return %c0_i32, %c0_i32_0, %c0_i32_1 : i32, i32, i32
  }
  func.func @transform_4(%arg0: i32) -> (i32, i32, i32) {
    %c0_i32 = arith.constant 0 : i32
    %c0_i32_0 = arith.constant 0 : i32
    %c0_i32_1 = arith.constant 0 : i32
    %c0_i32_2 = arith.constant 0 : i32
    return %c0_i32, %c0_i32_0, %c0_i32_1 : i32, i32, i32
  }
  func.func @transform_5(%arg0: i32) -> (i32, i32, i32) {
    %c0_i32 = arith.constant 0 : i32
    %c0_i32_0 = arith.constant 0 : i32
    %c0_i32_1 = arith.constant 0 : i32
    %c0_i32_2 = arith.constant 0 : i32
    return %c0_i32, %c0_i32_0, %c0_i32_1 : i32, i32, i32
  }
  func.func @transform_6(%arg0: i32) -> (i32, i32, i32, i32) {
    %c0_i32 = arith.constant 0 : i32
    %c0_i32_0 = arith.constant 0 : i32
    %c0_i32_1 = arith.constant 0 : i32
    %c0_i32_2 = arith.constant 0 : i32
    %c0_i32_3 = arith.constant 0 : i32
    return %c0_i32, %c0_i32_0, %c0_i32_1, %c0_i32_2 : i32, i32, i32, i32
  }
  func.func @transform_7(%arg0: i32) -> (i32, i32, i32) {
    %c0_i32 = arith.constant 0 : i32
    %c0_i32_0 = arith.constant 0 : i32
    %c0_i32_1 = arith.constant 0 : i32
    %c0_i32_2 = arith.constant 0 : i32
    return %c0_i32, %c0_i32_0, %c0_i32_1 : i32, i32, i32
  }
  func.func @transform_8(%arg0: i32) -> (i32, i32, i32) {
    %c0_i32 = arith.constant 0 : i32
    %c0_i32_0 = arith.constant 0 : i32
    %c0_i32_1 = arith.constant 0 : i32
    %c0_i32_2 = arith.constant 0 : i32
    return %c0_i32, %c0_i32_0, %c0_i32_1 : i32, i32, i32
  }
  func.func @transform_9(%arg0: i32) -> (i32, i32, i32) {
    %c0_i32 = arith.constant 0 : i32
    %c0_i32_0 = arith.constant 0 : i32
    %c0_i32_1 = arith.constant 0 : i32
    %c0_i32_2 = arith.constant 0 : i32
    return %c0_i32, %c0_i32_0, %c0_i32_1 : i32, i32, i32
  }
  func.func @transform_10(%arg0: i32) -> (i32, i32, i32) {
    %c0_i32 = arith.constant 0 : i32
    %c0_i32_0 = arith.constant 0 : i32
    %c0_i32_1 = arith.constant 0 : i32
    %c0_i32_2 = arith.constant 0 : i32
    return %c0_i32, %c0_i32_0, %c0_i32_1 : i32, i32, i32
  }
  func.func @transform_11(%arg0: i32) -> (i32, i32, i32) {
    %c0_i32 = arith.constant 0 : i32
    %c0_i32_0 = arith.constant 0 : i32
    %c0_i32_1 = arith.constant 0 : i32
    %c0_i32_2 = arith.constant 0 : i32
    return %c0_i32, %c0_i32_0, %c0_i32_1 : i32, i32, i32
  }
  func.func @transform_12(%arg0: i32) -> (i32, i32, i32) {
    %c0_i32 = arith.constant 0 : i32
    %c0_i32_0 = arith.constant 0 : i32
    %c0_i32_1 = arith.constant 0 : i32
    %c0_i32_2 = arith.constant 0 : i32
    return %c0_i32, %c0_i32_0, %c0_i32_1 : i32, i32, i32
  }
  func.func @transform_13(%arg0: i32) -> (i32, i32, i32) {
    %c0_i32 = arith.constant 0 : i32
    %c0_i32_0 = arith.constant 0 : i32
    %c0_i32_1 = arith.constant 0 : i32
    %c0_i32_2 = arith.constant 0 : i32
    return %c0_i32, %c0_i32_0, %c0_i32_1 : i32, i32, i32
  }
  func.func @transform_14(%arg0: i32) -> (i32, i32, i32) {
    %c0_i32 = arith.constant 0 : i32
    %c0_i32_0 = arith.constant 0 : i32
    %c0_i32_1 = arith.constant 0 : i32
    return %arg0, %c0_i32, %c0_i32_0 : i32, i32, i32
  }
}

module attributes {stable_mosaic.version = 11 : i64} {
  func.func @transformer_kernel(%arg0: i32, %arg1: memref<1x16x32xf32, #tpu.memory_space<vmem>>, %arg2: memref<17x16xf32, #tpu.memory_space<vmem>>, %arg3: memref<17x32xf32, #tpu.memory_space<vmem>>, %arg4: memref<2x1x32xf32, #tpu.memory_space<vmem>>, %arg5: memref<2x1x32xf32, #tpu.memory_space<vmem>>, %arg6: memref<2x32x96xf32, #tpu.memory_space<vmem>>, %arg7: memref<2x2x16x32xf32, #tpu.memory_space<vmem>>, %arg8: memref<2x1x32xf32, #tpu.memory_space<vmem>>, %arg9: memref<2x1x32xf32, #tpu.memory_space<vmem>>, %arg10: memref<2x1x32xf32, #tpu.memory_space<vmem>>, %arg11: memref<2x32x64xf32, #tpu.memory_space<vmem>>, %arg12: memref<2x1x64xf32, #tpu.memory_space<vmem>>, %arg13: memref<2x64x32xf32, #tpu.memory_space<vmem>>, %arg14: memref<2x1x32xf32, #tpu.memory_space<vmem>>, %arg15: memref<1x17x32xf32, #tpu.memory_space<vmem>>) attributes {dimension_semantics = [#tpu.dimension_semantics<parallel>], iteration_bounds = array<i64: 2>, scalar_prefetch = 0 : i64, scratch_operands = 0 : i64, tpu.core_type = #tpu.core_type<tc>, window_params = [{transform_indices = @transform_0, window_bounds = array<i64: 1, 16, 32>}, {pipeline_mode = #tpu.pipeline_mode<synchronous>, transform_indices = @transform_1, window_bounds = array<i64: 17, 16>}, {pipeline_mode = #tpu.pipeline_mode<synchronous>, transform_indices = @transform_2, window_bounds = array<i64: 17, 32>}, {pipeline_mode = #tpu.pipeline_mode<synchronous>, transform_indices = @transform_3, window_bounds = array<i64: 2, 1, 32>}, {pipeline_mode = #tpu.pipeline_mode<synchronous>, transform_indices = @transform_4, window_bounds = array<i64: 2, 1, 32>}, {pipeline_mode = #tpu.pipeline_mode<synchronous>, transform_indices = @transform_5, window_bounds = array<i64: 2, 32, 96>}, {pipeline_mode = #tpu.pipeline_mode<synchronous>, transform_indices = @transform_6, window_bounds = array<i64: 2, 2, 16, 32>}, {pipeline_mode = #tpu.pipeline_mode<synchronous>, transform_indices = @transform_7, window_bounds = array<i64: 2, 1, 32>}, {pipeline_mode = #tpu.pipeline_mode<synchronous>, transform_indices = @transform_8, window_bounds = array<i64: 2, 1, 32>}, {pipeline_mode = #tpu.pipeline_mode<synchronous>, transform_indices = @transform_9, window_bounds = array<i64: 2, 1, 32>}, {pipeline_mode = #tpu.pipeline_mode<synchronous>, transform_indices = @transform_10, window_bounds = array<i64: 2, 32, 64>}, {pipeline_mode = #tpu.pipeline_mode<synchronous>, transform_indices = @transform_11, window_bounds = array<i64: 2, 1, 64>}, {pipeline_mode = #tpu.pipeline_mode<synchronous>, transform_indices = @transform_12, window_bounds = array<i64: 2, 64, 32>}, {pipeline_mode = #tpu.pipeline_mode<synchronous>, transform_indices = @transform_13, window_bounds = array<i64: 2, 1, 32>}, {transform_indices = @transform_14, window_bounds = array<i64: 1, 17, 32>}]} {
    %c0 = arith.constant 0 : index
    %c0_0 = arith.constant 0 : index
    %c0_1 = arith.constant 0 : index
    %0 = vector.load %arg1[%c0, %c0_0, %c0_1] : memref<1x16x32xf32, #tpu.memory_space<vmem>>, vector<1x16x32xf32>
    %1 = vector.shape_cast %0 : vector<1x16x32xf32> to vector<16x32xf32>
    %c0_2 = arith.constant 0 : index
    %c0_3 = arith.constant 0 : index
    %2 = vector.load %arg2[%c0_2, %c0_3] : memref<17x16xf32, #tpu.memory_space<vmem>>, vector<17x16xf32>
    %cst = arith.constant dense<0.000000e+00> : vector<17x32xf32>
    %3 = tpu.matmul %2, %1, %cst {dimension_numbers = #tpu.dot_dimension_numbers<[1], [0], [0], [1], [0, 0, 1, 1], [], []>} : vector<17x16xf32>, vector<16x32xf32>, vector<17x32xf32> -> vector<17x32xf32>
    %c0_4 = arith.constant 0 : index
    %c0_5 = arith.constant 0 : index
    %4 = vector.load %arg3[%c0_4, %c0_5] : memref<17x32xf32, #tpu.memory_space<vmem>>, vector<17x32xf32>
    %5 = arith.addf %3, %4 : vector<17x32xf32>
    %c0_6 = arith.constant 0 : index
    %c0_7 = arith.constant 0 : index
    %c0_8 = arith.constant 0 : index
    %6 = vector.load %arg4[%c0_6, %c0_7, %c0_8] : memref<2x1x32xf32, #tpu.memory_space<vmem>>, vector<1x1x32xf32>
    %7 = vector.shape_cast %6 : vector<1x1x32xf32> to vector<1x32xf32>
    %c0_9 = arith.constant 0 : index
    %c0_10 = arith.constant 0 : index
    %c0_11 = arith.constant 0 : index
    %8 = vector.load %arg5[%c0_9, %c0_10, %c0_11] : memref<2x1x32xf32, #tpu.memory_space<vmem>>, vector<1x1x32xf32>
    %9 = vector.shape_cast %8 : vector<1x1x32xf32> to vector<1x32xf32>
    %cst_12 = arith.constant dense<0.000000e+00> : vector<17xf32>
    %10 = vector.multi_reduction <add>, %5, %cst_12 [1] : vector<17x32xf32> to vector<17xf32>
    %11 = vector.shape_cast %10 : vector<17xf32> to vector<17x1xf32>
    %cst_13 = arith.constant 3.200000e+01 : f32
    %12 = vector.broadcast %cst_13 : f32 to vector<17x1xf32>
    %13 = arith.divf %11, %12 : vector<17x1xf32>
    %14 = vector.broadcast %13 : vector<17x1xf32> to vector<17x32xf32>
    %15 = arith.subf %5, %14 : vector<17x32xf32>
    %16 = arith.mulf %15, %15 : vector<17x32xf32>
    %cst_14 = arith.constant dense<0.000000e+00> : vector<17xf32>
    %17 = vector.multi_reduction <add>, %16, %cst_14 [1] : vector<17x32xf32> to vector<17xf32>
    %18 = vector.shape_cast %17 : vector<17xf32> to vector<17x1xf32>
    %cst_15 = arith.constant 3.200000e+01 : f32
    %19 = vector.broadcast %cst_15 : f32 to vector<17x1xf32>
    %20 = arith.divf %18, %19 : vector<17x1xf32>
    %21 = vector.broadcast %13 : vector<17x1xf32> to vector<17x32xf32>
    %22 = arith.subf %5, %21 : vector<17x32xf32>
    %cst_16 = arith.constant 9.99999974E-6 : f32
    %23 = vector.broadcast %cst_16 : f32 to vector<17x1xf32>
    %24 = arith.addf %20, %23 : vector<17x1xf32>
    %25 = math.rsqrt %24 : vector<17x1xf32>
    %26 = vector.broadcast %25 : vector<17x1xf32> to vector<17x32xf32>
    %27 = arith.mulf %22, %26 : vector<17x32xf32>
    %28 = vector.broadcast %7 : vector<1x32xf32> to vector<17x32xf32>
    %29 = arith.mulf %27, %28 : vector<17x32xf32>
    %30 = vector.broadcast %9 : vector<1x32xf32> to vector<17x32xf32>
    %31 = arith.addf %29, %30 : vector<17x32xf32>
    %c0_17 = arith.constant 0 : index
    %c0_18 = arith.constant 0 : index
    %c0_19 = arith.constant 0 : index
    %32 = vector.load %arg6[%c0_17, %c0_18, %c0_19] : memref<2x32x96xf32, #tpu.memory_space<vmem>>, vector<1x32x96xf32>
    %33 = vector.shape_cast %32 : vector<1x32x96xf32> to vector<32x96xf32>
    %cst_20 = arith.constant dense<0.000000e+00> : vector<17x96xf32>
    %34 = tpu.matmul %31, %33, %cst_20 {dimension_numbers = #tpu.dot_dimension_numbers<[1], [0], [0], [1], [0, 0, 1, 1], [], []>} : vector<17x32xf32>, vector<32x96xf32>, vector<17x96xf32> -> vector<17x96xf32>
    %cst_21 = arith.constant 0.000000e+00 : f32
    %35 = vector.broadcast %cst_21 : f32 to vector<17x32xf32>
    %36 = vector.extract_strided_slice %34 {offsets = [0, 0], sizes = [17, 16], strides = [1, 1]} : vector<17x96xf32> to vector<17x16xf32>
    %37 = vector.extract_strided_slice %34 {offsets = [0, 32], sizes = [17, 16], strides = [1, 1]} : vector<17x96xf32> to vector<17x16xf32>
    %38 = vector.extract_strided_slice %34 {offsets = [0, 64], sizes = [17, 16], strides = [1, 1]} : vector<17x96xf32> to vector<17x16xf32>
    %cst_22 = arith.constant dense<0.000000e+00> : vector<17x17xf32>
    %39 = tpu.matmul %36, %37, %cst_22 {dimension_numbers = #tpu.dot_dimension_numbers<[1], [1], [0], [0], [0, 0, 1, 0], [], []>} : vector<17x16xf32>, vector<17x16xf32>, vector<17x17xf32> -> vector<17x17xf32>
    %cst_23 = arith.constant dense<0xFF800000> : vector<17xf32>
    %40 = vector.multi_reduction <maximumf>, %39, %cst_23 [1] : vector<17x17xf32> to vector<17xf32>
    %41 = vector.shape_cast %40 : vector<17xf32> to vector<17x1xf32>
    %42 = vector.broadcast %41 : vector<17x1xf32> to vector<17x17xf32>
    %43 = arith.subf %39, %42 : vector<17x17xf32>
    %44 = math.exp %43 : vector<17x17xf32>
    %cst_24 = arith.constant dense<0.000000e+00> : vector<17xf32>
    %45 = vector.multi_reduction <add>, %44, %cst_24 [1] : vector<17x17xf32> to vector<17xf32>
    %46 = vector.shape_cast %45 : vector<17xf32> to vector<17x1xf32>
    %47 = tpu.reciprocal %46 {approx = true} : vector<17x1xf32> -> vector<17x1xf32>
    %48 = vector.broadcast %47 : vector<17x1xf32> to vector<17x17xf32>
    %49 = arith.mulf %44, %48 : vector<17x17xf32>
    %cst_25 = arith.constant dense<0.000000e+00> : vector<17x16xf32>
    %50 = tpu.matmul %49, %38, %cst_25 {dimension_numbers = #tpu.dot_dimension_numbers<[1], [0], [0], [1], [0, 0, 1, 1], [], []>} : vector<17x17xf32>, vector<17x16xf32>, vector<17x16xf32> -> vector<17x16xf32>
    %c0_26 = arith.constant 0 : index
    %c0_27 = arith.constant 0 : index
    %c0_28 = arith.constant 0 : index
    %c0_29 = arith.constant 0 : index
    %51 = vector.load %arg7[%c0_26, %c0_27, %c0_28, %c0_29] : memref<2x2x16x32xf32, #tpu.memory_space<vmem>>, vector<1x1x16x32xf32>
    %52 = vector.shape_cast %51 : vector<1x1x16x32xf32> to vector<16x32xf32>
    %cst_30 = arith.constant dense<0.000000e+00> : vector<17x32xf32>
    %53 = tpu.matmul %50, %52, %cst_30 {dimension_numbers = #tpu.dot_dimension_numbers<[1], [0], [0], [1], [0, 0, 1, 1], [], []>} : vector<17x16xf32>, vector<16x32xf32>, vector<17x32xf32> -> vector<17x32xf32>
    %54 = arith.addf %35, %53 : vector<17x32xf32>
    %55 = vector.extract_strided_slice %34 {offsets = [0, 16], sizes = [17, 16], strides = [1, 1]} : vector<17x96xf32> to vector<17x16xf32>
    %56 = vector.extract_strided_slice %34 {offsets = [0, 48], sizes = [17, 16], strides = [1, 1]} : vector<17x96xf32> to vector<17x16xf32>
    %57 = vector.extract_strided_slice %34 {offsets = [0, 80], sizes = [17, 16], strides = [1, 1]} : vector<17x96xf32> to vector<17x16xf32>
    %cst_31 = arith.constant dense<0.000000e+00> : vector<17x17xf32>
    %58 = tpu.matmul %55, %56, %cst_31 {dimension_numbers = #tpu.dot_dimension_numbers<[1], [1], [0], [0], [0, 0, 1, 0], [], []>} : vector<17x16xf32>, vector<17x16xf32>, vector<17x17xf32> -> vector<17x17xf32>
    %cst_32 = arith.constant dense<0xFF800000> : vector<17xf32>
    %59 = vector.multi_reduction <maximumf>, %58, %cst_32 [1] : vector<17x17xf32> to vector<17xf32>
    %60 = vector.shape_cast %59 : vector<17xf32> to vector<17x1xf32>
    %61 = vector.broadcast %60 : vector<17x1xf32> to vector<17x17xf32>
    %62 = arith.subf %58, %61 : vector<17x17xf32>
    %63 = math.exp %62 : vector<17x17xf32>
    %cst_33 = arith.constant dense<0.000000e+00> : vector<17xf32>
    %64 = vector.multi_reduction <add>, %63, %cst_33 [1] : vector<17x17xf32> to vector<17xf32>
    %65 = vector.shape_cast %64 : vector<17xf32> to vector<17x1xf32>
    %66 = tpu.reciprocal %65 {approx = true} : vector<17x1xf32> -> vector<17x1xf32>
    %67 = vector.broadcast %66 : vector<17x1xf32> to vector<17x17xf32>
    %68 = arith.mulf %63, %67 : vector<17x17xf32>
    %cst_34 = arith.constant dense<0.000000e+00> : vector<17x16xf32>
    %69 = tpu.matmul %68, %57, %cst_34 {dimension_numbers = #tpu.dot_dimension_numbers<[1], [0], [0], [1], [0, 0, 1, 1], [], []>} : vector<17x17xf32>, vector<17x16xf32>, vector<17x16xf32> -> vector<17x16xf32>
    %c0_35 = arith.constant 0 : index
    %c1 = arith.constant 1 : index
    %c0_36 = arith.constant 0 : index
    %c0_37 = arith.constant 0 : index
    %70 = vector.load %arg7[%c0_35, %c1, %c0_36, %c0_37] : memref<2x2x16x32xf32, #tpu.memory_space<vmem>>, vector<1x1x16x32xf32>
    %71 = vector.shape_cast %70 : vector<1x1x16x32xf32> to vector<16x32xf32>
    %cst_38 = arith.constant dense<0.000000e+00> : vector<17x32xf32>
    %72 = tpu.matmul %69, %71, %cst_38 {dimension_numbers = #tpu.dot_dimension_numbers<[1], [0], [0], [1], [0, 0, 1, 1], [], []>} : vector<17x16xf32>, vector<16x32xf32>, vector<17x32xf32> -> vector<17x32xf32>
    %73 = arith.addf %54, %72 : vector<17x32xf32>
    %74 = arith.addf %5, %73 : vector<17x32xf32>
    %c0_39 = arith.constant 0 : index
    %c0_40 = arith.constant 0 : index
    %c0_41 = arith.constant 0 : index
    %75 = vector.load %arg8[%c0_39, %c0_40, %c0_41] : memref<2x1x32xf32, #tpu.memory_space<vmem>>, vector<1x1x32xf32>
    %76 = vector.shape_cast %75 : vector<1x1x32xf32> to vector<1x32xf32>
    %77 = vector.broadcast %76 : vector<1x32xf32> to vector<17x32xf32>
    %78 = arith.addf %74, %77 : vector<17x32xf32>
    %c0_42 = arith.constant 0 : index
    %c0_43 = arith.constant 0 : index
    %c0_44 = arith.constant 0 : index
    %79 = vector.load %arg9[%c0_42, %c0_43, %c0_44] : memref<2x1x32xf32, #tpu.memory_space<vmem>>, vector<1x1x32xf32>
    %80 = vector.shape_cast %79 : vector<1x1x32xf32> to vector<1x32xf32>
    %c0_45 = arith.constant 0 : index
    %c0_46 = arith.constant 0 : index
    %c0_47 = arith.constant 0 : index
    %81 = vector.load %arg10[%c0_45, %c0_46, %c0_47] : memref<2x1x32xf32, #tpu.memory_space<vmem>>, vector<1x1x32xf32>
    %82 = vector.shape_cast %81 : vector<1x1x32xf32> to vector<1x32xf32>
    %cst_48 = arith.constant dense<0.000000e+00> : vector<17xf32>
    %83 = vector.multi_reduction <add>, %78, %cst_48 [1] : vector<17x32xf32> to vector<17xf32>
    %84 = vector.shape_cast %83 : vector<17xf32> to vector<17x1xf32>
    %cst_49 = arith.constant 3.200000e+01 : f32
    %85 = vector.broadcast %cst_49 : f32 to vector<17x1xf32>
    %86 = arith.divf %84, %85 : vector<17x1xf32>
    %87 = vector.broadcast %86 : vector<17x1xf32> to vector<17x32xf32>
    %88 = arith.subf %78, %87 : vector<17x32xf32>
    %89 = arith.mulf %88, %88 : vector<17x32xf32>
    %cst_50 = arith.constant dense<0.000000e+00> : vector<17xf32>
    %90 = vector.multi_reduction <add>, %89, %cst_50 [1] : vector<17x32xf32> to vector<17xf32>
    %91 = vector.shape_cast %90 : vector<17xf32> to vector<17x1xf32>
    %cst_51 = arith.constant 3.200000e+01 : f32
    %92 = vector.broadcast %cst_51 : f32 to vector<17x1xf32>
    %93 = arith.divf %91, %92 : vector<17x1xf32>
    %94 = vector.broadcast %86 : vector<17x1xf32> to vector<17x32xf32>
    %95 = arith.subf %78, %94 : vector<17x32xf32>
    %cst_52 = arith.constant 9.99999974E-6 : f32
    %96 = vector.broadcast %cst_52 : f32 to vector<17x1xf32>
    %97 = arith.addf %93, %96 : vector<17x1xf32>
    %98 = math.rsqrt %97 : vector<17x1xf32>
    %99 = vector.broadcast %98 : vector<17x1xf32> to vector<17x32xf32>
    %100 = arith.mulf %95, %99 : vector<17x32xf32>
    %101 = vector.broadcast %80 : vector<1x32xf32> to vector<17x32xf32>
    %102 = arith.mulf %100, %101 : vector<17x32xf32>
    %103 = vector.broadcast %82 : vector<1x32xf32> to vector<17x32xf32>
    %104 = arith.addf %102, %103 : vector<17x32xf32>
    %c0_53 = arith.constant 0 : index
    %c0_54 = arith.constant 0 : index
    %c0_55 = arith.constant 0 : index
    %105 = vector.load %arg11[%c0_53, %c0_54, %c0_55] : memref<2x32x64xf32, #tpu.memory_space<vmem>>, vector<1x32x64xf32>
    %106 = vector.shape_cast %105 : vector<1x32x64xf32> to vector<32x64xf32>
    %cst_56 = arith.constant dense<0.000000e+00> : vector<17x64xf32>
    %107 = tpu.matmul %104, %106, %cst_56 {dimension_numbers = #tpu.dot_dimension_numbers<[1], [0], [0], [1], [0, 0, 1, 1], [], []>} : vector<17x32xf32>, vector<32x64xf32>, vector<17x64xf32> -> vector<17x64xf32>
    %c0_57 = arith.constant 0 : index
    %c0_58 = arith.constant 0 : index
    %c0_59 = arith.constant 0 : index
    %108 = vector.load %arg12[%c0_57, %c0_58, %c0_59] : memref<2x1x64xf32, #tpu.memory_space<vmem>>, vector<1x1x64xf32>
    %109 = vector.shape_cast %108 : vector<1x1x64xf32> to vector<1x64xf32>
    %110 = vector.broadcast %109 : vector<1x64xf32> to vector<17x64xf32>
    %111 = arith.addf %107, %110 : vector<17x64xf32>
    %cst_60 = arith.constant 5.000000e-01 : f32
    %112 = vector.broadcast %cst_60 : f32 to vector<17x64xf32>
    %113 = arith.mulf %112, %111 : vector<17x64xf32>
    %cst_61 = arith.constant 4.471500e-02 : f32
    %114 = vector.broadcast %cst_61 : f32 to vector<17x64xf32>
    %115 = arith.mulf %114, %111 : vector<17x64xf32>
    %116 = arith.mulf %115, %111 : vector<17x64xf32>
    %117 = arith.mulf %116, %111 : vector<17x64xf32>
    %118 = arith.addf %111, %117 : vector<17x64xf32>
    %cst_62 = arith.constant 0.797884583 : f32
    %119 = vector.broadcast %cst_62 : f32 to vector<17x64xf32>
    %120 = arith.mulf %119, %118 : vector<17x64xf32>
    %121 = math.tanh %120 : vector<17x64xf32>
    %cst_63 = arith.constant 1.000000e+00 : f32
    %122 = vector.broadcast %cst_63 : f32 to vector<17x64xf32>
    %123 = arith.addf %122, %121 : vector<17x64xf32>
    %124 = arith.mulf %113, %123 : vector<17x64xf32>
    %c0_64 = arith.constant 0 : index
    %c0_65 = arith.constant 0 : index
    %c0_66 = arith.constant 0 : index
    %125 = vector.load %arg13[%c0_64, %c0_65, %c0_66] : memref<2x64x32xf32, #tpu.memory_space<vmem>>, vector<1x64x32xf32>
    %126 = vector.shape_cast %125 : vector<1x64x32xf32> to vector<64x32xf32>
    %cst_67 = arith.constant dense<0.000000e+00> : vector<17x32xf32>
    %127 = tpu.matmul %124, %126, %cst_67 {dimension_numbers = #tpu.dot_dimension_numbers<[1], [0], [0], [1], [0, 0, 1, 1], [], []>} : vector<17x64xf32>, vector<64x32xf32>, vector<17x32xf32> -> vector<17x32xf32>
    %128 = arith.addf %78, %127 : vector<17x32xf32>
    %c0_68 = arith.constant 0 : index
    %c0_69 = arith.constant 0 : index
    %c0_70 = arith.constant 0 : index
    %129 = vector.load %arg14[%c0_68, %c0_69, %c0_70] : memref<2x1x32xf32, #tpu.memory_space<vmem>>, vector<1x1x32xf32>
    %130 = vector.shape_cast %129 : vector<1x1x32xf32> to vector<1x32xf32>
    %131 = vector.broadcast %130 : vector<1x32xf32> to vector<17x32xf32>
    %132 = arith.addf %128, %131 : vector<17x32xf32>
    %c1_71 = arith.constant 1 : index
    %c0_72 = arith.constant 0 : index
    %c0_73 = arith.constant 0 : index
    %133 = vector.load %arg4[%c1_71, %c0_72, %c0_73] : memref<2x1x32xf32, #tpu.memory_space<vmem>>, vector<1x1x32xf32>
    %134 = vector.shape_cast %133 : vector<1x1x32xf32> to vector<1x32xf32>
    %c1_74 = arith.constant 1 : index
    %c0_75 = arith.constant 0 : index
    %c0_76 = arith.constant 0 : index
    %135 = vector.load %arg5[%c1_74, %c0_75, %c0_76] : memref<2x1x32xf32, #tpu.memory_space<vmem>>, vector<1x1x32xf32>
    %136 = vector.shape_cast %135 : vector<1x1x32xf32> to vector<1x32xf32>
    %cst_77 = arith.constant dense<0.000000e+00> : vector<17xf32>
    %137 = vector.multi_reduction <add>, %132, %cst_77 [1] : vector<17x32xf32> to vector<17xf32>
    %138 = vector.shape_cast %137 : vector<17xf32> to vector<17x1xf32>
    %cst_78 = arith.constant 3.200000e+01 : f32
    %139 = vector.broadcast %cst_78 : f32 to vector<17x1xf32>
    %140 = arith.divf %138, %139 : vector<17x1xf32>
    %141 = vector.broadcast %140 : vector<17x1xf32> to vector<17x32xf32>
    %142 = arith.subf %132, %141 : vector<17x32xf32>
    %143 = arith.mulf %142, %142 : vector<17x32xf32>
    %cst_79 = arith.constant dense<0.000000e+00> : vector<17xf32>
    %144 = vector.multi_reduction <add>, %143, %cst_79 [1] : vector<17x32xf32> to vector<17xf32>
    %145 = vector.shape_cast %144 : vector<17xf32> to vector<17x1xf32>
    %cst_80 = arith.constant 3.200000e+01 : f32
    %146 = vector.broadcast %cst_80 : f32 to vector<17x1xf32>
    %147 = arith.divf %145, %146 : vector<17x1xf32>
    %148 = vector.broadcast %140 : vector<17x1xf32> to vector<17x32xf32>
    %149 = arith.subf %132, %148 : vector<17x32xf32>
    %cst_81 = arith.constant 9.99999974E-6 : f32
    %150 = vector.broadcast %cst_81 : f32 to vector<17x1xf32>
    %151 = arith.addf %147, %150 : vector<17x1xf32>
    %152 = math.rsqrt %151 : vector<17x1xf32>
    %153 = vector.broadcast %152 : vector<17x1xf32> to vector<17x32xf32>
    %154 = arith.mulf %149, %153 : vector<17x32xf32>
    %155 = vector.broadcast %134 : vector<1x32xf32> to vector<17x32xf32>
    %156 = arith.mulf %154, %155 : vector<17x32xf32>
    %157 = vector.broadcast %136 : vector<1x32xf32> to vector<17x32xf32>
    %158 = arith.addf %156, %157 : vector<17x32xf32>
    %c1_82 = arith.constant 1 : index
    %c0_83 = arith.constant 0 : index
    %c0_84 = arith.constant 0 : index
    %159 = vector.load %arg6[%c1_82, %c0_83, %c0_84] : memref<2x32x96xf32, #tpu.memory_space<vmem>>, vector<1x32x96xf32>
    %160 = vector.shape_cast %159 : vector<1x32x96xf32> to vector<32x96xf32>
    %cst_85 = arith.constant dense<0.000000e+00> : vector<17x96xf32>
    %161 = tpu.matmul %158, %160, %cst_85 {dimension_numbers = #tpu.dot_dimension_numbers<[1], [0], [0], [1], [0, 0, 1, 1], [], []>} : vector<17x32xf32>, vector<32x96xf32>, vector<17x96xf32> -> vector<17x96xf32>
    %cst_86 = arith.constant 0.000000e+00 : f32
    %162 = vector.broadcast %cst_86 : f32 to vector<17x32xf32>
    %163 = vector.extract_strided_slice %161 {offsets = [0, 0], sizes = [17, 16], strides = [1, 1]} : vector<17x96xf32> to vector<17x16xf32>
    %164 = vector.extract_strided_slice %161 {offsets = [0, 32], sizes = [17, 16], strides = [1, 1]} : vector<17x96xf32> to vector<17x16xf32>
    %165 = vector.extract_strided_slice %161 {offsets = [0, 64], sizes = [17, 16], strides = [1, 1]} : vector<17x96xf32> to vector<17x16xf32>
    %cst_87 = arith.constant dense<0.000000e+00> : vector<17x17xf32>
    %166 = tpu.matmul %163, %164, %cst_87 {dimension_numbers = #tpu.dot_dimension_numbers<[1], [1], [0], [0], [0, 0, 1, 0], [], []>} : vector<17x16xf32>, vector<17x16xf32>, vector<17x17xf32> -> vector<17x17xf32>
    %cst_88 = arith.constant dense<0xFF800000> : vector<17xf32>
    %167 = vector.multi_reduction <maximumf>, %166, %cst_88 [1] : vector<17x17xf32> to vector<17xf32>
    %168 = vector.shape_cast %167 : vector<17xf32> to vector<17x1xf32>
    %169 = vector.broadcast %168 : vector<17x1xf32> to vector<17x17xf32>
    %170 = arith.subf %166, %169 : vector<17x17xf32>
    %171 = math.exp %170 : vector<17x17xf32>
    %cst_89 = arith.constant dense<0.000000e+00> : vector<17xf32>
    %172 = vector.multi_reduction <add>, %171, %cst_89 [1] : vector<17x17xf32> to vector<17xf32>
    %173 = vector.shape_cast %172 : vector<17xf32> to vector<17x1xf32>
    %174 = tpu.reciprocal %173 {approx = true} : vector<17x1xf32> -> vector<17x1xf32>
    %175 = vector.broadcast %174 : vector<17x1xf32> to vector<17x17xf32>
    %176 = arith.mulf %171, %175 : vector<17x17xf32>
    %cst_90 = arith.constant dense<0.000000e+00> : vector<17x16xf32>
    %177 = tpu.matmul %176, %165, %cst_90 {dimension_numbers = #tpu.dot_dimension_numbers<[1], [0], [0], [1], [0, 0, 1, 1], [], []>} : vector<17x17xf32>, vector<17x16xf32>, vector<17x16xf32> -> vector<17x16xf32>
    %c1_91 = arith.constant 1 : index
    %c0_92 = arith.constant 0 : index
    %c0_93 = arith.constant 0 : index
    %c0_94 = arith.constant 0 : index
    %178 = vector.load %arg7[%c1_91, %c0_92, %c0_93, %c0_94] : memref<2x2x16x32xf32, #tpu.memory_space<vmem>>, vector<1x1x16x32xf32>
    %179 = vector.shape_cast %178 : vector<1x1x16x32xf32> to vector<16x32xf32>
    %cst_95 = arith.constant dense<0.000000e+00> : vector<17x32xf32>
    %180 = tpu.matmul %177, %179, %cst_95 {dimension_numbers = #tpu.dot_dimension_numbers<[1], [0], [0], [1], [0, 0, 1, 1], [], []>} : vector<17x16xf32>, vector<16x32xf32>, vector<17x32xf32> -> vector<17x32xf32>
    %181 = arith.addf %162, %180 : vector<17x32xf32>
    %182 = vector.extract_strided_slice %161 {offsets = [0, 16], sizes = [17, 16], strides = [1, 1]} : vector<17x96xf32> to vector<17x16xf32>
    %183 = vector.extract_strided_slice %161 {offsets = [0, 48], sizes = [17, 16], strides = [1, 1]} : vector<17x96xf32> to vector<17x16xf32>
    %184 = vector.extract_strided_slice %161 {offsets = [0, 80], sizes = [17, 16], strides = [1, 1]} : vector<17x96xf32> to vector<17x16xf32>
    %cst_96 = arith.constant dense<0.000000e+00> : vector<17x17xf32>
    %185 = tpu.matmul %182, %183, %cst_96 {dimension_numbers = #tpu.dot_dimension_numbers<[1], [1], [0], [0], [0, 0, 1, 0], [], []>} : vector<17x16xf32>, vector<17x16xf32>, vector<17x17xf32> -> vector<17x17xf32>
    %cst_97 = arith.constant dense<0xFF800000> : vector<17xf32>
    %186 = vector.multi_reduction <maximumf>, %185, %cst_97 [1] : vector<17x17xf32> to vector<17xf32>
    %187 = vector.shape_cast %186 : vector<17xf32> to vector<17x1xf32>
    %188 = vector.broadcast %187 : vector<17x1xf32> to vector<17x17xf32>
    %189 = arith.subf %185, %188 : vector<17x17xf32>
    %190 = math.exp %189 : vector<17x17xf32>
    %cst_98 = arith.constant dense<0.000000e+00> : vector<17xf32>
    %191 = vector.multi_reduction <add>, %190, %cst_98 [1] : vector<17x17xf32> to vector<17xf32>
    %192 = vector.shape_cast %191 : vector<17xf32> to vector<17x1xf32>
    %193 = tpu.reciprocal %192 {approx = true} : vector<17x1xf32> -> vector<17x1xf32>
    %194 = vector.broadcast %193 : vector<17x1xf32> to vector<17x17xf32>
    %195 = arith.mulf %190, %194 : vector<17x17xf32>
    %cst_99 = arith.constant dense<0.000000e+00> : vector<17x16xf32>
    %196 = tpu.matmul %195, %184, %cst_99 {dimension_numbers = #tpu.dot_dimension_numbers<[1], [0], [0], [1], [0, 0, 1, 1], [], []>} : vector<17x17xf32>, vector<17x16xf32>, vector<17x16xf32> -> vector<17x16xf32>
    %c1_100 = arith.constant 1 : index
    %c1_101 = arith.constant 1 : index
    %c0_102 = arith.constant 0 : index
    %c0_103 = arith.constant 0 : index
    %197 = vector.load %arg7[%c1_100, %c1_101, %c0_102, %c0_103] : memref<2x2x16x32xf32, #tpu.memory_space<vmem>>, vector<1x1x16x32xf32>
    %198 = vector.shape_cast %197 : vector<1x1x16x32xf32> to vector<16x32xf32>
    %cst_104 = arith.constant dense<0.000000e+00> : vector<17x32xf32>
    %199 = tpu.matmul %196, %198, %cst_104 {dimension_numbers = #tpu.dot_dimension_numbers<[1], [0], [0], [1], [0, 0, 1, 1], [], []>} : vector<17x16xf32>, vector<16x32xf32>, vector<17x32xf32> -> vector<17x32xf32>
    %200 = arith.addf %181, %199 : vector<17x32xf32>
    %201 = arith.addf %132, %200 : vector<17x32xf32>
    %c1_105 = arith.constant 1 : index
    %c0_106 = arith.constant 0 : index
    %c0_107 = arith.constant 0 : index
    %202 = vector.load %arg8[%c1_105, %c0_106, %c0_107] : memref<2x1x32xf32, #tpu.memory_space<vmem>>, vector<1x1x32xf32>
    %203 = vector.shape_cast %202 : vector<1x1x32xf32> to vector<1x32xf32>
    %204 = vector.broadcast %203 : vector<1x32xf32> to vector<17x32xf32>
    %205 = arith.addf %201, %204 : vector<17x32xf32>
    %c1_108 = arith.constant 1 : index
    %c0_109 = arith.constant 0 : index
    %c0_110 = arith.constant 0 : index
    %206 = vector.load %arg9[%c1_108, %c0_109, %c0_110] : memref<2x1x32xf32, #tpu.memory_space<vmem>>, vector<1x1x32xf32>
    %207 = vector.shape_cast %206 : vector<1x1x32xf32> to vector<1x32xf32>
    %c1_111 = arith.constant 1 : index
    %c0_112 = arith.constant 0 : index
    %c0_113 = arith.constant 0 : index
    %208 = vector.load %arg10[%c1_111, %c0_112, %c0_113] : memref<2x1x32xf32, #tpu.memory_space<vmem>>, vector<1x1x32xf32>
    %209 = vector.shape_cast %208 : vector<1x1x32xf32> to vector<1x32xf32>
    %cst_114 = arith.constant dense<0.000000e+00> : vector<17xf32>
    %210 = vector.multi_reduction <add>, %205, %cst_114 [1] : vector<17x32xf32> to vector<17xf32>
    %211 = vector.shape_cast %210 : vector<17xf32> to vector<17x1xf32>
    %cst_115 = arith.constant 3.200000e+01 : f32
    %212 = vector.broadcast %cst_115 : f32 to vector<17x1xf32>
    %213 = arith.divf %211, %212 : vector<17x1xf32>
    %214 = vector.broadcast %213 : vector<17x1xf32> to vector<17x32xf32>
    %215 = arith.subf %205, %214 : vector<17x32xf32>
    %216 = arith.mulf %215, %215 : vector<17x32xf32>
    %cst_116 = arith.constant dense<0.000000e+00> : vector<17xf32>
    %217 = vector.multi_reduction <add>, %216, %cst_116 [1] : vector<17x32xf32> to vector<17xf32>
    %218 = vector.shape_cast %217 : vector<17xf32> to vector<17x1xf32>
    %cst_117 = arith.constant 3.200000e+01 : f32
    %219 = vector.broadcast %cst_117 : f32 to vector<17x1xf32>
    %220 = arith.divf %218, %219 : vector<17x1xf32>
    %221 = vector.broadcast %213 : vector<17x1xf32> to vector<17x32xf32>
    %222 = arith.subf %205, %221 : vector<17x32xf32>
    %cst_118 = arith.constant 9.99999974E-6 : f32
    %223 = vector.broadcast %cst_118 : f32 to vector<17x1xf32>
    %224 = arith.addf %220, %223 : vector<17x1xf32>
    %225 = math.rsqrt %224 : vector<17x1xf32>
    %226 = vector.broadcast %225 : vector<17x1xf32> to vector<17x32xf32>
    %227 = arith.mulf %222, %226 : vector<17x32xf32>
    %228 = vector.broadcast %207 : vector<1x32xf32> to vector<17x32xf32>
    %229 = arith.mulf %227, %228 : vector<17x32xf32>
    %230 = vector.broadcast %209 : vector<1x32xf32> to vector<17x32xf32>
    %231 = arith.addf %229, %230 : vector<17x32xf32>
    %c1_119 = arith.constant 1 : index
    %c0_120 = arith.constant 0 : index
    %c0_121 = arith.constant 0 : index
    %232 = vector.load %arg11[%c1_119, %c0_120, %c0_121] : memref<2x32x64xf32, #tpu.memory_space<vmem>>, vector<1x32x64xf32>
    %233 = vector.shape_cast %232 : vector<1x32x64xf32> to vector<32x64xf32>
    %cst_122 = arith.constant dense<0.000000e+00> : vector<17x64xf32>
    %234 = tpu.matmul %231, %233, %cst_122 {dimension_numbers = #tpu.dot_dimension_numbers<[1], [0], [0], [1], [0, 0, 1, 1], [], []>} : vector<17x32xf32>, vector<32x64xf32>, vector<17x64xf32> -> vector<17x64xf32>
    %c1_123 = arith.constant 1 : index
    %c0_124 = arith.constant 0 : index
    %c0_125 = arith.constant 0 : index
    %235 = vector.load %arg12[%c1_123, %c0_124, %c0_125] : memref<2x1x64xf32, #tpu.memory_space<vmem>>, vector<1x1x64xf32>
    %236 = vector.shape_cast %235 : vector<1x1x64xf32> to vector<1x64xf32>
    %237 = vector.broadcast %236 : vector<1x64xf32> to vector<17x64xf32>
    %238 = arith.addf %234, %237 : vector<17x64xf32>
    %cst_126 = arith.constant 5.000000e-01 : f32
    %239 = vector.broadcast %cst_126 : f32 to vector<17x64xf32>
    %240 = arith.mulf %239, %238 : vector<17x64xf32>
    %cst_127 = arith.constant 4.471500e-02 : f32
    %241 = vector.broadcast %cst_127 : f32 to vector<17x64xf32>
    %242 = arith.mulf %241, %238 : vector<17x64xf32>
    %243 = arith.mulf %242, %238 : vector<17x64xf32>
    %244 = arith.mulf %243, %238 : vector<17x64xf32>
    %245 = arith.addf %238, %244 : vector<17x64xf32>
    %cst_128 = arith.constant 0.797884583 : f32
    %246 = vector.broadcast %cst_128 : f32 to vector<17x64xf32>
    %247 = arith.mulf %246, %245 : vector<17x64xf32>
    %248 = math.tanh %247 : vector<17x64xf32>
    %cst_129 = arith.constant 1.000000e+00 : f32
    %249 = vector.broadcast %cst_129 : f32 to vector<17x64xf32>
    %250 = arith.addf %249, %248 : vector<17x64xf32>
    %251 = arith.mulf %240, %250 : vector<17x64xf32>
    %c1_130 = arith.constant 1 : index
    %c0_131 = arith.constant 0 : index
    %c0_132 = arith.constant 0 : index
    %252 = vector.load %arg13[%c1_130, %c0_131, %c0_132] : memref<2x64x32xf32, #tpu.memory_space<vmem>>, vector<1x64x32xf32>
    %253 = vector.shape_cast %252 : vector<1x64x32xf32> to vector<64x32xf32>
    %cst_133 = arith.constant dense<0.000000e+00> : vector<17x32xf32>
    %254 = tpu.matmul %251, %253, %cst_133 {dimension_numbers = #tpu.dot_dimension_numbers<[1], [0], [0], [1], [0, 0, 1, 1], [], []>} : vector<17x64xf32>, vector<64x32xf32>, vector<17x32xf32> -> vector<17x32xf32>
    %255 = arith.addf %205, %254 : vector<17x32xf32>
    %c1_134 = arith.constant 1 : index
    %c0_135 = arith.constant 0 : index
    %c0_136 = arith.constant 0 : index
    %256 = vector.load %arg14[%c1_134, %c0_135, %c0_136] : memref<2x1x32xf32, #tpu.memory_space<vmem>>, vector<1x1x32xf32>
    %257 = vector.shape_cast %256 : vector<1x1x32xf32> to vector<1x32xf32>
    %258 = vector.broadcast %257 : vector<1x32xf32> to vector<17x32xf32>
    %259 = arith.addf %255, %258 : vector<17x32xf32>
    %c0_137 = arith.constant 0 : index
    %c0_138 = arith.constant 0 : index
    %c0_139 = arith.constant 0 : index
    %260 = vector.load %arg15[%c0_137, %c0_138, %c0_139] : memref<1x17x32xf32, #tpu.memory_space<vmem>>, vector<1x17x32xf32>
    %261 = vector.shape_cast %260 : vector<1x17x32xf32> to vector<17x32xf32>
    %262 = vector.shape_cast %259 : vector<17x32xf32> to vector<1x17x32xf32>
    tpu.vector_store %arg15[%c0_137, %c0_138, %c0_139], %262 {strides = array<i32>} : memref<1x17x32xf32, #tpu.memory_space<vmem>>, vector<1x17x32xf32>,
    return
  }
  func.func @transform_0(%arg0: i32) -> (i32, i32, i32) {
    %c0_i32 = arith.constant 0 : i32
    %c0_i32_0 = arith.constant 0 : i32
    %c0_i32_1 = arith.constant 0 : i32
    return %arg0, %c0_i32, %c0_i32_0 : i32, i32, i32
  }
  func.func @transform_1(%arg0: i32) -> (i32, i32) {
    %c0_i32 = arith.constant 0 : i32
    %c0_i32_0 = arith.constant 0 : i32
    %c0_i32_1 = arith.constant 0 : i32
    return %c0_i32, %c0_i32_0 : i32, i32
  }
  func.func @transform_2(%arg0: i32) -> (i32, i32) {
    %c0_i32 = arith.constant 0 : i32
    %c0_i32_0 = arith.constant 0 : i32
    %c0_i32_1 = arith.constant 0 : i32
    return %c0_i32, %c0_i32_0 : i32, i32
  }
  func.func @transform_3(%arg0: i32) -> (i32, i32, i32) {
    %c0_i32 = arith.constant 0 : i32
    %c0_i32_0 = arith.constant 0 : i32
    %c0_i32_1 = arith.constant 0 : i32
    %c0_i32_2 = arith.constant 0 : i32
    return %c0_i32, %c0_i32_0, %c0_i32_1 : i32, i32, i32
  }
  func.func @transform_4(%arg0: i32) -> (i32, i32, i32) {
    %c0_i32 = arith.constant 0 : i32
    %c0_i32_0 = arith.constant 0 : i32
    %c0_i32_1 = arith.constant 0 : i32
    %c0_i32_2 = arith.constant 0 : i32
    return %c0_i32, %c0_i32_0, %c0_i32_1 : i32, i32, i32
  }
  func.func @transform_5(%arg0: i32) -> (i32, i32, i32) {
    %c0_i32 = arith.constant 0 : i32
    %c0_i32_0 = arith.constant 0 : i32
    %c0_i32_1 = arith.constant 0 : i32
    %c0_i32_2 = arith.constant 0 : i32
    return %c0_i32, %c0_i32_0, %c0_i32_1 : i32, i32, i32
  }
  func.func @transform_6(%arg0: i32) -> (i32, i32, i32, i32) {
    %c0_i32 = arith.constant 0 : i32
    %c0_i32_0 = arith.constant 0 : i32
    %c0_i32_1 = arith.constant 0 : i32
    %c0_i32_2 = arith.constant 0 : i32
    %c0_i32_3 = arith.constant 0 : i32
    return %c0_i32, %c0_i32_0, %c0_i32_1, %c0_i32_2 : i32, i32, i32, i32
  }
  func.func @transform_7(%arg0: i32) -> (i32, i32, i32) {
    %c0_i32 = arith.constant 0 : i32
    %c0_i32_0 = arith.constant 0 : i32
    %c0_i32_1 = arith.constant 0 : i32
    %c0_i32_2 = arith.constant 0 : i32
    return %c0_i32, %c0_i32_0, %c0_i32_1 : i32, i32, i32
  }
  func.func @transform_8(%arg0: i32) -> (i32, i32, i32) {
    %c0_i32 = arith.constant 0 : i32
    %c0_i32_0 = arith.constant 0 : i32
    %c0_i32_1 = arith.constant 0 : i32
    %c0_i32_2 = arith.constant 0 : i32
    return %c0_i32, %c0_i32_0, %c0_i32_1 : i32, i32, i32
  }
  func.func @transform_9(%arg0: i32) -> (i32, i32, i32) {
    %c0_i32 = arith.constant 0 : i32
    %c0_i32_0 = arith.constant 0 : i32
    %c0_i32_1 = arith.constant 0 : i32
    %c0_i32_2 = arith.constant 0 : i32
    return %c0_i32, %c0_i32_0, %c0_i32_1 : i32, i32, i32
  }
  func.func @transform_10(%arg0: i32) -> (i32, i32, i32) {
    %c0_i32 = arith.constant 0 : i32
    %c0_i32_0 = arith.constant 0 : i32
    %c0_i32_1 = arith.constant 0 : i32
    %c0_i32_2 = arith.constant 0 : i32
    return %c0_i32, %c0_i32_0, %c0_i32_1 : i32, i32, i32
  }
  func.func @transform_11(%arg0: i32) -> (i32, i32, i32) {
    %c0_i32 = arith.constant 0 : i32
    %c0_i32_0 = arith.constant 0 : i32
    %c0_i32_1 = arith.constant 0 : i32
    %c0_i32_2 = arith.constant 0 : i32
    return %c0_i32, %c0_i32_0, %c0_i32_1 : i32, i32, i32
  }
  func.func @transform_12(%arg0: i32) -> (i32, i32, i32) {
    %c0_i32 = arith.constant 0 : i32
    %c0_i32_0 = arith.constant 0 : i32
    %c0_i32_1 = arith.constant 0 : i32
    %c0_i32_2 = arith.constant 0 : i32
    return %c0_i32, %c0_i32_0, %c0_i32_1 : i32, i32, i32
  }
  func.func @transform_13(%arg0: i32) -> (i32, i32, i32) {
    %c0_i32 = arith.constant 0 : i32
    %c0_i32_0 = arith.constant 0 : i32
    %c0_i32_1 = arith.constant 0 : i32
    %c0_i32_2 = arith.constant 0 : i32
    return %c0_i32, %c0_i32_0, %c0_i32_1 : i32, i32, i32
  }
  func.func @transform_14(%arg0: i32) -> (i32, i32, i32) {
    %c0_i32 = arith.constant 0 : i32
    %c0_i32_0 = arith.constant 0 : i32
    %c0_i32_1 = arith.constant 0 : i32
    return %arg0, %c0_i32, %c0_i32_0 : i32, i32, i32
  }
}

</mosaic_0001>

<llo_original>
// kernel: vit_forward.2
$region0: #{vit_forward.2}
  #allocation0 [shape = 'u32[]', space=smem, size = 0x4, offset = 0x4, fixed_abs, tag = 'smem constant byte address 0x4 - core index']
  #allocation1 [shape = 'u32[144,128]{1,0:T(1,128)}', space=vmem, size = 0x12000, scoped, tag = 'internal scratch']
  %s0 = inlined_call_operand.vmem [shape: f32[2,16,32], index: 0, kind: input, shape index: {}]
  %s1 = inlined_call_operand.vmem [shape: f32[17,16], index: 1, kind: input, shape index: {}]
  %s2 = inlined_call_operand.vmem [shape: f32[17,32], index: 2, kind: input, shape index: {}]
  %s3 = inlined_call_operand.vmem [shape: f32[2,1,32], index: 3, kind: input, shape index: {}]
  %s4 = inlined_call_operand.vmem [shape: f32[2,1,32], index: 4, kind: input, shape index: {}]
  %s5 = inlined_call_operand.vmem [shape: f32[2,32,96], index: 5, kind: input, shape index: {}]
  %s6 = inlined_call_operand.vmem [shape: f32[2,2,16,32], index: 6, kind: input, shape index: {}]
  %s7 = inlined_call_operand.vmem [shape: f32[2,1,32], index: 7, kind: input, shape index: {}]
  %s8 = inlined_call_operand.vmem [shape: f32[2,1,32], index: 8, kind: input, shape index: {}]
  %s9 = inlined_call_operand.vmem [shape: f32[2,1,32], index: 9, kind: input, shape index: {}]
  %s10 = inlined_call_operand.vmem [shape: f32[2,32,64], index: 10, kind: input, shape index: {}]
  %s11 = inlined_call_operand.hbm [shape: f32[2,1,64], index: 11, kind: input, shape index: {}]
  %s12 = inlined_call_operand.vmem [shape: f32[2,64,32], index: 12, kind: input, shape index: {}]
  %s13 = inlined_call_operand.hbm [shape: f32[2,1,32], index: 13, kind: input, shape index: {}]
  %s14 = inlined_call_operand.vmem [shape: f32[2,17,32], index: 14, kind: output, shape index: {}]
  %s15 = sld [smem:[#allocation0]]
  $region97: #{vit_forward.2} parent=0
    _
  %s17 = ssub.s32 1, %s15
  %s18 = scalar_select 0, %s17, %s15
  $region1: #{vit_forward.2} parent=0
    #allocation2 [shape = 'u8[1024]{0}', space=vmem, size = 0x400, scoped, tag = 'input window, operand 11, single buffered']
    #allocation3 [shape = 's32[2]{0}', space=sflag, size = 0x8, scoped, tag = 'scoped memory for vit_forward.2']
    #allocation4 [shape = 'u8[1024]{0}', space=vmem, size = 0x400, scoped, tag = 'input window, operand 13, single buffered']
    #allocation5 [shape = 's32[1]{0}', space=sflag, size = 0x4, scoped, tag = 'scoped memory for vit_forward.2']
    %19 = vsyncpa [#allocation3], 0
    %20 = vsyncpa [#allocation5], 0
    loop: start=0, step=1, limit=4
    $region2: #{vit_forward.2} parent=1 // loop_pre_header
      _
    $region3: #{vit_forward.2} parent=1 // loop_header
      %s22 = sphi 0, %s26
      %p23 = scmp.ge.s32.totalorder %s22, 4
      %s32 = sphi 0, %s34
      %s35 = sphi 0, %s32
      %s36 = sphi 0, %s35
      %s52 = sphi 0, %s36
      %s56 = sphi 0, %s56
      %s58 = sphi 0, %s56
      %s59 = sphi 0, %s58
      %s73 = sphi 0, %s59
      %s77 = sphi 0, %s77
      %s79 = sphi 0, %s77
      %s80 = sphi 0, %s79
      %s94 = sphi 0, %s80
      %s98 = sphi 0, %s98
      %s100 = sphi 0, %s98
      %s101 = sphi 0, %s100
      %s115 = sphi 0, %s101
      %s119 = sphi 0, %s119
      %s121 = sphi 0, %s119
      %s122 = sphi 0, %s121
      %s136 = sphi 0, %s122
      %s140 = sphi 0, %s140
      %s142 = sphi 0, %s140
      %s143 = sphi 0, %s142
      %s157 = sphi 0, %s143
      %s161 = sphi 0, %s161
      %s163 = sphi 0, %s161
      %s164 = sphi 0, %s163
      %s178 = sphi 0, %s164
      %s182 = sphi 0, %s182
      %s184 = sphi 0, %s182
      %s185 = sphi 0, %s184
      %s199 = sphi 0, %s185
      %s203 = sphi 0, %s203
      %s205 = sphi 0, %s203
      %s206 = sphi 0, %s205
      %s220 = sphi 0, %s206
      %s224 = sphi 0, %s224
      %s226 = sphi 0, %s224
      %s227 = sphi 0, %s226
      %s241 = sphi 0, %s227
      %s245 = sphi 0, %s245
      %s247 = sphi 0, %s245
      %s248 = sphi 0, %s247
      %s262 = sphi 0, %s248
      %s266 = sphi 0, %s266
      %s268 = sphi 0, %s266
      %s269 = sphi 0, %s268
      %s283 = sphi 0, %s269
      %s287 = sphi 0, %s287
      %s289 = sphi 0, %s287
      %s290 = sphi 0, %s289
      %s304 = sphi 0, %s290
      %s308 = sphi 0, %s308
      %s310 = sphi 0, %s308
      %s311 = sphi 0, %s310
      %s325 = sphi 0, %s311
      %s331 = sphi 0, %s333
      %s334 = sphi 0, %s331
      %s335 = sphi 0, %s334
      %s351 = sphi 0, %s335
    $region4: #{vit_forward.2} parent=1 // loop_header_branch
      %25 = sbr.rel (%p23) target = $region8
    $region5: #{vit_forward.2} parent=1 // loop_body
      %s27 = ssub.s32 %s22, 1
      %s28 = ssub.s32 %s22, 2
      %s29 = sadd.s32 %s22, 1
      %s30 = ssub.s32 %s22, %s29
      %p31 = scmp.eq.s32.totalorder %s30, 0
      %s33 = sadd.s32 %s32, 1
      %s34 = scalar_select %p31, %s32, %s33
      %p37 = pneg %p31
      %p38 = scmp.eq.s32.totalorder %s22, 1
      %p39 = por %p37, %p38
      %p40 = scmp.ne.s32.totalorder %s32, %s35
      %p41 = scmp.eq.s32.totalorder %s22, 0
      %p42 = por %p40, %p41
      %p43 = scmp.ne.s32.totalorder %s32, %s35
      %p44 = scmp.eq.s32.totalorder %s27, 1
      %p45 = por %p43, %p44
      %p46 = scmp.ne.s32.totalorder %s35, %s36
      %p47 = scmp.eq.s32.totalorder %s27, 0
      %p48 = por %p46, %p47
      %p49 = scmp.ne.s32.totalorder %s35, %s36
      %p50 = scmp.eq.s32.totalorder %s28, 1
      %p51 = por %p49, %p50
      %p53 = scmp.ne.s32.totalorder %s36, %s52
      %p54 = scmp.eq.s32.totalorder %s28, 0
      %p55 = por %p53, %p54
      %s57 = sadd.s32 %s56, 1
      %p60 = scmp.eq.s32.totalorder %s22, 1
      %p61 = scmp.ne.s32.totalorder %s56, %s58
      %p62 = scmp.eq.s32.totalorder %s22, 0
      %p63 = por %p61, %p62
      %p64 = scmp.ne.s32.totalorder %s56, %s58
      %p65 = scmp.eq.s32.totalorder %s27, 1
      %p66 = por %p64, %p65
      %p67 = scmp.ne.s32.totalorder %s58, %s59
      %p68 = scmp.eq.s32.totalorder %s27, 0
      %p69 = por %p67, %p68
      %p70 = scmp.ne.s32.totalorder %s58, %s59
      %p71 = scmp.eq.s32.totalorder %s28, 1
      %p72 = por %p70, %p71
      %p74 = scmp.ne.s32.totalorder %s59, %s73
      %p75 = scmp.eq.s32.totalorder %s28, 0
      %p76 = por %p74, %p75
      %s78 = sadd.s32 %s77, 1
      %p81 = scmp.eq.s32.totalorder %s22, 1
      %p82 = scmp.ne.s32.totalorder %s77, %s79
      %p83 = scmp.eq.s32.totalorder %s22, 0
      %p84 = por %p82, %p83
      %p85 = scmp.ne.s32.totalorder %s77, %s79
      %p86 = scmp.eq.s32.totalorder %s27, 1
      %p87 = por %p85, %p86
      %p88 = scmp.ne.s32.totalorder %s79, %s80
      %p89 = scmp.eq.s32.totalorder %s27, 0
      %p90 = por %p88, %p89
      %p91 = scmp.ne.s32.totalorder %s79, %s80
      %p92 = scmp.eq.s32.totalorder %s28, 1
      %p93 = por %p91, %p92
      %p95 = scmp.ne.s32.totalorder %s80, %s94
      %p96 = scmp.eq.s32.totalorder %s28, 0
      %p97 = por %p95, %p96
      %s99 = sadd.s32 %s98, 1
      %p102 = scmp.eq.s32.totalorder %s22, 1
      %p103 = scmp.ne.s32.totalorder %s98, %s100
      %p104 = scmp.eq.s32.totalorder %s22, 0
      %p105 = por %p103, %p104
      %p106 = scmp.ne.s32.totalorder %s98, %s100
      %p107 = scmp.eq.s32.totalorder %s27, 1
      %p108 = por %p106, %p107
      %p109 = scmp.ne.s32.totalorder %s100, %s101
      %p110 = scmp.eq.s32.totalorder %s27, 0
      %p111 = por %p109, %p110
      %p112 = scmp.ne.s32.totalorder %s100, %s101
      %p113 = scmp.eq.s32.totalorder %s28, 1
      %p114 = por %p112, %p113
      %p116 = scmp.ne.s32.totalorder %s101, %s115
      %p117 = scmp.eq.s32.totalorder %s28, 0
      %p118 = por %p116, %p117
      %s120 = sadd.s32 %s119, 1
      %p123 = scmp.eq.s32.totalorder %s22, 1
      %p124 = scmp.ne.s32.totalorder %s119, %s121
      %p125 = scmp.eq.s32.totalorder %s22, 0
      %p126 = por %p124, %p125
      %p127 = scmp.ne.s32.totalorder %s119, %s121
      %p128 = scmp.eq.s32.totalorder %s27, 1
      %p129 = por %p127, %p128
      %p130 = scmp.ne.s32.totalorder %s121, %s122
      %p131 = scmp.eq.s32.totalorder %s27, 0
      %p132 = por %p130, %p131
      %p133 = scmp.ne.s32.totalorder %s121, %s122
      %p134 = scmp.eq.s32.totalorder %s28, 1
      %p135 = por %p133, %p134
      %p137 = scmp.ne.s32.totalorder %s122, %s136
      %p138 = scmp.eq.s32.totalorder %s28, 0
      %p139 = por %p137, %p138
      %s141 = sadd.s32 %s140, 1
      %p144 = scmp.eq.s32.totalorder %s22, 1
      %p145 = scmp.ne.s32.totalorder %s140, %s142
      %p146 = scmp.eq.s32.totalorder %s22, 0
      %p147 = por %p145, %p146
      %p148 = scmp.ne.s32.totalorder %s140, %s142
      %p149 = scmp.eq.s32.totalorder %s27, 1
      %p150 = por %p148, %p149
      %p151 = scmp.ne.s32.totalorder %s142, %s143
      %p152 = scmp.eq.s32.totalorder %s27, 0
      %p153 = por %p151, %p152
      %p154 = scmp.ne.s32.totalorder %s142, %s143
      %p155 = scmp.eq.s32.totalorder %s28, 1
      %p156 = por %p154, %p155
      %p158 = scmp.ne.s32.totalorder %s143, %s157
      %p159 = scmp.eq.s32.totalorder %s28, 0
      %p160 = por %p158, %p159
      %s162 = sadd.s32 %s161, 1
      %p165 = scmp.eq.s32.totalorder %s22, 1
      %p166 = scmp.ne.s32.totalorder %s161, %s163
      %p167 = scmp.eq.s32.totalorder %s22, 0
      %p168 = por %p166, %p167
      %p169 = scmp.ne.s32.totalorder %s161, %s163
      %p170 = scmp.eq.s32.totalorder %s27, 1
      %p171 = por %p169, %p170
      %p172 = scmp.ne.s32.totalorder %s163, %s164
      %p173 = scmp.eq.s32.totalorder %s27, 0
      %p174 = por %p172, %p173
      %p175 = scmp.ne.s32.totalorder %s163, %s164
      %p176 = scmp.eq.s32.totalorder %s28, 1
      %p177 = por %p175, %p176
      %p179 = scmp.ne.s32.totalorder %s164, %s178
      %p180 = scmp.eq.s32.totalorder %s28, 0
      %p181 = por %p179, %p180
      %s183 = sadd.s32 %s182, 1
      %p186 = scmp.eq.s32.totalorder %s22, 1
      %p187 = scmp.ne.s32.totalorder %s182, %s184
      %p188 = scmp.eq.s32.totalorder %s22, 0
      %p189 = por %p187, %p188
      %p190 = scmp.ne.s32.totalorder %s182, %s184
      %p191 = scmp.eq.s32.totalorder %s27, 1
      %p192 = por %p190, %p191
      %p193 = scmp.ne.s32.totalorder %s184, %s185
      %p194 = scmp.eq.s32.totalorder %s27, 0
      %p195 = por %p193, %p194
      %p196 = scmp.ne.s32.totalorder %s184, %s185
      %p197 = scmp.eq.s32.totalorder %s28, 1
      %p198 = por %p196, %p197
      %p200 = scmp.ne.s32.totalorder %s185, %s199
      %p201 = scmp.eq.s32.totalorder %s28, 0
      %p202 = por %p200, %p201
      %s204 = sadd.s32 %s203, 1
      %p207 = scmp.eq.s32.totalorder %s22, 1
      %p208 = scmp.ne.s32.totalorder %s203, %s205
      %p209 = scmp.eq.s32.totalorder %s22, 0
      %p210 = por %p208, %p209
      %p211 = scmp.ne.s32.totalorder %s203, %s205
      %p212 = scmp.eq.s32.totalorder %s27, 1
      %p213 = por %p211, %p212
      %p214 = scmp.ne.s32.totalorder %s205, %s206
      %p215 = scmp.eq.s32.totalorder %s27, 0
      %p216 = por %p214, %p215
      %p217 = scmp.ne.s32.totalorder %s205, %s206
      %p218 = scmp.eq.s32.totalorder %s28, 1
      %p219 = por %p217, %p218
      %p221 = scmp.ne.s32.totalorder %s206, %s220
      %p222 = scmp.eq.s32.totalorder %s28, 0
      %p223 = por %p221, %p222
      %s225 = sadd.s32 %s224, 1
      %p228 = scmp.eq.s32.totalorder %s22, 1
      %p229 = scmp.ne.s32.totalorder %s224, %s226
      %p230 = scmp.eq.s32.totalorder %s22, 0
      %p231 = por %p229, %p230
      %p232 = scmp.ne.s32.totalorder %s224, %s226
      %p233 = scmp.eq.s32.totalorder %s27, 1
      %p234 = por %p232, %p233
      %p235 = scmp.ne.s32.totalorder %s226, %s227
      %p236 = scmp.eq.s32.totalorder %s27, 0
      %p237 = por %p235, %p236
      %p238 = scmp.ne.s32.totalorder %s226, %s227
      %p239 = scmp.eq.s32.totalorder %s28, 1
      %p240 = por %p238, %p239
      %p242 = scmp.ne.s32.totalorder %s227, %s241
      %p243 = scmp.eq.s32.totalorder %s28, 0
      %p244 = por %p242, %p243
      %s246 = sadd.s32 %s245, 1
      %p249 = scmp.eq.s32.totalorder %s22, 1
      %p250 = scmp.ne.s32.totalorder %s245, %s247
      %p251 = scmp.eq.s32.totalorder %s22, 0
      %p252 = por %p250, %p251
      %p253 = scmp.ne.s32.totalorder %s245, %s247
      %p254 = scmp.eq.s32.totalorder %s27, 1
      %p255 = por %p253, %p254
      %p256 = scmp.ne.s32.totalorder %s247, %s248
      %p257 = scmp.eq.s32.totalorder %s27, 0
      %p258 = por %p256, %p257
      %p259 = scmp.ne.s32.totalorder %s247, %s248
      %p260 = scmp.eq.s32.totalorder %s28, 1
      %p261 = por %p259, %p260
      %p263 = scmp.ne.s32.totalorder %s248, %s262
      %p264 = scmp.eq.s32.totalorder %s28, 0
      %p265 = por %p263, %p264
      %s267 = sadd.s32 %s266, 1
      %p270 = scmp.eq.s32.totalorder %s22, 1
      %p271 = scmp.ne.s32.totalorder %s266, %s268
      %p272 = scmp.eq.s32.totalorder %s22, 0
      %p273 = por %p271, %p272
      %p274 = scmp.ne.s32.totalorder %s266, %s268
      %p275 = scmp.eq.s32.totalorder %s27, 1
      %p276 = por %p274, %p275
      %p277 = scmp.ne.s32.totalorder %s268, %s269
      %p278 = scmp.eq.s32.totalorder %s27, 0
      %p279 = por %p277, %p278
      %p280 = scmp.ne.s32.totalorder %s268, %s269
      %p281 = scmp.eq.s32.totalorder %s28, 1
      %p282 = por %p280, %p281
      %p284 = scmp.ne.s32.totalorder %s269, %s283
      %p285 = scmp.eq.s32.totalorder %s28, 0
      %p286 = por %p284, %p285
      %s288 = sadd.s32 %s287, 1
      %p291 = scmp.eq.s32.totalorder %s22, 1
      %p292 = scmp.ne.s32.totalorder %s287, %s289
      %p293 = scmp.eq.s32.totalorder %s22, 0
      %p294 = por %p292, %p293
      %p295 = scmp.ne.s32.totalorder %s287, %s289
      %p296 = scmp.eq.s32.totalorder %s27, 1
      %p297 = por %p295, %p296
      %p298 = scmp.ne.s32.totalorder %s289, %s290
      %p299 = scmp.eq.s32.totalorder %s27, 0
      %p300 = por %p298, %p299
      %p301 = scmp.ne.s32.totalorder %s289, %s290
      %p302 = scmp.eq.s32.totalorder %s28, 1
      %p303 = por %p301, %p302
      %p305 = scmp.ne.s32.totalorder %s290, %s304
      %p306 = scmp.eq.s32.totalorder %s28, 0
      %p307 = por %p305, %p306
      %s309 = sadd.s32 %s308, 1
      %p312 = scmp.eq.s32.totalorder %s22, 1
      %p313 = scmp.ne.s32.totalorder %s308, %s310
      %p314 = scmp.eq.s32.totalorder %s22, 0
      %p315 = por %p313, %p314
      %p316 = scmp.ne.s32.totalorder %s308, %s310
      %p317 = scmp.eq.s32.totalorder %s27, 1
      %p318 = por %p316, %p317
      %p319 = scmp.ne.s32.totalorder %s310, %s311
      %p320 = scmp.eq.s32.totalorder %s27, 0
      %p321 = por %p319, %p320
      %p322 = scmp.ne.s32.totalorder %s310, %s311
      %p323 = scmp.eq.s32.totalorder %s28, 1
      %p324 = por %p322, %p323
      %p326 = scmp.ne.s32.totalorder %s311, %s325
      %p327 = scmp.eq.s32.totalorder %s28, 0
      %p328 = por %p326, %p327
      %s329 = ssub.s32 %s22, %s29
      %p330 = scmp.eq.s32.totalorder %s329, 0
      %s332 = sadd.s32 %s331, 1
      %s333 = scalar_select %p330, %s331, %s332
      %p336 = pneg %p330
      %p337 = scmp.eq.s32.totalorder %s22, 1
      %p338 = por %p336, %p337
      %p339 = scmp.ne.s32.totalorder %s331, %s334
      %p340 = scmp.eq.s32.totalorder %s22, 0
      %p341 = por %p339, %p340
      %p342 = scmp.ne.s32.totalorder %s331, %s334
      %p343 = scmp.eq.s32.totalorder %s27, 1
      %p344 = por %p342, %p343
      %p345 = scmp.ne.s32.totalorder %s334, %s335
      %p346 = scmp.eq.s32.totalorder %s27, 0
      %p347 = por %p345, %p346
      %p348 = scmp.ne.s32.totalorder %s334, %s335
      %p349 = scmp.eq.s32.totalorder %s28, 1
      %p350 = por %p348, %p349
      %p352 = scmp.ne.s32.totalorder %s335, %s351
      %p353 = scmp.eq.s32.totalorder %s28, 0
      %p354 = por %p352, %p353
      %p355 = scmp.le.s32.totalorder 1, %s22
      %p356 = scmp.lt.s32.totalorder %s22, 3
      %p357 = pnand %p355, %p356
      %p358 = pneg %p357
      // Predicated region
      $region9: #{vit_forward.2} parent=5 // pred_check
        _
      $region10: #{vit_forward.2} parent=5 // pred_check_branch
        %360 = sbr.rel (%p357) target = $region12
      $region11: #{vit_forward.2} parent=5 // pred_region
        %s361 = ssub.s32 %s22, 1
        // Predicated region
        $region13: #{vit_forward.2} parent=11 // pred_check
          %p362 = pneg %p69
        $region14: #{vit_forward.2} parent=11 // pred_check_branch
          %364 = sbr.rel (%p362) target = $region16
        $region15: #{vit_forward.2} parent=11 // pred_region
          _
        $region16: #{vit_forward.2} parent=11 // pred_fallthru
          _
        // Predicated region
        $region17: #{vit_forward.2} parent=11 // pred_check
          %p365 = pneg %p90
        $region18: #{vit_forward.2} parent=11 // pred_check_branch
          %367 = sbr.rel (%p365) target = $region20
        $region19: #{vit_forward.2} parent=11 // pred_region
          _
        $region20: #{vit_forward.2} parent=11 // pred_fallthru
          _
        // Predicated region
        $region21: #{vit_forward.2} parent=11 // pred_check
          %p368 = pneg %p111
        $region22: #{vit_forward.2} parent=11 // pred_check_branch
          %370 = sbr.rel (%p368) target = $region24
        $region23: #{vit_forward.2} parent=11 // pred_region
          _
        $region24: #{vit_forward.2} parent=11 // pred_fallthru
          _
        // Predicated region
        $region25: #{vit_forward.2} parent=11 // pred_check
          %p371 = pneg %p132
        $region26: #{vit_forward.2} parent=11 // pred_check_branch
          %373 = sbr.rel (%p371) target = $region28
        $region27: #{vit_forward.2} parent=11 // pred_region
          _
        $region28: #{vit_forward.2} parent=11 // pred_fallthru
          _
        // Predicated region
        $region29: #{vit_forward.2} parent=11 // pred_check
          %p374 = pneg %p153
        $region30: #{vit_forward.2} parent=11 // pred_check_branch
          %376 = sbr.rel (%p374) target = $region32
        $region31: #{vit_forward.2} parent=11 // pred_region
          _
        $region32: #{vit_forward.2} parent=11 // pred_fallthru
          _
        // Predicated region
        $region33: #{vit_forward.2} parent=11 // pred_check
          %p377 = pneg %p174
        $region34: #{vit_forward.2} parent=11 // pred_check_branch
          %379 = sbr.rel (%p377) target = $region36
        $region35: #{vit_forward.2} parent=11 // pred_region
          _
        $region36: #{vit_forward.2} parent=11 // pred_fallthru
          _
        // Predicated region
        $region37: #{vit_forward.2} parent=11 // pred_check
          %p380 = pneg %p195
        $region38: #{vit_forward.2} parent=11 // pred_check_branch
          %382 = sbr.rel (%p380) target = $region40
        $region39: #{vit_forward.2} parent=11 // pred_region
          _
        $region40: #{vit_forward.2} parent=11 // pred_fallthru
          _
        // Predicated region
        $region41: #{vit_forward.2} parent=11 // pred_check
          %p383 = pneg %p216
        $region42: #{vit_forward.2} parent=11 // pred_check_branch
          %385 = sbr.rel (%p383) target = $region44
        $region43: #{vit_forward.2} parent=11 // pred_region
          _
        $region44: #{vit_forward.2} parent=11 // pred_fallthru
          _
        // Predicated region
        $region45: #{vit_forward.2} parent=11 // pred_check
          %p386 = pneg %p237
        $region46: #{vit_forward.2} parent=11 // pred_check_branch
          %388 = sbr.rel (%p386) target = $region48
        $region47: #{vit_forward.2} parent=11 // pred_region
          _
        $region48: #{vit_forward.2} parent=11 // pred_fallthru
          _
        // Predicated region
        $region49: #{vit_forward.2} parent=11 // pred_check
          %p389 = pneg %p258
        $region50: #{vit_forward.2} parent=11 // pred_check_branch
          %391 = sbr.rel (%p389) target = $region52
        $region51: #{vit_forward.2} parent=11 // pred_region
          _
        $region52: #{vit_forward.2} parent=11 // pred_fallthru
          _
        // Predicated region
        $region53: #{vit_forward.2} parent=11 // pred_check
          %p392 = pneg %p279
        $region54: #{vit_forward.2} parent=11 // pred_check_branch
          %394 = sbr.rel (%p392) target = $region56
        $region55: #{vit_forward.2} parent=11 // pred_region
          %s396 = ssub.s32 32, 32
          %397 = vsyncadd [#allocation3], %s396
          %s398 = sshll.u32 [#allocation2], 4
          %s399 = int_to_ptr.vmem [resolvable:$true] %s398
          %404 = dma.hbm_to_vmem [thread:$0]  %s11, 32, %s399, [#allocation3], 16, 16, 1
        $region56: #{vit_forward.2} parent=11 // pred_fallthru
          _
        // Predicated region
        $region57: #{vit_forward.2} parent=11 // pred_check
          %p405 = pneg %p300
        $region58: #{vit_forward.2} parent=11 // pred_check_branch
          %407 = sbr.rel (%p405) target = $region60
        $region59: #{vit_forward.2} parent=11 // pred_region
          _
        $region60: #{vit_forward.2} parent=11 // pred_fallthru
          _
        // Predicated region
        $region61: #{vit_forward.2} parent=11 // pred_check
          %p408 = pneg %p321
        $region62: #{vit_forward.2} parent=11 // pred_check_branch
          %410 = sbr.rel (%p408) target = $region64
        $region63: #{vit_forward.2} parent=11 // pred_region
          %s412 = ssub.s32 32, 32
          %413 = vsyncadd [#allocation5], %s412
          %s414 = sshll.u32 [#allocation4], 4
          %s415 = int_to_ptr.vmem [resolvable:$true] %s414
          %420 = dma.hbm_to_vmem [thread:$0]  %s13, 32, %s415, [#allocation5], 16, 16, 1
        $region64: #{vit_forward.2} parent=11 // pred_fallthru
          _
      $region12: #{vit_forward.2} parent=5 // pred_fallthru
        _
      %p421 = scmp.lt.s32.totalorder %s22, 2
      // Predicated region
      $region65: #{vit_forward.2} parent=5 // pred_check
        %p422 = pneg %p421
      $region66: #{vit_forward.2} parent=5 // pred_check_branch
        %424 = sbr.rel (%p422) target = $region68
      $region67: #{vit_forward.2} parent=5 // pred_region
        // Predicated region
        $region69: #{vit_forward.2} parent=67 // pred_check
          %p425 = pneg %p42
        $region70: #{vit_forward.2} parent=67 // pred_check_branch
          %427 = sbr.rel (%p425) target = $region72
        $region71: #{vit_forward.2} parent=67 // pred_region
          %p428 = scmp.lt.s32.totalorder %s22, 1
          %s429 = scalar_select %p428, %s22, 1
          %s430 = smul.addr %s429, 2
          %s431 = smul.addr %s430, 8
          %s432 = scalar_lea.vmem %s0, %s431
        $region72: #{vit_forward.2} parent=67 // pred_fallthru
          _
      $region68: #{vit_forward.2} parent=5 // pred_fallthru
        _
      %p433 = scmp.le.s32.totalorder 1, %s22
      %p434 = scmp.lt.s32.totalorder %s22, 3
      %p435 = pnand %p433, %p434
      %p436 = pneg %p435
      // Predicated region
      $region73: #{vit_forward.2} parent=5 // pred_check
        _
      $region74: #{vit_forward.2} parent=5 // pred_check_branch
        %438 = sbr.rel (%p435) target = $region76
      $region75: #{vit_forward.2} parent=5 // pred_region
        %s439 = ssub.s32 %s22, 1
        // Predicated region
        $region77: #{vit_forward.2} parent=75 // pred_check
          %p440 = pneg %p279
        $region78: #{vit_forward.2} parent=75 // pred_check_branch
          %442 = sbr.rel (%p440) target = $region80
        $region79: #{vit_forward.2} parent=75 // pred_region
          %443 = dma.done [#allocation3], 32
        $region80: #{vit_forward.2} parent=75 // pred_fallthru
          _
        // Predicated region
        $region81: #{vit_forward.2} parent=75 // pred_check
          %p444 = pneg %p321
        $region82: #{vit_forward.2} parent=75 // pred_check_branch
          %446 = sbr.rel (%p444) target = $region84
        $region83: #{vit_forward.2} parent=75 // pred_region
          %447 = dma.done [#allocation5], 32
        $region84: #{vit_forward.2} parent=75 // pred_fallthru
          _
        %p448 = scmp.lt.s32.totalorder %s27, 1
        %s449 = scalar_select %p448, %s27, 1
        %s450 = smul.addr %s449, 2
        %s451 = smul.addr %s450, 8
        %s452 = scalar_lea.vmem %s0, %s451
        %p453 = pneg %p48
        %p454 = pneg %p45
        %p455 = pneg %p69
        %p456 = pneg %p66
        %p457 = pneg %p90
        %p458 = pneg %p87
        %p459 = pneg %p111
        %p460 = pneg %p108
        %p461 = pneg %p132
        %p462 = pneg %p129
        %p463 = pneg %p153
        %p464 = pneg %p150
        %p465 = pneg %p174
        %p466 = pneg %p171
        %p467 = pneg %p195
        %p468 = pneg %p192
        %p469 = pneg %p216
        %p470 = pneg %p213
        %p471 = pneg %p237
        %p472 = pneg %p234
        %p473 = pneg %p258
        %p474 = pneg %p255
        %p475 = pneg %p279
        %p476 = pneg %p276
        %p477 = pneg %p300
        %p478 = pneg %p297
        %p479 = pneg %p321
        %p480 = pneg %p318
        %p481 = pneg %p347
        %p482 = pneg %p344
        %p483 = scmp.lt.s32.totalorder %s27, 1
        %s484 = scalar_select %p483, %s27, 1
        %s485 = smul.addr %s484, 3
        %s486 = smul.addr %s485, 8
        %s487 = scalar_lea.vmem %s14, %s486
        %p488 = scmp.lt.s32.totalorder %s27, 1
        %s489 = scalar_select %p488, %s27, 1
        %s490 = smul.addr %s489, 2
        %s491 = smul.addr %s490, 8
        %s492 = scalar_lea.vmem %s0, %s491
        %p493 = scmp.lt.s32.totalorder %s27, 1
        %s494 = scalar_select %p493, %s27, 1
        %s495 = smul.addr %s494, 3
        %s496 = smul.addr %s495, 8
        %s497 = scalar_lea.vmem %s14, %s496
        %v498 = vld [vmem:[%s492] sm:$0xff]
        %v499 = vld [vmem:[%s492 + $0x8] sm:$0xff]
        %v500 = vld [vmem:[%s1] sm:$0xff]
        %v501 = vld [vmem:[%s1 + $0x8] sm:$0xff]
        %v502 = vld [vmem:[%s1 + $0x10] sm:$0x1]
        %v503 = vld [vmem:[%s2] sm:$0xff]
        %v504 = vld [vmem:[%s2 + $0x8] sm:$0xff]
        %v505 = vld [vmem:[%s2 + $0x10] sm:$0x1]
        %vm506 = vcmask 130048
        %v508 = vsel %vm506, %v500, 0
        %v511 = vsel %vm506, %v501, 0
        %v514 = vsel %vm506, %v502, 0
        %516 = vmatprep.subr.mxu0 0.0
        %517 = vmatpush1.msra.mxu0 0.0
        %518 = vmatprep.subr.mxu0 0.0
        %519 = vmatpush1.msra.mxu0 0.0
        %520 = vmatprep.subr.mxu0 0.0
        %521 = vmatpush1.msra.mxu0 0.0
        %522 = vmatprep.subr.mxu0 0.0
        %523 = vmatpush1.msra.mxu0 0.0
        %524 = vmatprep.subr.mxu0 0.0
        %525 = vmatpush1.msra.mxu0 0.0
        %526 = vmatprep.subr.mxu0 0.0
        %527 = vmatpush1.msra.mxu0 0.0
        %528 = vmatprep.subr.mxu0 0.0
        %529 = vmatpush1.msra.mxu0 0.0
        %530 = vmatprep.subr.mxu0 0.0
        %531 = vmatpush1.msra.mxu0 0.0
        %532 = vmatprep.subr.mxu0 0.0
        %533 = vmatpush1.msra.mxu0 0.0
        %534 = vmatprep.subr.mxu0 0.0
        %535 = vmatpush1.msra.mxu0 0.0
        %536 = vmatprep.subr.mxu0 0.0
        %537 = vmatpush1.msra.mxu0 0.0
        %538 = vmatprep.subr.mxu0 0.0
        %539 = vmatpush1.msra.mxu0 0.0
        %540 = vmatprep.subr.mxu0 0.0
        %541 = vmatpush1.msra.mxu0 0.0
        %542 = vmatprep.subr.mxu0 0.0
        %543 = vmatpush1.msra.mxu0 0.0
        %544 = vmatprep.subr.mxu0 0.0
        %545 = vmatpush1.msra.mxu0 %v499
        %546 = vmatprep.subr.mxu0 0.0
        %547 = vmatpush1.msra.mxu0 %v498
        %548 = vmatprep.subr.mxu0 0.0
        %549 = vmatpush2.msra.mxu0 0.0
        %550 = vmatprep.subr.mxu0 0.0
        %551 = vmatpush2.msra.mxu0 0.0
        %552 = vmatprep.subr.mxu0 0.0
        %553 = vmatpush2.msra.mxu0 0.0
        %554 = vmatprep.subr.mxu0 0.0
        %555 = vmatpush2.msra.mxu0 0.0
        %556 = vmatprep.subr.mxu0 0.0
        %557 = vmatpush2.msra.mxu0 0.0
        %558 = vmatprep.subr.mxu0 0.0
        %559 = vmatpush2.msra.mxu0 0.0
        %560 = vmatprep.subr.mxu0 0.0
        %561 = vmatpush2.msra.mxu0 0.0
        %562 = vmatprep.subr.mxu0 0.0
        %563 = vmatpush2.msra.mxu0 0.0
        %564 = vmatprep.subr.mxu0 0.0
        %565 = vmatpush2.msra.mxu0 0.0
        %566 = vmatprep.subr.mxu0 0.0
        %567 = vmatpush2.msra.mxu0 0.0
        %568 = vmatprep.subr.mxu0 0.0
        %569 = vmatpush2.msra.mxu0 0.0
        %570 = vmatprep.subr.mxu0 0.0
        %571 = vmatpush2.msra.mxu0 0.0
        %572 = vmatprep.subr.mxu0 0.0
        %573 = vmatpush2.msra.mxu0 0.0
        %574 = vmatprep.subr.mxu0 0.0
        %575 = vmatpush2.msra.mxu0 0.0
        %576 = vmatprep.subr.mxu0 0.0
        %577 = vmatpush2.msra.mxu0 0.0
        %578 = vmatprep.subr.mxu0 0.0
        %579 = vmatpush2.msra.mxu0 0.0
        %580 = vmatprep.mubr.f32.mxu0 0.0
        %581 = vmatmul.mubr.f32.gmra.mxu0 %v508
        %v582 = vpop.f32.mrf.mxu0
        %v583 = vadd.f32 %v503, %v582
        %v584 = vpop.f32.mrf.mxu0
        %585 = vmatprep.mubr.f32.mxu0 0.0
        %586 = vmatmul.mubr.f32.gmra.mxu0 %v511
        %v587 = vpop.f32.mrf.mxu0
        %v588 = vadd.f32 %v504, %v587
        %v589 = vpop.f32.mrf.mxu0
        %590 = vmatprep.mubr.f32.mxu0 0.0
        %591 = vmatmul.mubr.f32.gmra.mxu0 %v514
        %v592 = vpop.f32.mrf.mxu0
        %v593 = vadd.f32 %v505, %v592
        %v594 = vpop.f32.mrf.mxu0
        %595 = vdwg.mxu0
        %v596 = vld [vmem:[%s3] sm:$0x1]
        %v597 = vld [vmem:[%s4] sm:$0x1]
        %vm598 = vcmask 261120
        %v599 = vsel %vm598, %v583, 0.0
        %600 = vadd.xlane.f32.xlu0 %v599
        %v601 = vpop.xlane.xlu0 %600
        %v602 = vsel %vm598, %v588, 0.0
        %603 = vadd.xlane.f32.xlu0 %v602
        %v604 = vpop.xlane.xlu0 %603
        %vm605 = vcmask 253952
        %v606 = vsel %vm605, %v593, 0.0
        %607 = vadd.xlane.f32.xlu0 %v606
        %v608 = vpop.xlane.xlu0 %607
        %v609 = vrcp.pop 32.0
        %v610 = vmul.f32 %v601, %v609
        %v611 = vmul.f32 %v604, %v609
        %v612 = vmul.f32 %v608, %v609
        %v613 = vsub.f32 %v583, %v610
        %v614 = vsub.f32 %v588, %v611
        %v615 = vsub.f32 %v593, %v612
        %v616 = vmul.f32 %v613, %v613
        %v617 = vmul.f32 %v614, %v614
        %v618 = vmul.f32 %v615, %v615
        %v619 = vsel %vm598, %v616, 0.0
        %620 = vadd.xlane.f32.xlu0 %v619
        %v621 = vpop.xlane.xlu0 %620
        %v622 = vsel %vm598, %v617, 0.0
        %623 = vadd.xlane.f32.xlu0 %v622
        %v624 = vpop.xlane.xlu0 %623
        %v625 = vsel %vm605, %v618, 0.0
        %626 = vadd.xlane.f32.xlu0 %v625
        %v627 = vpop.xlane.xlu0 %626
        %v628 = vmul.f32 %v621, %v609
        %v629 = vmul.f32 %v624, %v609
        %v630 = vmul.f32 %v627, %v609
        %v631 = vadd.f32 %v628, 1e-05
        %v632 = vadd.f32 %v629, 1e-05
        %v633 = vadd.f32 %v630, 1e-05
        %v634 = vrsqrt.pop %v631
        %v635 = vrsqrt.pop %v632
        %v636 = vrsqrt.pop %v633
        %v637 = vmul.f32 %v613, %v634
        %v638 = vmul.f32 %v614, %v635
        %v639 = vmul.f32 %v615, %v636
        %v641 = vlaneseq
        %v642 = vshrl.u32 %v641, 7
        %v643 = vsub.s32 0, %v642
        %v644 = vrot.slane %v596, %v643
        %v646 = vmul.f32 %v637, %v644
        %v647 = vmul.f32 %v638, %v644
        %v648 = vmul.f32 %v639, %v644
        %v650 = vlaneseq
        %v651 = vshrl.u32 %v650, 7
        %v652 = vsub.s32 0, %v651
        %v653 = vrot.slane %v597, %v652
        %v655 = vadd.f32 %v646, %v653
        %v656 = vadd.f32 %v647, %v653
        %v657 = vadd.f32 %v648, %v653
        %v658 = vld [vmem:[%s5] sm:$0xff]
        %v659 = vld [vmem:[%s5 + $0x8] sm:$0xff]
        %v660 = vld [vmem:[%s5 + $0x10] sm:$0xff]
        %v661 = vld [vmem:[%s5 + $0x18] sm:$0xff]
        %v663 = vsel %vm598, %v655, 0
        %v666 = vsel %vm598, %v656, 0
        %v669 = vsel %vm598, %v657, 0
        %671 = vmatprep.subr.mxu0 0.0
        %672 = vmatpush1.msra.mxu0 0.0
        %673 = vmatprep.subr.mxu0 0.0
        %674 = vmatpush1.msra.mxu0 0.0
        %675 = vmatprep.subr.mxu0 0.0
        %676 = vmatpush1.msra.mxu0 0.0
        %677 = vmatprep.subr.mxu0 0.0
        %678 = vmatpush1.msra.mxu0 0.0
        %679 = vmatprep.subr.mxu0 0.0
        %680 = vmatpush1.msra.mxu0 0.0
        %681 = vmatprep.subr.mxu0 0.0
        %682 = vmatpush1.msra.mxu0 0.0
        %683 = vmatprep.subr.mxu0 0.0
        %684 = vmatpush1.msra.mxu0 0.0
        %685 = vmatprep.subr.mxu0 0.0
        %686 = vmatpush1.msra.mxu0 0.0
        %687 = vmatprep.subr.mxu0 0.0
        %688 = vmatpush1.msra.mxu0 0.0
        %689 = vmatprep.subr.mxu0 0.0
        %690 = vmatpush1.msra.mxu0 0.0
        %691 = vmatprep.subr.mxu0 0.0
        %692 = vmatpush1.msra.mxu0 0.0
        %693 = vmatprep.subr.mxu0 0.0
        %694 = vmatpush1.msra.mxu0 0.0
        %695 = vmatprep.subr.mxu0 0.0
        %696 = vmatpush1.msra.mxu0 %v661
        %697 = vmatprep.subr.mxu0 0.0
        %698 = vmatpush1.msra.mxu0 %v660
        %699 = vmatprep.subr.mxu0 0.0
        %700 = vmatpush1.msra.mxu0 %v659
        %701 = vmatprep.subr.mxu0 0.0
        %702 = vmatpush1.msra.mxu0 %v658
        %703 = vmatprep.subr.mxu0 0.0
        %704 = vmatpush2.msra.mxu0 0.0
        %705 = vmatprep.subr.mxu0 0.0
        %706 = vmatpush2.msra.mxu0 0.0
        %707 = vmatprep.subr.mxu0 0.0
        %708 = vmatpush2.msra.mxu0 0.0
        %709 = vmatprep.subr.mxu0 0.0
        %710 = vmatpush2.msra.mxu0 0.0
        %711 = vmatprep.subr.mxu0 0.0
        %712 = vmatpush2.msra.mxu0 0.0
        %713 = vmatprep.subr.mxu0 0.0
        %714 = vmatpush2.msra.mxu0 0.0
        %715 = vmatprep.subr.mxu0 0.0
        %716 = vmatpush2.msra.mxu0 0.0
        %717 = vmatprep.subr.mxu0 0.0
        %718 = vmatpush2.msra.mxu0 0.0
        %719 = vmatprep.subr.mxu0 0.0
        %720 = vmatpush2.msra.mxu0 0.0
        %721 = vmatprep.subr.mxu0 0.0
        %722 = vmatpush2.msra.mxu0 0.0
        %723 = vmatprep.subr.mxu0 0.0
        %724 = vmatpush2.msra.mxu0 0.0
        %725 = vmatprep.subr.mxu0 0.0
        %726 = vmatpush2.msra.mxu0 0.0
        %727 = vmatprep.subr.mxu0 0.0
        %728 = vmatpush2.msra.mxu0 0.0
        %729 = vmatprep.subr.mxu0 0.0
        %730 = vmatpush2.msra.mxu0 0.0
        %731 = vmatprep.subr.mxu0 0.0
        %732 = vmatpush2.msra.mxu0 0.0
        %733 = vmatprep.subr.mxu0 0.0
        %734 = vmatpush2.msra.mxu0 0.0
        %735 = vmatprep.mubr.f32.mxu0 0.0
        %736 = vmatmul.mubr.f32.gmra.mxu0 %v663
        %v737 = vpop.f32.mrf.mxu0
        %v738 = vadd.f32 0.0, %v737
        %v739 = vpop.f32.mrf.mxu0
        %740 = vmatprep.mubr.f32.mxu0 0.0
        %741 = vmatmul.mubr.f32.gmra.mxu0 %v666
        %v742 = vpop.f32.mrf.mxu0
        %v743 = vadd.f32 0.0, %v742
        %v744 = vpop.f32.mrf.mxu0
        %745 = vmatprep.mubr.f32.mxu0 0.0
        %746 = vmatmul.mubr.f32.gmra.mxu0 %v669
        %v747 = vpop.f32.mrf.mxu0
        %v748 = vadd.f32 0.0, %v747
        %v749 = vpop.f32.mrf.mxu0
        %750 = vdwg.mxu0
        %754 = vrot.lane.b32.xlu0 %v738, 96
        %v755 = vpop.permute.xlu0 %754
        %756 = vrot.lane.b32.xlu0 %v743, 96
        %v757 = vpop.permute.xlu0 %756
        %758 = vrot.lane.b32.xlu0 %v748, 96
        %v759 = vpop.permute.xlu0 %758
        %v760 = vsel %vm506, %v738, 0
        %v762 = vsel %vm506, %v743, 0
        %v764 = vsel %vm506, %v748, 0
        %v766 = vsel %vm506, %v755, 0
        %v768 = vsel %vm506, %v757, 0
        %v770 = vsel %vm506, %v759, 0
        %772 = vmatprep.subr.mxu0 0.0
        %773 = vmatpush1.xpose.msra.mxu0 0.0
        %774 = vmatprep.subr.mxu0 0.0
        %775 = vmatpush1.xpose.msra.mxu0 0.0
        %776 = vmatprep.subr.mxu0 0.0
        %777 = vmatpush1.xpose.msra.mxu0 0.0
        %778 = vmatprep.subr.mxu0 0.0
        %779 = vmatpush1.xpose.msra.mxu0 0.0
        %780 = vmatprep.subr.mxu0 0.0
        %781 = vmatpush1.xpose.msra.mxu0 0.0
        %782 = vmatprep.subr.mxu0 0.0
        %783 = vmatpush1.xpose.msra.mxu0 0.0
        %784 = vmatprep.subr.mxu0 0.0
        %785 = vmatpush1.xpose.msra.mxu0 0.0
        %786 = vmatprep.subr.mxu0 0.0
        %787 = vmatpush1.xpose.msra.mxu0 0.0
        %788 = vmatprep.subr.mxu0 0.0
        %789 = vmatpush1.xpose.msra.mxu0 0.0
        %790 = vmatprep.subr.mxu0 0.0
        %791 = vmatpush1.xpose.msra.mxu0 0.0
        %792 = vmatprep.subr.mxu0 0.0
        %793 = vmatpush1.xpose.msra.mxu0 0.0
        %794 = vmatprep.subr.mxu0 0.0
        %795 = vmatpush1.xpose.msra.mxu0 0.0
        %796 = vmatprep.subr.mxu0 0.0
        %797 = vmatpush1.xpose.msra.mxu0 0.0
        %798 = vmatprep.subr.mxu0 0.0
        %799 = vmatpush1.xpose.msra.mxu0 %v770
        %800 = vmatprep.subr.mxu0 0.0
        %801 = vmatpush1.xpose.msra.mxu0 %v768
        %802 = vmatprep.subr.mxu0 0.0
        %803 = vmatpush1.xpose.msra.mxu0 %v766
        %804 = vmatprep.subr.mxu0 0.0
        %805 = vmatpush2.xpose.msra.mxu0 0.0
        %806 = vmatprep.subr.mxu0 0.0
        %807 = vmatpush2.xpose.msra.mxu0 0.0
        %808 = vmatprep.subr.mxu0 0.0
        %809 = vmatpush2.xpose.msra.mxu0 0.0
        %810 = vmatprep.subr.mxu0 0.0
        %811 = vmatpush2.xpose.msra.mxu0 0.0
        %812 = vmatprep.subr.mxu0 0.0
        %813 = vmatpush2.xpose.msra.mxu0 0.0
        %814 = vmatprep.subr.mxu0 0.0
        %815 = vmatpush2.xpose.msra.mxu0 0.0
        %816 = vmatprep.subr.mxu0 0.0
        %817 = vmatpush2.xpose.msra.mxu0 0.0
        %818 = vmatprep.subr.mxu0 0.0
        %819 = vmatpush2.xpose.msra.mxu0 0.0
        %820 = vmatprep.subr.mxu0 0.0
        %821 = vmatpush2.xpose.msra.mxu0 0.0
        %822 = vmatprep.subr.mxu0 0.0
        %823 = vmatpush2.xpose.msra.mxu0 0.0
        %824 = vmatprep.subr.mxu0 0.0
        %825 = vmatpush2.xpose.msra.mxu0 0.0
        %826 = vmatprep.subr.mxu0 0.0
        %827 = vmatpush2.xpose.msra.mxu0 0.0
        %828 = vmatprep.subr.mxu0 0.0
        %829 = vmatpush2.xpose.msra.mxu0 0.0
        %830 = vmatprep.subr.mxu0 0.0
        %831 = vmatpush2.xpose.msra.mxu0 0.0
        %832 = vmatprep.subr.mxu0 0.0
        %833 = vmatpush2.xpose.msra.mxu0 0.0
        %834 = vmatprep.subr.mxu0 0.0
        %835 = vmatpush2.xpose.msra.mxu0 0.0
        %836 = vmatprep.mubr.f32.mxu0 0.0
        %837 = vmatmul.mubr.f32.gmra.mxu0 %v760
        %v838 = vpop.f32.mrf.mxu0
        %v839 = vadd.f32 0.0, %v838
        %v840 = vpop.f32.mrf.mxu0
        %841 = vmatprep.mubr.f32.mxu0 0.0
        %842 = vmatmul.mubr.f32.gmra.mxu0 %v762
        %v843 = vpop.f32.mrf.mxu0
        %v844 = vadd.f32 0.0, %v843
        %v845 = vpop.f32.mrf.mxu0
        %846 = vmatprep.mubr.f32.mxu0 0.0
        %847 = vmatmul.mubr.f32.gmra.mxu0 %v764
        %v848 = vpop.f32.mrf.mxu0
        %v849 = vadd.f32 0.0, %v848
        %v850 = vpop.f32.mrf.mxu0
        %851 = vdwg.mxu0
        %vm852 = vcmask 138240
        %v853 = vsel %vm852, %v839, -inf
        %854 = vmax.xlane.f32.xlu0 %v853
        %v855 = vpop.xlane.xlu0 %854
        %v856 = vsel %vm852, %v844, -inf
        %857 = vmax.xlane.f32.xlu0 %v856
        %v858 = vpop.xlane.xlu0 %857
        %vm859 = vcmask 131072
        %v860 = vsel %vm859, %v849, -inf
        %861 = vmax.xlane.f32.xlu0 %v860
        %v862 = vpop.xlane.xlu0 %861
        %v863 = vsub.f32 %v839, %v855
        %v864 = vsub.f32 %v844, %v858
        %v865 = vsub.f32 %v849, %v862
        %v866 = vmul.f32 %v863, 1.442695
        %v867 = vpow.pop %v866
        %v868 = vmul.f32 %v864, 1.442695
        %v869 = vpow.pop %v868
        %v870 = vmul.f32 %v865, 1.442695
        %v871 = vpow.pop %v870
        %v872 = vsel %vm852, %v867, 0.0
        %873 = vadd.xlane.f32.xlu0 %v872
        %v874 = vpop.xlane.xlu0 %873
        %v875 = vsel %vm852, %v869, 0.0
        %876 = vadd.xlane.f32.xlu0 %v875
        %v877 = vpop.xlane.xlu0 %876
        %v878 = vsel %vm859, %v871, 0.0
        %879 = vadd.xlane.f32.xlu0 %v878
        %v880 = vpop.xlane.xlu0 %879
        %v881 = vrcp.pop %v874
        %v882 = vrcp.pop %v877
        %v883 = vrcp.pop %v880
        %v884 = vmul.f32 %v867, %v881
        %v885 = vmul.f32 %v869, %v882
        %v886 = vmul.f32 %v871, %v883
        %887 = vrot.lane.b32.xlu0 %v738, 64
        %v888 = vpop.permute.xlu0 %887
        %889 = vrot.lane.b32.xlu0 %v743, 64
        %v890 = vpop.permute.xlu0 %889
        %891 = vrot.lane.b32.xlu0 %v748, 64
        %v892 = vpop.permute.xlu0 %891
        %v896 = vsel %vm852, %v884, 0
        %v899 = vsel %vm852, %v885, 0
        %v902 = vsel %vm852, %v886, 0
        %vm904 = vcmask 1040384
        %v905 = vsel %vm904, %v892, 0
        %907 = vmatprep.subr.mxu0 0.0
        %908 = vmatpush1.msra.mxu0 0.0
        %909 = vmatprep.subr.mxu0 0.0
        %910 = vmatpush1.msra.mxu0 0.0
        %911 = vmatprep.subr.mxu0 0.0
        %912 = vmatpush1.msra.mxu0 0.0
        %913 = vmatprep.subr.mxu0 0.0
        %914 = vmatpush1.msra.mxu0 0.0
        %915 = vmatprep.subr.mxu0 0.0
        %916 = vmatpush1.msra.mxu0 0.0
        %917 = vmatprep.subr.mxu0 0.0
        %918 = vmatpush1.msra.mxu0 0.0
        %919 = vmatprep.subr.mxu0 0.0
        %920 = vmatpush1.msra.mxu0 0.0
        %921 = vmatprep.subr.mxu0 0.0
        %922 = vmatpush1.msra.mxu0 0.0
        %923 = vmatprep.subr.mxu0 0.0
        %924 = vmatpush1.msra.mxu0 0.0
        %925 = vmatprep.subr.mxu0 0.0
        %926 = vmatpush1.msra.mxu0 0.0
        %927 = vmatprep.subr.mxu0 0.0
        %928 = vmatpush1.msra.mxu0 0.0
        %929 = vmatprep.subr.mxu0 0.0
        %930 = vmatpush1.msra.mxu0 0.0
        %931 = vmatprep.subr.mxu0 0.0
        %932 = vmatpush1.msra.mxu0 0.0
        %933 = vmatprep.subr.mxu0 0.0
        %934 = vmatpush1.msra.mxu0 %v905
        %935 = vmatprep.subr.mxu0 0.0
        %936 = vmatpush1.msra.mxu0 %v890
        %937 = vmatprep.subr.mxu0 0.0
        %938 = vmatpush1.msra.mxu0 %v888
        %939 = vmatprep.subr.mxu0 0.0
        %940 = vmatpush2.msra.mxu0 0.0
        %941 = vmatprep.subr.mxu0 0.0
        %942 = vmatpush2.msra.mxu0 0.0
        %943 = vmatprep.subr.mxu0 0.0
        %944 = vmatpush2.msra.mxu0 0.0
        %945 = vmatprep.subr.mxu0 0.0
        %946 = vmatpush2.msra.mxu0 0.0
        %947 = vmatprep.subr.mxu0 0.0
        %948 = vmatpush2.msra.mxu0 0.0
        %949 = vmatprep.subr.mxu0 0.0
        %950 = vmatpush2.msra.mxu0 0.0
        %951 = vmatprep.subr.mxu0 0.0
        %952 = vmatpush2.msra.mxu0 0.0
        %953 = vmatprep.subr.mxu0 0.0
        %954 = vmatpush2.msra.mxu0 0.0
        %955 = vmatprep.subr.mxu0 0.0
        %956 = vmatpush2.msra.mxu0 0.0
        %957 = vmatprep.subr.mxu0 0.0
        %958 = vmatpush2.msra.mxu0 0.0
        %959 = vmatprep.subr.mxu0 0.0
        %960 = vmatpush2.msra.mxu0 0.0
        %961 = vmatprep.subr.mxu0 0.0
        %962 = vmatpush2.msra.mxu0 0.0
        %963 = vmatprep.subr.mxu0 0.0
        %964 = vmatpush2.msra.mxu0 0.0
        %965 = vmatprep.subr.mxu0 0.0
        %966 = vmatpush2.msra.mxu0 0.0
        %967 = vmatprep.subr.mxu0 0.0
        %968 = vmatpush2.msra.mxu0 0.0
        %969 = vmatprep.subr.mxu0 0.0
        %970 = vmatpush2.msra.mxu0 0.0
        %971 = vmatprep.mubr.f32.mxu0 0.0
        %972 = vmatmul.mubr.f32.gmra.mxu0 %v896
        %v973 = vpop.f32.mrf.mxu0
        %v974 = vadd.f32 0.0, %v973
        %v975 = vpop.f32.mrf.mxu0
        %976 = vmatprep.mubr.f32.mxu0 0.0
        %977 = vmatmul.mubr.f32.gmra.mxu0 %v899
        %v978 = vpop.f32.mrf.mxu0
        %v979 = vadd.f32 0.0, %v978
        %v980 = vpop.f32.mrf.mxu0
        %981 = vmatprep.mubr.f32.mxu0 0.0
        %982 = vmatmul.mubr.f32.gmra.mxu0 %v902
        %v983 = vpop.f32.mrf.mxu0
        %v984 = vadd.f32 0.0, %v983
        %v985 = vpop.f32.mrf.mxu0
        %986 = vdwg.mxu0
        %v987 = vld [vmem:[%s6] sm:$0xff]
        %v988 = vld [vmem:[%s6 + $0x8] sm:$0xff]
        %989 = vrot.lane.b32.xlu0 %v738, 112
        %v990 = vpop.permute.xlu0 %989
        %991 = vrot.lane.b32.xlu0 %v743, 112
        %v992 = vpop.permute.xlu0 %991
        %993 = vrot.lane.b32.xlu0 %v748, 112
        %v994 = vpop.permute.xlu0 %993
        %995 = vrot.lane.b32.xlu0 %v738, 80
        %v996 = vpop.permute.xlu0 %995
        %997 = vrot.lane.b32.xlu0 %v743, 80
        %v998 = vpop.permute.xlu0 %997
        %999 = vrot.lane.b32.xlu0 %v748, 80
        %v1000 = vpop.permute.xlu0 %999
        %v1001 = vsel %vm506, %v990, 0
        %v1003 = vsel %vm506, %v992, 0
        %v1005 = vsel %vm506, %v994, 0
        %v1007 = vsel %vm506, %v996, 0
        %v1009 = vsel %vm506, %v998, 0
        %v1011 = vsel %vm506, %v1000, 0
        %1013 = vmatprep.subr.mxu0 0.0
        %1014 = vmatpush1.xpose.msra.mxu0 0.0
        %1015 = vmatprep.subr.mxu0 0.0
        %1016 = vmatpush1.xpose.msra.mxu0 0.0
        %1017 = vmatprep.subr.mxu0 0.0
        %1018 = vmatpush1.xpose.msra.mxu0 0.0
        %1019 = vmatprep.subr.mxu0 0.0
        %1020 = vmatpush1.xpose.msra.mxu0 0.0
        %1021 = vmatprep.subr.mxu0 0.0
        %1022 = vmatpush1.xpose.msra.mxu0 0.0
        %1023 = vmatprep.subr.mxu0 0.0
        %1024 = vmatpush1.xpose.msra.mxu0 0.0
        %1025 = vmatprep.subr.mxu0 0.0
        %1026 = vmatpush1.xpose.msra.mxu0 0.0
        %1027 = vmatprep.subr.mxu0 0.0
        %1028 = vmatpush1.xpose.msra.mxu0 0.0
        %1029 = vmatprep.subr.mxu0 0.0
        %1030 = vmatpush1.xpose.msra.mxu0 0.0
        %1031 = vmatprep.subr.mxu0 0.0
        %1032 = vmatpush1.xpose.msra.mxu0 0.0
        %1033 = vmatprep.subr.mxu0 0.0
        %1034 = vmatpush1.xpose.msra.mxu0 0.0
        %1035 = vmatprep.subr.mxu0 0.0
        %1036 = vmatpush1.xpose.msra.mxu0 0.0
        %1037 = vmatprep.subr.mxu0 0.0
        %1038 = vmatpush1.xpose.msra.mxu0 0.0
        %1039 = vmatprep.subr.mxu0 0.0
        %1040 = vmatpush1.xpose.msra.mxu0 %v1011
        %1041 = vmatprep.subr.mxu0 0.0
        %1042 = vmatpush1.xpose.msra.mxu0 %v1009
        %1043 = vmatprep.subr.mxu0 0.0
        %1044 = vmatpush1.xpose.msra.mxu0 %v1007
        %1045 = vmatprep.subr.mxu0 0.0
        %1046 = vmatpush2.xpose.msra.mxu0 0.0
        %1047 = vmatprep.subr.mxu0 0.0
        %1048 = vmatpush2.xpose.msra.mxu0 0.0
        %1049 = vmatprep.subr.mxu0 0.0
        %1050 = vmatpush2.xpose.msra.mxu0 0.0
        %1051 = vmatprep.subr.mxu0 0.0
        %1052 = vmatpush2.xpose.msra.mxu0 0.0
        %1053 = vmatprep.subr.mxu0 0.0
        %1054 = vmatpush2.xpose.msra.mxu0 0.0
        %1055 = vmatprep.subr.mxu0 0.0
        %1056 = vmatpush2.xpose.msra.mxu0 0.0
        %1057 = vmatprep.subr.mxu0 0.0
        %1058 = vmatpush2.xpose.msra.mxu0 0.0
        %1059 = vmatprep.subr.mxu0 0.0
        %1060 = vmatpush2.xpose.msra.mxu0 0.0
        %1061 = vmatprep.subr.mxu0 0.0
        %1062 = vmatpush2.xpose.msra.mxu0 0.0
        %1063 = vmatprep.subr.mxu0 0.0
        %1064 = vmatpush2.xpose.msra.mxu0 0.0
        %1065 = vmatprep.subr.mxu0 0.0
        %1066 = vmatpush2.xpose.msra.mxu0 0.0
        %1067 = vmatprep.subr.mxu0 0.0
        %1068 = vmatpush2.xpose.msra.mxu0 0.0
        %1069 = vmatprep.subr.mxu0 0.0
        %1070 = vmatpush2.xpose.msra.mxu0 0.0
        %1071 = vmatprep.subr.mxu0 0.0
        %1072 = vmatpush2.xpose.msra.mxu0 0.0
        %1073 = vmatprep.subr.mxu0 0.0
        %1074 = vmatpush2.xpose.msra.mxu0 0.0
        %1075 = vmatprep.subr.mxu0 0.0
        %1076 = vmatpush2.xpose.msra.mxu0 0.0
        %1077 = vmatprep.mubr.f32.mxu0 0.0
        %1078 = vmatmul.mubr.f32.gmra.mxu0 %v1001
        %v1079 = vpop.f32.mrf.mxu0
        %v1080 = vadd.f32 0.0, %v1079
        %v1081 = vpop.f32.mrf.mxu0
        %1082 = vmatprep.mubr.f32.mxu0 0.0
        %1083 = vmatmul.mubr.f32.gmra.mxu0 %v1003
        %v1084 = vpop.f32.mrf.mxu0
        %v1085 = vadd.f32 0.0, %v1084
        %v1086 = vpop.f32.mrf.mxu0
        %1087 = vmatprep.mubr.f32.mxu0 0.0
        %1088 = vmatmul.mubr.f32.gmra.mxu0 %v1005
        %v1089 = vpop.f32.mrf.mxu0
        %v1090 = vadd.f32 0.0, %v1089
        %v1091 = vpop.f32.mrf.mxu0
        %1092 = vdwg.mxu0
        %v1093 = vsel %vm852, %v1080, -inf
        %1094 = vmax.xlane.f32.xlu0 %v1093
        %v1095 = vpop.xlane.xlu0 %1094
        %v1096 = vsel %vm852, %v1085, -inf
        %1097 = vmax.xlane.f32.xlu0 %v1096
        %v1098 = vpop.xlane.xlu0 %1097
        %v1099 = vsel %vm859, %v1090, -inf
        %1100 = vmax.xlane.f32.xlu0 %v1099
        %v1101 = vpop.xlane.xlu0 %1100
        %v1102 = vsub.f32 %v1080, %v1095
        %v1103 = vsub.f32 %v1085, %v1098
        %v1104 = vsub.f32 %v1090, %v1101
        %v1105 = vmul.f32 %v1102, 1.442695
        %v1106 = vpow.pop %v1105
        %v1107 = vmul.f32 %v1103, 1.442695
        %v1108 = vpow.pop %v1107
        %v1109 = vmul.f32 %v1104, 1.442695
        %v1110 = vpow.pop %v1109
        %v1111 = vsel %vm852, %v1106, 0.0
        %1112 = vadd.xlane.f32.xlu0 %v1111
        %v1113 = vpop.xlane.xlu0 %1112
        %v1114 = vsel %vm852, %v1108, 0.0
        %1115 = vadd.xlane.f32.xlu0 %v1114
        %v1116 = vpop.xlane.xlu0 %1115
        %v1117 = vsel %vm859, %v1110, 0.0
        %1118 = vadd.xlane.f32.xlu0 %v1117
        %v1119 = vpop.xlane.xlu0 %1118
        %v1120 = vrcp.pop %v1113
        %v1121 = vrcp.pop %v1116
        %v1122 = vrcp.pop %v1119
        %v1123 = vmul.f32 %v1106, %v1120
        %v1124 = vmul.f32 %v1108, %v1121
        %v1125 = vmul.f32 %v1110, %v1122
        %1126 = vrot.lane.b32.xlu0 %v738, 48
        %v1127 = vpop.permute.xlu0 %1126
        %1128 = vrot.lane.b32.xlu0 %v743, 48
        %v1129 = vpop.permute.xlu0 %1128
        %1130 = vrot.lane.b32.xlu0 %v748, 48
        %v1131 = vpop.permute.xlu0 %1130
        %v1135 = vsel %vm852, %v1123, 0
        %v1138 = vsel %vm852, %v1124, 0
        %v1141 = vsel %vm852, %v1125, 0
        %v1143 = vsel %vm904, %v1131, 0
        %1145 = vmatprep.subr.mxu0 0.0
        %1146 = vmatpush1.msra.mxu0 0.0
        %1147 = vmatprep.subr.mxu0 0.0
        %1148 = vmatpush1.msra.mxu0 0.0
        %1149 = vmatprep.subr.mxu0 0.0
        %1150 = vmatpush1.msra.mxu0 0.0
        %1151 = vmatprep.subr.mxu0 0.0
        %1152 = vmatpush1.msra.mxu0 0.0
        %1153 = vmatprep.subr.mxu0 0.0
        %1154 = vmatpush1.msra.mxu0 0.0
        %1155 = vmatprep.subr.mxu0 0.0
        %1156 = vmatpush1.msra.mxu0 0.0
        %1157 = vmatprep.subr.mxu0 0.0
        %1158 = vmatpush1.msra.mxu0 0.0
        %1159 = vmatprep.subr.mxu0 0.0
        %1160 = vmatpush1.msra.mxu0 0.0
        %1161 = vmatprep.subr.mxu0 0.0
        %1162 = vmatpush1.msra.mxu0 0.0
        %1163 = vmatprep.subr.mxu0 0.0
        %1164 = vmatpush1.msra.mxu0 0.0
        %1165 = vmatprep.subr.mxu0 0.0
        %1166 = vmatpush1.msra.mxu0 0.0
        %1167 = vmatprep.subr.mxu0 0.0
        %1168 = vmatpush1.msra.mxu0 0.0
        %1169 = vmatprep.subr.mxu0 0.0
        %1170 = vmatpush1.msra.mxu0 0.0
        %1171 = vmatprep.subr.mxu0 0.0
        %1172 = vmatpush1.msra.mxu0 %v1143
        %1173 = vmatprep.subr.mxu0 0.0
        %1174 = vmatpush1.msra.mxu0 %v1129
        %1175 = vmatprep.subr.mxu0 0.0
        %1176 = vmatpush1.msra.mxu0 %v1127
        %1177 = vmatprep.subr.mxu0 0.0
        %1178 = vmatpush2.msra.mxu0 0.0
        %1179 = vmatprep.subr.mxu0 0.0
        %1180 = vmatpush2.msra.mxu0 0.0
        %1181 = vmatprep.subr.mxu0 0.0
        %1182 = vmatpush2.msra.mxu0 0.0
        %1183 = vmatprep.subr.mxu0 0.0
        %1184 = vmatpush2.msra.mxu0 0.0
        %1185 = vmatprep.subr.mxu0 0.0
        %1186 = vmatpush2.msra.mxu0 0.0
        %1187 = vmatprep.subr.mxu0 0.0
        %1188 = vmatpush2.msra.mxu0 0.0
        %1189 = vmatprep.subr.mxu0 0.0
        %1190 = vmatpush2.msra.mxu0 0.0
        %1191 = vmatprep.subr.mxu0 0.0
        %1192 = vmatpush2.msra.mxu0 0.0
        %1193 = vmatprep.subr.mxu0 0.0
        %1194 = vmatpush2.msra.mxu0 0.0
        %1195 = vmatprep.subr.mxu0 0.0
        %1196 = vmatpush2.msra.mxu0 0.0
        %1197 = vmatprep.subr.mxu0 0.0
        %1198 = vmatpush2.msra.mxu0 0.0
        %1199 = vmatprep.subr.mxu0 0.0
        %1200 = vmatpush2.msra.mxu0 0.0
        %1201 = vmatprep.subr.mxu0 0.0
        %1202 = vmatpush2.msra.mxu0 0.0
        %1203 = vmatprep.subr.mxu0 0.0
        %1204 = vmatpush2.msra.mxu0 0.0
        %1205 = vmatprep.subr.mxu0 0.0
        %1206 = vmatpush2.msra.mxu0 0.0
        %1207 = vmatprep.subr.mxu0 0.0
        %1208 = vmatpush2.msra.mxu0 0.0
        %1209 = vmatprep.mubr.f32.mxu0 0.0
        %1210 = vmatmul.mubr.f32.gmra.mxu0 %v1135
        %v1211 = vpop.f32.mrf.mxu0
        %v1212 = vadd.f32 0.0, %v1211
        %v1213 = vpop.f32.mrf.mxu0
        %1214 = vmatprep.mubr.f32.mxu0 0.0
        %1215 = vmatmul.mubr.f32.gmra.mxu0 %v1138
        %v1216 = vpop.f32.mrf.mxu0
        %v1217 = vadd.f32 0.0, %v1216
        %v1218 = vpop.f32.mrf.mxu0
        %1219 = vmatprep.mubr.f32.mxu0 0.0
        %1220 = vmatmul.mubr.f32.gmra.mxu0 %v1141
        %v1221 = vpop.f32.mrf.mxu0
        %v1222 = vadd.f32 0.0, %v1221
        %v1223 = vpop.f32.mrf.mxu0
        %1224 = vdwg.mxu0
        %s1225 = scalar_lea.vmem %s6, 16
        %v1226 = vld [vmem:[%s1225] sm:$0xff]
        %v1227 = vld [vmem:[%s1225 + $0x8] sm:$0xff]
        %v1229 = vsel %vm506, %v1212, 0
        %v1232 = vsel %vm506, %v1217, 0
        %v1235 = vsel %vm506, %v1222, 0
        %1237 = vmatprep.subr.mxu0 0.0
        %1238 = vmatpush1.msra.mxu0 0.0
        %1239 = vmatprep.subr.mxu0 0.0
        %1240 = vmatpush1.msra.mxu0 0.0
        %1241 = vmatprep.subr.mxu0 0.0
        %1242 = vmatpush1.msra.mxu0 0.0
        %1243 = vmatprep.subr.mxu0 0.0
        %1244 = vmatpush1.msra.mxu0 0.0
        %1245 = vmatprep.subr.mxu0 0.0
        %1246 = vmatpush1.msra.mxu0 0.0
        %1247 = vmatprep.subr.mxu0 0.0
        %1248 = vmatpush1.msra.mxu0 0.0
        %1249 = vmatprep.subr.mxu0 0.0
        %1250 = vmatpush1.msra.mxu0 0.0
        %1251 = vmatprep.subr.mxu0 0.0
        %1252 = vmatpush1.msra.mxu0 0.0
        %1253 = vmatprep.subr.mxu0 0.0
        %1254 = vmatpush1.msra.mxu0 0.0
        %1255 = vmatprep.subr.mxu0 0.0
        %1256 = vmatpush1.msra.mxu0 0.0
        %1257 = vmatprep.subr.mxu0 0.0
        %1258 = vmatpush1.msra.mxu0 0.0
        %1259 = vmatprep.subr.mxu0 0.0
        %1260 = vmatpush1.msra.mxu0 0.0
        %1261 = vmatprep.subr.mxu0 0.0
        %1262 = vmatpush1.msra.mxu0 0.0
        %1263 = vmatprep.subr.mxu0 0.0
        %1264 = vmatpush1.msra.mxu0 0.0
        %1265 = vmatprep.subr.mxu0 0.0
        %1266 = vmatpush1.msra.mxu0 %v1227
        %1267 = vmatprep.subr.mxu0 0.0
        %1268 = vmatpush1.msra.mxu0 %v1226
        %1269 = vmatprep.subr.mxu0 0.0
        %1270 = vmatpush2.msra.mxu0 0.0
        %1271 = vmatprep.subr.mxu0 0.0
        %1272 = vmatpush2.msra.mxu0 0.0
        %1273 = vmatprep.subr.mxu0 0.0
        %1274 = vmatpush2.msra.mxu0 0.0
        %1275 = vmatprep.subr.mxu0 0.0
        %1276 = vmatpush2.msra.mxu0 0.0
        %1277 = vmatprep.subr.mxu0 0.0
        %1278 = vmatpush2.msra.mxu0 0.0
        %1279 = vmatprep.subr.mxu0 0.0
        %1280 = vmatpush2.msra.mxu0 0.0
        %1281 = vmatprep.subr.mxu0 0.0
        %1282 = vmatpush2.msra.mxu0 0.0
        %1283 = vmatprep.subr.mxu0 0.0
        %1284 = vmatpush2.msra.mxu0 0.0
        %1285 = vmatprep.subr.mxu0 0.0
        %1286 = vmatpush2.msra.mxu0 0.0
        %1287 = vmatprep.subr.mxu0 0.0
        %1288 = vmatpush2.msra.mxu0 0.0
        %1289 = vmatprep.subr.mxu0 0.0
        %1290 = vmatpush2.msra.mxu0 0.0
        %1291 = vmatprep.subr.mxu0 0.0
        %1292 = vmatpush2.msra.mxu0 0.0
        %1293 = vmatprep.subr.mxu0 0.0
        %1294 = vmatpush2.msra.mxu0 0.0
        %1295 = vmatprep.subr.mxu0 0.0
        %1296 = vmatpush2.msra.mxu0 0.0
        %1297 = vmatprep.subr.mxu0 0.0
        %1298 = vmatpush2.msra.mxu0 0.0
        %1299 = vmatprep.subr.mxu0 0.0
        %1300 = vmatpush2.msra.mxu0 0.0
        %1301 = vmatprep.mubr.f32.mxu0 0.0
        %1302 = vmatmul.mubr.f32.gmra.mxu0 %v1229
        %v1303 = vpop.f32.mrf.mxu0
        %v1304 = vadd.f32 0.0, %v1303
        %v1305 = vpop.f32.mrf.mxu0
        %1306 = vmatprep.mubr.f32.mxu0 0.0
        %1307 = vmatmul.mubr.f32.gmra.mxu0 %v1232
        %v1308 = vpop.f32.mrf.mxu0
        %v1309 = vadd.f32 0.0, %v1308
        %v1310 = vpop.f32.mrf.mxu0
        %1311 = vmatprep.mubr.f32.mxu0 0.0
        %1312 = vmatmul.mubr.f32.gmra.mxu0 %v1235
        %v1313 = vpop.f32.mrf.mxu0
        %v1314 = vadd.f32 0.0, %v1313
        %v1315 = vpop.f32.mrf.mxu0
        %1316 = vdwg.mxu0
        %v1318 = vsel %vm506, %v974, 0
        %v1321 = vsel %vm506, %v979, 0
        %v1324 = vsel %vm506, %v984, 0
        %1326 = vmatprep.subr.mxu0 0.0
        %1327 = vmatpush1.msra.mxu0 0.0
        %1328 = vmatprep.subr.mxu0 0.0
        %1329 = vmatpush1.msra.mxu0 0.0
        %1330 = vmatprep.subr.mxu0 0.0
        %1331 = vmatpush1.msra.mxu0 0.0
        %1332 = vmatprep.subr.mxu0 0.0
        %1333 = vmatpush1.msra.mxu0 0.0
        %1334 = vmatprep.subr.mxu0 0.0
        %1335 = vmatpush1.msra.mxu0 0.0
        %1336 = vmatprep.subr.mxu0 0.0
        %1337 = vmatpush1.msra.mxu0 0.0
        %1338 = vmatprep.subr.mxu0 0.0
        %1339 = vmatpush1.msra.mxu0 0.0
        %1340 = vmatprep.subr.mxu0 0.0
        %1341 = vmatpush1.msra.mxu0 0.0
        %1342 = vmatprep.subr.mxu0 0.0
        %1343 = vmatpush1.msra.mxu0 0.0
        %1344 = vmatprep.subr.mxu0 0.0
        %1345 = vmatpush1.msra.mxu0 0.0
        %1346 = vmatprep.subr.mxu0 0.0
        %1347 = vmatpush1.msra.mxu0 0.0
        %1348 = vmatprep.subr.mxu0 0.0
        %1349 = vmatpush1.msra.mxu0 0.0
        %1350 = vmatprep.subr.mxu0 0.0
        %1351 = vmatpush1.msra.mxu0 0.0
        %1352 = vmatprep.subr.mxu0 0.0
        %1353 = vmatpush1.msra.mxu0 0.0
        %1354 = vmatprep.subr.mxu0 0.0
        %1355 = vmatpush1.msra.mxu0 %v988
        %1356 = vmatprep.subr.mxu0 0.0
        %1357 = vmatpush1.msra.mxu0 %v987
        %1358 = vmatprep.subr.mxu0 0.0
        %1359 = vmatpush2.msra.mxu0 0.0
        %1360 = vmatprep.subr.mxu0 0.0
        %1361 = vmatpush2.msra.mxu0 0.0
        %1362 = vmatprep.subr.mxu0 0.0
        %1363 = vmatpush2.msra.mxu0 0.0
        %1364 = vmatprep.subr.mxu0 0.0
        %1365 = vmatpush2.msra.mxu0 0.0
        %1366 = vmatprep.subr.mxu0 0.0
        %1367 = vmatpush2.msra.mxu0 0.0
        %1368 = vmatprep.subr.mxu0 0.0
        %1369 = vmatpush2.msra.mxu0 0.0
        %1370 = vmatprep.subr.mxu0 0.0
        %1371 = vmatpush2.msra.mxu0 0.0
        %1372 = vmatprep.subr.mxu0 0.0
        %1373 = vmatpush2.msra.mxu0 0.0
        %1374 = vmatprep.subr.mxu0 0.0
        %1375 = vmatpush2.msra.mxu0 0.0
        %1376 = vmatprep.subr.mxu0 0.0
        %1377 = vmatpush2.msra.mxu0 0.0
        %1378 = vmatprep.subr.mxu0 0.0
        %1379 = vmatpush2.msra.mxu0 0.0
        %1380 = vmatprep.subr.mxu0 0.0
        %1381 = vmatpush2.msra.mxu0 0.0
        %1382 = vmatprep.subr.mxu0 0.0
        %1383 = vmatpush2.msra.mxu0 0.0
        %1384 = vmatprep.subr.mxu0 0.0
        %1385 = vmatpush2.msra.mxu0 0.0
        %1386 = vmatprep.subr.mxu0 0.0
        %1387 = vmatpush2.msra.mxu0 0.0
        %1388 = vmatprep.subr.mxu0 0.0
        %1389 = vmatpush2.msra.mxu0 0.0
        %1390 = vmatprep.mubr.f32.mxu0 0.0
        %1391 = vmatmul.mubr.f32.gmra.mxu0 %v1318
        %v1392 = vpop.f32.mrf.mxu0
        %v1393 = vadd.f32 %v1304, %v1392
        %v1394 = vpop.f32.mrf.mxu0
        %1395 = vmatprep.mubr.f32.mxu0 0.0
        %1396 = vmatmul.mubr.f32.gmra.mxu0 %v1321
        %v1397 = vpop.f32.mrf.mxu0
        %v1398 = vadd.f32 %v1309, %v1397
        %v1399 = vpop.f32.mrf.mxu0
        %1400 = vmatprep.mubr.f32.mxu0 0.0
        %1401 = vmatmul.mubr.f32.gmra.mxu0 %v1324
        %v1402 = vpop.f32.mrf.mxu0
        %v1403 = vadd.f32 %v1314, %v1402
        %v1404 = vpop.f32.mrf.mxu0
        %1405 = vdwg.mxu0
        %v1406 = vadd.f32 %v583, %v1393
        %v1407 = vadd.f32 %v588, %v1398
        %v1408 = vadd.f32 %v593, %v1403
        %v1409 = vld [vmem:[%s7] sm:$0x1]
        %v1411 = vlaneseq
        %v1412 = vshrl.u32 %v1411, 7
        %v1413 = vsub.s32 0, %v1412
        %v1414 = vrot.slane %v1409, %v1413
        %v1416 = vadd.f32 %v1406, %v1414
        %v1417 = vadd.f32 %v1407, %v1414
        %v1418 = vadd.f32 %v1408, %v1414
        %v1419 = vld [vmem:[%s8] sm:$0x1]
        %v1420 = vld [vmem:[%s9] sm:$0x1]
        %v1421 = vsel %vm598, %v1416, 0.0
        %1422 = vadd.xlane.f32.xlu0 %v1421
        %v1423 = vpop.xlane.xlu0 %1422
        %v1424 = vsel %vm598, %v1417, 0.0
        %1425 = vadd.xlane.f32.xlu0 %v1424
        %v1426 = vpop.xlane.xlu0 %1425
        %v1427 = vsel %vm605, %v1418, 0.0
        %1428 = vadd.xlane.f32.xlu0 %v1427
        %v1429 = vpop.xlane.xlu0 %1428
        %v1430 = vmul.f32 %v1423, %v609
        %v1431 = vmul.f32 %v1426, %v609
        %v1432 = vmul.f32 %v1429, %v609
        %v1433 = vsub.f32 %v1416, %v1430
        %v1434 = vsub.f32 %v1417, %v1431
        %v1435 = vsub.f32 %v1418, %v1432
        %v1436 = vmul.f32 %v1433, %v1433
        %v1437 = vmul.f32 %v1434, %v1434
        %v1438 = vmul.f32 %v1435, %v1435
        %v1439 = vsel %vm598, %v1436, 0.0
        %1440 = vadd.xlane.f32.xlu0 %v1439
        %v1441 = vpop.xlane.xlu0 %1440
        %v1442 = vsel %vm598, %v1437, 0.0
        %1443 = vadd.xlane.f32.xlu0 %v1442
        %v1444 = vpop.xlane.xlu0 %1443
        %v1445 = vsel %vm605, %v1438, 0.0
        %1446 = vadd.xlane.f32.xlu0 %v1445
        %v1447 = vpop.xlane.xlu0 %1446
        %v1448 = vmul.f32 %v1441, %v609
        %v1449 = vmul.f32 %v1444, %v609
        %v1450 = vmul.f32 %v1447, %v609
        %v1451 = vadd.f32 %v1448, 1e-05
        %v1452 = vadd.f32 %v1449, 1e-05
        %v1453 = vadd.f32 %v1450, 1e-05
        %v1454 = vrsqrt.pop %v1451
        %v1455 = vrsqrt.pop %v1452
        %v1456 = vrsqrt.pop %v1453
        %v1457 = vmul.f32 %v1433, %v1454
        %v1458 = vmul.f32 %v1434, %v1455
        %v1459 = vmul.f32 %v1435, %v1456
        %v1461 = vlaneseq
        %v1462 = vshrl.u32 %v1461, 7
        %v1463 = vsub.s32 0, %v1462
        %v1464 = vrot.slane %v1419, %v1463
        %v1466 = vmul.f32 %v1457, %v1464
        %v1467 = vmul.f32 %v1458, %v1464
        %v1468 = vmul.f32 %v1459, %v1464
        %v1470 = vlaneseq
        %v1471 = vshrl.u32 %v1470, 7
        %v1472 = vsub.s32 0, %v1471
        %v1473 = vrot.slane %v1420, %v1472
        %v1475 = vadd.f32 %v1466, %v1473
        %v1476 = vadd.f32 %v1467, %v1473
        %v1477 = vadd.f32 %v1468, %v1473
        %v1478 = vld [vmem:[%s10] sm:$0xff]
        %v1479 = vld [vmem:[%s10 + $0x8] sm:$0xff]
        %v1480 = vld [vmem:[%s10 + $0x10] sm:$0xff]
        %v1481 = vld [vmem:[%s10 + $0x18] sm:$0xff]
        %v1482 = vld [vmem:[#allocation2] sm:$0x1]
        %v1484 = vlaneseq
        %v1485 = vshrl.u32 %v1484, 7
        %v1486 = vsub.s32 0, %v1485
        %v1487 = vrot.slane %v1482, %v1486
        %v1490 = vsel %vm598, %v1475, 0
        %v1493 = vsel %vm598, %v1476, 0
        %v1496 = vsel %vm598, %v1477, 0
        %1498 = vmatprep.subr.mxu0 0.0
        %1499 = vmatpush1.msra.mxu0 0.0
        %1500 = vmatprep.subr.mxu0 0.0
        %1501 = vmatpush1.msra.mxu0 0.0
        %1502 = vmatprep.subr.mxu0 0.0
        %1503 = vmatpush1.msra.mxu0 0.0
        %1504 = vmatprep.subr.mxu0 0.0
        %1505 = vmatpush1.msra.mxu0 0.0
        %1506 = vmatprep.subr.mxu0 0.0
        %1507 = vmatpush1.msra.mxu0 0.0
        %1508 = vmatprep.subr.mxu0 0.0
        %1509 = vmatpush1.msra.mxu0 0.0
        %1510 = vmatprep.subr.mxu0 0.0
        %1511 = vmatpush1.msra.mxu0 0.0
        %1512 = vmatprep.subr.mxu0 0.0
        %1513 = vmatpush1.msra.mxu0 0.0
        %1514 = vmatprep.subr.mxu0 0.0
        %1515 = vmatpush1.msra.mxu0 0.0
        %1516 = vmatprep.subr.mxu0 0.0
        %1517 = vmatpush1.msra.mxu0 0.0
        %1518 = vmatprep.subr.mxu0 0.0
        %1519 = vmatpush1.msra.mxu0 0.0
        %1520 = vmatprep.subr.mxu0 0.0
        %1521 = vmatpush1.msra.mxu0 0.0
        %1522 = vmatprep.subr.mxu0 0.0
        %1523 = vmatpush1.msra.mxu0 %v1481
        %1524 = vmatprep.subr.mxu0 0.0
        %1525 = vmatpush1.msra.mxu0 %v1480
        %1526 = vmatprep.subr.mxu0 0.0
        %1527 = vmatpush1.msra.mxu0 %v1479
        %1528 = vmatprep.subr.mxu0 0.0
        %1529 = vmatpush1.msra.mxu0 %v1478
        %1530 = vmatprep.subr.mxu0 0.0
        %1531 = vmatpush2.msra.mxu0 0.0
        %1532 = vmatprep.subr.mxu0 0.0
        %1533 = vmatpush2.msra.mxu0 0.0
        %1534 = vmatprep.subr.mxu0 0.0
        %1535 = vmatpush2.msra.mxu0 0.0
        %1536 = vmatprep.subr.mxu0 0.0
        %1537 = vmatpush2.msra.mxu0 0.0
        %1538 = vmatprep.subr.mxu0 0.0
        %1539 = vmatpush2.msra.mxu0 0.0
        %1540 = vmatprep.subr.mxu0 0.0
        %1541 = vmatpush2.msra.mxu0 0.0
        %1542 = vmatprep.subr.mxu0 0.0
        %1543 = vmatpush2.msra.mxu0 0.0
        %1544 = vmatprep.subr.mxu0 0.0
        %1545 = vmatpush2.msra.mxu0 0.0
        %1546 = vmatprep.subr.mxu0 0.0
        %1547 = vmatpush2.msra.mxu0 0.0
        %1548 = vmatprep.subr.mxu0 0.0
        %1549 = vmatpush2.msra.mxu0 0.0
        %1550 = vmatprep.subr.mxu0 0.0
        %1551 = vmatpush2.msra.mxu0 0.0
        %1552 = vmatprep.subr.mxu0 0.0
        %1553 = vmatpush2.msra.mxu0 0.0
        %1554 = vmatprep.subr.mxu0 0.0
        %1555 = vmatpush2.msra.mxu0 0.0
        %1556 = vmatprep.subr.mxu0 0.0
        %1557 = vmatpush2.msra.mxu0 0.0
        %1558 = vmatprep.subr.mxu0 0.0
        %1559 = vmatpush2.msra.mxu0 0.0
        %1560 = vmatprep.subr.mxu0 0.0
        %1561 = vmatpush2.msra.mxu0 0.0
        %1562 = vmatprep.mubr.f32.mxu0 0.0
        %1563 = vmatmul.mubr.f32.gmra.mxu0 %v1490
        %v1564 = vpop.f32.mrf.mxu0
        %v1565 = vadd.f32 %v1487, %v1564
        %v1566 = vpop.f32.mrf.mxu0
        %1567 = vmatprep.mubr.f32.mxu0 0.0
        %1568 = vmatmul.mubr.f32.gmra.mxu0 %v1493
        %v1569 = vpop.f32.mrf.mxu0
        %v1570 = vadd.f32 %v1487, %v1569
        %v1571 = vpop.f32.mrf.mxu0
        %1572 = vmatprep.mubr.f32.mxu0 0.0
        %1573 = vmatmul.mubr.f32.gmra.mxu0 %v1496
        %v1574 = vpop.f32.mrf.mxu0
        %v1575 = vadd.f32 %v1487, %v1574
        %v1576 = vpop.f32.mrf.mxu0
        %1577 = vdwg.mxu0
        %v1578 = vmul.f32 %v1565, 0.5
        %v1579 = vmul.f32 %v1570, 0.5
        %v1580 = vmul.f32 %v1575, 0.5
        %v1581 = vmul.f32 %v1565, 0.044715
        %v1582 = vmul.f32 %v1570, 0.044715
        %v1583 = vmul.f32 %v1575, 0.044715
        %v1584 = vmul.f32 %v1581, %v1565
        %v1585 = vmul.f32 %v1582, %v1570
        %v1586 = vmul.f32 %v1583, %v1575
        %v1587 = vmul.f32 %v1584, %v1565
        %v1588 = vmul.f32 %v1585, %v1570
        %v1589 = vmul.f32 %v1586, %v1575
        %v1590 = vadd.f32 %v1565, %v1587
        %v1591 = vadd.f32 %v1570, %v1588
        %v1592 = vadd.f32 %v1575, %v1589
        %v1593 = vmul.f32 %v1590, 0.7978846
        %v1594 = vmul.f32 %v1591, 0.7978846
        %v1595 = vmul.f32 %v1592, 0.7978846
        %v1596 = vtanh.pop %v1593
        %v1597 = vtanh.pop %v1594
        %v1598 = vtanh.pop %v1595
        %v1599 = vadd.f32 %v1596, 1.0
        %v1600 = vadd.f32 %v1597, 1.0
        %v1601 = vadd.f32 %v1598, 1.0
        %v1602 = vmul.f32 %v1578, %v1599
        %v1603 = vmul.f32 %v1579, %v1600
        %v1604 = vmul.f32 %v1580, %v1601
        %v1605 = vld [vmem:[%s12] sm:$0xff]
        %v1606 = vld [vmem:[%s12 + $0x8] sm:$0xff]
        %v1607 = vld [vmem:[%s12 + $0x10] sm:$0xff]
        %v1608 = vld [vmem:[%s12 + $0x18] sm:$0xff]
        %v1609 = vld [vmem:[%s12 + $0x20] sm:$0xff]
        %v1610 = vld [vmem:[%s12 + $0x28] sm:$0xff]
        %v1611 = vld [vmem:[%s12 + $0x30] sm:$0xff]
        %v1612 = vld [vmem:[%s12 + $0x38] sm:$0xff]
        %vm1613 = vcmask 523264
        %v1615 = vsel %vm1613, %v1602, 0
        %v1618 = vsel %vm1613, %v1603, 0
        %v1621 = vsel %vm1613, %v1604, 0
        %1623 = vmatprep.subr.mxu0 0.0
        %1624 = vmatpush1.msra.mxu0 0.0
        %1625 = vmatprep.subr.mxu0 0.0
        %1626 = vmatpush1.msra.mxu0 0.0
        %1627 = vmatprep.subr.mxu0 0.0
        %1628 = vmatpush1.msra.mxu0 0.0
        %1629 = vmatprep.subr.mxu0 0.0
        %1630 = vmatpush1.msra.mxu0 0.0
        %1631 = vmatprep.subr.mxu0 0.0
        %1632 = vmatpush1.msra.mxu0 0.0
        %1633 = vmatprep.subr.mxu0 0.0
        %1634 = vmatpush1.msra.mxu0 0.0
        %1635 = vmatprep.subr.mxu0 0.0
        %1636 = vmatpush1.msra.mxu0 0.0
        %1637 = vmatprep.subr.mxu0 0.0
        %1638 = vmatpush1.msra.mxu0 0.0
        %1639 = vmatprep.subr.mxu0 0.0
        %1640 = vmatpush1.msra.mxu0 %v1612
        %1641 = vmatprep.subr.mxu0 0.0
        %1642 = vmatpush1.msra.mxu0 %v1611
        %1643 = vmatprep.subr.mxu0 0.0
        %1644 = vmatpush1.msra.mxu0 %v1610
        %1645 = vmatprep.subr.mxu0 0.0
        %1646 = vmatpush1.msra.mxu0 %v1609
        %1647 = vmatprep.subr.mxu0 0.0
        %1648 = vmatpush1.msra.mxu0 %v1608
        %1649 = vmatprep.subr.mxu0 0.0
        %1650 = vmatpush1.msra.mxu0 %v1607
        %1651 = vmatprep.subr.mxu0 0.0
        %1652 = vmatpush1.msra.mxu0 %v1606
        %1653 = vmatprep.subr.mxu0 0.0
        %1654 = vmatpush1.msra.mxu0 %v1605
        %1655 = vmatprep.subr.mxu0 0.0
        %1656 = vmatpush2.msra.mxu0 0.0
        %1657 = vmatprep.subr.mxu0 0.0
        %1658 = vmatpush2.msra.mxu0 0.0
        %1659 = vmatprep.subr.mxu0 0.0
        %1660 = vmatpush2.msra.mxu0 0.0
        %1661 = vmatprep.subr.mxu0 0.0
        %1662 = vmatpush2.msra.mxu0 0.0
        %1663 = vmatprep.subr.mxu0 0.0
        %1664 = vmatpush2.msra.mxu0 0.0
        %1665 = vmatprep.subr.mxu0 0.0
        %1666 = vmatpush2.msra.mxu0 0.0
        %1667 = vmatprep.subr.mxu0 0.0
        %1668 = vmatpush2.msra.mxu0 0.0
        %1669 = vmatprep.subr.mxu0 0.0
        %1670 = vmatpush2.msra.mxu0 0.0
        %1671 = vmatprep.subr.mxu0 0.0
        %1672 = vmatpush2.msra.mxu0 0.0
        %1673 = vmatprep.subr.mxu0 0.0
        %1674 = vmatpush2.msra.mxu0 0.0
        %1675 = vmatprep.subr.mxu0 0.0
        %1676 = vmatpush2.msra.mxu0 0.0
        %1677 = vmatprep.subr.mxu0 0.0
        %1678 = vmatpush2.msra.mxu0 0.0
        %1679 = vmatprep.subr.mxu0 0.0
        %1680 = vmatpush2.msra.mxu0 0.0
        %1681 = vmatprep.subr.mxu0 0.0
        %1682 = vmatpush2.msra.mxu0 0.0
        %1683 = vmatprep.subr.mxu0 0.0
        %1684 = vmatpush2.msra.mxu0 0.0
        %1685 = vmatprep.subr.mxu0 0.0
        %1686 = vmatpush2.msra.mxu0 0.0
        %1687 = vmatprep.mubr.f32.mxu0 0.0
        %1688 = vmatmul.mubr.f32.gmra.mxu0 %v1615
        %v1689 = vpop.f32.mrf.mxu0
        %v1690 = vadd.f32 0.0, %v1689
        %v1691 = vpop.f32.mrf.mxu0
        %1692 = vmatprep.mubr.f32.mxu0 0.0
        %1693 = vmatmul.mubr.f32.gmra.mxu0 %v1618
        %v1694 = vpop.f32.mrf.mxu0
        %v1695 = vadd.f32 0.0, %v1694
        %v1696 = vpop.f32.mrf.mxu0
        %1697 = vmatprep.mubr.f32.mxu0 0.0
        %1698 = vmatmul.mubr.f32.gmra.mxu0 %v1621
        %v1699 = vpop.f32.mrf.mxu0
        %v1700 = vadd.f32 0.0, %v1699
        %v1701 = vpop.f32.mrf.mxu0
        %1702 = vdwg.mxu0
        %v1703 = vadd.f32 %v1416, %v1690
        %v1704 = vadd.f32 %v1417, %v1695
        %v1705 = vadd.f32 %v1418, %v1700
        %v1706 = vld [vmem:[#allocation4] sm:$0x1]
        %v1708 = vlaneseq
        %v1709 = vshrl.u32 %v1708, 7
        %v1710 = vsub.s32 0, %v1709
        %v1711 = vrot.slane %v1706, %v1710
        %v1713 = vadd.f32 %v1703, %v1711
        %v1714 = vadd.f32 %v1704, %v1711
        %v1715 = vadd.f32 %v1705, %v1711
        %s1716 = scalar_lea.vmem %s3, 1
        %v1717 = vld [vmem:[%s1716] sm:$0x1]
        %s1718 = scalar_lea.vmem %s4, 1
        %v1719 = vld [vmem:[%s1718] sm:$0x1]
        %v1720 = vsel %vm598, %v1713, 0.0
        %1721 = vadd.xlane.f32.xlu0 %v1720
        %v1722 = vpop.xlane.xlu0 %1721
        %v1723 = vsel %vm598, %v1714, 0.0
        %1724 = vadd.xlane.f32.xlu0 %v1723
        %v1725 = vpop.xlane.xlu0 %1724
        %v1726 = vsel %vm605, %v1715, 0.0
        %1727 = vadd.xlane.f32.xlu0 %v1726
        %v1728 = vpop.xlane.xlu0 %1727
        %v1729 = vmul.f32 %v1722, %v609
        %v1730 = vmul.f32 %v1725, %v609
        %v1731 = vmul.f32 %v1728, %v609
        %v1732 = vsub.f32 %v1713, %v1729
        %v1733 = vsub.f32 %v1714, %v1730
        %v1734 = vsub.f32 %v1715, %v1731
        %v1735 = vmul.f32 %v1732, %v1732
        %v1736 = vmul.f32 %v1733, %v1733
        %v1737 = vmul.f32 %v1734, %v1734
        %v1738 = vsel %vm598, %v1735, 0.0
        %1739 = vadd.xlane.f32.xlu0 %v1738
        %v1740 = vpop.xlane.xlu0 %1739
        %v1741 = vsel %vm598, %v1736, 0.0
        %1742 = vadd.xlane.f32.xlu0 %v1741
        %v1743 = vpop.xlane.xlu0 %1742
        %v1744 = vsel %vm605, %v1737, 0.0
        %1745 = vadd.xlane.f32.xlu0 %v1744
        %v1746 = vpop.xlane.xlu0 %1745
        %v1747 = vmul.f32 %v1740, %v609
        %v1748 = vmul.f32 %v1743, %v609
        %v1749 = vmul.f32 %v1746, %v609
        %v1750 = vadd.f32 %v1747, 1e-05
        %v1751 = vadd.f32 %v1748, 1e-05
        %v1752 = vadd.f32 %v1749, 1e-05
        %v1753 = vrsqrt.pop %v1750
        %v1754 = vrsqrt.pop %v1751
        %v1755 = vrsqrt.pop %v1752
        %v1756 = vmul.f32 %v1732, %v1753
        %v1757 = vmul.f32 %v1733, %v1754
        %v1758 = vmul.f32 %v1734, %v1755
        %v1760 = vlaneseq
        %v1761 = vshrl.u32 %v1760, 7
        %v1762 = vsub.s32 0, %v1761
        %v1763 = vrot.slane %v1717, %v1762
        %v1765 = vmul.f32 %v1756, %v1763
        %v1766 = vmul.f32 %v1757, %v1763
        %v1767 = vmul.f32 %v1758, %v1763
        %v1769 = vlaneseq
        %v1770 = vshrl.u32 %v1769, 7
        %v1771 = vsub.s32 0, %v1770
        %v1772 = vrot.slane %v1719, %v1771
        %v1774 = vadd.f32 %v1765, %v1772
        %v1775 = vadd.f32 %v1766, %v1772
        %v1776 = vadd.f32 %v1767, %v1772
        %s1777 = scalar_lea.vmem %s5, 32
        %v1778 = vld [vmem:[%s1777] sm:$0xff]
        %v1779 = vld [vmem:[%s1777 + $0x8] sm:$0xff]
        %v1780 = vld [vmem:[%s1777 + $0x10] sm:$0xff]
        %v1781 = vld [vmem:[%s1777 + $0x18] sm:$0xff]
        %v1783 = vsel %vm598, %v1774, 0
        %v1786 = vsel %vm598, %v1775, 0
        %v1789 = vsel %vm598, %v1776, 0
        %1791 = vmatprep.subr.mxu0 0.0
        %1792 = vmatpush1.msra.mxu0 0.0
        %1793 = vmatprep.subr.mxu0 0.0
        %1794 = vmatpush1.msra.mxu0 0.0
        %1795 = vmatprep.subr.mxu0 0.0
        %1796 = vmatpush1.msra.mxu0 0.0
        %1797 = vmatprep.subr.mxu0 0.0
        %1798 = vmatpush1.msra.mxu0 0.0
        %1799 = vmatprep.subr.mxu0 0.0
        %1800 = vmatpush1.msra.mxu0 0.0
        %1801 = vmatprep.subr.mxu0 0.0
        %1802 = vmatpush1.msra.mxu0 0.0
        %1803 = vmatprep.subr.mxu0 0.0
        %1804 = vmatpush1.msra.mxu0 0.0
        %1805 = vmatprep.subr.mxu0 0.0
        %1806 = vmatpush1.msra.mxu0 0.0
        %1807 = vmatprep.subr.mxu0 0.0
        %1808 = vmatpush1.msra.mxu0 0.0
        %1809 = vmatprep.subr.mxu0 0.0
        %1810 = vmatpush1.msra.mxu0 0.0
        %1811 = vmatprep.subr.mxu0 0.0
        %1812 = vmatpush1.msra.mxu0 0.0
        %1813 = vmatprep.subr.mxu0 0.0
        %1814 = vmatpush1.msra.mxu0 0.0
        %1815 = vmatprep.subr.mxu0 0.0
        %1816 = vmatpush1.msra.mxu0 %v1781
        %1817 = vmatprep.subr.mxu0 0.0
        %1818 = vmatpush1.msra.mxu0 %v1780
        %1819 = vmatprep.subr.mxu0 0.0
        %1820 = vmatpush1.msra.mxu0 %v1779
        %1821 = vmatprep.subr.mxu0 0.0
        %1822 = vmatpush1.msra.mxu0 %v1778
        %1823 = vmatprep.subr.mxu0 0.0
        %1824 = vmatpush2.msra.mxu0 0.0
        %1825 = vmatprep.subr.mxu0 0.0
        %1826 = vmatpush2.msra.mxu0 0.0
        %1827 = vmatprep.subr.mxu0 0.0
        %1828 = vmatpush2.msra.mxu0 0.0
        %1829 = vmatprep.subr.mxu0 0.0
        %1830 = vmatpush2.msra.mxu0 0.0
        %1831 = vmatprep.subr.mxu0 0.0
        %1832 = vmatpush2.msra.mxu0 0.0
        %1833 = vmatprep.subr.mxu0 0.0
        %1834 = vmatpush2.msra.mxu0 0.0
        %1835 = vmatprep.subr.mxu0 0.0
        %1836 = vmatpush2.msra.mxu0 0.0
        %1837 = vmatprep.subr.mxu0 0.0
        %1838 = vmatpush2.msra.mxu0 0.0
        %1839 = vmatprep.subr.mxu0 0.0
        %1840 = vmatpush2.msra.mxu0 0.0
        %1841 = vmatprep.subr.mxu0 0.0
        %1842 = vmatpush2.msra.mxu0 0.0
        %1843 = vmatprep.subr.mxu0 0.0
        %1844 = vmatpush2.msra.mxu0 0.0
        %1845 = vmatprep.subr.mxu0 0.0
        %1846 = vmatpush2.msra.mxu0 0.0
        %1847 = vmatprep.subr.mxu0 0.0
        %1848 = vmatpush2.msra.mxu0 0.0
        %1849 = vmatprep.subr.mxu0 0.0
        %1850 = vmatpush2.msra.mxu0 0.0
        %1851 = vmatprep.subr.mxu0 0.0
        %1852 = vmatpush2.msra.mxu0 0.0
        %1853 = vmatprep.subr.mxu0 0.0
        %1854 = vmatpush2.msra.mxu0 0.0
        %1855 = vmatprep.mubr.f32.mxu0 0.0
        %1856 = vmatmul.mubr.f32.gmra.mxu0 %v1783
        %v1857 = vpop.f32.mrf.mxu0
        %v1858 = vadd.f32 0.0, %v1857
        %v1859 = vpop.f32.mrf.mxu0
        %1860 = vmatprep.mubr.f32.mxu0 0.0
        %1861 = vmatmul.mubr.f32.gmra.mxu0 %v1786
        %v1862 = vpop.f32.mrf.mxu0
        %v1863 = vadd.f32 0.0, %v1862
        %v1864 = vpop.f32.mrf.mxu0
        %1865 = vmatprep.mubr.f32.mxu0 0.0
        %1866 = vmatmul.mubr.f32.gmra.mxu0 %v1789
        %v1867 = vpop.f32.mrf.mxu0
        %v1868 = vadd.f32 0.0, %v1867
        %v1869 = vpop.f32.mrf.mxu0
        %1870 = vdwg.mxu0
        %1874 = vrot.lane.b32.xlu0 %v1858, 96
        %v1875 = vpop.permute.xlu0 %1874
        %1876 = vrot.lane.b32.xlu0 %v1863, 96
        %v1877 = vpop.permute.xlu0 %1876
        %1878 = vrot.lane.b32.xlu0 %v1868, 96
        %v1879 = vpop.permute.xlu0 %1878
        %v1880 = vsel %vm506, %v1858, 0
        %v1882 = vsel %vm506, %v1863, 0
        %v1884 = vsel %vm506, %v1868, 0
        %v1886 = vsel %vm506, %v1875, 0
        %v1888 = vsel %vm506, %v1877, 0
        %v1890 = vsel %vm506, %v1879, 0
        %1892 = vmatprep.subr.mxu0 0.0
        %1893 = vmatpush1.xpose.msra.mxu0 0.0
        %1894 = vmatprep.subr.mxu0 0.0
        %1895 = vmatpush1.xpose.msra.mxu0 0.0
        %1896 = vmatprep.subr.mxu0 0.0
        %1897 = vmatpush1.xpose.msra.mxu0 0.0
        %1898 = vmatprep.subr.mxu0 0.0
        %1899 = vmatpush1.xpose.msra.mxu0 0.0
        %1900 = vmatprep.subr.mxu0 0.0
        %1901 = vmatpush1.xpose.msra.mxu0 0.0
        %1902 = vmatprep.subr.mxu0 0.0
        %1903 = vmatpush1.xpose.msra.mxu0 0.0
        %1904 = vmatprep.subr.mxu0 0.0
        %1905 = vmatpush1.xpose.msra.mxu0 0.0
        %1906 = vmatprep.subr.mxu0 0.0
        %1907 = vmatpush1.xpose.msra.mxu0 0.0
        %1908 = vmatprep.subr.mxu0 0.0
        %1909 = vmatpush1.xpose.msra.mxu0 0.0
        %1910 = vmatprep.subr.mxu0 0.0
        %1911 = vmatpush1.xpose.msra.mxu0 0.0
        %1912 = vmatprep.subr.mxu0 0.0
        %1913 = vmatpush1.xpose.msra.mxu0 0.0
        %1914 = vmatprep.subr.mxu0 0.0
        %1915 = vmatpush1.xpose.msra.mxu0 0.0
        %1916 = vmatprep.subr.mxu0 0.0
        %1917 = vmatpush1.xpose.msra.mxu0 0.0
        %1918 = vmatprep.subr.mxu0 0.0
        %1919 = vmatpush1.xpose.msra.mxu0 %v1890
        %1920 = vmatprep.subr.mxu0 0.0
        %1921 = vmatpush1.xpose.msra.mxu0 %v1888
        %1922 = vmatprep.subr.mxu0 0.0
        %1923 = vmatpush1.xpose.msra.mxu0 %v1886
        %1924 = vmatprep.subr.mxu0 0.0
        %1925 = vmatpush2.xpose.msra.mxu0 0.0
        %1926 = vmatprep.subr.mxu0 0.0
        %1927 = vmatpush2.xpose.msra.mxu0 0.0
        %1928 = vmatprep.subr.mxu0 0.0
        %1929 = vmatpush2.xpose.msra.mxu0 0.0
        %1930 = vmatprep.subr.mxu0 0.0
        %1931 = vmatpush2.xpose.msra.mxu0 0.0
        %1932 = vmatprep.subr.mxu0 0.0
        %1933 = vmatpush2.xpose.msra.mxu0 0.0
        %1934 = vmatprep.subr.mxu0 0.0
        %1935 = vmatpush2.xpose.msra.mxu0 0.0
        %1936 = vmatprep.subr.mxu0 0.0
        %1937 = vmatpush2.xpose.msra.mxu0 0.0
        %1938 = vmatprep.subr.mxu0 0.0
        %1939 = vmatpush2.xpose.msra.mxu0 0.0
        %1940 = vmatprep.subr.mxu0 0.0
        %1941 = vmatpush2.xpose.msra.mxu0 0.0
        %1942 = vmatprep.subr.mxu0 0.0
        %1943 = vmatpush2.xpose.msra.mxu0 0.0
        %1944 = vmatprep.subr.mxu0 0.0
        %1945 = vmatpush2.xpose.msra.mxu0 0.0
        %1946 = vmatprep.subr.mxu0 0.0
        %1947 = vmatpush2.xpose.msra.mxu0 0.0
        %1948 = vmatprep.subr.mxu0 0.0
        %1949 = vmatpush2.xpose.msra.mxu0 0.0
        %1950 = vmatprep.subr.mxu0 0.0
        %1951 = vmatpush2.xpose.msra.mxu0 0.0
        %1952 = vmatprep.subr.mxu0 0.0
        %1953 = vmatpush2.xpose.msra.mxu0 0.0
        %1954 = vmatprep.subr.mxu0 0.0
        %1955 = vmatpush2.xpose.msra.mxu0 0.0
        %1956 = vmatprep.mubr.f32.mxu0 0.0
        %1957 = vmatmul.mubr.f32.gmra.mxu0 %v1880
        %v1958 = vpop.f32.mrf.mxu0
        %v1959 = vadd.f32 0.0, %v1958
        %v1960 = vpop.f32.mrf.mxu0
        %1961 = vmatprep.mubr.f32.mxu0 0.0
        %1962 = vmatmul.mubr.f32.gmra.mxu0 %v1882
        %v1963 = vpop.f32.mrf.mxu0
        %v1964 = vadd.f32 0.0, %v1963
        %v1965 = vpop.f32.mrf.mxu0
        %1966 = vmatprep.mubr.f32.mxu0 0.0
        %1967 = vmatmul.mubr.f32.gmra.mxu0 %v1884
        %v1968 = vpop.f32.mrf.mxu0
        %v1969 = vadd.f32 0.0, %v1968
        %v1970 = vpop.f32.mrf.mxu0
        %1971 = vdwg.mxu0
        %v1972 = vsel %vm852, %v1959, -inf
        %1973 = vmax.xlane.f32.xlu0 %v1972
        %v1974 = vpop.xlane.xlu0 %1973
        %v1975 = vsel %vm852, %v1964, -inf
        %1976 = vmax.xlane.f32.xlu0 %v1975
        %v1977 = vpop.xlane.xlu0 %1976
        %v1978 = vsel %vm859, %v1969, -inf
        %1979 = vmax.xlane.f32.xlu0 %v1978
        %v1980 = vpop.xlane.xlu0 %1979
        %v1981 = vsub.f32 %v1959, %v1974
        %v1982 = vsub.f32 %v1964, %v1977
        %v1983 = vsub.f32 %v1969, %v1980
        %v1984 = vmul.f32 %v1981, 1.442695
        %v1985 = vpow.pop %v1984
        %v1986 = vmul.f32 %v1982, 1.442695
        %v1987 = vpow.pop %v1986
        %v1988 = vmul.f32 %v1983, 1.442695
        %v1989 = vpow.pop %v1988
        %v1990 = vsel %vm852, %v1985, 0.0
        %1991 = vadd.xlane.f32.xlu0 %v1990
        %v1992 = vpop.xlane.xlu0 %1991
        %v1993 = vsel %vm852, %v1987, 0.0
        %1994 = vadd.xlane.f32.xlu0 %v1993
        %v1995 = vpop.xlane.xlu0 %1994
        %v1996 = vsel %vm859, %v1989, 0.0
        %1997 = vadd.xlane.f32.xlu0 %v1996
        %v1998 = vpop.xlane.xlu0 %1997
        %v1999 = vrcp.pop %v1992
        %v2000 = vrcp.pop %v1995
        %v2001 = vrcp.pop %v1998
        %v2002 = vmul.f32 %v1985, %v1999
        %v2003 = vmul.f32 %v1987, %v2000
        %v2004 = vmul.f32 %v1989, %v2001
        %2005 = vrot.lane.b32.xlu0 %v1858, 64
        %v2006 = vpop.permute.xlu0 %2005
        %2007 = vrot.lane.b32.xlu0 %v1863, 64
        %v2008 = vpop.permute.xlu0 %2007
        %2009 = vrot.lane.b32.xlu0 %v1868, 64
        %v2010 = vpop.permute.xlu0 %2009
        %v2014 = vsel %vm852, %v2002, 0
        %v2017 = vsel %vm852, %v2003, 0
        %v2020 = vsel %vm852, %v2004, 0
        %v2022 = vsel %vm904, %v2010, 0
        %2024 = vmatprep.subr.mxu0 0.0
        %2025 = vmatpush1.msra.mxu0 0.0
        %2026 = vmatprep.subr.mxu0 0.0
        %2027 = vmatpush1.msra.mxu0 0.0
        %2028 = vmatprep.subr.mxu0 0.0
        %2029 = vmatpush1.msra.mxu0 0.0
        %2030 = vmatprep.subr.mxu0 0.0
        %2031 = vmatpush1.msra.mxu0 0.0
        %2032 = vmatprep.subr.mxu0 0.0
        %2033 = vmatpush1.msra.mxu0 0.0
        %2034 = vmatprep.subr.mxu0 0.0
        %2035 = vmatpush1.msra.mxu0 0.0
        %2036 = vmatprep.subr.mxu0 0.0
        %2037 = vmatpush1.msra.mxu0 0.0
        %2038 = vmatprep.subr.mxu0 0.0
        %2039 = vmatpush1.msra.mxu0 0.0
        %2040 = vmatprep.subr.mxu0 0.0
        %2041 = vmatpush1.msra.mxu0 0.0
        %2042 = vmatprep.subr.mxu0 0.0
        %2043 = vmatpush1.msra.mxu0 0.0
        %2044 = vmatprep.subr.mxu0 0.0
        %2045 = vmatpush1.msra.mxu0 0.0
        %2046 = vmatprep.subr.mxu0 0.0
        %2047 = vmatpush1.msra.mxu0 0.0
        %2048 = vmatprep.subr.mxu0 0.0
        %2049 = vmatpush1.msra.mxu0 0.0
        %2050 = vmatprep.subr.mxu0 0.0
        %2051 = vmatpush1.msra.mxu0 %v2022
        %2052 = vmatprep.subr.mxu0 0.0
        %2053 = vmatpush1.msra.mxu0 %v2008
        %2054 = vmatprep.subr.mxu0 0.0
        %2055 = vmatpush1.msra.mxu0 %v2006
        %2056 = vmatprep.subr.mxu0 0.0
        %2057 = vmatpush2.msra.mxu0 0.0
        %2058 = vmatprep.subr.mxu0 0.0
        %2059 = vmatpush2.msra.mxu0 0.0
        %2060 = vmatprep.subr.mxu0 0.0
        %2061 = vmatpush2.msra.mxu0 0.0
        %2062 = vmatprep.subr.mxu0 0.0
        %2063 = vmatpush2.msra.mxu0 0.0
        %2064 = vmatprep.subr.mxu0 0.0
        %2065 = vmatpush2.msra.mxu0 0.0
        %2066 = vmatprep.subr.mxu0 0.0
        %2067 = vmatpush2.msra.mxu0 0.0
        %2068 = vmatprep.subr.mxu0 0.0
        %2069 = vmatpush2.msra.mxu0 0.0
        %2070 = vmatprep.subr.mxu0 0.0
        %2071 = vmatpush2.msra.mxu0 0.0
        %2072 = vmatprep.subr.mxu0 0.0
        %2073 = vmatpush2.msra.mxu0 0.0
        %2074 = vmatprep.subr.mxu0 0.0
        %2075 = vmatpush2.msra.mxu0 0.0
        %2076 = vmatprep.subr.mxu0 0.0
        %2077 = vmatpush2.msra.mxu0 0.0
        %2078 = vmatprep.subr.mxu0 0.0
        %2079 = vmatpush2.msra.mxu0 0.0
        %2080 = vmatprep.subr.mxu0 0.0
        %2081 = vmatpush2.msra.mxu0 0.0
        %2082 = vmatprep.subr.mxu0 0.0
        %2083 = vmatpush2.msra.mxu0 0.0
        %2084 = vmatprep.subr.mxu0 0.0
        %2085 = vmatpush2.msra.mxu0 0.0
        %2086 = vmatprep.subr.mxu0 0.0
        %2087 = vmatpush2.msra.mxu0 0.0
        %2088 = vmatprep.mubr.f32.mxu0 0.0
        %2089 = vmatmul.mubr.f32.gmra.mxu0 %v2014
        %v2090 = vpop.f32.mrf.mxu0
        %v2091 = vadd.f32 0.0, %v2090
        %v2092 = vpop.f32.mrf.mxu0
        %2093 = vmatprep.mubr.f32.mxu0 0.0
        %2094 = vmatmul.mubr.f32.gmra.mxu0 %v2017
        %v2095 = vpop.f32.mrf.mxu0
        %v2096 = vadd.f32 0.0, %v2095
        %v2097 = vpop.f32.mrf.mxu0
        %2098 = vmatprep.mubr.f32.mxu0 0.0
        %2099 = vmatmul.mubr.f32.gmra.mxu0 %v2020
        %v2100 = vpop.f32.mrf.mxu0
        %v2101 = vadd.f32 0.0, %v2100
        %v2102 = vpop.f32.mrf.mxu0
        %2103 = vdwg.mxu0
        %s2104 = scalar_lea.vmem %s6, 32
        %v2105 = vld [vmem:[%s2104] sm:$0xff]
        %v2106 = vld [vmem:[%s2104 + $0x8] sm:$0xff]
        %2107 = vrot.lane.b32.xlu0 %v1858, 112
        %v2108 = vpop.permute.xlu0 %2107
        %2109 = vrot.lane.b32.xlu0 %v1863, 112
        %v2110 = vpop.permute.xlu0 %2109
        %2111 = vrot.lane.b32.xlu0 %v1868, 112
        %v2112 = vpop.permute.xlu0 %2111
        %2113 = vrot.lane.b32.xlu0 %v1858, 80
        %v2114 = vpop.permute.xlu0 %2113
        %2115 = vrot.lane.b32.xlu0 %v1863, 80
        %v2116 = vpop.permute.xlu0 %2115
        %2117 = vrot.lane.b32.xlu0 %v1868, 80
        %v2118 = vpop.permute.xlu0 %2117
        %v2119 = vsel %vm506, %v2108, 0
        %v2121 = vsel %vm506, %v2110, 0
        %v2123 = vsel %vm506, %v2112, 0
        %v2125 = vsel %vm506, %v2114, 0
        %v2127 = vsel %vm506, %v2116, 0
        %v2129 = vsel %vm506, %v2118, 0
        %2131 = vmatprep.subr.mxu0 0.0
        %2132 = vmatpush1.xpose.msra.mxu0 0.0
        %2133 = vmatprep.subr.mxu0 0.0
        %2134 = vmatpush1.xpose.msra.mxu0 0.0
        %2135 = vmatprep.subr.mxu0 0.0
        %2136 = vmatpush1.xpose.msra.mxu0 0.0
        %2137 = vmatprep.subr.mxu0 0.0
        %2138 = vmatpush1.xpose.msra.mxu0 0.0
        %2139 = vmatprep.subr.mxu0 0.0
        %2140 = vmatpush1.xpose.msra.mxu0 0.0
        %2141 = vmatprep.subr.mxu0 0.0
        %2142 = vmatpush1.xpose.msra.mxu0 0.0
        %2143 = vmatprep.subr.mxu0 0.0
        %2144 = vmatpush1.xpose.msra.mxu0 0.0
        %2145 = vmatprep.subr.mxu0 0.0
        %2146 = vmatpush1.xpose.msra.mxu0 0.0
        %2147 = vmatprep.subr.mxu0 0.0
        %2148 = vmatpush1.xpose.msra.mxu0 0.0
        %2149 = vmatprep.subr.mxu0 0.0
        %2150 = vmatpush1.xpose.msra.mxu0 0.0
        %2151 = vmatprep.subr.mxu0 0.0
        %2152 = vmatpush1.xpose.msra.mxu0 0.0
        %2153 = vmatprep.subr.mxu0 0.0
        %2154 = vmatpush1.xpose.msra.mxu0 0.0
        %2155 = vmatprep.subr.mxu0 0.0
        %2156 = vmatpush1.xpose.msra.mxu0 0.0
        %2157 = vmatprep.subr.mxu0 0.0
        %2158 = vmatpush1.xpose.msra.mxu0 %v2129
        %2159 = vmatprep.subr.mxu0 0.0
        %2160 = vmatpush1.xpose.msra.mxu0 %v2127
        %2161 = vmatprep.subr.mxu0 0.0
        %2162 = vmatpush1.xpose.msra.mxu0 %v2125
        %2163 = vmatprep.subr.mxu0 0.0
        %2164 = vmatpush2.xpose.msra.mxu0 0.0
        %2165 = vmatprep.subr.mxu0 0.0
        %2166 = vmatpush2.xpose.msra.mxu0 0.0
        %2167 = vmatprep.subr.mxu0 0.0
        %2168 = vmatpush2.xpose.msra.mxu0 0.0
        %2169 = vmatprep.subr.mxu0 0.0
        %2170 = vmatpush2.xpose.msra.mxu0 0.0
        %2171 = vmatprep.subr.mxu0 0.0
        %2172 = vmatpush2.xpose.msra.mxu0 0.0
        %2173 = vmatprep.subr.mxu0 0.0
        %2174 = vmatpush2.xpose.msra.mxu0 0.0
        %2175 = vmatprep.subr.mxu0 0.0
        %2176 = vmatpush2.xpose.msra.mxu0 0.0
        %2177 = vmatprep.subr.mxu0 0.0
        %2178 = vmatpush2.xpose.msra.mxu0 0.0
        %2179 = vmatprep.subr.mxu0 0.0
        %2180 = vmatpush2.xpose.msra.mxu0 0.0
        %2181 = vmatprep.subr.mxu0 0.0
        %2182 = vmatpush2.xpose.msra.mxu0 0.0
        %2183 = vmatprep.subr.mxu0 0.0
        %2184 = vmatpush2.xpose.msra.mxu0 0.0
        %2185 = vmatprep.subr.mxu0 0.0
        %2186 = vmatpush2.xpose.msra.mxu0 0.0
        %2187 = vmatprep.subr.mxu0 0.0
        %2188 = vmatpush2.xpose.msra.mxu0 0.0
        %2189 = vmatprep.subr.mxu0 0.0
        %2190 = vmatpush2.xpose.msra.mxu0 0.0
        %2191 = vmatprep.subr.mxu0 0.0
        %2192 = vmatpush2.xpose.msra.mxu0 0.0
        %2193 = vmatprep.subr.mxu0 0.0
        %2194 = vmatpush2.xpose.msra.mxu0 0.0
        %2195 = vmatprep.mubr.f32.mxu0 0.0
        %2196 = vmatmul.mubr.f32.gmra.mxu0 %v2119
        %v2197 = vpop.f32.mrf.mxu0
        %v2198 = vadd.f32 0.0, %v2197
        %v2199 = vpop.f32.mrf.mxu0
        %2200 = vmatprep.mubr.f32.mxu0 0.0
        %2201 = vmatmul.mubr.f32.gmra.mxu0 %v2121
        %v2202 = vpop.f32.mrf.mxu0
        %v2203 = vadd.f32 0.0, %v2202
        %v2204 = vpop.f32.mrf.mxu0
        %2205 = vmatprep.mubr.f32.mxu0 0.0
        %2206 = vmatmul.mubr.f32.gmra.mxu0 %v2123
        %v2207 = vpop.f32.mrf.mxu0
        %v2208 = vadd.f32 0.0, %v2207
        %v2209 = vpop.f32.mrf.mxu0
        %2210 = vdwg.mxu0
        %v2211 = vsel %vm852, %v2198, -inf
        %2212 = vmax.xlane.f32.xlu0 %v2211
        %v2213 = vpop.xlane.xlu0 %2212
        %v2214 = vsel %vm852, %v2203, -inf
        %2215 = vmax.xlane.f32.xlu0 %v2214
        %v2216 = vpop.xlane.xlu0 %2215
        %v2217 = vsel %vm859, %v2208, -inf
        %2218 = vmax.xlane.f32.xlu0 %v2217
        %v2219 = vpop.xlane.xlu0 %2218
        %v2220 = vsub.f32 %v2198, %v2213
        %v2221 = vsub.f32 %v2203, %v2216
        %v2222 = vsub.f32 %v2208, %v2219
        %v2223 = vmul.f32 %v2220, 1.442695
        %v2224 = vpow.pop %v2223
        %v2225 = vmul.f32 %v2221, 1.442695
        %v2226 = vpow.pop %v2225
        %v2227 = vmul.f32 %v2222, 1.442695
        %v2228 = vpow.pop %v2227
        %v2229 = vsel %vm852, %v2224, 0.0
        %2230 = vadd.xlane.f32.xlu0 %v2229
        %v2231 = vpop.xlane.xlu0 %2230
        %v2232 = vsel %vm852, %v2226, 0.0
        %2233 = vadd.xlane.f32.xlu0 %v2232
        %v2234 = vpop.xlane.xlu0 %2233
        %v2235 = vsel %vm859, %v2228, 0.0
        %2236 = vadd.xlane.f32.xlu0 %v2235
        %v2237 = vpop.xlane.xlu0 %2236
        %v2238 = vrcp.pop %v2231
        %v2239 = vrcp.pop %v2234
        %v2240 = vrcp.pop %v2237
        %v2241 = vmul.f32 %v2224, %v2238
        %v2242 = vmul.f32 %v2226, %v2239
        %v2243 = vmul.f32 %v2228, %v2240
        %2244 = vrot.lane.b32.xlu0 %v1858, 48
        %v2245 = vpop.permute.xlu0 %2244
        %2246 = vrot.lane.b32.xlu0 %v1863, 48
        %v2247 = vpop.permute.xlu0 %2246
        %2248 = vrot.lane.b32.xlu0 %v1868, 48
        %v2249 = vpop.permute.xlu0 %2248
        %v2253 = vsel %vm852, %v2241, 0
        %v2256 = vsel %vm852, %v2242, 0
        %v2259 = vsel %vm852, %v2243, 0
        %v2261 = vsel %vm904, %v2249, 0
        %2263 = vmatprep.subr.mxu0 0.0
        %2264 = vmatpush1.msra.mxu0 0.0
        %2265 = vmatprep.subr.mxu0 0.0
        %2266 = vmatpush1.msra.mxu0 0.0
        %2267 = vmatprep.subr.mxu0 0.0
        %2268 = vmatpush1.msra.mxu0 0.0
        %2269 = vmatprep.subr.mxu0 0.0
        %2270 = vmatpush1.msra.mxu0 0.0
        %2271 = vmatprep.subr.mxu0 0.0
        %2272 = vmatpush1.msra.mxu0 0.0
        %2273 = vmatprep.subr.mxu0 0.0
        %2274 = vmatpush1.msra.mxu0 0.0
        %2275 = vmatprep.subr.mxu0 0.0
        %2276 = vmatpush1.msra.mxu0 0.0
        %2277 = vmatprep.subr.mxu0 0.0
        %2278 = vmatpush1.msra.mxu0 0.0
        %2279 = vmatprep.subr.mxu0 0.0
        %2280 = vmatpush1.msra.mxu0 0.0
        %2281 = vmatprep.subr.mxu0 0.0
        %2282 = vmatpush1.msra.mxu0 0.0
        %2283 = vmatprep.subr.mxu0 0.0
        %2284 = vmatpush1.msra.mxu0 0.0
        %2285 = vmatprep.subr.mxu0 0.0
        %2286 = vmatpush1.msra.mxu0 0.0
        %2287 = vmatprep.subr.mxu0 0.0
        %2288 = vmatpush1.msra.mxu0 0.0
        %2289 = vmatprep.subr.mxu0 0.0
        %2290 = vmatpush1.msra.mxu0 %v2261
        %2291 = vmatprep.subr.mxu0 0.0
        %2292 = vmatpush1.msra.mxu0 %v2247
        %2293 = vmatprep.subr.mxu0 0.0
        %2294 = vmatpush1.msra.mxu0 %v2245
        %2295 = vmatprep.subr.mxu0 0.0
        %2296 = vmatpush2.msra.mxu0 0.0
        %2297 = vmatprep.subr.mxu0 0.0
        %2298 = vmatpush2.msra.mxu0 0.0
        %2299 = vmatprep.subr.mxu0 0.0
        %2300 = vmatpush2.msra.mxu0 0.0
        %2301 = vmatprep.subr.mxu0 0.0
        %2302 = vmatpush2.msra.mxu0 0.0
        %2303 = vmatprep.subr.mxu0 0.0
        %2304 = vmatpush2.msra.mxu0 0.0
        %2305 = vmatprep.subr.mxu0 0.0
        %2306 = vmatpush2.msra.mxu0 0.0
        %2307 = vmatprep.subr.mxu0 0.0
        %2308 = vmatpush2.msra.mxu0 0.0
        %2309 = vmatprep.subr.mxu0 0.0
        %2310 = vmatpush2.msra.mxu0 0.0
        %2311 = vmatprep.subr.mxu0 0.0
        %2312 = vmatpush2.msra.mxu0 0.0
        %2313 = vmatprep.subr.mxu0 0.0
        %2314 = vmatpush2.msra.mxu0 0.0
        %2315 = vmatprep.subr.mxu0 0.0
        %2316 = vmatpush2.msra.mxu0 0.0
        %2317 = vmatprep.subr.mxu0 0.0
        %2318 = vmatpush2.msra.mxu0 0.0
        %2319 = vmatprep.subr.mxu0 0.0
        %2320 = vmatpush2.msra.mxu0 0.0
        %2321 = vmatprep.subr.mxu0 0.0
        %2322 = vmatpush2.msra.mxu0 0.0
        %2323 = vmatprep.subr.mxu0 0.0
        %2324 = vmatpush2.msra.mxu0 0.0
        %2325 = vmatprep.subr.mxu0 0.0
        %2326 = vmatpush2.msra.mxu0 0.0
        %2327 = vmatprep.mubr.f32.mxu0 0.0
        %2328 = vmatmul.mubr.f32.gmra.mxu0 %v2253
        %v2329 = vpop.f32.mrf.mxu0
        %v2330 = vadd.f32 0.0, %v2329
        %v2331 = vpop.f32.mrf.mxu0
        %2332 = vmatprep.mubr.f32.mxu0 0.0
        %2333 = vmatmul.mubr.f32.gmra.mxu0 %v2256
        %v2334 = vpop.f32.mrf.mxu0
        %v2335 = vadd.f32 0.0, %v2334
        %v2336 = vpop.f32.mrf.mxu0
        %2337 = vmatprep.mubr.f32.mxu0 0.0
        %2338 = vmatmul.mubr.f32.gmra.mxu0 %v2259
        %v2339 = vpop.f32.mrf.mxu0
        %v2340 = vadd.f32 0.0, %v2339
        %v2341 = vpop.f32.mrf.mxu0
        %2342 = vdwg.mxu0
        %s2343 = scalar_lea.vmem %s6, 48
        %v2344 = vld [vmem:[%s2343] sm:$0xff]
        %v2345 = vld [vmem:[%s2343 + $0x8] sm:$0xff]
        %v2347 = vsel %vm506, %v2330, 0
        %v2350 = vsel %vm506, %v2335, 0
        %v2353 = vsel %vm506, %v2340, 0
        %2355 = vmatprep.subr.mxu0 0.0
        %2356 = vmatpush1.msra.mxu0 0.0
        %2357 = vmatprep.subr.mxu0 0.0
        %2358 = vmatpush1.msra.mxu0 0.0
        %2359 = vmatprep.subr.mxu0 0.0
        %2360 = vmatpush1.msra.mxu0 0.0
        %2361 = vmatprep.subr.mxu0 0.0
        %2362 = vmatpush1.msra.mxu0 0.0
        %2363 = vmatprep.subr.mxu0 0.0
        %2364 = vmatpush1.msra.mxu0 0.0
        %2365 = vmatprep.subr.mxu0 0.0
        %2366 = vmatpush1.msra.mxu0 0.0
        %2367 = vmatprep.subr.mxu0 0.0
        %2368 = vmatpush1.msra.mxu0 0.0
        %2369 = vmatprep.subr.mxu0 0.0
        %2370 = vmatpush1.msra.mxu0 0.0
        %2371 = vmatprep.subr.mxu0 0.0
        %2372 = vmatpush1.msra.mxu0 0.0
        %2373 = vmatprep.subr.mxu0 0.0
        %2374 = vmatpush1.msra.mxu0 0.0
        %2375 = vmatprep.subr.mxu0 0.0
        %2376 = vmatpush1.msra.mxu0 0.0
        %2377 = vmatprep.subr.mxu0 0.0
        %2378 = vmatpush1.msra.mxu0 0.0
        %2379 = vmatprep.subr.mxu0 0.0
        %2380 = vmatpush1.msra.mxu0 0.0
        %2381 = vmatprep.subr.mxu0 0.0
        %2382 = vmatpush1.msra.mxu0 0.0
        %2383 = vmatprep.subr.mxu0 0.0
        %2384 = vmatpush1.msra.mxu0 %v2345
        %2385 = vmatprep.subr.mxu0 0.0
        %2386 = vmatpush1.msra.mxu0 %v2344
        %2387 = vmatprep.subr.mxu0 0.0
        %2388 = vmatpush2.msra.mxu0 0.0
        %2389 = vmatprep.subr.mxu0 0.0
        %2390 = vmatpush2.msra.mxu0 0.0
        %2391 = vmatprep.subr.mxu0 0.0
        %2392 = vmatpush2.msra.mxu0 0.0
        %2393 = vmatprep.subr.mxu0 0.0
        %2394 = vmatpush2.msra.mxu0 0.0
        %2395 = vmatprep.subr.mxu0 0.0
        %2396 = vmatpush2.msra.mxu0 0.0
        %2397 = vmatprep.subr.mxu0 0.0
        %2398 = vmatpush2.msra.mxu0 0.0
        %2399 = vmatprep.subr.mxu0 0.0
        %2400 = vmatpush2.msra.mxu0 0.0
        %2401 = vmatprep.subr.mxu0 0.0
        %2402 = vmatpush2.msra.mxu0 0.0
        %2403 = vmatprep.subr.mxu0 0.0
        %2404 = vmatpush2.msra.mxu0 0.0
        %2405 = vmatprep.subr.mxu0 0.0
        %2406 = vmatpush2.msra.mxu0 0.0
        %2407 = vmatprep.subr.mxu0 0.0
        %2408 = vmatpush2.msra.mxu0 0.0
        %2409 = vmatprep.subr.mxu0 0.0
        %2410 = vmatpush2.msra.mxu0 0.0
        %2411 = vmatprep.subr.mxu0 0.0
        %2412 = vmatpush2.msra.mxu0 0.0
        %2413 = vmatprep.subr.mxu0 0.0
        %2414 = vmatpush2.msra.mxu0 0.0
        %2415 = vmatprep.subr.mxu0 0.0
        %2416 = vmatpush2.msra.mxu0 0.0
        %2417 = vmatprep.subr.mxu0 0.0
        %2418 = vmatpush2.msra.mxu0 0.0
        %2419 = vmatprep.mubr.f32.mxu0 0.0
        %2420 = vmatmul.mubr.f32.gmra.mxu0 %v2347
        %v2421 = vpop.f32.mrf.mxu0
        %v2422 = vadd.f32 0.0, %v2421
        %v2423 = vpop.f32.mrf.mxu0
        %2424 = vmatprep.mubr.f32.mxu0 0.0
        %2425 = vmatmul.mubr.f32.gmra.mxu0 %v2350
        %v2426 = vpop.f32.mrf.mxu0
        %v2427 = vadd.f32 0.0, %v2426
        %v2428 = vpop.f32.mrf.mxu0
        %2429 = vmatprep.mubr.f32.mxu0 0.0
        %2430 = vmatmul.mubr.f32.gmra.mxu0 %v2353
        %v2431 = vpop.f32.mrf.mxu0
        %v2432 = vadd.f32 0.0, %v2431
        %v2433 = vpop.f32.mrf.mxu0
        %2434 = vdwg.mxu0
        %v2436 = vsel %vm506, %v2091, 0
        %v2439 = vsel %vm506, %v2096, 0
        %v2442 = vsel %vm506, %v2101, 0
        %2444 = vmatprep.subr.mxu0 0.0
        %2445 = vmatpush1.msra.mxu0 0.0
        %2446 = vmatprep.subr.mxu0 0.0
        %2447 = vmatpush1.msra.mxu0 0.0
        %2448 = vmatprep.subr.mxu0 0.0
        %2449 = vmatpush1.msra.mxu0 0.0
        %2450 = vmatprep.subr.mxu0 0.0
        %2451 = vmatpush1.msra.mxu0 0.0
        %2452 = vmatprep.subr.mxu0 0.0
        %2453 = vmatpush1.msra.mxu0 0.0
        %2454 = vmatprep.subr.mxu0 0.0
        %2455 = vmatpush1.msra.mxu0 0.0
        %2456 = vmatprep.subr.mxu0 0.0
        %2457 = vmatpush1.msra.mxu0 0.0
        %2458 = vmatprep.subr.mxu0 0.0
        %2459 = vmatpush1.msra.mxu0 0.0
        %2460 = vmatprep.subr.mxu0 0.0
        %2461 = vmatpush1.msra.mxu0 0.0
        %2462 = vmatprep.subr.mxu0 0.0
        %2463 = vmatpush1.msra.mxu0 0.0
        %2464 = vmatprep.subr.mxu0 0.0
        %2465 = vmatpush1.msra.mxu0 0.0
        %2466 = vmatprep.subr.mxu0 0.0
        %2467 = vmatpush1.msra.mxu0 0.0
        %2468 = vmatprep.subr.mxu0 0.0
        %2469 = vmatpush1.msra.mxu0 0.0
        %2470 = vmatprep.subr.mxu0 0.0
        %2471 = vmatpush1.msra.mxu0 0.0
        %2472 = vmatprep.subr.mxu0 0.0
        %2473 = vmatpush1.msra.mxu0 %v2106
        %2474 = vmatprep.subr.mxu0 0.0
        %2475 = vmatpush1.msra.mxu0 %v2105
        %2476 = vmatprep.subr.mxu0 0.0
        %2477 = vmatpush2.msra.mxu0 0.0
        %2478 = vmatprep.subr.mxu0 0.0
        %2479 = vmatpush2.msra.mxu0 0.0
        %2480 = vmatprep.subr.mxu0 0.0
        %2481 = vmatpush2.msra.mxu0 0.0
        %2482 = vmatprep.subr.mxu0 0.0
        %2483 = vmatpush2.msra.mxu0 0.0
        %2484 = vmatprep.subr.mxu0 0.0
        %2485 = vmatpush2.msra.mxu0 0.0
        %2486 = vmatprep.subr.mxu0 0.0
        %2487 = vmatpush2.msra.mxu0 0.0
        %2488 = vmatprep.subr.mxu0 0.0
        %2489 = vmatpush2.msra.mxu0 0.0
        %2490 = vmatprep.subr.mxu0 0.0
        %2491 = vmatpush2.msra.mxu0 0.0
        %2492 = vmatprep.subr.mxu0 0.0
        %2493 = vmatpush2.msra.mxu0 0.0
        %2494 = vmatprep.subr.mxu0 0.0
        %2495 = vmatpush2.msra.mxu0 0.0
        %2496 = vmatprep.subr.mxu0 0.0
        %2497 = vmatpush2.msra.mxu0 0.0
        %2498 = vmatprep.subr.mxu0 0.0
        %2499 = vmatpush2.msra.mxu0 0.0
        %2500 = vmatprep.subr.mxu0 0.0
        %2501 = vmatpush2.msra.mxu0 0.0
        %2502 = vmatprep.subr.mxu0 0.0
        %2503 = vmatpush2.msra.mxu0 0.0
        %2504 = vmatprep.subr.mxu0 0.0
        %2505 = vmatpush2.msra.mxu0 0.0
        %2506 = vmatprep.subr.mxu0 0.0
        %2507 = vmatpush2.msra.mxu0 0.0
        %2508 = vmatprep.mubr.f32.mxu0 0.0
        %2509 = vmatmul.mubr.f32.gmra.mxu0 %v2436
        %v2510 = vpop.f32.mrf.mxu0
        %v2511 = vadd.f32 %v2422, %v2510
        %v2512 = vpop.f32.mrf.mxu0
        %2513 = vmatprep.mubr.f32.mxu0 0.0
        %2514 = vmatmul.mubr.f32.gmra.mxu0 %v2439
        %v2515 = vpop.f32.mrf.mxu0
        %v2516 = vadd.f32 %v2427, %v2515
        %v2517 = vpop.f32.mrf.mxu0
        %2518 = vmatprep.mubr.f32.mxu0 0.0
        %2519 = vmatmul.mubr.f32.gmra.mxu0 %v2442
        %v2520 = vpop.f32.mrf.mxu0
        %v2521 = vadd.f32 %v2432, %v2520
        %v2522 = vpop.f32.mrf.mxu0
        %2523 = vdwg.mxu0
        %v2524 = vadd.f32 %v1713, %v2511
        %v2525 = vadd.f32 %v1714, %v2516
        %v2526 = vadd.f32 %v1715, %v2521
        %s2527 = scalar_lea.vmem %s7, 1
        %v2528 = vld [vmem:[%s2527] sm:$0x1]
        %v2530 = vlaneseq
        %v2531 = vshrl.u32 %v2530, 7
        %v2532 = vsub.s32 0, %v2531
        %v2533 = vrot.slane %v2528, %v2532
        %v2535 = vadd.f32 %v2524, %v2533
        %v2536 = vadd.f32 %v2525, %v2533
        %v2537 = vadd.f32 %v2526, %v2533
        %s2538 = scalar_lea.vmem %s8, 1
        %v2539 = vld [vmem:[%s2538] sm:$0x1]
        %s2540 = scalar_lea.vmem %s9, 1
        %v2541 = vld [vmem:[%s2540] sm:$0x1]
        %v2542 = vsel %vm598, %v2535, 0.0
        %2543 = vadd.xlane.f32.xlu0 %v2542
        %v2544 = vpop.xlane.xlu0 %2543
        %v2545 = vsel %vm598, %v2536, 0.0
        %2546 = vadd.xlane.f32.xlu0 %v2545
        %v2547 = vpop.xlane.xlu0 %2546
        %v2548 = vsel %vm605, %v2537, 0.0
        %2549 = vadd.xlane.f32.xlu0 %v2548
        %v2550 = vpop.xlane.xlu0 %2549
        %v2551 = vmul.f32 %v2544, %v609
        %v2552 = vmul.f32 %v2547, %v609
        %v2553 = vmul.f32 %v2550, %v609
        %v2554 = vsub.f32 %v2535, %v2551
        %v2555 = vsub.f32 %v2536, %v2552
        %v2556 = vsub.f32 %v2537, %v2553
        %v2557 = vmul.f32 %v2554, %v2554
        %v2558 = vmul.f32 %v2555, %v2555
        %v2559 = vmul.f32 %v2556, %v2556
        %v2560 = vsel %vm598, %v2557, 0.0
        %2561 = vadd.xlane.f32.xlu0 %v2560
        %v2562 = vpop.xlane.xlu0 %2561
        %v2563 = vsel %vm598, %v2558, 0.0
        %2564 = vadd.xlane.f32.xlu0 %v2563
        %v2565 = vpop.xlane.xlu0 %2564
        %v2566 = vsel %vm605, %v2559, 0.0
        %2567 = vadd.xlane.f32.xlu0 %v2566
        %v2568 = vpop.xlane.xlu0 %2567
        %v2569 = vmul.f32 %v2562, %v609
        %v2570 = vmul.f32 %v2565, %v609
        %v2571 = vmul.f32 %v2568, %v609
        %v2572 = vadd.f32 %v2569, 1e-05
        %v2573 = vadd.f32 %v2570, 1e-05
        %v2574 = vadd.f32 %v2571, 1e-05
        %v2575 = vrsqrt.pop %v2572
        %v2576 = vrsqrt.pop %v2573
        %v2577 = vrsqrt.pop %v2574
        %v2578 = vmul.f32 %v2554, %v2575
        %v2579 = vmul.f32 %v2555, %v2576
        %v2580 = vmul.f32 %v2556, %v2577
        %v2582 = vlaneseq
        %v2583 = vshrl.u32 %v2582, 7
        %v2584 = vsub.s32 0, %v2583
        %v2585 = vrot.slane %v2539, %v2584
        %v2587 = vmul.f32 %v2578, %v2585
        %v2588 = vmul.f32 %v2579, %v2585
        %v2589 = vmul.f32 %v2580, %v2585
        %v2591 = vlaneseq
        %v2592 = vshrl.u32 %v2591, 7
        %v2593 = vsub.s32 0, %v2592
        %v2594 = vrot.slane %v2541, %v2593
        %v2596 = vadd.f32 %v2587, %v2594
        %v2597 = vadd.f32 %v2588, %v2594
        %v2598 = vadd.f32 %v2589, %v2594
        %s2599 = scalar_lea.vmem %s10, 32
        %v2600 = vld [vmem:[%s2599] sm:$0xff]
        %v2601 = vld [vmem:[%s2599 + $0x8] sm:$0xff]
        %v2602 = vld [vmem:[%s2599 + $0x10] sm:$0xff]
        %v2603 = vld [vmem:[%s2599 + $0x18] sm:$0xff]
        %s2604 = scalar_lea.vmem [#allocation2], 1
        %v2605 = vld [vmem:[%s2604] sm:$0x1]
        %v2607 = vlaneseq
        %v2608 = vshrl.u32 %v2607, 7
        %v2609 = vsub.s32 0, %v2608
        %v2610 = vrot.slane %v2605, %v2609
        %v2613 = vsel %vm598, %v2596, 0
        %v2616 = vsel %vm598, %v2597, 0
        %v2619 = vsel %vm598, %v2598, 0
        %2621 = vmatprep.subr.mxu0 0.0
        %2622 = vmatpush1.msra.mxu0 0.0
        %2623 = vmatprep.subr.mxu0 0.0
        %2624 = vmatpush1.msra.mxu0 0.0
        %2625 = vmatprep.subr.mxu0 0.0
        %2626 = vmatpush1.msra.mxu0 0.0
        %2627 = vmatprep.subr.mxu0 0.0
        %2628 = vmatpush1.msra.mxu0 0.0
        %2629 = vmatprep.subr.mxu0 0.0
        %2630 = vmatpush1.msra.mxu0 0.0
        %2631 = vmatprep.subr.mxu0 0.0
        %2632 = vmatpush1.msra.mxu0 0.0
        %2633 = vmatprep.subr.mxu0 0.0
        %2634 = vmatpush1.msra.mxu0 0.0
        %2635 = vmatprep.subr.mxu0 0.0
        %2636 = vmatpush1.msra.mxu0 0.0
        %2637 = vmatprep.subr.mxu0 0.0
        %2638 = vmatpush1.msra.mxu0 0.0
        %2639 = vmatprep.subr.mxu0 0.0
        %2640 = vmatpush1.msra.mxu0 0.0
        %2641 = vmatprep.subr.mxu0 0.0
        %2642 = vmatpush1.msra.mxu0 0.0
        %2643 = vmatprep.subr.mxu0 0.0
        %2644 = vmatpush1.msra.mxu0 0.0
        %2645 = vmatprep.subr.mxu0 0.0
        %2646 = vmatpush1.msra.mxu0 %v2603
        %2647 = vmatprep.subr.mxu0 0.0
        %2648 = vmatpush1.msra.mxu0 %v2602
        %2649 = vmatprep.subr.mxu0 0.0
        %2650 = vmatpush1.msra.mxu0 %v2601
        %2651 = vmatprep.subr.mxu0 0.0
        %2652 = vmatpush1.msra.mxu0 %v2600
        %2653 = vmatprep.subr.mxu0 0.0
        %2654 = vmatpush2.msra.mxu0 0.0
        %2655 = vmatprep.subr.mxu0 0.0
        %2656 = vmatpush2.msra.mxu0 0.0
        %2657 = vmatprep.subr.mxu0 0.0
        %2658 = vmatpush2.msra.mxu0 0.0
        %2659 = vmatprep.subr.mxu0 0.0
        %2660 = vmatpush2.msra.mxu0 0.0
        %2661 = vmatprep.subr.mxu0 0.0
        %2662 = vmatpush2.msra.mxu0 0.0
        %2663 = vmatprep.subr.mxu0 0.0
        %2664 = vmatpush2.msra.mxu0 0.0
        %2665 = vmatprep.subr.mxu0 0.0
        %2666 = vmatpush2.msra.mxu0 0.0
        %2667 = vmatprep.subr.mxu0 0.0
        %2668 = vmatpush2.msra.mxu0 0.0
        %2669 = vmatprep.subr.mxu0 0.0
        %2670 = vmatpush2.msra.mxu0 0.0
        %2671 = vmatprep.subr.mxu0 0.0
        %2672 = vmatpush2.msra.mxu0 0.0
        %2673 = vmatprep.subr.mxu0 0.0
        %2674 = vmatpush2.msra.mxu0 0.0
        %2675 = vmatprep.subr.mxu0 0.0
        %2676 = vmatpush2.msra.mxu0 0.0
        %2677 = vmatprep.subr.mxu0 0.0
        %2678 = vmatpush2.msra.mxu0 0.0
        %2679 = vmatprep.subr.mxu0 0.0
        %2680 = vmatpush2.msra.mxu0 0.0
        %2681 = vmatprep.subr.mxu0 0.0
        %2682 = vmatpush2.msra.mxu0 0.0
        %2683 = vmatprep.subr.mxu0 0.0
        %2684 = vmatpush2.msra.mxu0 0.0
        %2685 = vmatprep.mubr.f32.mxu0 0.0
        %2686 = vmatmul.mubr.f32.gmra.mxu0 %v2613
        %v2687 = vpop.f32.mrf.mxu0
        %v2688 = vadd.f32 %v2610, %v2687
        %v2689 = vpop.f32.mrf.mxu0
        %2690 = vmatprep.mubr.f32.mxu0 0.0
        %2691 = vmatmul.mubr.f32.gmra.mxu0 %v2616
        %v2692 = vpop.f32.mrf.mxu0
        %v2693 = vadd.f32 %v2610, %v2692
        %v2694 = vpop.f32.mrf.mxu0
        %2695 = vmatprep.mubr.f32.mxu0 0.0
        %2696 = vmatmul.mubr.f32.gmra.mxu0 %v2619
        %v2697 = vpop.f32.mrf.mxu0
        %v2698 = vadd.f32 %v2610, %v2697
        %v2699 = vpop.f32.mrf.mxu0
        %2700 = vdwg.mxu0
        %v2701 = vmul.f32 %v2688, 0.5
        %v2702 = vmul.f32 %v2693, 0.5
        %v2703 = vmul.f32 %v2698, 0.5
        %v2704 = vmul.f32 %v2688, 0.044715
        %v2705 = vmul.f32 %v2693, 0.044715
        %v2706 = vmul.f32 %v2698, 0.044715
        %v2707 = vmul.f32 %v2704, %v2688
        %v2708 = vmul.f32 %v2705, %v2693
        %v2709 = vmul.f32 %v2706, %v2698
        %v2710 = vmul.f32 %v2707, %v2688
        %v2711 = vmul.f32 %v2708, %v2693
        %v2712 = vmul.f32 %v2709, %v2698
        %v2713 = vadd.f32 %v2688, %v2710
        %v2714 = vadd.f32 %v2693, %v2711
        %v2715 = vadd.f32 %v2698, %v2712
        %v2716 = vmul.f32 %v2713, 0.7978846
        %v2717 = vmul.f32 %v2714, 0.7978846
        %v2718 = vmul.f32 %v2715, 0.7978846
        %v2719 = vtanh.pop %v2716
        %v2720 = vtanh.pop %v2717
        %v2721 = vtanh.pop %v2718
        %v2722 = vadd.f32 %v2719, 1.0
        %v2723 = vadd.f32 %v2720, 1.0
        %v2724 = vadd.f32 %v2721, 1.0
        %v2725 = vmul.f32 %v2701, %v2722
        %v2726 = vmul.f32 %v2702, %v2723
        %v2727 = vmul.f32 %v2703, %v2724
        %s2728 = scalar_lea.vmem %s12, 64
        %v2729 = vld [vmem:[%s2728] sm:$0xff]
        %v2730 = vld [vmem:[%s2728 + $0x8] sm:$0xff]
        %v2731 = vld [vmem:[%s2728 + $0x10] sm:$0xff]
        %v2732 = vld [vmem:[%s2728 + $0x18] sm:$0xff]
        %v2733 = vld [vmem:[%s2728 + $0x20] sm:$0xff]
        %v2734 = vld [vmem:[%s2728 + $0x28] sm:$0xff]
        %v2735 = vld [vmem:[%s2728 + $0x30] sm:$0xff]
        %v2736 = vld [vmem:[%s2728 + $0x38] sm:$0xff]
        %v2738 = vsel %vm1613, %v2725, 0
        %v2741 = vsel %vm1613, %v2726, 0
        %v2744 = vsel %vm1613, %v2727, 0
        %2746 = vmatprep.subr.mxu0 0.0
        %2747 = vmatpush1.msra.mxu0 0.0
        %2748 = vmatprep.subr.mxu0 0.0
        %2749 = vmatpush1.msra.mxu0 0.0
        %2750 = vmatprep.subr.mxu0 0.0
        %2751 = vmatpush1.msra.mxu0 0.0
        %2752 = vmatprep.subr.mxu0 0.0
        %2753 = vmatpush1.msra.mxu0 0.0
        %2754 = vmatprep.subr.mxu0 0.0
        %2755 = vmatpush1.msra.mxu0 0.0
        %2756 = vmatprep.subr.mxu0 0.0
        %2757 = vmatpush1.msra.mxu0 0.0
        %2758 = vmatprep.subr.mxu0 0.0
        %2759 = vmatpush1.msra.mxu0 0.0
        %2760 = vmatprep.subr.mxu0 0.0
        %2761 = vmatpush1.msra.mxu0 0.0
        %2762 = vmatprep.subr.mxu0 0.0
        %2763 = vmatpush1.msra.mxu0 %v2736
        %2764 = vmatprep.subr.mxu0 0.0
        %2765 = vmatpush1.msra.mxu0 %v2735
        %2766 = vmatprep.subr.mxu0 0.0
        %2767 = vmatpush1.msra.mxu0 %v2734
        %2768 = vmatprep.subr.mxu0 0.0
        %2769 = vmatpush1.msra.mxu0 %v2733
        %2770 = vmatprep.subr.mxu0 0.0
        %2771 = vmatpush1.msra.mxu0 %v2732
        %2772 = vmatprep.subr.mxu0 0.0
        %2773 = vmatpush1.msra.mxu0 %v2731
        %2774 = vmatprep.subr.mxu0 0.0
        %2775 = vmatpush1.msra.mxu0 %v2730
        %2776 = vmatprep.subr.mxu0 0.0
        %2777 = vmatpush1.msra.mxu0 %v2729
        %2778 = vmatprep.subr.mxu0 0.0
        %2779 = vmatpush2.msra.mxu0 0.0
        %2780 = vmatprep.subr.mxu0 0.0
        %2781 = vmatpush2.msra.mxu0 0.0
        %2782 = vmatprep.subr.mxu0 0.0
        %2783 = vmatpush2.msra.mxu0 0.0
        %2784 = vmatprep.subr.mxu0 0.0
        %2785 = vmatpush2.msra.mxu0 0.0
        %2786 = vmatprep.subr.mxu0 0.0
        %2787 = vmatpush2.msra.mxu0 0.0
        %2788 = vmatprep.subr.mxu0 0.0
        %2789 = vmatpush2.msra.mxu0 0.0
        %2790 = vmatprep.subr.mxu0 0.0
        %2791 = vmatpush2.msra.mxu0 0.0
        %2792 = vmatprep.subr.mxu0 0.0
        %2793 = vmatpush2.msra.mxu0 0.0
        %2794 = vmatprep.subr.mxu0 0.0
        %2795 = vmatpush2.msra.mxu0 0.0
        %2796 = vmatprep.subr.mxu0 0.0
        %2797 = vmatpush2.msra.mxu0 0.0
        %2798 = vmatprep.subr.mxu0 0.0
        %2799 = vmatpush2.msra.mxu0 0.0
        %2800 = vmatprep.subr.mxu0 0.0
        %2801 = vmatpush2.msra.mxu0 0.0
        %2802 = vmatprep.subr.mxu0 0.0
        %2803 = vmatpush2.msra.mxu0 0.0
        %2804 = vmatprep.subr.mxu0 0.0
        %2805 = vmatpush2.msra.mxu0 0.0
        %2806 = vmatprep.subr.mxu0 0.0
        %2807 = vmatpush2.msra.mxu0 0.0
        %2808 = vmatprep.subr.mxu0 0.0
        %2809 = vmatpush2.msra.mxu0 0.0
        %2810 = vmatprep.mubr.f32.mxu0 0.0
        %2811 = vmatmul.mubr.f32.gmra.mxu0 %v2738
        %v2812 = vpop.f32.mrf.mxu0
        %v2813 = vadd.f32 0.0, %v2812
        %v2814 = vpop.f32.mrf.mxu0
        %2815 = vmatprep.mubr.f32.mxu0 0.0
        %2816 = vmatmul.mubr.f32.gmra.mxu0 %v2741
        %v2817 = vpop.f32.mrf.mxu0
        %v2818 = vadd.f32 0.0, %v2817
        %v2819 = vpop.f32.mrf.mxu0
        %2820 = vmatprep.mubr.f32.mxu0 0.0
        %2821 = vmatmul.mubr.f32.gmra.mxu0 %v2744
        %v2822 = vpop.f32.mrf.mxu0
        %v2823 = vadd.f32 0.0, %v2822
        %v2824 = vpop.f32.mrf.mxu0
        %2825 = vdwg.mxu0
        %v2826 = vadd.f32 %v2535, %v2813
        %v2827 = vadd.f32 %v2536, %v2818
        %v2828 = vadd.f32 %v2537, %v2823
        %s2829 = scalar_lea.vmem [#allocation4], 1
        %v2830 = vld [vmem:[%s2829] sm:$0x1]
        %v2832 = vlaneseq
        %v2833 = vshrl.u32 %v2832, 7
        %v2834 = vsub.s32 0, %v2833
        %v2835 = vrot.slane %v2830, %v2834
        %v2837 = vadd.f32 %v2826, %v2835
        %v2838 = vadd.f32 %v2827, %v2835
        %v2839 = vadd.f32 %v2828, %v2835
        %2840 = vst.msk [vmem:[%s497] sm:$0xff] %vm598, %v2837
        %2841 = vst.msk [vmem:[%s497 + $0x8] sm:$0xff] %vm598, %v2838
        %2842 = vst.msk [vmem:[%s497 + $0x10] sm:$0x1] %vm605, %v2839
        %p2843 = scmp.lt.s32.totalorder %s27, 1
        %s2844 = scalar_select %p2843, %s27, 1
        %s2845 = smul.addr %s2844, 3
        %s2846 = smul.addr %s2845, 8
        %s2847 = scalar_lea.vmem %s14, %s2846
        // Predicated region
        $region85: #{vit_forward.2} parent=75 // pred_check
          %p2848 = pneg %p344
        $region86: #{vit_forward.2} parent=75 // pred_check_branch
          %2850 = sbr.rel (%p2848) target = $region88
        $region87: #{vit_forward.2} parent=75 // pred_region
          _
        $region88: #{vit_forward.2} parent=75 // pred_fallthru
          _
      $region76: #{vit_forward.2} parent=5 // pred_fallthru
        _
      %p2851 = scmp.le.s32.totalorder 2, %s22
      // Predicated region
      $region89: #{vit_forward.2} parent=5 // pred_check
        %p2852 = pneg %p2851
      $region90: #{vit_forward.2} parent=5 // pred_check_branch
        %2854 = sbr.rel (%p2852) target = $region92
      $region91: #{vit_forward.2} parent=5 // pred_region
        %s2855 = ssub.s32 %s22, 2
        // Predicated region
        $region93: #{vit_forward.2} parent=91 // pred_check
          %p2856 = pneg %p350
        $region94: #{vit_forward.2} parent=91 // pred_check_branch
          %2858 = sbr.rel (%p2856) target = $region96
        $region95: #{vit_forward.2} parent=91 // pred_region
          %p2859 = scmp.lt.s32.totalorder %s28, 1
          %s2860 = scalar_select %p2859, %s28, 1
          %s2861 = smul.addr %s2860, 3
          %s2862 = smul.addr %s2861, 8
          %s2863 = scalar_lea.vmem %s14, %s2862
        $region96: #{vit_forward.2} parent=91 // pred_fallthru
          _
      $region92: #{vit_forward.2} parent=5 // pred_fallthru
        _
    $region6: #{vit_forward.2} parent=1 // loop_footer
      %s26 = sadd.s32 1, %s22
    $region7: #{vit_forward.2} parent=1 // loop_footer_branch
      %21 = sbr.rel target = $region3
    $region8: #{vit_forward.2} parent=1 // loop_exit
      _
    %2864 = vsyncpa [#allocation3], 1
    %s2865 = scalar_lea.sflag [#allocation3], 1
    %2866 = vsyncpa %s2865, 1
    %2867 = vsyncpa [#allocation5], 1

// kernel: vit_forward.3
$region0: #{vit_forward.3}
  #allocation0 [shape = 'u32[]', space=smem, size = 0x4, offset = 0x4, fixed_abs, tag = 'smem constant byte address 0x4 - core index']
  #allocation1 [shape = 'u32[144,128]{1,0:T(1,128)}', space=vmem, size = 0x12000, scoped, tag = 'internal scratch']
  %s0 = inlined_call_operand.vmem [shape: f32[2,32,16], index: 0, kind: input, shape index: {}]
  %s1 = inlined_call_operand.vmem [shape: f32[33,32], index: 1, kind: input, shape index: {}]
  %s2 = inlined_call_operand.vmem [shape: f32[33,16], index: 2, kind: input, shape index: {}]
  %s3 = inlined_call_operand.vmem [shape: f32[2,1,16], index: 3, kind: input, shape index: {}]
  %s4 = inlined_call_operand.vmem [shape: f32[2,1,16], index: 4, kind: input, shape index: {}]
  %s5 = inlined_call_operand.vmem [shape: f32[2,16,96], index: 5, kind: input, shape index: {}]
  %s6 = inlined_call_operand.vmem [shape: f32[2,2,16,16], index: 6, kind: input, shape index: {}]
  %s7 = inlined_call_operand.vmem [shape: f32[2,1,16], index: 7, kind: input, shape index: {}]
  %s8 = inlined_call_operand.vmem [shape: f32[2,1,16], index: 8, kind: input, shape index: {}]
  %s9 = inlined_call_operand.vmem [shape: f32[2,1,16], index: 9, kind: input, shape index: {}]
  %s10 = inlined_call_operand.vmem [shape: f32[2,16,64], index: 10, kind: input, shape index: {}]
  %s11 = inlined_call_operand.vmem [shape: f32[2,1,64], index: 11, kind: input, shape index: {}]
  %s12 = inlined_call_operand.vmem [shape: f32[2,64,16], index: 12, kind: input, shape index: {}]
  %s13 = inlined_call_operand.vmem [shape: f32[2,1,16], index: 13, kind: input, shape index: {}]
  %s14 = inlined_call_operand.vmem [shape: f32[2,1,16], index: 14, kind: output, shape index: {}]
  %s15 = sld [smem:[#allocation0]]
  $region89: #{vit_forward.3} parent=0
    _
  %s17 = ssub.s32 1, %s15
  %s18 = scalar_select 0, %s17, %s15
  loop: start=0, step=1, limit=4
  $region2: #{vit_forward.3} parent=0 // loop_pre_header
    _
  $region3: #{vit_forward.3} parent=0 // loop_header
    %s20 = sphi 0, %s24
    %p21 = scmp.ge.s32.totalorder %s20, 4
    %s30 = sphi 0, %s32
    %s33 = sphi 0, %s30
    %s34 = sphi 0, %s33
    %s50 = sphi 0, %s34
    %s54 = sphi 0, %s54
    %s56 = sphi 0, %s54
    %s57 = sphi 0, %s56
    %s71 = sphi 0, %s57
    %s75 = sphi 0, %s75
    %s77 = sphi 0, %s75
    %s78 = sphi 0, %s77
    %s92 = sphi 0, %s78
    %s96 = sphi 0, %s96
    %s98 = sphi 0, %s96
    %s99 = sphi 0, %s98
    %s113 = sphi 0, %s99
    %s117 = sphi 0, %s117
    %s119 = sphi 0, %s117
    %s120 = sphi 0, %s119
    %s134 = sphi 0, %s120
    %s138 = sphi 0, %s138
    %s140 = sphi 0, %s138
    %s141 = sphi 0, %s140
    %s155 = sphi 0, %s141
    %s159 = sphi 0, %s159
    %s161 = sphi 0, %s159
    %s162 = sphi 0, %s161
    %s176 = sphi 0, %s162
    %s180 = sphi 0, %s180
    %s182 = sphi 0, %s180
    %s183 = sphi 0, %s182
    %s197 = sphi 0, %s183
    %s201 = sphi 0, %s201
    %s203 = sphi 0, %s201
    %s204 = sphi 0, %s203
    %s218 = sphi 0, %s204
    %s222 = sphi 0, %s222
    %s224 = sphi 0, %s222
    %s225 = sphi 0, %s224
    %s239 = sphi 0, %s225
    %s243 = sphi 0, %s243
    %s245 = sphi 0, %s243
    %s246 = sphi 0, %s245
    %s260 = sphi 0, %s246
    %s264 = sphi 0, %s264
    %s266 = sphi 0, %s264
    %s267 = sphi 0, %s266
    %s281 = sphi 0, %s267
    %s285 = sphi 0, %s285
    %s287 = sphi 0, %s285
    %s288 = sphi 0, %s287
    %s302 = sphi 0, %s288
    %s306 = sphi 0, %s306
    %s308 = sphi 0, %s306
    %s309 = sphi 0, %s308
    %s323 = sphi 0, %s309
    %s329 = sphi 0, %s331
    %s332 = sphi 0, %s329
    %s333 = sphi 0, %s332
    %s349 = sphi 0, %s333
  $region4: #{vit_forward.3} parent=0 // loop_header_branch
    %23 = sbr.rel (%p21) target = $region8
  $region5: #{vit_forward.3} parent=0 // loop_body
    %s25 = ssub.s32 %s20, 1
    %s26 = ssub.s32 %s20, 2
    %s27 = sadd.s32 %s20, 1
    %s28 = ssub.s32 %s20, %s27
    %p29 = scmp.eq.s32.totalorder %s28, 0
    %s31 = sadd.s32 %s30, 1
    %s32 = scalar_select %p29, %s30, %s31
    %p35 = pneg %p29
    %p36 = scmp.eq.s32.totalorder %s20, 1
    %p37 = por %p35, %p36
    %p38 = scmp.ne.s32.totalorder %s30, %s33
    %p39 = scmp.eq.s32.totalorder %s20, 0
    %p40 = por %p38, %p39
    %p41 = scmp.ne.s32.totalorder %s30, %s33
    %p42 = scmp.eq.s32.totalorder %s25, 1
    %p43 = por %p41, %p42
    %p44 = scmp.ne.s32.totalorder %s33, %s34
    %p45 = scmp.eq.s32.totalorder %s25, 0
    %p46 = por %p44, %p45
    %p47 = scmp.ne.s32.totalorder %s33, %s34
    %p48 = scmp.eq.s32.totalorder %s26, 1
    %p49 = por %p47, %p48
    %p51 = scmp.ne.s32.totalorder %s34, %s50
    %p52 = scmp.eq.s32.totalorder %s26, 0
    %p53 = por %p51, %p52
    %s55 = sadd.s32 %s54, 1
    %p58 = scmp.eq.s32.totalorder %s20, 1
    %p59 = scmp.ne.s32.totalorder %s54, %s56
    %p60 = scmp.eq.s32.totalorder %s20, 0
    %p61 = por %p59, %p60
    %p62 = scmp.ne.s32.totalorder %s54, %s56
    %p63 = scmp.eq.s32.totalorder %s25, 1
    %p64 = por %p62, %p63
    %p65 = scmp.ne.s32.totalorder %s56, %s57
    %p66 = scmp.eq.s32.totalorder %s25, 0
    %p67 = por %p65, %p66
    %p68 = scmp.ne.s32.totalorder %s56, %s57
    %p69 = scmp.eq.s32.totalorder %s26, 1
    %p70 = por %p68, %p69
    %p72 = scmp.ne.s32.totalorder %s57, %s71
    %p73 = scmp.eq.s32.totalorder %s26, 0
    %p74 = por %p72, %p73
    %s76 = sadd.s32 %s75, 1
    %p79 = scmp.eq.s32.totalorder %s20, 1
    %p80 = scmp.ne.s32.totalorder %s75, %s77
    %p81 = scmp.eq.s32.totalorder %s20, 0
    %p82 = por %p80, %p81
    %p83 = scmp.ne.s32.totalorder %s75, %s77
    %p84 = scmp.eq.s32.totalorder %s25, 1
    %p85 = por %p83, %p84
    %p86 = scmp.ne.s32.totalorder %s77, %s78
    %p87 = scmp.eq.s32.totalorder %s25, 0
    %p88 = por %p86, %p87
    %p89 = scmp.ne.s32.totalorder %s77, %s78
    %p90 = scmp.eq.s32.totalorder %s26, 1
    %p91 = por %p89, %p90
    %p93 = scmp.ne.s32.totalorder %s78, %s92
    %p94 = scmp.eq.s32.totalorder %s26, 0
    %p95 = por %p93, %p94
    %s97 = sadd.s32 %s96, 1
    %p100 = scmp.eq.s32.totalorder %s20, 1
    %p101 = scmp.ne.s32.totalorder %s96, %s98
    %p102 = scmp.eq.s32.totalorder %s20, 0
    %p103 = por %p101, %p102
    %p104 = scmp.ne.s32.totalorder %s96, %s98
    %p105 = scmp.eq.s32.totalorder %s25, 1
    %p106 = por %p104, %p105
    %p107 = scmp.ne.s32.totalorder %s98, %s99
    %p108 = scmp.eq.s32.totalorder %s25, 0
    %p109 = por %p107, %p108
    %p110 = scmp.ne.s32.totalorder %s98, %s99
    %p111 = scmp.eq.s32.totalorder %s26, 1
    %p112 = por %p110, %p111
    %p114 = scmp.ne.s32.totalorder %s99, %s113
    %p115 = scmp.eq.s32.totalorder %s26, 0
    %p116 = por %p114, %p115
    %s118 = sadd.s32 %s117, 1
    %p121 = scmp.eq.s32.totalorder %s20, 1
    %p122 = scmp.ne.s32.totalorder %s117, %s119
    %p123 = scmp.eq.s32.totalorder %s20, 0
    %p124 = por %p122, %p123
    %p125 = scmp.ne.s32.totalorder %s117, %s119
    %p126 = scmp.eq.s32.totalorder %s25, 1
    %p127 = por %p125, %p126
    %p128 = scmp.ne.s32.totalorder %s119, %s120
    %p129 = scmp.eq.s32.totalorder %s25, 0
    %p130 = por %p128, %p129
    %p131 = scmp.ne.s32.totalorder %s119, %s120
    %p132 = scmp.eq.s32.totalorder %s26, 1
    %p133 = por %p131, %p132
    %p135 = scmp.ne.s32.totalorder %s120, %s134
    %p136 = scmp.eq.s32.totalorder %s26, 0
    %p137 = por %p135, %p136
    %s139 = sadd.s32 %s138, 1
    %p142 = scmp.eq.s32.totalorder %s20, 1
    %p143 = scmp.ne.s32.totalorder %s138, %s140
    %p144 = scmp.eq.s32.totalorder %s20, 0
    %p145 = por %p143, %p144
    %p146 = scmp.ne.s32.totalorder %s138, %s140
    %p147 = scmp.eq.s32.totalorder %s25, 1
    %p148 = por %p146, %p147
    %p149 = scmp.ne.s32.totalorder %s140, %s141
    %p150 = scmp.eq.s32.totalorder %s25, 0
    %p151 = por %p149, %p150
    %p152 = scmp.ne.s32.totalorder %s140, %s141
    %p153 = scmp.eq.s32.totalorder %s26, 1
    %p154 = por %p152, %p153
    %p156 = scmp.ne.s32.totalorder %s141, %s155
    %p157 = scmp.eq.s32.totalorder %s26, 0
    %p158 = por %p156, %p157
    %s160 = sadd.s32 %s159, 1
    %p163 = scmp.eq.s32.totalorder %s20, 1
    %p164 = scmp.ne.s32.totalorder %s159, %s161
    %p165 = scmp.eq.s32.totalorder %s20, 0
    %p166 = por %p164, %p165
    %p167 = scmp.ne.s32.totalorder %s159, %s161
    %p168 = scmp.eq.s32.totalorder %s25, 1
    %p169 = por %p167, %p168
    %p170 = scmp.ne.s32.totalorder %s161, %s162
    %p171 = scmp.eq.s32.totalorder %s25, 0
    %p172 = por %p170, %p171
    %p173 = scmp.ne.s32.totalorder %s161, %s162
    %p174 = scmp.eq.s32.totalorder %s26, 1
    %p175 = por %p173, %p174
    %p177 = scmp.ne.s32.totalorder %s162, %s176
    %p178 = scmp.eq.s32.totalorder %s26, 0
    %p179 = por %p177, %p178
    %s181 = sadd.s32 %s180, 1
    %p184 = scmp.eq.s32.totalorder %s20, 1
    %p185 = scmp.ne.s32.totalorder %s180, %s182
    %p186 = scmp.eq.s32.totalorder %s20, 0
    %p187 = por %p185, %p186
    %p188 = scmp.ne.s32.totalorder %s180, %s182
    %p189 = scmp.eq.s32.totalorder %s25, 1
    %p190 = por %p188, %p189
    %p191 = scmp.ne.s32.totalorder %s182, %s183
    %p192 = scmp.eq.s32.totalorder %s25, 0
    %p193 = por %p191, %p192
    %p194 = scmp.ne.s32.totalorder %s182, %s183
    %p195 = scmp.eq.s32.totalorder %s26, 1
    %p196 = por %p194, %p195
    %p198 = scmp.ne.s32.totalorder %s183, %s197
    %p199 = scmp.eq.s32.totalorder %s26, 0
    %p200 = por %p198, %p199
    %s202 = sadd.s32 %s201, 1
    %p205 = scmp.eq.s32.totalorder %s20, 1
    %p206 = scmp.ne.s32.totalorder %s201, %s203
    %p207 = scmp.eq.s32.totalorder %s20, 0
    %p208 = por %p206, %p207
    %p209 = scmp.ne.s32.totalorder %s201, %s203
    %p210 = scmp.eq.s32.totalorder %s25, 1
    %p211 = por %p209, %p210
    %p212 = scmp.ne.s32.totalorder %s203, %s204
    %p213 = scmp.eq.s32.totalorder %s25, 0
    %p214 = por %p212, %p213
    %p215 = scmp.ne.s32.totalorder %s203, %s204
    %p216 = scmp.eq.s32.totalorder %s26, 1
    %p217 = por %p215, %p216
    %p219 = scmp.ne.s32.totalorder %s204, %s218
    %p220 = scmp.eq.s32.totalorder %s26, 0
    %p221 = por %p219, %p220
    %s223 = sadd.s32 %s222, 1
    %p226 = scmp.eq.s32.totalorder %s20, 1
    %p227 = scmp.ne.s32.totalorder %s222, %s224
    %p228 = scmp.eq.s32.totalorder %s20, 0
    %p229 = por %p227, %p228
    %p230 = scmp.ne.s32.totalorder %s222, %s224
    %p231 = scmp.eq.s32.totalorder %s25, 1
    %p232 = por %p230, %p231
    %p233 = scmp.ne.s32.totalorder %s224, %s225
    %p234 = scmp.eq.s32.totalorder %s25, 0
    %p235 = por %p233, %p234
    %p236 = scmp.ne.s32.totalorder %s224, %s225
    %p237 = scmp.eq.s32.totalorder %s26, 1
    %p238 = por %p236, %p237
    %p240 = scmp.ne.s32.totalorder %s225, %s239
    %p241 = scmp.eq.s32.totalorder %s26, 0
    %p242 = por %p240, %p241
    %s244 = sadd.s32 %s243, 1
    %p247 = scmp.eq.s32.totalorder %s20, 1
    %p248 = scmp.ne.s32.totalorder %s243, %s245
    %p249 = scmp.eq.s32.totalorder %s20, 0
    %p250 = por %p248, %p249
    %p251 = scmp.ne.s32.totalorder %s243, %s245
    %p252 = scmp.eq.s32.totalorder %s25, 1
    %p253 = por %p251, %p252
    %p254 = scmp.ne.s32.totalorder %s245, %s246
    %p255 = scmp.eq.s32.totalorder %s25, 0
    %p256 = por %p254, %p255
    %p257 = scmp.ne.s32.totalorder %s245, %s246
    %p258 = scmp.eq.s32.totalorder %s26, 1
    %p259 = por %p257, %p258
    %p261 = scmp.ne.s32.totalorder %s246, %s260
    %p262 = scmp.eq.s32.totalorder %s26, 0
    %p263 = por %p261, %p262
    %s265 = sadd.s32 %s264, 1
    %p268 = scmp.eq.s32.totalorder %s20, 1
    %p269 = scmp.ne.s32.totalorder %s264, %s266
    %p270 = scmp.eq.s32.totalorder %s20, 0
    %p271 = por %p269, %p270
    %p272 = scmp.ne.s32.totalorder %s264, %s266
    %p273 = scmp.eq.s32.totalorder %s25, 1
    %p274 = por %p272, %p273
    %p275 = scmp.ne.s32.totalorder %s266, %s267
    %p276 = scmp.eq.s32.totalorder %s25, 0
    %p277 = por %p275, %p276
    %p278 = scmp.ne.s32.totalorder %s266, %s267
    %p279 = scmp.eq.s32.totalorder %s26, 1
    %p280 = por %p278, %p279
    %p282 = scmp.ne.s32.totalorder %s267, %s281
    %p283 = scmp.eq.s32.totalorder %s26, 0
    %p284 = por %p282, %p283
    %s286 = sadd.s32 %s285, 1
    %p289 = scmp.eq.s32.totalorder %s20, 1
    %p290 = scmp.ne.s32.totalorder %s285, %s287
    %p291 = scmp.eq.s32.totalorder %s20, 0
    %p292 = por %p290, %p291
    %p293 = scmp.ne.s32.totalorder %s285, %s287
    %p294 = scmp.eq.s32.totalorder %s25, 1
    %p295 = por %p293, %p294
    %p296 = scmp.ne.s32.totalorder %s287, %s288
    %p297 = scmp.eq.s32.totalorder %s25, 0
    %p298 = por %p296, %p297
    %p299 = scmp.ne.s32.totalorder %s287, %s288
    %p300 = scmp.eq.s32.totalorder %s26, 1
    %p301 = por %p299, %p300
    %p303 = scmp.ne.s32.totalorder %s288, %s302
    %p304 = scmp.eq.s32.totalorder %s26, 0
    %p305 = por %p303, %p304
    %s307 = sadd.s32 %s306, 1
    %p310 = scmp.eq.s32.totalorder %s20, 1
    %p311 = scmp.ne.s32.totalorder %s306, %s308
    %p312 = scmp.eq.s32.totalorder %s20, 0
    %p313 = por %p311, %p312
    %p314 = scmp.ne.s32.totalorder %s306, %s308
    %p315 = scmp.eq.s32.totalorder %s25, 1
    %p316 = por %p314, %p315
    %p317 = scmp.ne.s32.totalorder %s308, %s309
    %p318 = scmp.eq.s32.totalorder %s25, 0
    %p319 = por %p317, %p318
    %p320 = scmp.ne.s32.totalorder %s308, %s309
    %p321 = scmp.eq.s32.totalorder %s26, 1
    %p322 = por %p320, %p321
    %p324 = scmp.ne.s32.totalorder %s309, %s323
    %p325 = scmp.eq.s32.totalorder %s26, 0
    %p326 = por %p324, %p325
    %s327 = ssub.s32 %s20, %s27
    %p328 = scmp.eq.s32.totalorder %s327, 0
    %s330 = sadd.s32 %s329, 1
    %s331 = scalar_select %p328, %s329, %s330
    %p334 = pneg %p328
    %p335 = scmp.eq.s32.totalorder %s20, 1
    %p336 = por %p334, %p335
    %p337 = scmp.ne.s32.totalorder %s329, %s332
    %p338 = scmp.eq.s32.totalorder %s20, 0
    %p339 = por %p337, %p338
    %p340 = scmp.ne.s32.totalorder %s329, %s332
    %p341 = scmp.eq.s32.totalorder %s25, 1
    %p342 = por %p340, %p341
    %p343 = scmp.ne.s32.totalorder %s332, %s333
    %p344 = scmp.eq.s32.totalorder %s25, 0
    %p345 = por %p343, %p344
    %p346 = scmp.ne.s32.totalorder %s332, %s333
    %p347 = scmp.eq.s32.totalorder %s26, 1
    %p348 = por %p346, %p347
    %p350 = scmp.ne.s32.totalorder %s333, %s349
    %p351 = scmp.eq.s32.totalorder %s26, 0
    %p352 = por %p350, %p351
    %p353 = scmp.le.s32.totalorder 1, %s20
    %p354 = scmp.lt.s32.totalorder %s20, 3
    %p355 = pnand %p353, %p354
    %p356 = pneg %p355
    // Predicated region
    $region9: #{vit_forward.3} parent=5 // pred_check
      _
    $region10: #{vit_forward.3} parent=5 // pred_check_branch
      %358 = sbr.rel (%p355) target = $region12
    $region11: #{vit_forward.3} parent=5 // pred_region
      %s359 = ssub.s32 %s20, 1
      // Predicated region
      $region13: #{vit_forward.3} parent=11 // pred_check
        %p360 = pneg %p67
      $region14: #{vit_forward.3} parent=11 // pred_check_branch
        %362 = sbr.rel (%p360) target = $region16
      $region15: #{vit_forward.3} parent=11 // pred_region
        _
      $region16: #{vit_forward.3} parent=11 // pred_fallthru
        _
      // Predicated region
      $region17: #{vit_forward.3} parent=11 // pred_check
        %p363 = pneg %p88
      $region18: #{vit_forward.3} parent=11 // pred_check_branch
        %365 = sbr.rel (%p363) target = $region20
      $region19: #{vit_forward.3} parent=11 // pred_region
        _
      $region20: #{vit_forward.3} parent=11 // pred_fallthru
        _
      // Predicated region
      $region21: #{vit_forward.3} parent=11 // pred_check
        %p366 = pneg %p109
      $region22: #{vit_forward.3} parent=11 // pred_check_branch
        %368 = sbr.rel (%p366) target = $region24
      $region23: #{vit_forward.3} parent=11 // pred_region
        _
      $region24: #{vit_forward.3} parent=11 // pred_fallthru
        _
      // Predicated region
      $region25: #{vit_forward.3} parent=11 // pred_check
        %p369 = pneg %p130
      $region26: #{vit_forward.3} parent=11 // pred_check_branch
        %371 = sbr.rel (%p369) target = $region28
      $region27: #{vit_forward.3} parent=11 // pred_region
        _
      $region28: #{vit_forward.3} parent=11 // pred_fallthru
        _
      // Predicated region
      $region29: #{vit_forward.3} parent=11 // pred_check
        %p372 = pneg %p151
      $region30: #{vit_forward.3} parent=11 // pred_check_branch
        %374 = sbr.rel (%p372) target = $region32
      $region31: #{vit_forward.3} parent=11 // pred_region
        _
      $region32: #{vit_forward.3} parent=11 // pred_fallthru
        _
      // Predicated region
      $region33: #{vit_forward.3} parent=11 // pred_check
        %p375 = pneg %p172
      $region34: #{vit_forward.3} parent=11 // pred_check_branch
        %377 = sbr.rel (%p375) target = $region36
      $region35: #{vit_forward.3} parent=11 // pred_region
        _
      $region36: #{vit_forward.3} parent=11 // pred_fallthru
        _
      // Predicated region
      $region37: #{vit_forward.3} parent=11 // pred_check
        %p378 = pneg %p193
      $region38: #{vit_forward.3} parent=11 // pred_check_branch
        %380 = sbr.rel (%p378) target = $region40
      $region39: #{vit_forward.3} parent=11 // pred_region
        _
      $region40: #{vit_forward.3} parent=11 // pred_fallthru
        _
      // Predicated region
      $region41: #{vit_forward.3} parent=11 // pred_check
        %p381 = pneg %p214
      $region42: #{vit_forward.3} parent=11 // pred_check_branch
        %383 = sbr.rel (%p381) target = $region44
      $region43: #{vit_forward.3} parent=11 // pred_region
        _
      $region44: #{vit_forward.3} parent=11 // pred_fallthru
        _
      // Predicated region
      $region45: #{vit_forward.3} parent=11 // pred_check
        %p384 = pneg %p235
      $region46: #{vit_forward.3} parent=11 // pred_check_branch
        %386 = sbr.rel (%p384) target = $region48
      $region47: #{vit_forward.3} parent=11 // pred_region
        _
      $region48: #{vit_forward.3} parent=11 // pred_fallthru
        _
      // Predicated region
      $region49: #{vit_forward.3} parent=11 // pred_check
        %p387 = pneg %p256
      $region50: #{vit_forward.3} parent=11 // pred_check_branch
        %389 = sbr.rel (%p387) target = $region52
      $region51: #{vit_forward.3} parent=11 // pred_region
        _
      $region52: #{vit_forward.3} parent=11 // pred_fallthru
        _
      // Predicated region
      $region53: #{vit_forward.3} parent=11 // pred_check
        %p390 = pneg %p277
      $region54: #{vit_forward.3} parent=11 // pred_check_branch
        %392 = sbr.rel (%p390) target = $region56
      $region55: #{vit_forward.3} parent=11 // pred_region
        _
      $region56: #{vit_forward.3} parent=11 // pred_fallthru
        _
      // Predicated region
      $region57: #{vit_forward.3} parent=11 // pred_check
        %p393 = pneg %p298
      $region58: #{vit_forward.3} parent=11 // pred_check_branch
        %395 = sbr.rel (%p393) target = $region60
      $region59: #{vit_forward.3} parent=11 // pred_region
        _
      $region60: #{vit_forward.3} parent=11 // pred_fallthru
        _
      // Predicated region
      $region61: #{vit_forward.3} parent=11 // pred_check
        %p396 = pneg %p319
      $region62: #{vit_forward.3} parent=11 // pred_check_branch
        %398 = sbr.rel (%p396) target = $region64
      $region63: #{vit_forward.3} parent=11 // pred_region
        _
      $region64: #{vit_forward.3} parent=11 // pred_fallthru
        _
    $region12: #{vit_forward.3} parent=5 // pred_fallthru
      _
    %p399 = scmp.lt.s32.totalorder %s20, 2
    // Predicated region
    $region65: #{vit_forward.3} parent=5 // pred_check
      %p400 = pneg %p399
    $region66: #{vit_forward.3} parent=5 // pred_check_branch
      %402 = sbr.rel (%p400) target = $region68
    $region67: #{vit_forward.3} parent=5 // pred_region
      // Predicated region
      $region69: #{vit_forward.3} parent=67 // pred_check
        %p403 = pneg %p40
      $region70: #{vit_forward.3} parent=67 // pred_check_branch
        %405 = sbr.rel (%p403) target = $region72
      $region71: #{vit_forward.3} parent=67 // pred_region
        %p406 = scmp.lt.s32.totalorder %s20, 1
        %s407 = scalar_select %p406, %s20, 1
        %s408 = smul.addr %s407, 4
        %s409 = smul.addr %s408, 8
        %s410 = scalar_lea.vmem %s0, %s409
      $region72: #{vit_forward.3} parent=67 // pred_fallthru
        _
    $region68: #{vit_forward.3} parent=5 // pred_fallthru
      _
    %p411 = scmp.le.s32.totalorder 1, %s20
    %p412 = scmp.lt.s32.totalorder %s20, 3
    %p413 = pnand %p411, %p412
    %p414 = pneg %p413
    // Predicated region
    $region73: #{vit_forward.3} parent=5 // pred_check
      _
    $region74: #{vit_forward.3} parent=5 // pred_check_branch
      %416 = sbr.rel (%p413) target = $region76
    $region75: #{vit_forward.3} parent=5 // pred_region
      %s417 = ssub.s32 %s20, 1
      %p418 = scmp.lt.s32.totalorder %s25, 1
      %s419 = scalar_select %p418, %s25, 1
      %s420 = smul.addr %s419, 4
      %s421 = smul.addr %s420, 8
      %s422 = scalar_lea.vmem %s0, %s421
      %p423 = pneg %p46
      %p424 = pneg %p43
      %p425 = pneg %p67
      %p426 = pneg %p64
      %p427 = pneg %p88
      %p428 = pneg %p85
      %p429 = pneg %p109
      %p430 = pneg %p106
      %p431 = pneg %p130
      %p432 = pneg %p127
      %p433 = pneg %p151
      %p434 = pneg %p148
      %p435 = pneg %p172
      %p436 = pneg %p169
      %p437 = pneg %p193
      %p438 = pneg %p190
      %p439 = pneg %p214
      %p440 = pneg %p211
      %p441 = pneg %p235
      %p442 = pneg %p232
      %p443 = pneg %p256
      %p444 = pneg %p253
      %p445 = pneg %p277
      %p446 = pneg %p274
      %p447 = pneg %p298
      %p448 = pneg %p295
      %p449 = pneg %p319
      %p450 = pneg %p316
      %p451 = pneg %p345
      %p452 = pneg %p342
      %p453 = scmp.lt.s32.totalorder %s25, 1
      %s454 = scalar_select %p453, %s25, 1
      %s455 = scalar_lea.vmem %s14, %s454
      %p456 = scmp.lt.s32.totalorder %s25, 1
      %s457 = scalar_select %p456, %s25, 1
      %s458 = smul.addr %s457, 4
      %s459 = smul.addr %s458, 8
      %s460 = scalar_lea.vmem %s0, %s459
      %p461 = scmp.lt.s32.totalorder %s25, 1
      %s462 = scalar_select %p461, %s25, 1
      %s463 = scalar_lea.vmem %s14, %s462
      %v464 = vld [vmem:[%s460] sm:$0xff]
      %v465 = vld [vmem:[%s460 + $0x8] sm:$0xff]
      %v466 = vld [vmem:[%s460 + $0x10] sm:$0xff]
      %v467 = vld [vmem:[%s460 + $0x18] sm:$0xff]
      %v468 = vld [vmem:[%s1] sm:$0xff]
      %v469 = vld [vmem:[%s1 + $0x8] sm:$0xff]
      %v470 = vld [vmem:[%s1 + $0x10] sm:$0xff]
      %v471 = vld [vmem:[%s1 + $0x18] sm:$0xff]
      %v472 = vld [vmem:[%s1 + $0x20] sm:$0x1]
      %v473 = vld [vmem:[%s2] sm:$0xff]
      %v474 = vld [vmem:[%s2 + $0x8] sm:$0xff]
      %v475 = vld [vmem:[%s2 + $0x10] sm:$0xff]
      %v476 = vld [vmem:[%s2 + $0x18] sm:$0xff]
      %v477 = vld [vmem:[%s2 + $0x20] sm:$0x1]
      %vm478 = vcmask 261120
      %v480 = vsel %vm478, %v468, 0
      %v483 = vsel %vm478, %v469, 0
      %v486 = vsel %vm478, %v470, 0
      %v489 = vsel %vm478, %v471, 0
      %v492 = vsel %vm478, %v472, 0
      %494 = vmatprep.subr.mxu0 0.0
      %495 = vmatpush1.msra.mxu0 0.0
      %496 = vmatprep.subr.mxu0 0.0
      %497 = vmatpush1.msra.mxu0 0.0
      %498 = vmatprep.subr.mxu0 0.0
      %499 = vmatpush1.msra.mxu0 0.0
      %500 = vmatprep.subr.mxu0 0.0
      %501 = vmatpush1.msra.mxu0 0.0
      %502 = vmatprep.subr.mxu0 0.0
      %503 = vmatpush1.msra.mxu0 0.0
      %504 = vmatprep.subr.mxu0 0.0
      %505 = vmatpush1.msra.mxu0 0.0
      %506 = vmatprep.subr.mxu0 0.0
      %507 = vmatpush1.msra.mxu0 0.0
      %508 = vmatprep.subr.mxu0 0.0
      %509 = vmatpush1.msra.mxu0 0.0
      %510 = vmatprep.subr.mxu0 0.0
      %511 = vmatpush1.msra.mxu0 0.0
      %512 = vmatprep.subr.mxu0 0.0
      %513 = vmatpush1.msra.mxu0 0.0
      %514 = vmatprep.subr.mxu0 0.0
      %515 = vmatpush1.msra.mxu0 0.0
      %516 = vmatprep.subr.mxu0 0.0
      %517 = vmatpush1.msra.mxu0 0.0
      %518 = vmatprep.subr.mxu0 0.0
      %519 = vmatpush1.msra.mxu0 %v467
      %520 = vmatprep.subr.mxu0 0.0
      %521 = vmatpush1.msra.mxu0 %v466
      %522 = vmatprep.subr.mxu0 0.0
      %523 = vmatpush1.msra.mxu0 %v465
      %524 = vmatprep.subr.mxu0 0.0
      %525 = vmatpush1.msra.mxu0 %v464
      %526 = vmatprep.subr.mxu0 0.0
      %527 = vmatpush2.msra.mxu0 0.0
      %528 = vmatprep.subr.mxu0 0.0
      %529 = vmatpush2.msra.mxu0 0.0
      %530 = vmatprep.subr.mxu0 0.0
      %531 = vmatpush2.msra.mxu0 0.0
      %532 = vmatprep.subr.mxu0 0.0
      %533 = vmatpush2.msra.mxu0 0.0
      %534 = vmatprep.subr.mxu0 0.0
      %535 = vmatpush2.msra.mxu0 0.0
      %536 = vmatprep.subr.mxu0 0.0
      %537 = vmatpush2.msra.mxu0 0.0
      %538 = vmatprep.subr.mxu0 0.0
      %539 = vmatpush2.msra.mxu0 0.0
      %540 = vmatprep.subr.mxu0 0.0
      %541 = vmatpush2.msra.mxu0 0.0
      %542 = vmatprep.subr.mxu0 0.0
      %543 = vmatpush2.msra.mxu0 0.0
      %544 = vmatprep.subr.mxu0 0.0
      %545 = vmatpush2.msra.mxu0 0.0
      %546 = vmatprep.subr.mxu0 0.0
      %547 = vmatpush2.msra.mxu0 0.0
      %548 = vmatprep.subr.mxu0 0.0
      %549 = vmatpush2.msra.mxu0 0.0
      %550 = vmatprep.subr.mxu0 0.0
      %551 = vmatpush2.msra.mxu0 0.0
      %552 = vmatprep.subr.mxu0 0.0
      %553 = vmatpush2.msra.mxu0 0.0
      %554 = vmatprep.subr.mxu0 0.0
      %555 = vmatpush2.msra.mxu0 0.0
      %556 = vmatprep.subr.mxu0 0.0
      %557 = vmatpush2.msra.mxu0 0.0
      %558 = vmatprep.mubr.f32.mxu0 0.0
      %559 = vmatmul.mubr.f32.gmra.mxu0 %v480
      %v560 = vpop.f32.mrf.mxu0
      %v561 = vadd.f32 %v473, %v560
      %v562 = vpop.f32.mrf.mxu0
      %563 = vmatprep.mubr.f32.mxu0 0.0
      %564 = vmatmul.mubr.f32.gmra.mxu0 %v483
      %v565 = vpop.f32.mrf.mxu0
      %v566 = vadd.f32 %v474, %v565
      %v567 = vpop.f32.mrf.mxu0
      %568 = vmatprep.mubr.f32.mxu0 0.0
      %569 = vmatmul.mubr.f32.gmra.mxu0 %v486
      %v570 = vpop.f32.mrf.mxu0
      %v571 = vadd.f32 %v475, %v570
      %v572 = vpop.f32.mrf.mxu0
      %573 = vmatprep.mubr.f32.mxu0 0.0
      %574 = vmatmul.mubr.f32.gmra.mxu0 %v489
      %v575 = vpop.f32.mrf.mxu0
      %v576 = vadd.f32 %v476, %v575
      %v577 = vpop.f32.mrf.mxu0
      %578 = vmatprep.mubr.f32.mxu0 0.0
      %579 = vmatmul.mubr.f32.gmra.mxu0 %v492
      %v580 = vpop.f32.mrf.mxu0
      %v581 = vadd.f32 %v477, %v580
      %v582 = vpop.f32.mrf.mxu0
      %583 = vdwg.mxu0
      %v584 = vld [vmem:[%s3] sm:$0x1]
      %v585 = vld [vmem:[%s4] sm:$0x1]
      %vm586 = vcmask 130048
      %v587 = vsel %vm586, %v561, 0.0
      %588 = vadd.xlane.f32.xlu0 %v587
      %v589 = vpop.xlane.xlu0 %588
      %v590 = vsel %vm586, %v566, 0.0
      %591 = vadd.xlane.f32.xlu0 %v590
      %v592 = vpop.xlane.xlu0 %591
      %v593 = vsel %vm586, %v571, 0.0
      %594 = vadd.xlane.f32.xlu0 %v593
      %v595 = vpop.xlane.xlu0 %594
      %v596 = vsel %vm586, %v576, 0.0
      %597 = vadd.xlane.f32.xlu0 %v596
      %v598 = vpop.xlane.xlu0 %597
      %vm599 = vcmask 122880
      %v600 = vsel %vm599, %v581, 0.0
      %601 = vadd.xlane.f32.xlu0 %v600
      %v602 = vpop.xlane.xlu0 %601
      %v603 = vrcp.pop 16.0
      %v604 = vmul.f32 %v589, %v603
      %v605 = vmul.f32 %v592, %v603
      %v606 = vmul.f32 %v595, %v603
      %v607 = vmul.f32 %v598, %v603
      %v608 = vmul.f32 %v602, %v603
      %v609 = vsub.f32 %v561, %v604
      %v610 = vsub.f32 %v566, %v605
      %v611 = vsub.f32 %v571, %v606
      %v612 = vsub.f32 %v576, %v607
      %v613 = vsub.f32 %v581, %v608
      %v614 = vmul.f32 %v609, %v609
      %v615 = vmul.f32 %v610, %v610
      %v616 = vmul.f32 %v611, %v611
      %v617 = vmul.f32 %v612, %v612
      %v618 = vmul.f32 %v613, %v613
      %v619 = vsel %vm586, %v614, 0.0
      %620 = vadd.xlane.f32.xlu0 %v619
      %v621 = vpop.xlane.xlu0 %620
      %v622 = vsel %vm586, %v615, 0.0
      %623 = vadd.xlane.f32.xlu0 %v622
      %v624 = vpop.xlane.xlu0 %623
      %v625 = vsel %vm586, %v616, 0.0
      %626 = vadd.xlane.f32.xlu0 %v625
      %v627 = vpop.xlane.xlu0 %626
      %v628 = vsel %vm586, %v617, 0.0
      %629 = vadd.xlane.f32.xlu0 %v628
      %v630 = vpop.xlane.xlu0 %629
      %v631 = vsel %vm599, %v618, 0.0
      %632 = vadd.xlane.f32.xlu0 %v631
      %v633 = vpop.xlane.xlu0 %632
      %v634 = vmul.f32 %v621, %v603
      %v635 = vmul.f32 %v624, %v603
      %v636 = vmul.f32 %v627, %v603
      %v637 = vmul.f32 %v630, %v603
      %v638 = vmul.f32 %v633, %v603
      %v639 = vadd.f32 %v634, 1e-05
      %v640 = vadd.f32 %v635, 1e-05
      %v641 = vadd.f32 %v636, 1e-05
      %v642 = vadd.f32 %v637, 1e-05
      %v643 = vadd.f32 %v638, 1e-05
      %v644 = vrsqrt.pop %v639
      %v645 = vrsqrt.pop %v640
      %v646 = vrsqrt.pop %v641
      %v647 = vrsqrt.pop %v642
      %v648 = vrsqrt.pop %v643
      %v649 = vmul.f32 %v609, %v644
      %v650 = vmul.f32 %v610, %v645
      %v651 = vmul.f32 %v611, %v646
      %v652 = vmul.f32 %v612, %v647
      %v653 = vmul.f32 %v613, %v648
      %v655 = vlaneseq
      %v656 = vshrl.u32 %v655, 7
      %v657 = vsub.s32 0, %v656
      %v658 = vrot.slane %v584, %v657
      %v660 = vmul.f32 %v649, %v658
      %v661 = vmul.f32 %v650, %v658
      %v662 = vmul.f32 %v651, %v658
      %v663 = vmul.f32 %v652, %v658
      %v664 = vmul.f32 %v653, %v658
      %v666 = vlaneseq
      %v667 = vshrl.u32 %v666, 7
      %v668 = vsub.s32 0, %v667
      %v669 = vrot.slane %v585, %v668
      %v671 = vadd.f32 %v660, %v669
      %v672 = vadd.f32 %v661, %v669
      %v673 = vadd.f32 %v662, %v669
      %v674 = vadd.f32 %v663, %v669
      %v675 = vadd.f32 %v664, %v669
      %v676 = vld [vmem:[%s5] sm:$0xff]
      %v677 = vld [vmem:[%s5 + $0x8] sm:$0xff]
      %v679 = vsel %vm586, %v671, 0
      %v682 = vsel %vm586, %v672, 0
      %v685 = vsel %vm586, %v673, 0
      %v688 = vsel %vm586, %v674, 0
      %v691 = vsel %vm586, %v675, 0
      %693 = vmatprep.subr.mxu0 0.0
      %694 = vmatpush1.msra.mxu0 0.0
      %695 = vmatprep.subr.mxu0 0.0
      %696 = vmatpush1.msra.mxu0 0.0
      %697 = vmatprep.subr.mxu0 0.0
      %698 = vmatpush1.msra.mxu0 0.0
      %699 = vmatprep.subr.mxu0 0.0
      %700 = vmatpush1.msra.mxu0 0.0
      %701 = vmatprep.subr.mxu0 0.0
      %702 = vmatpush1.msra.mxu0 0.0
      %703 = vmatprep.subr.mxu0 0.0
      %704 = vmatpush1.msra.mxu0 0.0
      %705 = vmatprep.subr.mxu0 0.0
      %706 = vmatpush1.msra.mxu0 0.0
      %707 = vmatprep.subr.mxu0 0.0
      %708 = vmatpush1.msra.mxu0 0.0
      %709 = vmatprep.subr.mxu0 0.0
      %710 = vmatpush1.msra.mxu0 0.0
      %711 = vmatprep.subr.mxu0 0.0
      %712 = vmatpush1.msra.mxu0 0.0
      %713 = vmatprep.subr.mxu0 0.0
      %714 = vmatpush1.msra.mxu0 0.0
      %715 = vmatprep.subr.mxu0 0.0
      %716 = vmatpush1.msra.mxu0 0.0
      %717 = vmatprep.subr.mxu0 0.0
      %718 = vmatpush1.msra.mxu0 0.0
      %719 = vmatprep.subr.mxu0 0.0
      %720 = vmatpush1.msra.mxu0 0.0
      %721 = vmatprep.subr.mxu0 0.0
      %722 = vmatpush1.msra.mxu0 %v677
      %723 = vmatprep.subr.mxu0 0.0
      %724 = vmatpush1.msra.mxu0 %v676
      %725 = vmatprep.subr.mxu0 0.0
      %726 = vmatpush2.msra.mxu0 0.0
      %727 = vmatprep.subr.mxu0 0.0
      %728 = vmatpush2.msra.mxu0 0.0
      %729 = vmatprep.subr.mxu0 0.0
      %730 = vmatpush2.msra.mxu0 0.0
      %731 = vmatprep.subr.mxu0 0.0
      %732 = vmatpush2.msra.mxu0 0.0
      %733 = vmatprep.subr.mxu0 0.0
      %734 = vmatpush2.msra.mxu0 0.0
      %735 = vmatprep.subr.mxu0 0.0
      %736 = vmatpush2.msra.mxu0 0.0
      %737 = vmatprep.subr.mxu0 0.0
      %738 = vmatpush2.msra.mxu0 0.0
      %739 = vmatprep.subr.mxu0 0.0
      %740 = vmatpush2.msra.mxu0 0.0
      %741 = vmatprep.subr.mxu0 0.0
      %742 = vmatpush2.msra.mxu0 0.0
      %743 = vmatprep.subr.mxu0 0.0
      %744 = vmatpush2.msra.mxu0 0.0
      %745 = vmatprep.subr.mxu0 0.0
      %746 = vmatpush2.msra.mxu0 0.0
      %747 = vmatprep.subr.mxu0 0.0
      %748 = vmatpush2.msra.mxu0 0.0
      %749 = vmatprep.subr.mxu0 0.0
      %750 = vmatpush2.msra.mxu0 0.0
      %751 = vmatprep.subr.mxu0 0.0
      %752 = vmatpush2.msra.mxu0 0.0
      %753 = vmatprep.subr.mxu0 0.0
      %754 = vmatpush2.msra.mxu0 0.0
      %755 = vmatprep.subr.mxu0 0.0
      %756 = vmatpush2.msra.mxu0 0.0
      %757 = vmatprep.mubr.f32.mxu0 0.0
      %758 = vmatmul.mubr.f32.gmra.mxu0 %v679
      %v759 = vpop.f32.mrf.mxu0
      %v760 = vadd.f32 0.0, %v759
      %v761 = vpop.f32.mrf.mxu0
      %762 = vmatprep.mubr.f32.mxu0 0.0
      %763 = vmatmul.mubr.f32.gmra.mxu0 %v682
      %v764 = vpop.f32.mrf.mxu0
      %v765 = vadd.f32 0.0, %v764
      %v766 = vpop.f32.mrf.mxu0
      %767 = vmatprep.mubr.f32.mxu0 0.0
      %768 = vmatmul.mubr.f32.gmra.mxu0 %v685
      %v769 = vpop.f32.mrf.mxu0
      %v770 = vadd.f32 0.0, %v769
      %v771 = vpop.f32.mrf.mxu0
      %772 = vmatprep.mubr.f32.mxu0 0.0
      %773 = vmatmul.mubr.f32.gmra.mxu0 %v688
      %v774 = vpop.f32.mrf.mxu0
      %v775 = vadd.f32 0.0, %v774
      %v776 = vpop.f32.mrf.mxu0
      %777 = vmatprep.mubr.f32.mxu0 0.0
      %778 = vmatmul.mubr.f32.gmra.mxu0 %v691
      %v779 = vpop.f32.mrf.mxu0
      %v780 = vadd.f32 0.0, %v779
      %v781 = vpop.f32.mrf.mxu0
      %782 = vdwg.mxu0
      %788 = vrot.lane.b32.xlu0 %v760, 96
      %v789 = vpop.permute.xlu0 %788
      %790 = vrot.lane.b32.xlu0 %v765, 96
      %v791 = vpop.permute.xlu0 %790
      %792 = vrot.lane.b32.xlu0 %v770, 96
      %v793 = vpop.permute.xlu0 %792
      %794 = vrot.lane.b32.xlu0 %v775, 96
      %v795 = vpop.permute.xlu0 %794
      %796 = vrot.lane.b32.xlu0 %v780, 96
      %v797 = vpop.permute.xlu0 %796
      %v798 = vsel %vm586, %v760, 0
      %v800 = vsel %vm586, %v765, 0
      %v802 = vsel %vm586, %v770, 0
      %v804 = vsel %vm586, %v775, 0
      %v806 = vsel %vm586, %v780, 0
      %v808 = vsel %vm586, %v789, 0
      %v810 = vsel %vm586, %v791, 0
      %v812 = vsel %vm586, %v793, 0
      %v814 = vsel %vm586, %v795, 0
      %v816 = vsel %vm586, %v797, 0
      %818 = vmatprep.subr.mxu0 0.0
      %819 = vmatpush1.xpose.msra.mxu0 0.0
      %820 = vmatprep.subr.mxu0 0.0
      %821 = vmatpush1.xpose.msra.mxu0 0.0
      %822 = vmatprep.subr.mxu0 0.0
      %823 = vmatpush1.xpose.msra.mxu0 0.0
      %824 = vmatprep.subr.mxu0 0.0
      %825 = vmatpush1.xpose.msra.mxu0 0.0
      %826 = vmatprep.subr.mxu0 0.0
      %827 = vmatpush1.xpose.msra.mxu0 0.0
      %828 = vmatprep.subr.mxu0 0.0
      %829 = vmatpush1.xpose.msra.mxu0 0.0
      %830 = vmatprep.subr.mxu0 0.0
      %831 = vmatpush1.xpose.msra.mxu0 0.0
      %832 = vmatprep.subr.mxu0 0.0
      %833 = vmatpush1.xpose.msra.mxu0 0.0
      %834 = vmatprep.subr.mxu0 0.0
      %835 = vmatpush1.xpose.msra.mxu0 0.0
      %836 = vmatprep.subr.mxu0 0.0
      %837 = vmatpush1.xpose.msra.mxu0 0.0
      %838 = vmatprep.subr.mxu0 0.0
      %839 = vmatpush1.xpose.msra.mxu0 0.0
      %840 = vmatprep.subr.mxu0 0.0
      %841 = vmatpush1.xpose.msra.mxu0 %v816
      %842 = vmatprep.subr.mxu0 0.0
      %843 = vmatpush1.xpose.msra.mxu0 %v814
      %844 = vmatprep.subr.mxu0 0.0
      %845 = vmatpush1.xpose.msra.mxu0 %v812
      %846 = vmatprep.subr.mxu0 0.0
      %847 = vmatpush1.xpose.msra.mxu0 %v810
      %848 = vmatprep.subr.mxu0 0.0
      %849 = vmatpush1.xpose.msra.mxu0 %v808
      %850 = vmatprep.subr.mxu0 0.0
      %851 = vmatpush2.xpose.msra.mxu0 0.0
      %852 = vmatprep.subr.mxu0 0.0
      %853 = vmatpush2.xpose.msra.mxu0 0.0
      %854 = vmatprep.subr.mxu0 0.0
      %855 = vmatpush2.xpose.msra.mxu0 0.0
      %856 = vmatprep.subr.mxu0 0.0
      %857 = vmatpush2.xpose.msra.mxu0 0.0
      %858 = vmatprep.subr.mxu0 0.0
      %859 = vmatpush2.xpose.msra.mxu0 0.0
      %860 = vmatprep.subr.mxu0 0.0
      %861 = vmatpush2.xpose.msra.mxu0 0.0
      %862 = vmatprep.subr.mxu0 0.0
      %863 = vmatpush2.xpose.msra.mxu0 0.0
      %864 = vmatprep.subr.mxu0 0.0
      %865 = vmatpush2.xpose.msra.mxu0 0.0
      %866 = vmatprep.subr.mxu0 0.0
      %867 = vmatpush2.xpose.msra.mxu0 0.0
      %868 = vmatprep.subr.mxu0 0.0
      %869 = vmatpush2.xpose.msra.mxu0 0.0
      %870 = vmatprep.subr.mxu0 0.0
      %871 = vmatpush2.xpose.msra.mxu0 0.0
      %872 = vmatprep.subr.mxu0 0.0
      %873 = vmatpush2.xpose.msra.mxu0 0.0
      %874 = vmatprep.subr.mxu0 0.0
      %875 = vmatpush2.xpose.msra.mxu0 0.0
      %876 = vmatprep.subr.mxu0 0.0
      %877 = vmatpush2.xpose.msra.mxu0 0.0
      %878 = vmatprep.subr.mxu0 0.0
      %879 = vmatpush2.xpose.msra.mxu0 0.0
      %880 = vmatprep.subr.mxu0 0.0
      %881 = vmatpush2.xpose.msra.mxu0 0.0
      %882 = vmatprep.mubr.f32.mxu0 0.0
      %883 = vmatmul.mubr.f32.gmra.mxu0 %v798
      %v884 = vpop.f32.mrf.mxu0
      %v885 = vadd.f32 0.0, %v884
      %v886 = vpop.f32.mrf.mxu0
      %887 = vmatprep.mubr.f32.mxu0 0.0
      %888 = vmatmul.mubr.f32.gmra.mxu0 %v800
      %v889 = vpop.f32.mrf.mxu0
      %v890 = vadd.f32 0.0, %v889
      %v891 = vpop.f32.mrf.mxu0
      %892 = vmatprep.mubr.f32.mxu0 0.0
      %893 = vmatmul.mubr.f32.gmra.mxu0 %v802
      %v894 = vpop.f32.mrf.mxu0
      %v895 = vadd.f32 0.0, %v894
      %v896 = vpop.f32.mrf.mxu0
      %897 = vmatprep.mubr.f32.mxu0 0.0
      %898 = vmatmul.mubr.f32.gmra.mxu0 %v804
      %v899 = vpop.f32.mrf.mxu0
      %v900 = vadd.f32 0.0, %v899
      %v901 = vpop.f32.mrf.mxu0
      %902 = vmatprep.mubr.f32.mxu0 0.0
      %903 = vmatmul.mubr.f32.gmra.mxu0 %v806
      %v904 = vpop.f32.mrf.mxu0
      %v905 = vadd.f32 0.0, %v904
      %v906 = vpop.f32.mrf.mxu0
      %907 = vdwg.mxu0
      %vm908 = vcmask 269312
      %v909 = vsel %vm908, %v885, -inf
      %910 = vmax.xlane.f32.xlu0 %v909
      %v911 = vpop.xlane.xlu0 %910
      %v912 = vsel %vm908, %v890, -inf
      %913 = vmax.xlane.f32.xlu0 %v912
      %v914 = vpop.xlane.xlu0 %913
      %v915 = vsel %vm908, %v895, -inf
      %916 = vmax.xlane.f32.xlu0 %v915
      %v917 = vpop.xlane.xlu0 %916
      %v918 = vsel %vm908, %v900, -inf
      %919 = vmax.xlane.f32.xlu0 %v918
      %v920 = vpop.xlane.xlu0 %919
      %vm921 = vcmask 262144
      %v922 = vsel %vm921, %v905, -inf
      %923 = vmax.xlane.f32.xlu0 %v922
      %v924 = vpop.xlane.xlu0 %923
      %v925 = vsub.f32 %v885, %v911
      %v926 = vsub.f32 %v890, %v914
      %v927 = vsub.f32 %v895, %v917
      %v928 = vsub.f32 %v900, %v920
      %v929 = vsub.f32 %v905, %v924
      %v930 = vmul.f32 %v925, 1.442695
      %v931 = vpow.pop %v930
      %v932 = vmul.f32 %v926, 1.442695
      %v933 = vpow.pop %v932
      %v934 = vmul.f32 %v927, 1.442695
      %v935 = vpow.pop %v934
      %v936 = vmul.f32 %v928, 1.442695
      %v937 = vpow.pop %v936
      %v938 = vmul.f32 %v929, 1.442695
      %v939 = vpow.pop %v938
      %v940 = vsel %vm908, %v931, 0.0
      %941 = vadd.xlane.f32.xlu0 %v940
      %v942 = vpop.xlane.xlu0 %941
      %v943 = vsel %vm908, %v933, 0.0
      %944 = vadd.xlane.f32.xlu0 %v943
      %v945 = vpop.xlane.xlu0 %944
      %v946 = vsel %vm908, %v935, 0.0
      %947 = vadd.xlane.f32.xlu0 %v946
      %v948 = vpop.xlane.xlu0 %947
      %v949 = vsel %vm908, %v937, 0.0
      %950 = vadd.xlane.f32.xlu0 %v949
      %v951 = vpop.xlane.xlu0 %950
      %v952 = vsel %vm921, %v939, 0.0
      %953 = vadd.xlane.f32.xlu0 %v952
      %v954 = vpop.xlane.xlu0 %953
      %v955 = vrcp.pop %v942
      %v956 = vrcp.pop %v945
      %v957 = vrcp.pop %v948
      %v958 = vrcp.pop %v951
      %v959 = vrcp.pop %v954
      %v960 = vmul.f32 %v931, %v955
      %v961 = vmul.f32 %v933, %v956
      %v962 = vmul.f32 %v935, %v957
      %v963 = vmul.f32 %v937, %v958
      %v964 = vmul.f32 %v939, %v959
      %965 = vrot.lane.b32.xlu0 %v760, 64
      %v966 = vpop.permute.xlu0 %965
      %967 = vrot.lane.b32.xlu0 %v765, 64
      %v968 = vpop.permute.xlu0 %967
      %969 = vrot.lane.b32.xlu0 %v770, 64
      %v970 = vpop.permute.xlu0 %969
      %971 = vrot.lane.b32.xlu0 %v775, 64
      %v972 = vpop.permute.xlu0 %971
      %973 = vrot.lane.b32.xlu0 %v780, 64
      %v974 = vpop.permute.xlu0 %973
      %v980 = vsel %vm908, %v960, 0
      %v983 = vsel %vm908, %v961, 0
      %v986 = vsel %vm908, %v962, 0
      %v989 = vsel %vm908, %v963, 0
      %v992 = vsel %vm908, %v964, 0
      %vm994 = vcmask 1040384
      %v995 = vsel %vm994, %v974, 0
      %997 = vmatprep.subr.mxu0 0.0
      %998 = vmatpush1.msra.mxu0 0.0
      %999 = vmatprep.subr.mxu0 0.0
      %1000 = vmatpush1.msra.mxu0 0.0
      %1001 = vmatprep.subr.mxu0 0.0
      %1002 = vmatpush1.msra.mxu0 0.0
      %1003 = vmatprep.subr.mxu0 0.0
      %1004 = vmatpush1.msra.mxu0 0.0
      %1005 = vmatprep.subr.mxu0 0.0
      %1006 = vmatpush1.msra.mxu0 0.0
      %1007 = vmatprep.subr.mxu0 0.0
      %1008 = vmatpush1.msra.mxu0 0.0
      %1009 = vmatprep.subr.mxu0 0.0
      %1010 = vmatpush1.msra.mxu0 0.0
      %1011 = vmatprep.subr.mxu0 0.0
      %1012 = vmatpush1.msra.mxu0 0.0
      %1013 = vmatprep.subr.mxu0 0.0
      %1014 = vmatpush1.msra.mxu0 0.0
      %1015 = vmatprep.subr.mxu0 0.0
      %1016 = vmatpush1.msra.mxu0 0.0
      %1017 = vmatprep.subr.mxu0 0.0
      %1018 = vmatpush1.msra.mxu0 0.0
      %1019 = vmatprep.subr.mxu0 0.0
      %1020 = vmatpush1.msra.mxu0 %v995
      %1021 = vmatprep.subr.mxu0 0.0
      %1022 = vmatpush1.msra.mxu0 %v972
      %1023 = vmatprep.subr.mxu0 0.0
      %1024 = vmatpush1.msra.mxu0 %v970
      %1025 = vmatprep.subr.mxu0 0.0
      %1026 = vmatpush1.msra.mxu0 %v968
      %1027 = vmatprep.subr.mxu0 0.0
      %1028 = vmatpush1.msra.mxu0 %v966
      %1029 = vmatprep.subr.mxu0 0.0
      %1030 = vmatpush2.msra.mxu0 0.0
      %1031 = vmatprep.subr.mxu0 0.0
      %1032 = vmatpush2.msra.mxu0 0.0
      %1033 = vmatprep.subr.mxu0 0.0
      %1034 = vmatpush2.msra.mxu0 0.0
      %1035 = vmatprep.subr.mxu0 0.0
      %1036 = vmatpush2.msra.mxu0 0.0
      %1037 = vmatprep.subr.mxu0 0.0
      %1038 = vmatpush2.msra.mxu0 0.0
      %1039 = vmatprep.subr.mxu0 0.0
      %1040 = vmatpush2.msra.mxu0 0.0
      %1041 = vmatprep.subr.mxu0 0.0
      %1042 = vmatpush2.msra.mxu0 0.0
      %1043 = vmatprep.subr.mxu0 0.0
      %1044 = vmatpush2.msra.mxu0 0.0
      %1045 = vmatprep.subr.mxu0 0.0
      %1046 = vmatpush2.msra.mxu0 0.0
      %1047 = vmatprep.subr.mxu0 0.0
      %1048 = vmatpush2.msra.mxu0 0.0
      %1049 = vmatprep.subr.mxu0 0.0
      %1050 = vmatpush2.msra.mxu0 0.0
      %1051 = vmatprep.subr.mxu0 0.0
      %1052 = vmatpush2.msra.mxu0 0.0
      %1053 = vmatprep.subr.mxu0 0.0
      %1054 = vmatpush2.msra.mxu0 0.0
      %1055 = vmatprep.subr.mxu0 0.0
      %1056 = vmatpush2.msra.mxu0 0.0
      %1057 = vmatprep.subr.mxu0 0.0
      %1058 = vmatpush2.msra.mxu0 0.0
      %1059 = vmatprep.subr.mxu0 0.0
      %1060 = vmatpush2.msra.mxu0 0.0
      %1061 = vmatprep.mubr.f32.mxu0 0.0
      %1062 = vmatmul.mubr.f32.gmra.mxu0 %v980
      %v1063 = vpop.f32.mrf.mxu0
      %v1064 = vadd.f32 0.0, %v1063
      %v1065 = vpop.f32.mrf.mxu0
      %1066 = vmatprep.mubr.f32.mxu0 0.0
      %1067 = vmatmul.mubr.f32.gmra.mxu0 %v983
      %v1068 = vpop.f32.mrf.mxu0
      %v1069 = vadd.f32 0.0, %v1068
      %v1070 = vpop.f32.mrf.mxu0
      %1071 = vmatprep.mubr.f32.mxu0 0.0
      %1072 = vmatmul.mubr.f32.gmra.mxu0 %v986
      %v1073 = vpop.f32.mrf.mxu0
      %v1074 = vadd.f32 0.0, %v1073
      %v1075 = vpop.f32.mrf.mxu0
      %1076 = vmatprep.mubr.f32.mxu0 0.0
      %1077 = vmatmul.mubr.f32.gmra.mxu0 %v989
      %v1078 = vpop.f32.mrf.mxu0
      %v1079 = vadd.f32 0.0, %v1078
      %v1080 = vpop.f32.mrf.mxu0
      %1081 = vmatprep.mubr.f32.mxu0 0.0
      %1082 = vmatmul.mubr.f32.gmra.mxu0 %v992
      %v1083 = vpop.f32.mrf.mxu0
      %v1084 = vadd.f32 0.0, %v1083
      %v1085 = vpop.f32.mrf.mxu0
      %1086 = vdwg.mxu0
      %v1087 = vld [vmem:[%s6] sm:$0xff]
      %v1088 = vld [vmem:[%s6 + $0x8] sm:$0xff]
      %1089 = vrot.lane.b32.xlu0 %v760, 112
      %v1090 = vpop.permute.xlu0 %1089
      %1091 = vrot.lane.b32.xlu0 %v765, 112
      %v1092 = vpop.permute.xlu0 %1091
      %1093 = vrot.lane.b32.xlu0 %v770, 112
      %v1094 = vpop.permute.xlu0 %1093
      %1095 = vrot.lane.b32.xlu0 %v775, 112
      %v1096 = vpop.permute.xlu0 %1095
      %1097 = vrot.lane.b32.xlu0 %v780, 112
      %v1098 = vpop.permute.xlu0 %1097
      %1099 = vrot.lane.b32.xlu0 %v760, 80
      %v1100 = vpop.permute.xlu0 %1099
      %1101 = vrot.lane.b32.xlu0 %v765, 80
      %v1102 = vpop.permute.xlu0 %1101
      %1103 = vrot.lane.b32.xlu0 %v770, 80
      %v1104 = vpop.permute.xlu0 %1103
      %1105 = vrot.lane.b32.xlu0 %v775, 80
      %v1106 = vpop.permute.xlu0 %1105
      %1107 = vrot.lane.b32.xlu0 %v780, 80
      %v1108 = vpop.permute.xlu0 %1107
      %v1109 = vsel %vm586, %v1090, 0
      %v1111 = vsel %vm586, %v1092, 0
      %v1113 = vsel %vm586, %v1094, 0
      %v1115 = vsel %vm586, %v1096, 0
      %v1117 = vsel %vm586, %v1098, 0
      %v1119 = vsel %vm586, %v1100, 0
      %v1121 = vsel %vm586, %v1102, 0
      %v1123 = vsel %vm586, %v1104, 0
      %v1125 = vsel %vm586, %v1106, 0
      %v1127 = vsel %vm586, %v1108, 0
      %1129 = vmatprep.subr.mxu0 0.0
      %1130 = vmatpush1.xpose.msra.mxu0 0.0
      %1131 = vmatprep.subr.mxu0 0.0
      %1132 = vmatpush1.xpose.msra.mxu0 0.0
      %1133 = vmatprep.subr.mxu0 0.0
      %1134 = vmatpush1.xpose.msra.mxu0 0.0
      %1135 = vmatprep.subr.mxu0 0.0
      %1136 = vmatpush1.xpose.msra.mxu0 0.0
      %1137 = vmatprep.subr.mxu0 0.0
      %1138 = vmatpush1.xpose.msra.mxu0 0.0
      %1139 = vmatprep.subr.mxu0 0.0
      %1140 = vmatpush1.xpose.msra.mxu0 0.0
      %1141 = vmatprep.subr.mxu0 0.0
      %1142 = vmatpush1.xpose.msra.mxu0 0.0
      %1143 = vmatprep.subr.mxu0 0.0
      %1144 = vmatpush1.xpose.msra.mxu0 0.0
      %1145 = vmatprep.subr.mxu0 0.0
      %1146 = vmatpush1.xpose.msra.mxu0 0.0
      %1147 = vmatprep.subr.mxu0 0.0
      %1148 = vmatpush1.xpose.msra.mxu0 0.0
      %1149 = vmatprep.subr.mxu0 0.0
      %1150 = vmatpush1.xpose.msra.mxu0 0.0
      %1151 = vmatprep.subr.mxu0 0.0
      %1152 = vmatpush1.xpose.msra.mxu0 %v1127
      %1153 = vmatprep.subr.mxu0 0.0
      %1154 = vmatpush1.xpose.msra.mxu0 %v1125
      %1155 = vmatprep.subr.mxu0 0.0
      %1156 = vmatpush1.xpose.msra.mxu0 %v1123
      %1157 = vmatprep.subr.mxu0 0.0
      %1158 = vmatpush1.xpose.msra.mxu0 %v1121
      %1159 = vmatprep.subr.mxu0 0.0
      %1160 = vmatpush1.xpose.msra.mxu0 %v1119
      %1161 = vmatprep.subr.mxu0 0.0
      %1162 = vmatpush2.xpose.msra.mxu0 0.0
      %1163 = vmatprep.subr.mxu0 0.0
      %1164 = vmatpush2.xpose.msra.mxu0 0.0
      %1165 = vmatprep.subr.mxu0 0.0
      %1166 = vmatpush2.xpose.msra.mxu0 0.0
      %1167 = vmatprep.subr.mxu0 0.0
      %1168 = vmatpush2.xpose.msra.mxu0 0.0
      %1169 = vmatprep.subr.mxu0 0.0
      %1170 = vmatpush2.xpose.msra.mxu0 0.0
      %1171 = vmatprep.subr.mxu0 0.0
      %1172 = vmatpush2.xpose.msra.mxu0 0.0
      %1173 = vmatprep.subr.mxu0 0.0
      %1174 = vmatpush2.xpose.msra.mxu0 0.0
      %1175 = vmatprep.subr.mxu0 0.0
      %1176 = vmatpush2.xpose.msra.mxu0 0.0
      %1177 = vmatprep.subr.mxu0 0.0
      %1178 = vmatpush2.xpose.msra.mxu0 0.0
      %1179 = vmatprep.subr.mxu0 0.0
      %1180 = vmatpush2.xpose.msra.mxu0 0.0
      %1181 = vmatprep.subr.mxu0 0.0
      %1182 = vmatpush2.xpose.msra.mxu0 0.0
      %1183 = vmatprep.subr.mxu0 0.0
      %1184 = vmatpush2.xpose.msra.mxu0 0.0
      %1185 = vmatprep.subr.mxu0 0.0
      %1186 = vmatpush2.xpose.msra.mxu0 0.0
      %1187 = vmatprep.subr.mxu0 0.0
      %1188 = vmatpush2.xpose.msra.mxu0 0.0
      %1189 = vmatprep.subr.mxu0 0.0
      %1190 = vmatpush2.xpose.msra.mxu0 0.0
      %1191 = vmatprep.subr.mxu0 0.0
      %1192 = vmatpush2.xpose.msra.mxu0 0.0
      %1193 = vmatprep.mubr.f32.mxu0 0.0
      %1194 = vmatmul.mubr.f32.gmra.mxu0 %v1109
      %v1195 = vpop.f32.mrf.mxu0
      %v1196 = vadd.f32 0.0, %v1195
      %v1197 = vpop.f32.mrf.mxu0
      %1198 = vmatprep.mubr.f32.mxu0 0.0
      %1199 = vmatmul.mubr.f32.gmra.mxu0 %v1111
      %v1200 = vpop.f32.mrf.mxu0
      %v1201 = vadd.f32 0.0, %v1200
      %v1202 = vpop.f32.mrf.mxu0
      %1203 = vmatprep.mubr.f32.mxu0 0.0
      %1204 = vmatmul.mubr.f32.gmra.mxu0 %v1113
      %v1205 = vpop.f32.mrf.mxu0
      %v1206 = vadd.f32 0.0, %v1205
      %v1207 = vpop.f32.mrf.mxu0
      %1208 = vmatprep.mubr.f32.mxu0 0.0
      %1209 = vmatmul.mubr.f32.gmra.mxu0 %v1115
      %v1210 = vpop.f32.mrf.mxu0
      %v1211 = vadd.f32 0.0, %v1210
      %v1212 = vpop.f32.mrf.mxu0
      %1213 = vmatprep.mubr.f32.mxu0 0.0
      %1214 = vmatmul.mubr.f32.gmra.mxu0 %v1117
      %v1215 = vpop.f32.mrf.mxu0
      %v1216 = vadd.f32 0.0, %v1215
      %v1217 = vpop.f32.mrf.mxu0
      %1218 = vdwg.mxu0
      %v1219 = vsel %vm908, %v1196, -inf
      %1220 = vmax.xlane.f32.xlu0 %v1219
      %v1221 = vpop.xlane.xlu0 %1220
      %v1222 = vsel %vm908, %v1201, -inf
      %1223 = vmax.xlane.f32.xlu0 %v1222
      %v1224 = vpop.xlane.xlu0 %1223
      %v1225 = vsel %vm908, %v1206, -inf
      %1226 = vmax.xlane.f32.xlu0 %v1225
      %v1227 = vpop.xlane.xlu0 %1226
      %v1228 = vsel %vm908, %v1211, -inf
      %1229 = vmax.xlane.f32.xlu0 %v1228
      %v1230 = vpop.xlane.xlu0 %1229
      %v1231 = vsel %vm921, %v1216, -inf
      %1232 = vmax.xlane.f32.xlu0 %v1231
      %v1233 = vpop.xlane.xlu0 %1232
      %v1234 = vsub.f32 %v1196, %v1221
      %v1235 = vsub.f32 %v1201, %v1224
      %v1236 = vsub.f32 %v1206, %v1227
      %v1237 = vsub.f32 %v1211, %v1230
      %v1238 = vsub.f32 %v1216, %v1233
      %v1239 = vmul.f32 %v1234, 1.442695
      %v1240 = vpow.pop %v1239
      %v1241 = vmul.f32 %v1235, 1.442695
      %v1242 = vpow.pop %v1241
      %v1243 = vmul.f32 %v1236, 1.442695
      %v1244 = vpow.pop %v1243
      %v1245 = vmul.f32 %v1237, 1.442695
      %v1246 = vpow.pop %v1245
      %v1247 = vmul.f32 %v1238, 1.442695
      %v1248 = vpow.pop %v1247
      %v1249 = vsel %vm908, %v1240, 0.0
      %1250 = vadd.xlane.f32.xlu0 %v1249
      %v1251 = vpop.xlane.xlu0 %1250
      %v1252 = vsel %vm908, %v1242, 0.0
      %1253 = vadd.xlane.f32.xlu0 %v1252
      %v1254 = vpop.xlane.xlu0 %1253
      %v1255 = vsel %vm908, %v1244, 0.0
      %1256 = vadd.xlane.f32.xlu0 %v1255
      %v1257 = vpop.xlane.xlu0 %1256
      %v1258 = vsel %vm908, %v1246, 0.0
      %1259 = vadd.xlane.f32.xlu0 %v1258
      %v1260 = vpop.xlane.xlu0 %1259
      %v1261 = vsel %vm921, %v1248, 0.0
      %1262 = vadd.xlane.f32.xlu0 %v1261
      %v1263 = vpop.xlane.xlu0 %1262
      %v1264 = vrcp.pop %v1251
      %v1265 = vrcp.pop %v1254
      %v1266 = vrcp.pop %v1257
      %v1267 = vrcp.pop %v1260
      %v1268 = vrcp.pop %v1263
      %v1269 = vmul.f32 %v1240, %v1264
      %v1270 = vmul.f32 %v1242, %v1265
      %v1271 = vmul.f32 %v1244, %v1266
      %v1272 = vmul.f32 %v1246, %v1267
      %v1273 = vmul.f32 %v1248, %v1268
      %1274 = vrot.lane.b32.xlu0 %v760, 48
      %v1275 = vpop.permute.xlu0 %1274
      %1276 = vrot.lane.b32.xlu0 %v765, 48
      %v1277 = vpop.permute.xlu0 %1276
      %1278 = vrot.lane.b32.xlu0 %v770, 48
      %v1279 = vpop.permute.xlu0 %1278
      %1280 = vrot.lane.b32.xlu0 %v775, 48
      %v1281 = vpop.permute.xlu0 %1280
      %1282 = vrot.lane.b32.xlu0 %v780, 48
      %v1283 = vpop.permute.xlu0 %1282
      %v1289 = vsel %vm908, %v1269, 0
      %v1292 = vsel %vm908, %v1270, 0
      %v1295 = vsel %vm908, %v1271, 0
      %v1298 = vsel %vm908, %v1272, 0
      %v1301 = vsel %vm908, %v1273, 0
      %v1303 = vsel %vm994, %v1283, 0
      %1305 = vmatprep.subr.mxu0 0.0
      %1306 = vmatpush1.msra.mxu0 0.0
      %1307 = vmatprep.subr.mxu0 0.0
      %1308 = vmatpush1.msra.mxu0 0.0
      %1309 = vmatprep.subr.mxu0 0.0
      %1310 = vmatpush1.msra.mxu0 0.0
      %1311 = vmatprep.subr.mxu0 0.0
      %1312 = vmatpush1.msra.mxu0 0.0
      %1313 = vmatprep.subr.mxu0 0.0
      %1314 = vmatpush1.msra.mxu0 0.0
      %1315 = vmatprep.subr.mxu0 0.0
      %1316 = vmatpush1.msra.mxu0 0.0
      %1317 = vmatprep.subr.mxu0 0.0
      %1318 = vmatpush1.msra.mxu0 0.0
      %1319 = vmatprep.subr.mxu0 0.0
      %1320 = vmatpush1.msra.mxu0 0.0
      %1321 = vmatprep.subr.mxu0 0.0
      %1322 = vmatpush1.msra.mxu0 0.0
      %1323 = vmatprep.subr.mxu0 0.0
      %1324 = vmatpush1.msra.mxu0 0.0
      %1325 = vmatprep.subr.mxu0 0.0
      %1326 = vmatpush1.msra.mxu0 0.0
      %1327 = vmatprep.subr.mxu0 0.0
      %1328 = vmatpush1.msra.mxu0 %v1303
      %1329 = vmatprep.subr.mxu0 0.0
      %1330 = vmatpush1.msra.mxu0 %v1281
      %1331 = vmatprep.subr.mxu0 0.0
      %1332 = vmatpush1.msra.mxu0 %v1279
      %1333 = vmatprep.subr.mxu0 0.0
      %1334 = vmatpush1.msra.mxu0 %v1277
      %1335 = vmatprep.subr.mxu0 0.0
      %1336 = vmatpush1.msra.mxu0 %v1275
      %1337 = vmatprep.subr.mxu0 0.0
      %1338 = vmatpush2.msra.mxu0 0.0
      %1339 = vmatprep.subr.mxu0 0.0
      %1340 = vmatpush2.msra.mxu0 0.0
      %1341 = vmatprep.subr.mxu0 0.0
      %1342 = vmatpush2.msra.mxu0 0.0
      %1343 = vmatprep.subr.mxu0 0.0
      %1344 = vmatpush2.msra.mxu0 0.0
      %1345 = vmatprep.subr.mxu0 0.0
      %1346 = vmatpush2.msra.mxu0 0.0
      %1347 = vmatprep.subr.mxu0 0.0
      %1348 = vmatpush2.msra.mxu0 0.0
      %1349 = vmatprep.subr.mxu0 0.0
      %1350 = vmatpush2.msra.mxu0 0.0
      %1351 = vmatprep.subr.mxu0 0.0
      %1352 = vmatpush2.msra.mxu0 0.0
      %1353 = vmatprep.subr.mxu0 0.0
      %1354 = vmatpush2.msra.mxu0 0.0
      %1355 = vmatprep.subr.mxu0 0.0
      %1356 = vmatpush2.msra.mxu0 0.0
      %1357 = vmatprep.subr.mxu0 0.0
      %1358 = vmatpush2.msra.mxu0 0.0
      %1359 = vmatprep.subr.mxu0 0.0
      %1360 = vmatpush2.msra.mxu0 0.0
      %1361 = vmatprep.subr.mxu0 0.0
      %1362 = vmatpush2.msra.mxu0 0.0
      %1363 = vmatprep.subr.mxu0 0.0
      %1364 = vmatpush2.msra.mxu0 0.0
      %1365 = vmatprep.subr.mxu0 0.0
      %1366 = vmatpush2.msra.mxu0 0.0
      %1367 = vmatprep.subr.mxu0 0.0
      %1368 = vmatpush2.msra.mxu0 0.0
      %1369 = vmatprep.mubr.f32.mxu0 0.0
      %1370 = vmatmul.mubr.f32.gmra.mxu0 %v1289
      %v1371 = vpop.f32.mrf.mxu0
      %v1372 = vadd.f32 0.0, %v1371
      %v1373 = vpop.f32.mrf.mxu0
      %1374 = vmatprep.mubr.f32.mxu0 0.0
      %1375 = vmatmul.mubr.f32.gmra.mxu0 %v1292
      %v1376 = vpop.f32.mrf.mxu0
      %v1377 = vadd.f32 0.0, %v1376
      %v1378 = vpop.f32.mrf.mxu0
      %1379 = vmatprep.mubr.f32.mxu0 0.0
      %1380 = vmatmul.mubr.f32.gmra.mxu0 %v1295
      %v1381 = vpop.f32.mrf.mxu0
      %v1382 = vadd.f32 0.0, %v1381
      %v1383 = vpop.f32.mrf.mxu0
      %1384 = vmatprep.mubr.f32.mxu0 0.0
      %1385 = vmatmul.mubr.f32.gmra.mxu0 %v1298
      %v1386 = vpop.f32.mrf.mxu0
      %v1387 = vadd.f32 0.0, %v1386
      %v1388 = vpop.f32.mrf.mxu0
      %1389 = vmatprep.mubr.f32.mxu0 0.0
      %1390 = vmatmul.mubr.f32.gmra.mxu0 %v1301
      %v1391 = vpop.f32.mrf.mxu0
      %v1392 = vadd.f32 0.0, %v1391
      %v1393 = vpop.f32.mrf.mxu0
      %1394 = vdwg.mxu0
      %s1395 = scalar_lea.vmem %s6, 16
      %v1396 = vld [vmem:[%s1395] sm:$0xff]
      %v1397 = vld [vmem:[%s1395 + $0x8] sm:$0xff]
      %v1399 = vsel %vm586, %v1372, 0
      %v1402 = vsel %vm586, %v1377, 0
      %v1405 = vsel %vm586, %v1382, 0
      %v1408 = vsel %vm586, %v1387, 0
      %v1411 = vsel %vm586, %v1392, 0
      %1413 = vmatprep.subr.mxu0 0.0
      %1414 = vmatpush1.msra.mxu0 0.0
      %1415 = vmatprep.subr.mxu0 0.0
      %1416 = vmatpush1.msra.mxu0 0.0
      %1417 = vmatprep.subr.mxu0 0.0
      %1418 = vmatpush1.msra.mxu0 0.0
      %1419 = vmatprep.subr.mxu0 0.0
      %1420 = vmatpush1.msra.mxu0 0.0
      %1421 = vmatprep.subr.mxu0 0.0
      %1422 = vmatpush1.msra.mxu0 0.0
      %1423 = vmatprep.subr.mxu0 0.0
      %1424 = vmatpush1.msra.mxu0 0.0
      %1425 = vmatprep.subr.mxu0 0.0
      %1426 = vmatpush1.msra.mxu0 0.0
      %1427 = vmatprep.subr.mxu0 0.0
      %1428 = vmatpush1.msra.mxu0 0.0
      %1429 = vmatprep.subr.mxu0 0.0
      %1430 = vmatpush1.msra.mxu0 0.0
      %1431 = vmatprep.subr.mxu0 0.0
      %1432 = vmatpush1.msra.mxu0 0.0
      %1433 = vmatprep.subr.mxu0 0.0
      %1434 = vmatpush1.msra.mxu0 0.0
      %1435 = vmatprep.subr.mxu0 0.0
      %1436 = vmatpush1.msra.mxu0 0.0
      %1437 = vmatprep.subr.mxu0 0.0
      %1438 = vmatpush1.msra.mxu0 0.0
      %1439 = vmatprep.subr.mxu0 0.0
      %1440 = vmatpush1.msra.mxu0 0.0
      %1441 = vmatprep.subr.mxu0 0.0
      %1442 = vmatpush1.msra.mxu0 %v1397
      %1443 = vmatprep.subr.mxu0 0.0
      %1444 = vmatpush1.msra.mxu0 %v1396
      %1445 = vmatprep.subr.mxu0 0.0
      %1446 = vmatpush2.msra.mxu0 0.0
      %1447 = vmatprep.subr.mxu0 0.0
      %1448 = vmatpush2.msra.mxu0 0.0
      %1449 = vmatprep.subr.mxu0 0.0
      %1450 = vmatpush2.msra.mxu0 0.0
      %1451 = vmatprep.subr.mxu0 0.0
      %1452 = vmatpush2.msra.mxu0 0.0
      %1453 = vmatprep.subr.mxu0 0.0
      %1454 = vmatpush2.msra.mxu0 0.0
      %1455 = vmatprep.subr.mxu0 0.0
      %1456 = vmatpush2.msra.mxu0 0.0
      %1457 = vmatprep.subr.mxu0 0.0
      %1458 = vmatpush2.msra.mxu0 0.0
      %1459 = vmatprep.subr.mxu0 0.0
      %1460 = vmatpush2.msra.mxu0 0.0
      %1461 = vmatprep.subr.mxu0 0.0
      %1462 = vmatpush2.msra.mxu0 0.0
      %1463 = vmatprep.subr.mxu0 0.0
      %1464 = vmatpush2.msra.mxu0 0.0
      %1465 = vmatprep.subr.mxu0 0.0
      %1466 = vmatpush2.msra.mxu0 0.0
      %1467 = vmatprep.subr.mxu0 0.0
      %1468 = vmatpush2.msra.mxu0 0.0
      %1469 = vmatprep.subr.mxu0 0.0
      %1470 = vmatpush2.msra.mxu0 0.0
      %1471 = vmatprep.subr.mxu0 0.0
      %1472 = vmatpush2.msra.mxu0 0.0
      %1473 = vmatprep.subr.mxu0 0.0
      %1474 = vmatpush2.msra.mxu0 0.0
      %1475 = vmatprep.subr.mxu0 0.0
      %1476 = vmatpush2.msra.mxu0 0.0
      %1477 = vmatprep.mubr.f32.mxu0 0.0
      %1478 = vmatmul.mubr.f32.gmra.mxu0 %v1399
      %v1479 = vpop.f32.mrf.mxu0
      %v1480 = vadd.f32 0.0, %v1479
      %v1481 = vpop.f32.mrf.mxu0
      %1482 = vmatprep.mubr.f32.mxu0 0.0
      %1483 = vmatmul.mubr.f32.gmra.mxu0 %v1402
      %v1484 = vpop.f32.mrf.mxu0
      %v1485 = vadd.f32 0.0, %v1484
      %v1486 = vpop.f32.mrf.mxu0
      %1487 = vmatprep.mubr.f32.mxu0 0.0
      %1488 = vmatmul.mubr.f32.gmra.mxu0 %v1405
      %v1489 = vpop.f32.mrf.mxu0
      %v1490 = vadd.f32 0.0, %v1489
      %v1491 = vpop.f32.mrf.mxu0
      %1492 = vmatprep.mubr.f32.mxu0 0.0
      %1493 = vmatmul.mubr.f32.gmra.mxu0 %v1408
      %v1494 = vpop.f32.mrf.mxu0
      %v1495 = vadd.f32 0.0, %v1494
      %v1496 = vpop.f32.mrf.mxu0
      %1497 = vmatprep.mubr.f32.mxu0 0.0
      %1498 = vmatmul.mubr.f32.gmra.mxu0 %v1411
      %v1499 = vpop.f32.mrf.mxu0
      %v1500 = vadd.f32 0.0, %v1499
      %v1501 = vpop.f32.mrf.mxu0
      %1502 = vdwg.mxu0
      %v1504 = vsel %vm586, %v1064, 0
      %v1507 = vsel %vm586, %v1069, 0
      %v1510 = vsel %vm586, %v1074, 0
      %v1513 = vsel %vm586, %v1079, 0
      %v1516 = vsel %vm586, %v1084, 0
      %1518 = vmatprep.subr.mxu0 0.0
      %1519 = vmatpush1.msra.mxu0 0.0
      %1520 = vmatprep.subr.mxu0 0.0
      %1521 = vmatpush1.msra.mxu0 0.0
      %1522 = vmatprep.subr.mxu0 0.0
      %1523 = vmatpush1.msra.mxu0 0.0
      %1524 = vmatprep.subr.mxu0 0.0
      %1525 = vmatpush1.msra.mxu0 0.0
      %1526 = vmatprep.subr.mxu0 0.0
      %1527 = vmatpush1.msra.mxu0 0.0
      %1528 = vmatprep.subr.mxu0 0.0
      %1529 = vmatpush1.msra.mxu0 0.0
      %1530 = vmatprep.subr.mxu0 0.0
      %1531 = vmatpush1.msra.mxu0 0.0
      %1532 = vmatprep.subr.mxu0 0.0
      %1533 = vmatpush1.msra.mxu0 0.0
      %1534 = vmatprep.subr.mxu0 0.0
      %1535 = vmatpush1.msra.mxu0 0.0
      %1536 = vmatprep.subr.mxu0 0.0
      %1537 = vmatpush1.msra.mxu0 0.0
      %1538 = vmatprep.subr.mxu0 0.0
      %1539 = vmatpush1.msra.mxu0 0.0
      %1540 = vmatprep.subr.mxu0 0.0
      %1541 = vmatpush1.msra.mxu0 0.0
      %1542 = vmatprep.subr.mxu0 0.0
      %1543 = vmatpush1.msra.mxu0 0.0
      %1544 = vmatprep.subr.mxu0 0.0
      %1545 = vmatpush1.msra.mxu0 0.0
      %1546 = vmatprep.subr.mxu0 0.0
      %1547 = vmatpush1.msra.mxu0 %v1088
      %1548 = vmatprep.subr.mxu0 0.0
      %1549 = vmatpush1.msra.mxu0 %v1087
      %1550 = vmatprep.subr.mxu0 0.0
      %1551 = vmatpush2.msra.mxu0 0.0
      %1552 = vmatprep.subr.mxu0 0.0
      %1553 = vmatpush2.msra.mxu0 0.0
      %1554 = vmatprep.subr.mxu0 0.0
      %1555 = vmatpush2.msra.mxu0 0.0
      %1556 = vmatprep.subr.mxu0 0.0
      %1557 = vmatpush2.msra.mxu0 0.0
      %1558 = vmatprep.subr.mxu0 0.0
      %1559 = vmatpush2.msra.mxu0 0.0
      %1560 = vmatprep.subr.mxu0 0.0
      %1561 = vmatpush2.msra.mxu0 0.0
      %1562 = vmatprep.subr.mxu0 0.0
      %1563 = vmatpush2.msra.mxu0 0.0
      %1564 = vmatprep.subr.mxu0 0.0
      %1565 = vmatpush2.msra.mxu0 0.0
      %1566 = vmatprep.subr.mxu0 0.0
      %1567 = vmatpush2.msra.mxu0 0.0
      %1568 = vmatprep.subr.mxu0 0.0
      %1569 = vmatpush2.msra.mxu0 0.0
      %1570 = vmatprep.subr.mxu0 0.0
      %1571 = vmatpush2.msra.mxu0 0.0
      %1572 = vmatprep.subr.mxu0 0.0
      %1573 = vmatpush2.msra.mxu0 0.0
      %1574 = vmatprep.subr.mxu0 0.0
      %1575 = vmatpush2.msra.mxu0 0.0
      %1576 = vmatprep.subr.mxu0 0.0
      %1577 = vmatpush2.msra.mxu0 0.0
      %1578 = vmatprep.subr.mxu0 0.0
      %1579 = vmatpush2.msra.mxu0 0.0
      %1580 = vmatprep.subr.mxu0 0.0
      %1581 = vmatpush2.msra.mxu0 0.0
      %1582 = vmatprep.mubr.f32.mxu0 0.0
      %1583 = vmatmul.mubr.f32.gmra.mxu0 %v1504
      %v1584 = vpop.f32.mrf.mxu0
      %v1585 = vadd.f32 %v1480, %v1584
      %v1586 = vpop.f32.mrf.mxu0
      %1587 = vmatprep.mubr.f32.mxu0 0.0
      %1588 = vmatmul.mubr.f32.gmra.mxu0 %v1507
      %v1589 = vpop.f32.mrf.mxu0
      %v1590 = vadd.f32 %v1485, %v1589
      %v1591 = vpop.f32.mrf.mxu0
      %1592 = vmatprep.mubr.f32.mxu0 0.0
      %1593 = vmatmul.mubr.f32.gmra.mxu0 %v1510
      %v1594 = vpop.f32.mrf.mxu0
      %v1595 = vadd.f32 %v1490, %v1594
      %v1596 = vpop.f32.mrf.mxu0
      %1597 = vmatprep.mubr.f32.mxu0 0.0
      %1598 = vmatmul.mubr.f32.gmra.mxu0 %v1513
      %v1599 = vpop.f32.mrf.mxu0
      %v1600 = vadd.f32 %v1495, %v1599
      %v1601 = vpop.f32.mrf.mxu0
      %1602 = vmatprep.mubr.f32.mxu0 0.0
      %1603 = vmatmul.mubr.f32.gmra.mxu0 %v1516
      %v1604 = vpop.f32.mrf.mxu0
      %v1605 = vadd.f32 %v1500, %v1604
      %v1606 = vpop.f32.mrf.mxu0
      %1607 = vdwg.mxu0
      %v1608 = vadd.f32 %v561, %v1585
      %v1609 = vadd.f32 %v566, %v1590
      %v1610 = vadd.f32 %v571, %v1595
      %v1611 = vadd.f32 %v576, %v1600
      %v1612 = vadd.f32 %v581, %v1605
      %v1613 = vld [vmem:[%s7] sm:$0x1]
      %v1615 = vlaneseq
      %v1616 = vshrl.u32 %v1615, 7
      %v1617 = vsub.s32 0, %v1616
      %v1618 = vrot.slane %v1613, %v1617
      %v1620 = vadd.f32 %v1608, %v1618
      %v1621 = vadd.f32 %v1609, %v1618
      %v1622 = vadd.f32 %v1610, %v1618
      %v1623 = vadd.f32 %v1611, %v1618
      %v1624 = vadd.f32 %v1612, %v1618
      %v1625 = vld [vmem:[%s8] sm:$0x1]
      %v1626 = vld [vmem:[%s9] sm:$0x1]
      %v1627 = vsel %vm586, %v1620, 0.0
      %1628 = vadd.xlane.f32.xlu0 %v1627
      %v1629 = vpop.xlane.xlu0 %1628
      %v1630 = vsel %vm586, %v1621, 0.0
      %1631 = vadd.xlane.f32.xlu0 %v1630
      %v1632 = vpop.xlane.xlu0 %1631
      %v1633 = vsel %vm586, %v1622, 0.0
      %1634 = vadd.xlane.f32.xlu0 %v1633
      %v1635 = vpop.xlane.xlu0 %1634
      %v1636 = vsel %vm586, %v1623, 0.0
      %1637 = vadd.xlane.f32.xlu0 %v1636
      %v1638 = vpop.xlane.xlu0 %1637
      %v1639 = vsel %vm599, %v1624, 0.0
      %1640 = vadd.xlane.f32.xlu0 %v1639
      %v1641 = vpop.xlane.xlu0 %1640
      %v1642 = vmul.f32 %v1629, %v603
      %v1643 = vmul.f32 %v1632, %v603
      %v1644 = vmul.f32 %v1635, %v603
      %v1645 = vmul.f32 %v1638, %v603
      %v1646 = vmul.f32 %v1641, %v603
      %v1647 = vsub.f32 %v1620, %v1642
      %v1648 = vsub.f32 %v1621, %v1643
      %v1649 = vsub.f32 %v1622, %v1644
      %v1650 = vsub.f32 %v1623, %v1645
      %v1651 = vsub.f32 %v1624, %v1646
      %v1652 = vmul.f32 %v1647, %v1647
      %v1653 = vmul.f32 %v1648, %v1648
      %v1654 = vmul.f32 %v1649, %v1649
      %v1655 = vmul.f32 %v1650, %v1650
      %v1656 = vmul.f32 %v1651, %v1651
      %v1657 = vsel %vm586, %v1652, 0.0
      %1658 = vadd.xlane.f32.xlu0 %v1657
      %v1659 = vpop.xlane.xlu0 %1658
      %v1660 = vsel %vm586, %v1653, 0.0
      %1661 = vadd.xlane.f32.xlu0 %v1660
      %v1662 = vpop.xlane.xlu0 %1661
      %v1663 = vsel %vm586, %v1654, 0.0
      %1664 = vadd.xlane.f32.xlu0 %v1663
      %v1665 = vpop.xlane.xlu0 %1664
      %v1666 = vsel %vm586, %v1655, 0.0
      %1667 = vadd.xlane.f32.xlu0 %v1666
      %v1668 = vpop.xlane.xlu0 %1667
      %v1669 = vsel %vm599, %v1656, 0.0
      %1670 = vadd.xlane.f32.xlu0 %v1669
      %v1671 = vpop.xlane.xlu0 %1670
      %v1672 = vmul.f32 %v1659, %v603
      %v1673 = vmul.f32 %v1662, %v603
      %v1674 = vmul.f32 %v1665, %v603
      %v1675 = vmul.f32 %v1668, %v603
      %v1676 = vmul.f32 %v1671, %v603
      %v1677 = vadd.f32 %v1672, 1e-05
      %v1678 = vadd.f32 %v1673, 1e-05
      %v1679 = vadd.f32 %v1674, 1e-05
      %v1680 = vadd.f32 %v1675, 1e-05
      %v1681 = vadd.f32 %v1676, 1e-05
      %v1682 = vrsqrt.pop %v1677
      %v1683 = vrsqrt.pop %v1678
      %v1684 = vrsqrt.pop %v1679
      %v1685 = vrsqrt.pop %v1680
      %v1686 = vrsqrt.pop %v1681
      %v1687 = vmul.f32 %v1647, %v1682
      %v1688 = vmul.f32 %v1648, %v1683
      %v1689 = vmul.f32 %v1649, %v1684
      %v1690 = vmul.f32 %v1650, %v1685
      %v1691 = vmul.f32 %v1651, %v1686
      %v1693 = vlaneseq
      %v1694 = vshrl.u32 %v1693, 7
      %v1695 = vsub.s32 0, %v1694
      %v1696 = vrot.slane %v1625, %v1695
      %v1698 = vmul.f32 %v1687, %v1696
      %v1699 = vmul.f32 %v1688, %v1696
      %v1700 = vmul.f32 %v1689, %v1696
      %v1701 = vmul.f32 %v1690, %v1696
      %v1702 = vmul.f32 %v1691, %v1696
      %v1704 = vlaneseq
      %v1705 = vshrl.u32 %v1704, 7
      %v1706 = vsub.s32 0, %v1705
      %v1707 = vrot.slane %v1626, %v1706
      %v1709 = vadd.f32 %v1698, %v1707
      %v1710 = vadd.f32 %v1699, %v1707
      %v1711 = vadd.f32 %v1700, %v1707
      %v1712 = vadd.f32 %v1701, %v1707
      %v1713 = vadd.f32 %v1702, %v1707
      %v1714 = vld [vmem:[%s10] sm:$0xff]
      %v1715 = vld [vmem:[%s10 + $0x8] sm:$0xff]
      %v1716 = vld [vmem:[%s11] sm:$0x1]
      %v1718 = vlaneseq
      %v1719 = vshrl.u32 %v1718, 7
      %v1720 = vsub.s32 0, %v1719
      %v1721 = vrot.slane %v1716, %v1720
      %v1724 = vsel %vm586, %v1709, 0
      %v1727 = vsel %vm586, %v1710, 0
      %v1730 = vsel %vm586, %v1711, 0
      %v1733 = vsel %vm586, %v1712, 0
      %v1736 = vsel %vm586, %v1713, 0
      %1738 = vmatprep.subr.mxu0 0.0
      %1739 = vmatpush1.msra.mxu0 0.0
      %1740 = vmatprep.subr.mxu0 0.0
      %1741 = vmatpush1.msra.mxu0 0.0
      %1742 = vmatprep.subr.mxu0 0.0
      %1743 = vmatpush1.msra.mxu0 0.0
      %1744 = vmatprep.subr.mxu0 0.0
      %1745 = vmatpush1.msra.mxu0 0.0
      %1746 = vmatprep.subr.mxu0 0.0
      %1747 = vmatpush1.msra.mxu0 0.0
      %1748 = vmatprep.subr.mxu0 0.0
      %1749 = vmatpush1.msra.mxu0 0.0
      %1750 = vmatprep.subr.mxu0 0.0
      %1751 = vmatpush1.msra.mxu0 0.0
      %1752 = vmatprep.subr.mxu0 0.0
      %1753 = vmatpush1.msra.mxu0 0.0
      %1754 = vmatprep.subr.mxu0 0.0
      %1755 = vmatpush1.msra.mxu0 0.0
      %1756 = vmatprep.subr.mxu0 0.0
      %1757 = vmatpush1.msra.mxu0 0.0
      %1758 = vmatprep.subr.mxu0 0.0
      %1759 = vmatpush1.msra.mxu0 0.0
      %1760 = vmatprep.subr.mxu0 0.0
      %1761 = vmatpush1.msra.mxu0 0.0
      %1762 = vmatprep.subr.mxu0 0.0
      %1763 = vmatpush1.msra.mxu0 0.0
      %1764 = vmatprep.subr.mxu0 0.0
      %1765 = vmatpush1.msra.mxu0 0.0
      %1766 = vmatprep.subr.mxu0 0.0
      %1767 = vmatpush1.msra.mxu0 %v1715
      %1768 = vmatprep.subr.mxu0 0.0
      %1769 = vmatpush1.msra.mxu0 %v1714
      %1770 = vmatprep.subr.mxu0 0.0
      %1771 = vmatpush2.msra.mxu0 0.0
      %1772 = vmatprep.subr.mxu0 0.0
      %1773 = vmatpush2.msra.mxu0 0.0
      %1774 = vmatprep.subr.mxu0 0.0
      %1775 = vmatpush2.msra.mxu0 0.0
      %1776 = vmatprep.subr.mxu0 0.0
      %1777 = vmatpush2.msra.mxu0 0.0
      %1778 = vmatprep.subr.mxu0 0.0
      %1779 = vmatpush2.msra.mxu0 0.0
      %1780 = vmatprep.subr.mxu0 0.0
      %1781 = vmatpush2.msra.mxu0 0.0
      %1782 = vmatprep.subr.mxu0 0.0
      %1783 = vmatpush2.msra.mxu0 0.0
      %1784 = vmatprep.subr.mxu0 0.0
      %1785 = vmatpush2.msra.mxu0 0.0
      %1786 = vmatprep.subr.mxu0 0.0
      %1787 = vmatpush2.msra.mxu0 0.0
      %1788 = vmatprep.subr.mxu0 0.0
      %1789 = vmatpush2.msra.mxu0 0.0
      %1790 = vmatprep.subr.mxu0 0.0
      %1791 = vmatpush2.msra.mxu0 0.0
      %1792 = vmatprep.subr.mxu0 0.0
      %1793 = vmatpush2.msra.mxu0 0.0
      %1794 = vmatprep.subr.mxu0 0.0
      %1795 = vmatpush2.msra.mxu0 0.0
      %1796 = vmatprep.subr.mxu0 0.0
      %1797 = vmatpush2.msra.mxu0 0.0
      %1798 = vmatprep.subr.mxu0 0.0
      %1799 = vmatpush2.msra.mxu0 0.0
      %1800 = vmatprep.subr.mxu0 0.0
      %1801 = vmatpush2.msra.mxu0 0.0
      %1802 = vmatprep.mubr.f32.mxu0 0.0
      %1803 = vmatmul.mubr.f32.gmra.mxu0 %v1724
      %v1804 = vpop.f32.mrf.mxu0
      %v1805 = vadd.f32 %v1721, %v1804
      %v1806 = vpop.f32.mrf.mxu0
      %1807 = vmatprep.mubr.f32.mxu0 0.0
      %1808 = vmatmul.mubr.f32.gmra.mxu0 %v1727
      %v1809 = vpop.f32.mrf.mxu0
      %v1810 = vadd.f32 %v1721, %v1809
      %v1811 = vpop.f32.mrf.mxu0
      %1812 = vmatprep.mubr.f32.mxu0 0.0
      %1813 = vmatmul.mubr.f32.gmra.mxu0 %v1730
      %v1814 = vpop.f32.mrf.mxu0
      %v1815 = vadd.f32 %v1721, %v1814
      %v1816 = vpop.f32.mrf.mxu0
      %1817 = vmatprep.mubr.f32.mxu0 0.0
      %1818 = vmatmul.mubr.f32.gmra.mxu0 %v1733
      %v1819 = vpop.f32.mrf.mxu0
      %v1820 = vadd.f32 %v1721, %v1819
      %v1821 = vpop.f32.mrf.mxu0
      %1822 = vmatprep.mubr.f32.mxu0 0.0
      %1823 = vmatmul.mubr.f32.gmra.mxu0 %v1736
      %v1824 = vpop.f32.mrf.mxu0
      %v1825 = vadd.f32 %v1721, %v1824
      %v1826 = vpop.f32.mrf.mxu0
      %1827 = vdwg.mxu0
      %v1828 = vmul.f32 %v1805, 0.5
      %v1829 = vmul.f32 %v1810, 0.5
      %v1830 = vmul.f32 %v1815, 0.5
      %v1831 = vmul.f32 %v1820, 0.5
      %v1832 = vmul.f32 %v1825, 0.5
      %v1833 = vmul.f32 %v1805, 0.044715
      %v1834 = vmul.f32 %v1810, 0.044715
      %v1835 = vmul.f32 %v1815, 0.044715
      %v1836 = vmul.f32 %v1820, 0.044715
      %v1837 = vmul.f32 %v1825, 0.044715
      %v1838 = vmul.f32 %v1833, %v1805
      %v1839 = vmul.f32 %v1834, %v1810
      %v1840 = vmul.f32 %v1835, %v1815
      %v1841 = vmul.f32 %v1836, %v1820
      %v1842 = vmul.f32 %v1837, %v1825
      %v1843 = vmul.f32 %v1838, %v1805
      %v1844 = vmul.f32 %v1839, %v1810
      %v1845 = vmul.f32 %v1840, %v1815
      %v1846 = vmul.f32 %v1841, %v1820
      %v1847 = vmul.f32 %v1842, %v1825
      %v1848 = vadd.f32 %v1805, %v1843
      %v1849 = vadd.f32 %v1810, %v1844
      %v1850 = vadd.f32 %v1815, %v1845
      %v1851 = vadd.f32 %v1820, %v1846
      %v1852 = vadd.f32 %v1825, %v1847
      %v1853 = vmul.f32 %v1848, 0.7978846
      %v1854 = vmul.f32 %v1849, 0.7978846
      %v1855 = vmul.f32 %v1850, 0.7978846
      %v1856 = vmul.f32 %v1851, 0.7978846
      %v1857 = vmul.f32 %v1852, 0.7978846
      %v1858 = vtanh.pop %v1853
      %v1859 = vtanh.pop %v1854
      %v1860 = vtanh.pop %v1855
      %v1861 = vtanh.pop %v1856
      %v1862 = vtanh.pop %v1857
      %v1863 = vadd.f32 %v1858, 1.0
      %v1864 = vadd.f32 %v1859, 1.0
      %v1865 = vadd.f32 %v1860, 1.0
      %v1866 = vadd.f32 %v1861, 1.0
      %v1867 = vadd.f32 %v1862, 1.0
      %v1868 = vmul.f32 %v1828, %v1863
      %v1869 = vmul.f32 %v1829, %v1864
      %v1870 = vmul.f32 %v1830, %v1865
      %v1871 = vmul.f32 %v1831, %v1866
      %v1872 = vmul.f32 %v1832, %v1867
      %v1873 = vld [vmem:[%s12] sm:$0xff]
      %v1874 = vld [vmem:[%s12 + $0x8] sm:$0xff]
      %v1875 = vld [vmem:[%s12 + $0x10] sm:$0xff]
      %v1876 = vld [vmem:[%s12 + $0x18] sm:$0xff]
      %v1877 = vld [vmem:[%s12 + $0x20] sm:$0xff]
      %v1878 = vld [vmem:[%s12 + $0x28] sm:$0xff]
      %v1879 = vld [vmem:[%s12 + $0x30] sm:$0xff]
      %v1880 = vld [vmem:[%s12 + $0x38] sm:$0xff]
      %vm1881 = vcmask 523264
      %v1883 = vsel %vm1881, %v1868, 0
      %v1886 = vsel %vm1881, %v1869, 0
      %v1889 = vsel %vm1881, %v1870, 0
      %v1892 = vsel %vm1881, %v1871, 0
      %v1895 = vsel %vm1881, %v1872, 0
      %1897 = vmatprep.subr.mxu0 0.0
      %1898 = vmatpush1.msra.mxu0 0.0
      %1899 = vmatprep.subr.mxu0 0.0
      %1900 = vmatpush1.msra.mxu0 0.0
      %1901 = vmatprep.subr.mxu0 0.0
      %1902 = vmatpush1.msra.mxu0 0.0
      %1903 = vmatprep.subr.mxu0 0.0
      %1904 = vmatpush1.msra.mxu0 0.0
      %1905 = vmatprep.subr.mxu0 0.0
      %1906 = vmatpush1.msra.mxu0 0.0
      %1907 = vmatprep.subr.mxu0 0.0
      %1908 = vmatpush1.msra.mxu0 0.0
      %1909 = vmatprep.subr.mxu0 0.0
      %1910 = vmatpush1.msra.mxu0 0.0
      %1911 = vmatprep.subr.mxu0 0.0
      %1912 = vmatpush1.msra.mxu0 0.0
      %1913 = vmatprep.subr.mxu0 0.0
      %1914 = vmatpush1.msra.mxu0 %v1880
      %1915 = vmatprep.subr.mxu0 0.0
      %1916 = vmatpush1.msra.mxu0 %v1879
      %1917 = vmatprep.subr.mxu0 0.0
      %1918 = vmatpush1.msra.mxu0 %v1878
      %1919 = vmatprep.subr.mxu0 0.0
      %1920 = vmatpush1.msra.mxu0 %v1877
      %1921 = vmatprep.subr.mxu0 0.0
      %1922 = vmatpush1.msra.mxu0 %v1876
      %1923 = vmatprep.subr.mxu0 0.0
      %1924 = vmatpush1.msra.mxu0 %v1875
      %1925 = vmatprep.subr.mxu0 0.0
      %1926 = vmatpush1.msra.mxu0 %v1874
      %1927 = vmatprep.subr.mxu0 0.0
      %1928 = vmatpush1.msra.mxu0 %v1873
      %1929 = vmatprep.subr.mxu0 0.0
      %1930 = vmatpush2.msra.mxu0 0.0
      %1931 = vmatprep.subr.mxu0 0.0
      %1932 = vmatpush2.msra.mxu0 0.0
      %1933 = vmatprep.subr.mxu0 0.0
      %1934 = vmatpush2.msra.mxu0 0.0
      %1935 = vmatprep.subr.mxu0 0.0
      %1936 = vmatpush2.msra.mxu0 0.0
      %1937 = vmatprep.subr.mxu0 0.0
      %1938 = vmatpush2.msra.mxu0 0.0
      %1939 = vmatprep.subr.mxu0 0.0
      %1940 = vmatpush2.msra.mxu0 0.0
      %1941 = vmatprep.subr.mxu0 0.0
      %1942 = vmatpush2.msra.mxu0 0.0
      %1943 = vmatprep.subr.mxu0 0.0
      %1944 = vmatpush2.msra.mxu0 0.0
      %1945 = vmatprep.subr.mxu0 0.0
      %1946 = vmatpush2.msra.mxu0 0.0
      %1947 = vmatprep.subr.mxu0 0.0
      %1948 = vmatpush2.msra.mxu0 0.0
      %1949 = vmatprep.subr.mxu0 0.0
      %1950 = vmatpush2.msra.mxu0 0.0
      %1951 = vmatprep.subr.mxu0 0.0
      %1952 = vmatpush2.msra.mxu0 0.0
      %1953 = vmatprep.subr.mxu0 0.0
      %1954 = vmatpush2.msra.mxu0 0.0
      %1955 = vmatprep.subr.mxu0 0.0
      %1956 = vmatpush2.msra.mxu0 0.0
      %1957 = vmatprep.subr.mxu0 0.0
      %1958 = vmatpush2.msra.mxu0 0.0
      %1959 = vmatprep.subr.mxu0 0.0
      %1960 = vmatpush2.msra.mxu0 0.0
      %1961 = vmatprep.mubr.f32.mxu0 0.0
      %1962 = vmatmul.mubr.f32.gmra.mxu0 %v1883
      %v1963 = vpop.f32.mrf.mxu0
      %v1964 = vadd.f32 0.0, %v1963
      %v1965 = vpop.f32.mrf.mxu0
      %1966 = vmatprep.mubr.f32.mxu0 0.0
      %1967 = vmatmul.mubr.f32.gmra.mxu0 %v1886
      %v1968 = vpop.f32.mrf.mxu0
      %v1969 = vadd.f32 0.0, %v1968
      %v1970 = vpop.f32.mrf.mxu0
      %1971 = vmatprep.mubr.f32.mxu0 0.0
      %1972 = vmatmul.mubr.f32.gmra.mxu0 %v1889
      %v1973 = vpop.f32.mrf.mxu0
      %v1974 = vadd.f32 0.0, %v1973
      %v1975 = vpop.f32.mrf.mxu0
      %1976 = vmatprep.mubr.f32.mxu0 0.0
      %1977 = vmatmul.mubr.f32.gmra.mxu0 %v1892
      %v1978 = vpop.f32.mrf.mxu0
      %v1979 = vadd.f32 0.0, %v1978
      %v1980 = vpop.f32.mrf.mxu0
      %1981 = vmatprep.mubr.f32.mxu0 0.0
      %1982 = vmatmul.mubr.f32.gmra.mxu0 %v1895
      %v1983 = vpop.f32.mrf.mxu0
      %v1984 = vadd.f32 0.0, %v1983
      %v1985 = vpop.f32.mrf.mxu0
      %1986 = vdwg.mxu0
      %v1987 = vadd.f32 %v1620, %v1964
      %v1988 = vadd.f32 %v1621, %v1969
      %v1989 = vadd.f32 %v1622, %v1974
      %v1990 = vadd.f32 %v1623, %v1979
      %v1991 = vadd.f32 %v1624, %v1984
      %v1992 = vld [vmem:[%s13] sm:$0x1]
      %v1994 = vlaneseq
      %v1995 = vshrl.u32 %v1994, 7
      %v1996 = vsub.s32 0, %v1995
      %v1997 = vrot.slane %v1992, %v1996
      %v1999 = vadd.f32 %v1987, %v1997
      %v2000 = vadd.f32 %v1988, %v1997
      %v2001 = vadd.f32 %v1989, %v1997
      %v2002 = vadd.f32 %v1990, %v1997
      %v2003 = vadd.f32 %v1991, %v1997
      %s2004 = scalar_lea.vmem %s3, 1
      %v2005 = vld [vmem:[%s2004] sm:$0x1]
      %s2006 = scalar_lea.vmem %s4, 1
      %v2007 = vld [vmem:[%s2006] sm:$0x1]
      %v2008 = vsel %vm586, %v1999, 0.0
      %2009 = vadd.xlane.f32.xlu0 %v2008
      %v2010 = vpop.xlane.xlu0 %2009
      %v2011 = vsel %vm586, %v2000, 0.0
      %2012 = vadd.xlane.f32.xlu0 %v2011
      %v2013 = vpop.xlane.xlu0 %2012
      %v2014 = vsel %vm586, %v2001, 0.0
      %2015 = vadd.xlane.f32.xlu0 %v2014
      %v2016 = vpop.xlane.xlu0 %2015
      %v2017 = vsel %vm586, %v2002, 0.0
      %2018 = vadd.xlane.f32.xlu0 %v2017
      %v2019 = vpop.xlane.xlu0 %2018
      %v2020 = vsel %vm599, %v2003, 0.0
      %2021 = vadd.xlane.f32.xlu0 %v2020
      %v2022 = vpop.xlane.xlu0 %2021
      %v2023 = vmul.f32 %v2010, %v603
      %v2024 = vmul.f32 %v2013, %v603
      %v2025 = vmul.f32 %v2016, %v603
      %v2026 = vmul.f32 %v2019, %v603
      %v2027 = vmul.f32 %v2022, %v603
      %v2028 = vsub.f32 %v1999, %v2023
      %v2029 = vsub.f32 %v2000, %v2024
      %v2030 = vsub.f32 %v2001, %v2025
      %v2031 = vsub.f32 %v2002, %v2026
      %v2032 = vsub.f32 %v2003, %v2027
      %v2033 = vmul.f32 %v2028, %v2028
      %v2034 = vmul.f32 %v2029, %v2029
      %v2035 = vmul.f32 %v2030, %v2030
      %v2036 = vmul.f32 %v2031, %v2031
      %v2037 = vmul.f32 %v2032, %v2032
      %v2038 = vsel %vm586, %v2033, 0.0
      %2039 = vadd.xlane.f32.xlu0 %v2038
      %v2040 = vpop.xlane.xlu0 %2039
      %v2041 = vsel %vm586, %v2034, 0.0
      %2042 = vadd.xlane.f32.xlu0 %v2041
      %v2043 = vpop.xlane.xlu0 %2042
      %v2044 = vsel %vm586, %v2035, 0.0
      %2045 = vadd.xlane.f32.xlu0 %v2044
      %v2046 = vpop.xlane.xlu0 %2045
      %v2047 = vsel %vm586, %v2036, 0.0
      %2048 = vadd.xlane.f32.xlu0 %v2047
      %v2049 = vpop.xlane.xlu0 %2048
      %v2050 = vsel %vm599, %v2037, 0.0
      %2051 = vadd.xlane.f32.xlu0 %v2050
      %v2052 = vpop.xlane.xlu0 %2051
      %v2053 = vmul.f32 %v2040, %v603
      %v2054 = vmul.f32 %v2043, %v603
      %v2055 = vmul.f32 %v2046, %v603
      %v2056 = vmul.f32 %v2049, %v603
      %v2057 = vmul.f32 %v2052, %v603
      %v2058 = vadd.f32 %v2053, 1e-05
      %v2059 = vadd.f32 %v2054, 1e-05
      %v2060 = vadd.f32 %v2055, 1e-05
      %v2061 = vadd.f32 %v2056, 1e-05
      %v2062 = vadd.f32 %v2057, 1e-05
      %v2063 = vrsqrt.pop %v2058
      %v2064 = vrsqrt.pop %v2059
      %v2065 = vrsqrt.pop %v2060
      %v2066 = vrsqrt.pop %v2061
      %v2067 = vrsqrt.pop %v2062
      %v2068 = vmul.f32 %v2028, %v2063
      %v2069 = vmul.f32 %v2029, %v2064
      %v2070 = vmul.f32 %v2030, %v2065
      %v2071 = vmul.f32 %v2031, %v2066
      %v2072 = vmul.f32 %v2032, %v2067
      %v2074 = vlaneseq
      %v2075 = vshrl.u32 %v2074, 7
      %v2076 = vsub.s32 0, %v2075
      %v2077 = vrot.slane %v2005, %v2076
      %v2079 = vmul.f32 %v2068, %v2077
      %v2080 = vmul.f32 %v2069, %v2077
      %v2081 = vmul.f32 %v2070, %v2077
      %v2082 = vmul.f32 %v2071, %v2077
      %v2083 = vmul.f32 %v2072, %v2077
      %v2085 = vlaneseq
      %v2086 = vshrl.u32 %v2085, 7
      %v2087 = vsub.s32 0, %v2086
      %v2088 = vrot.slane %v2007, %v2087
      %v2090 = vadd.f32 %v2079, %v2088
      %v2091 = vadd.f32 %v2080, %v2088
      %v2092 = vadd.f32 %v2081, %v2088
      %v2093 = vadd.f32 %v2082, %v2088
      %v2094 = vadd.f32 %v2083, %v2088
      %s2095 = scalar_lea.vmem %s5, 16
      %v2096 = vld [vmem:[%s2095] sm:$0xff]
      %v2097 = vld [vmem:[%s2095 + $0x8] sm:$0xff]
      %v2099 = vsel %vm586, %v2090, 0
      %v2102 = vsel %vm586, %v2091, 0
      %v2105 = vsel %vm586, %v2092, 0
      %v2108 = vsel %vm586, %v2093, 0
      %v2111 = vsel %vm586, %v2094, 0
      %2113 = vmatprep.subr.mxu0 0.0
      %2114 = vmatpush1.msra.mxu0 0.0
      %2115 = vmatprep.subr.mxu0 0.0
      %2116 = vmatpush1.msra.mxu0 0.0
      %2117 = vmatprep.subr.mxu0 0.0
      %2118 = vmatpush1.msra.mxu0 0.0
      %2119 = vmatprep.subr.mxu0 0.0
      %2120 = vmatpush1.msra.mxu0 0.0
      %2121 = vmatprep.subr.mxu0 0.0
      %2122 = vmatpush1.msra.mxu0 0.0
      %2123 = vmatprep.subr.mxu0 0.0
      %2124 = vmatpush1.msra.mxu0 0.0
      %2125 = vmatprep.subr.mxu0 0.0
      %2126 = vmatpush1.msra.mxu0 0.0
      %2127 = vmatprep.subr.mxu0 0.0
      %2128 = vmatpush1.msra.mxu0 0.0
      %2129 = vmatprep.subr.mxu0 0.0
      %2130 = vmatpush1.msra.mxu0 0.0
      %2131 = vmatprep.subr.mxu0 0.0
      %2132 = vmatpush1.msra.mxu0 0.0
      %2133 = vmatprep.subr.mxu0 0.0
      %2134 = vmatpush1.msra.mxu0 0.0
      %2135 = vmatprep.subr.mxu0 0.0
      %2136 = vmatpush1.msra.mxu0 0.0
      %2137 = vmatprep.subr.mxu0 0.0
      %2138 = vmatpush1.msra.mxu0 0.0
      %2139 = vmatprep.subr.mxu0 0.0
      %2140 = vmatpush1.msra.mxu0 0.0
      %2141 = vmatprep.subr.mxu0 0.0
      %2142 = vmatpush1.msra.mxu0 %v2097
      %2143 = vmatprep.subr.mxu0 0.0
      %2144 = vmatpush1.msra.mxu0 %v2096
      %2145 = vmatprep.subr.mxu0 0.0
      %2146 = vmatpush2.msra.mxu0 0.0
      %2147 = vmatprep.subr.mxu0 0.0
      %2148 = vmatpush2.msra.mxu0 0.0
      %2149 = vmatprep.subr.mxu0 0.0
      %2150 = vmatpush2.msra.mxu0 0.0
      %2151 = vmatprep.subr.mxu0 0.0
      %2152 = vmatpush2.msra.mxu0 0.0
      %2153 = vmatprep.subr.mxu0 0.0
      %2154 = vmatpush2.msra.mxu0 0.0
      %2155 = vmatprep.subr.mxu0 0.0
      %2156 = vmatpush2.msra.mxu0 0.0
      %2157 = vmatprep.subr.mxu0 0.0
      %2158 = vmatpush2.msra.mxu0 0.0
      %2159 = vmatprep.subr.mxu0 0.0
      %2160 = vmatpush2.msra.mxu0 0.0
      %2161 = vmatprep.subr.mxu0 0.0
      %2162 = vmatpush2.msra.mxu0 0.0
      %2163 = vmatprep.subr.mxu0 0.0
      %2164 = vmatpush2.msra.mxu0 0.0
      %2165 = vmatprep.subr.mxu0 0.0
      %2166 = vmatpush2.msra.mxu0 0.0
      %2167 = vmatprep.subr.mxu0 0.0
      %2168 = vmatpush2.msra.mxu0 0.0
      %2169 = vmatprep.subr.mxu0 0.0
      %2170 = vmatpush2.msra.mxu0 0.0
      %2171 = vmatprep.subr.mxu0 0.0
      %2172 = vmatpush2.msra.mxu0 0.0
      %2173 = vmatprep.subr.mxu0 0.0
      %2174 = vmatpush2.msra.mxu0 0.0
      %2175 = vmatprep.subr.mxu0 0.0
      %2176 = vmatpush2.msra.mxu0 0.0
      %2177 = vmatprep.mubr.f32.mxu0 0.0
      %2178 = vmatmul.mubr.f32.gmra.mxu0 %v2099
      %v2179 = vpop.f32.mrf.mxu0
      %v2180 = vadd.f32 0.0, %v2179
      %v2181 = vpop.f32.mrf.mxu0
      %2182 = vmatprep.mubr.f32.mxu0 0.0
      %2183 = vmatmul.mubr.f32.gmra.mxu0 %v2102
      %v2184 = vpop.f32.mrf.mxu0
      %v2185 = vadd.f32 0.0, %v2184
      %v2186 = vpop.f32.mrf.mxu0
      %2187 = vmatprep.mubr.f32.mxu0 0.0
      %2188 = vmatmul.mubr.f32.gmra.mxu0 %v2105
      %v2189 = vpop.f32.mrf.mxu0
      %v2190 = vadd.f32 0.0, %v2189
      %v2191 = vpop.f32.mrf.mxu0
      %2192 = vmatprep.mubr.f32.mxu0 0.0
      %2193 = vmatmul.mubr.f32.gmra.mxu0 %v2108
      %v2194 = vpop.f32.mrf.mxu0
      %v2195 = vadd.f32 0.0, %v2194
      %v2196 = vpop.f32.mrf.mxu0
      %2197 = vmatprep.mubr.f32.mxu0 0.0
      %2198 = vmatmul.mubr.f32.gmra.mxu0 %v2111
      %v2199 = vpop.f32.mrf.mxu0
      %v2200 = vadd.f32 0.0, %v2199
      %v2201 = vpop.f32.mrf.mxu0
      %2202 = vdwg.mxu0
      %2208 = vrot.lane.b32.xlu0 %v2180, 96
      %v2209 = vpop.permute.xlu0 %2208
      %2210 = vrot.lane.b32.xlu0 %v2185, 96
      %v2211 = vpop.permute.xlu0 %2210
      %2212 = vrot.lane.b32.xlu0 %v2190, 96
      %v2213 = vpop.permute.xlu0 %2212
      %2214 = vrot.lane.b32.xlu0 %v2195, 96
      %v2215 = vpop.permute.xlu0 %2214
      %2216 = vrot.lane.b32.xlu0 %v2200, 96
      %v2217 = vpop.permute.xlu0 %2216
      %v2218 = vsel %vm586, %v2180, 0
      %v2220 = vsel %vm586, %v2185, 0
      %v2222 = vsel %vm586, %v2190, 0
      %v2224 = vsel %vm586, %v2195, 0
      %v2226 = vsel %vm586, %v2200, 0
      %v2228 = vsel %vm586, %v2209, 0
      %v2230 = vsel %vm586, %v2211, 0
      %v2232 = vsel %vm586, %v2213, 0
      %v2234 = vsel %vm586, %v2215, 0
      %v2236 = vsel %vm586, %v2217, 0
      %2238 = vmatprep.subr.mxu0 0.0
      %2239 = vmatpush1.xpose.msra.mxu0 0.0
      %2240 = vmatprep.subr.mxu0 0.0
      %2241 = vmatpush1.xpose.msra.mxu0 0.0
      %2242 = vmatprep.subr.mxu0 0.0
      %2243 = vmatpush1.xpose.msra.mxu0 0.0
      %2244 = vmatprep.subr.mxu0 0.0
      %2245 = vmatpush1.xpose.msra.mxu0 0.0
      %2246 = vmatprep.subr.mxu0 0.0
      %2247 = vmatpush1.xpose.msra.mxu0 0.0
      %2248 = vmatprep.subr.mxu0 0.0
      %2249 = vmatpush1.xpose.msra.mxu0 0.0
      %2250 = vmatprep.subr.mxu0 0.0
      %2251 = vmatpush1.xpose.msra.mxu0 0.0
      %2252 = vmatprep.subr.mxu0 0.0
      %2253 = vmatpush1.xpose.msra.mxu0 0.0
      %2254 = vmatprep.subr.mxu0 0.0
      %2255 = vmatpush1.xpose.msra.mxu0 0.0
      %2256 = vmatprep.subr.mxu0 0.0
      %2257 = vmatpush1.xpose.msra.mxu0 0.0
      %2258 = vmatprep.subr.mxu0 0.0
      %2259 = vmatpush1.xpose.msra.mxu0 0.0
      %2260 = vmatprep.subr.mxu0 0.0
      %2261 = vmatpush1.xpose.msra.mxu0 %v2236
      %2262 = vmatprep.subr.mxu0 0.0
      %2263 = vmatpush1.xpose.msra.mxu0 %v2234
      %2264 = vmatprep.subr.mxu0 0.0
      %2265 = vmatpush1.xpose.msra.mxu0 %v2232
      %2266 = vmatprep.subr.mxu0 0.0
      %2267 = vmatpush1.xpose.msra.mxu0 %v2230
      %2268 = vmatprep.subr.mxu0 0.0
      %2269 = vmatpush1.xpose.msra.mxu0 %v2228
      %2270 = vmatprep.subr.mxu0 0.0
      %2271 = vmatpush2.xpose.msra.mxu0 0.0
      %2272 = vmatprep.subr.mxu0 0.0
      %2273 = vmatpush2.xpose.msra.mxu0 0.0
      %2274 = vmatprep.subr.mxu0 0.0
      %2275 = vmatpush2.xpose.msra.mxu0 0.0
      %2276 = vmatprep.subr.mxu0 0.0
      %2277 = vmatpush2.xpose.msra.mxu0 0.0
      %2278 = vmatprep.subr.mxu0 0.0
      %2279 = vmatpush2.xpose.msra.mxu0 0.0
      %2280 = vmatprep.subr.mxu0 0.0
      %2281 = vmatpush2.xpose.msra.mxu0 0.0
      %2282 = vmatprep.subr.mxu0 0.0
      %2283 = vmatpush2.xpose.msra.mxu0 0.0
      %2284 = vmatprep.subr.mxu0 0.0
      %2285 = vmatpush2.xpose.msra.mxu0 0.0
      %2286 = vmatprep.subr.mxu0 0.0
      %2287 = vmatpush2.xpose.msra.mxu0 0.0
      %2288 = vmatprep.subr.mxu0 0.0
      %2289 = vmatpush2.xpose.msra.mxu0 0.0
      %2290 = vmatprep.subr.mxu0 0.0
      %2291 = vmatpush2.xpose.msra.mxu0 0.0
      %2292 = vmatprep.subr.mxu0 0.0
      %2293 = vmatpush2.xpose.msra.mxu0 0.0
      %2294 = vmatprep.subr.mxu0 0.0
      %2295 = vmatpush2.xpose.msra.mxu0 0.0
      %2296 = vmatprep.subr.mxu0 0.0
      %2297 = vmatpush2.xpose.msra.mxu0 0.0
      %2298 = vmatprep.subr.mxu0 0.0
      %2299 = vmatpush2.xpose.msra.mxu0 0.0
      %2300 = vmatprep.subr.mxu0 0.0
      %2301 = vmatpush2.xpose.msra.mxu0 0.0
      %2302 = vmatprep.mubr.f32.mxu0 0.0
      %2303 = vmatmul.mubr.f32.gmra.mxu0 %v2218
      %v2304 = vpop.f32.mrf.mxu0
      %v2305 = vadd.f32 0.0, %v2304
      %v2306 = vpop.f32.mrf.mxu0
      %2307 = vmatprep.mubr.f32.mxu0 0.0
      %2308 = vmatmul.mubr.f32.gmra.mxu0 %v2220
      %v2309 = vpop.f32.mrf.mxu0
      %v2310 = vadd.f32 0.0, %v2309
      %v2311 = vpop.f32.mrf.mxu0
      %2312 = vmatprep.mubr.f32.mxu0 0.0
      %2313 = vmatmul.mubr.f32.gmra.mxu0 %v2222
      %v2314 = vpop.f32.mrf.mxu0
      %v2315 = vadd.f32 0.0, %v2314
      %v2316 = vpop.f32.mrf.mxu0
      %2317 = vmatprep.mubr.f32.mxu0 0.0
      %2318 = vmatmul.mubr.f32.gmra.mxu0 %v2224
      %v2319 = vpop.f32.mrf.mxu0
      %v2320 = vadd.f32 0.0, %v2319
      %v2321 = vpop.f32.mrf.mxu0
      %2322 = vmatprep.mubr.f32.mxu0 0.0
      %2323 = vmatmul.mubr.f32.gmra.mxu0 %v2226
      %v2324 = vpop.f32.mrf.mxu0
      %v2325 = vadd.f32 0.0, %v2324
      %v2326 = vpop.f32.mrf.mxu0
      %2327 = vdwg.mxu0
      %v2328 = vsel %vm908, %v2305, -inf
      %2329 = vmax.xlane.f32.xlu0 %v2328
      %v2330 = vpop.xlane.xlu0 %2329
      %v2331 = vsel %vm908, %v2310, -inf
      %2332 = vmax.xlane.f32.xlu0 %v2331
      %v2333 = vpop.xlane.xlu0 %2332
      %v2334 = vsel %vm908, %v2315, -inf
      %2335 = vmax.xlane.f32.xlu0 %v2334
      %v2336 = vpop.xlane.xlu0 %2335
      %v2337 = vsel %vm908, %v2320, -inf
      %2338 = vmax.xlane.f32.xlu0 %v2337
      %v2339 = vpop.xlane.xlu0 %2338
      %v2340 = vsel %vm921, %v2325, -inf
      %2341 = vmax.xlane.f32.xlu0 %v2340
      %v2342 = vpop.xlane.xlu0 %2341
      %v2343 = vsub.f32 %v2305, %v2330
      %v2344 = vsub.f32 %v2310, %v2333
      %v2345 = vsub.f32 %v2315, %v2336
      %v2346 = vsub.f32 %v2320, %v2339
      %v2347 = vsub.f32 %v2325, %v2342
      %v2348 = vmul.f32 %v2343, 1.442695
      %v2349 = vpow.pop %v2348
      %v2350 = vmul.f32 %v2344, 1.442695
      %v2351 = vpow.pop %v2350
      %v2352 = vmul.f32 %v2345, 1.442695
      %v2353 = vpow.pop %v2352
      %v2354 = vmul.f32 %v2346, 1.442695
      %v2355 = vpow.pop %v2354
      %v2356 = vmul.f32 %v2347, 1.442695
      %v2357 = vpow.pop %v2356
      %v2358 = vsel %vm908, %v2349, 0.0
      %2359 = vadd.xlane.f32.xlu0 %v2358
      %v2360 = vpop.xlane.xlu0 %2359
      %v2361 = vsel %vm908, %v2351, 0.0
      %2362 = vadd.xlane.f32.xlu0 %v2361
      %v2363 = vpop.xlane.xlu0 %2362
      %v2364 = vsel %vm908, %v2353, 0.0
      %2365 = vadd.xlane.f32.xlu0 %v2364
      %v2366 = vpop.xlane.xlu0 %2365
      %v2367 = vsel %vm908, %v2355, 0.0
      %2368 = vadd.xlane.f32.xlu0 %v2367
      %v2369 = vpop.xlane.xlu0 %2368
      %v2370 = vsel %vm921, %v2357, 0.0
      %2371 = vadd.xlane.f32.xlu0 %v2370
      %v2372 = vpop.xlane.xlu0 %2371
      %v2373 = vrcp.pop %v2360
      %v2374 = vrcp.pop %v2363
      %v2375 = vrcp.pop %v2366
      %v2376 = vrcp.pop %v2369
      %v2377 = vrcp.pop %v2372
      %v2378 = vmul.f32 %v2349, %v2373
      %v2379 = vmul.f32 %v2351, %v2374
      %v2380 = vmul.f32 %v2353, %v2375
      %v2381 = vmul.f32 %v2355, %v2376
      %v2382 = vmul.f32 %v2357, %v2377
      %2383 = vrot.lane.b32.xlu0 %v2180, 64
      %v2384 = vpop.permute.xlu0 %2383
      %2385 = vrot.lane.b32.xlu0 %v2185, 64
      %v2386 = vpop.permute.xlu0 %2385
      %2387 = vrot.lane.b32.xlu0 %v2190, 64
      %v2388 = vpop.permute.xlu0 %2387
      %2389 = vrot.lane.b32.xlu0 %v2195, 64
      %v2390 = vpop.permute.xlu0 %2389
      %2391 = vrot.lane.b32.xlu0 %v2200, 64
      %v2392 = vpop.permute.xlu0 %2391
      %v2398 = vsel %vm908, %v2378, 0
      %v2401 = vsel %vm908, %v2379, 0
      %v2404 = vsel %vm908, %v2380, 0
      %v2407 = vsel %vm908, %v2381, 0
      %v2410 = vsel %vm908, %v2382, 0
      %v2412 = vsel %vm994, %v2392, 0
      %2414 = vmatprep.subr.mxu0 0.0
      %2415 = vmatpush1.msra.mxu0 0.0
      %2416 = vmatprep.subr.mxu0 0.0
      %2417 = vmatpush1.msra.mxu0 0.0
      %2418 = vmatprep.subr.mxu0 0.0
      %2419 = vmatpush1.msra.mxu0 0.0
      %2420 = vmatprep.subr.mxu0 0.0
      %2421 = vmatpush1.msra.mxu0 0.0
      %2422 = vmatprep.subr.mxu0 0.0
      %2423 = vmatpush1.msra.mxu0 0.0
      %2424 = vmatprep.subr.mxu0 0.0
      %2425 = vmatpush1.msra.mxu0 0.0
      %2426 = vmatprep.subr.mxu0 0.0
      %2427 = vmatpush1.msra.mxu0 0.0
      %2428 = vmatprep.subr.mxu0 0.0
      %2429 = vmatpush1.msra.mxu0 0.0
      %2430 = vmatprep.subr.mxu0 0.0
      %2431 = vmatpush1.msra.mxu0 0.0
      %2432 = vmatprep.subr.mxu0 0.0
      %2433 = vmatpush1.msra.mxu0 0.0
      %2434 = vmatprep.subr.mxu0 0.0
      %2435 = vmatpush1.msra.mxu0 0.0
      %2436 = vmatprep.subr.mxu0 0.0
      %2437 = vmatpush1.msra.mxu0 %v2412
      %2438 = vmatprep.subr.mxu0 0.0
      %2439 = vmatpush1.msra.mxu0 %v2390
      %2440 = vmatprep.subr.mxu0 0.0
      %2441 = vmatpush1.msra.mxu0 %v2388
      %2442 = vmatprep.subr.mxu0 0.0
      %2443 = vmatpush1.msra.mxu0 %v2386
      %2444 = vmatprep.subr.mxu0 0.0
      %2445 = vmatpush1.msra.mxu0 %v2384
      %2446 = vmatprep.subr.mxu0 0.0
      %2447 = vmatpush2.msra.mxu0 0.0
      %2448 = vmatprep.subr.mxu0 0.0
      %2449 = vmatpush2.msra.mxu0 0.0
      %2450 = vmatprep.subr.mxu0 0.0
      %2451 = vmatpush2.msra.mxu0 0.0
      %2452 = vmatprep.subr.mxu0 0.0
      %2453 = vmatpush2.msra.mxu0 0.0
      %2454 = vmatprep.subr.mxu0 0.0
      %2455 = vmatpush2.msra.mxu0 0.0
      %2456 = vmatprep.subr.mxu0 0.0
      %2457 = vmatpush2.msra.mxu0 0.0
      %2458 = vmatprep.subr.mxu0 0.0
      %2459 = vmatpush2.msra.mxu0 0.0
      %2460 = vmatprep.subr.mxu0 0.0
      %2461 = vmatpush2.msra.mxu0 0.0
      %2462 = vmatprep.subr.mxu0 0.0
      %2463 = vmatpush2.msra.mxu0 0.0
      %2464 = vmatprep.subr.mxu0 0.0
      %2465 = vmatpush2.msra.mxu0 0.0
      %2466 = vmatprep.subr.mxu0 0.0
      %2467 = vmatpush2.msra.mxu0 0.0
      %2468 = vmatprep.subr.mxu0 0.0
      %2469 = vmatpush2.msra.mxu0 0.0
      %2470 = vmatprep.subr.mxu0 0.0
      %2471 = vmatpush2.msra.mxu0 0.0
      %2472 = vmatprep.subr.mxu0 0.0
      %2473 = vmatpush2.msra.mxu0 0.0
      %2474 = vmatprep.subr.mxu0 0.0
      %2475 = vmatpush2.msra.mxu0 0.0
      %2476 = vmatprep.subr.mxu0 0.0
      %2477 = vmatpush2.msra.mxu0 0.0
      %2478 = vmatprep.mubr.f32.mxu0 0.0
      %2479 = vmatmul.mubr.f32.gmra.mxu0 %v2398
      %v2480 = vpop.f32.mrf.mxu0
      %v2481 = vadd.f32 0.0, %v2480
      %v2482 = vpop.f32.mrf.mxu0
      %2483 = vmatprep.mubr.f32.mxu0 0.0
      %2484 = vmatmul.mubr.f32.gmra.mxu0 %v2401
      %v2485 = vpop.f32.mrf.mxu0
      %v2486 = vadd.f32 0.0, %v2485
      %v2487 = vpop.f32.mrf.mxu0
      %2488 = vmatprep.mubr.f32.mxu0 0.0
      %2489 = vmatmul.mubr.f32.gmra.mxu0 %v2404
      %v2490 = vpop.f32.mrf.mxu0
      %v2491 = vadd.f32 0.0, %v2490
      %v2492 = vpop.f32.mrf.mxu0
      %2493 = vmatprep.mubr.f32.mxu0 0.0
      %2494 = vmatmul.mubr.f32.gmra.mxu0 %v2407
      %v2495 = vpop.f32.mrf.mxu0
      %v2496 = vadd.f32 0.0, %v2495
      %v2497 = vpop.f32.mrf.mxu0
      %2498 = vmatprep.mubr.f32.mxu0 0.0
      %2499 = vmatmul.mubr.f32.gmra.mxu0 %v2410
      %v2500 = vpop.f32.mrf.mxu0
      %v2501 = vadd.f32 0.0, %v2500
      %v2502 = vpop.f32.mrf.mxu0
      %2503 = vdwg.mxu0
      %s2504 = scalar_lea.vmem %s6, 32
      %v2505 = vld [vmem:[%s2504] sm:$0xff]
      %v2506 = vld [vmem:[%s2504 + $0x8] sm:$0xff]
      %2507 = vrot.lane.b32.xlu0 %v2180, 112
      %v2508 = vpop.permute.xlu0 %2507
      %2509 = vrot.lane.b32.xlu0 %v2185, 112
      %v2510 = vpop.permute.xlu0 %2509
      %2511 = vrot.lane.b32.xlu0 %v2190, 112
      %v2512 = vpop.permute.xlu0 %2511
      %2513 = vrot.lane.b32.xlu0 %v2195, 112
      %v2514 = vpop.permute.xlu0 %2513
      %2515 = vrot.lane.b32.xlu0 %v2200, 112
      %v2516 = vpop.permute.xlu0 %2515
      %2517 = vrot.lane.b32.xlu0 %v2180, 80
      %v2518 = vpop.permute.xlu0 %2517
      %2519 = vrot.lane.b32.xlu0 %v2185, 80
      %v2520 = vpop.permute.xlu0 %2519
      %2521 = vrot.lane.b32.xlu0 %v2190, 80
      %v2522 = vpop.permute.xlu0 %2521
      %2523 = vrot.lane.b32.xlu0 %v2195, 80
      %v2524 = vpop.permute.xlu0 %2523
      %2525 = vrot.lane.b32.xlu0 %v2200, 80
      %v2526 = vpop.permute.xlu0 %2525
      %v2527 = vsel %vm586, %v2508, 0
      %v2529 = vsel %vm586, %v2510, 0
      %v2531 = vsel %vm586, %v2512, 0
      %v2533 = vsel %vm586, %v2514, 0
      %v2535 = vsel %vm586, %v2516, 0
      %v2537 = vsel %vm586, %v2518, 0
      %v2539 = vsel %vm586, %v2520, 0
      %v2541 = vsel %vm586, %v2522, 0
      %v2543 = vsel %vm586, %v2524, 0
      %v2545 = vsel %vm586, %v2526, 0
      %2547 = vmatprep.subr.mxu0 0.0
      %2548 = vmatpush1.xpose.msra.mxu0 0.0
      %2549 = vmatprep.subr.mxu0 0.0
      %2550 = vmatpush1.xpose.msra.mxu0 0.0
      %2551 = vmatprep.subr.mxu0 0.0
      %2552 = vmatpush1.xpose.msra.mxu0 0.0
      %2553 = vmatprep.subr.mxu0 0.0
      %2554 = vmatpush1.xpose.msra.mxu0 0.0
      %2555 = vmatprep.subr.mxu0 0.0
      %2556 = vmatpush1.xpose.msra.mxu0 0.0
      %2557 = vmatprep.subr.mxu0 0.0
      %2558 = vmatpush1.xpose.msra.mxu0 0.0
      %2559 = vmatprep.subr.mxu0 0.0
      %2560 = vmatpush1.xpose.msra.mxu0 0.0
      %2561 = vmatprep.subr.mxu0 0.0
      %2562 = vmatpush1.xpose.msra.mxu0 0.0
      %2563 = vmatprep.subr.mxu0 0.0
      %2564 = vmatpush1.xpose.msra.mxu0 0.0
      %2565 = vmatprep.subr.mxu0 0.0
      %2566 = vmatpush1.xpose.msra.mxu0 0.0
      %2567 = vmatprep.subr.mxu0 0.0
      %2568 = vmatpush1.xpose.msra.mxu0 0.0
      %2569 = vmatprep.subr.mxu0 0.0
      %2570 = vmatpush1.xpose.msra.mxu0 %v2545
      %2571 = vmatprep.subr.mxu0 0.0
      %2572 = vmatpush1.xpose.msra.mxu0 %v2543
      %2573 = vmatprep.subr.mxu0 0.0
      %2574 = vmatpush1.xpose.msra.mxu0 %v2541
      %2575 = vmatprep.subr.mxu0 0.0
      %2576 = vmatpush1.xpose.msra.mxu0 %v2539
      %2577 = vmatprep.subr.mxu0 0.0
      %2578 = vmatpush1.xpose.msra.mxu0 %v2537
      %2579 = vmatprep.subr.mxu0 0.0
      %2580 = vmatpush2.xpose.msra.mxu0 0.0
      %2581 = vmatprep.subr.mxu0 0.0
      %2582 = vmatpush2.xpose.msra.mxu0 0.0
      %2583 = vmatprep.subr.mxu0 0.0
      %2584 = vmatpush2.xpose.msra.mxu0 0.0
      %2585 = vmatprep.subr.mxu0 0.0
      %2586 = vmatpush2.xpose.msra.mxu0 0.0
      %2587 = vmatprep.subr.mxu0 0.0
      %2588 = vmatpush2.xpose.msra.mxu0 0.0
      %2589 = vmatprep.subr.mxu0 0.0
      %2590 = vmatpush2.xpose.msra.mxu0 0.0
      %2591 = vmatprep.subr.mxu0 0.0
      %2592 = vmatpush2.xpose.msra.mxu0 0.0
      %2593 = vmatprep.subr.mxu0 0.0
      %2594 = vmatpush2.xpose.msra.mxu0 0.0
      %2595 = vmatprep.subr.mxu0 0.0
      %2596 = vmatpush2.xpose.msra.mxu0 0.0
      %2597 = vmatprep.subr.mxu0 0.0
      %2598 = vmatpush2.xpose.msra.mxu0 0.0
      %2599 = vmatprep.subr.mxu0 0.0
      %2600 = vmatpush2.xpose.msra.mxu0 0.0
      %2601 = vmatprep.subr.mxu0 0.0
      %2602 = vmatpush2.xpose.msra.mxu0 0.0
      %2603 = vmatprep.subr.mxu0 0.0
      %2604 = vmatpush2.xpose.msra.mxu0 0.0
      %2605 = vmatprep.subr.mxu0 0.0
      %2606 = vmatpush2.xpose.msra.mxu0 0.0
      %2607 = vmatprep.subr.mxu0 0.0
      %2608 = vmatpush2.xpose.msra.mxu0 0.0
      %2609 = vmatprep.subr.mxu0 0.0
      %2610 = vmatpush2.xpose.msra.mxu0 0.0
      %2611 = vmatprep.mubr.f32.mxu0 0.0
      %2612 = vmatmul.mubr.f32.gmra.mxu0 %v2527
      %v2613 = vpop.f32.mrf.mxu0
      %v2614 = vadd.f32 0.0, %v2613
      %v2615 = vpop.f32.mrf.mxu0
      %2616 = vmatprep.mubr.f32.mxu0 0.0
      %2617 = vmatmul.mubr.f32.gmra.mxu0 %v2529
      %v2618 = vpop.f32.mrf.mxu0
      %v2619 = vadd.f32 0.0, %v2618
      %v2620 = vpop.f32.mrf.mxu0
      %2621 = vmatprep.mubr.f32.mxu0 0.0
      %2622 = vmatmul.mubr.f32.gmra.mxu0 %v2531
      %v2623 = vpop.f32.mrf.mxu0
      %v2624 = vadd.f32 0.0, %v2623
      %v2625 = vpop.f32.mrf.mxu0
      %2626 = vmatprep.mubr.f32.mxu0 0.0
      %2627 = vmatmul.mubr.f32.gmra.mxu0 %v2533
      %v2628 = vpop.f32.mrf.mxu0
      %v2629 = vadd.f32 0.0, %v2628
      %v2630 = vpop.f32.mrf.mxu0
      %2631 = vmatprep.mubr.f32.mxu0 0.0
      %2632 = vmatmul.mubr.f32.gmra.mxu0 %v2535
      %v2633 = vpop.f32.mrf.mxu0
      %v2634 = vadd.f32 0.0, %v2633
      %v2635 = vpop.f32.mrf.mxu0
      %2636 = vdwg.mxu0
      %v2637 = vsel %vm908, %v2614, -inf
      %2638 = vmax.xlane.f32.xlu0 %v2637
      %v2639 = vpop.xlane.xlu0 %2638
      %v2640 = vsel %vm908, %v2619, -inf
      %2641 = vmax.xlane.f32.xlu0 %v2640
      %v2642 = vpop.xlane.xlu0 %2641
      %v2643 = vsel %vm908, %v2624, -inf
      %2644 = vmax.xlane.f32.xlu0 %v2643
      %v2645 = vpop.xlane.xlu0 %2644
      %v2646 = vsel %vm908, %v2629, -inf
      %2647 = vmax.xlane.f32.xlu0 %v2646
      %v2648 = vpop.xlane.xlu0 %2647
      %v2649 = vsel %vm921, %v2634, -inf
      %2650 = vmax.xlane.f32.xlu0 %v2649
      %v2651 = vpop.xlane.xlu0 %2650
      %v2652 = vsub.f32 %v2614, %v2639
      %v2653 = vsub.f32 %v2619, %v2642
      %v2654 = vsub.f32 %v2624, %v2645
      %v2655 = vsub.f32 %v2629, %v2648
      %v2656 = vsub.f32 %v2634, %v2651
      %v2657 = vmul.f32 %v2652, 1.442695
      %v2658 = vpow.pop %v2657
      %v2659 = vmul.f32 %v2653, 1.442695
      %v2660 = vpow.pop %v2659
      %v2661 = vmul.f32 %v2654, 1.442695
      %v2662 = vpow.pop %v2661
      %v2663 = vmul.f32 %v2655, 1.442695
      %v2664 = vpow.pop %v2663
      %v2665 = vmul.f32 %v2656, 1.442695
      %v2666 = vpow.pop %v2665
      %v2667 = vsel %vm908, %v2658, 0.0
      %2668 = vadd.xlane.f32.xlu0 %v2667
      %v2669 = vpop.xlane.xlu0 %2668
      %v2670 = vsel %vm908, %v2660, 0.0
      %2671 = vadd.xlane.f32.xlu0 %v2670
      %v2672 = vpop.xlane.xlu0 %2671
      %v2673 = vsel %vm908, %v2662, 0.0
      %2674 = vadd.xlane.f32.xlu0 %v2673
      %v2675 = vpop.xlane.xlu0 %2674
      %v2676 = vsel %vm908, %v2664, 0.0
      %2677 = vadd.xlane.f32.xlu0 %v2676
      %v2678 = vpop.xlane.xlu0 %2677
      %v2679 = vsel %vm921, %v2666, 0.0
      %2680 = vadd.xlane.f32.xlu0 %v2679
      %v2681 = vpop.xlane.xlu0 %2680
      %v2682 = vrcp.pop %v2669
      %v2683 = vrcp.pop %v2672
      %v2684 = vrcp.pop %v2675
      %v2685 = vrcp.pop %v2678
      %v2686 = vrcp.pop %v2681
      %v2687 = vmul.f32 %v2658, %v2682
      %v2688 = vmul.f32 %v2660, %v2683
      %v2689 = vmul.f32 %v2662, %v2684
      %v2690 = vmul.f32 %v2664, %v2685
      %v2691 = vmul.f32 %v2666, %v2686
      %2692 = vrot.lane.b32.xlu0 %v2180, 48
      %v2693 = vpop.permute.xlu0 %2692
      %2694 = vrot.lane.b32.xlu0 %v2185, 48
      %v2695 = vpop.permute.xlu0 %2694
      %2696 = vrot.lane.b32.xlu0 %v2190, 48
      %v2697 = vpop.permute.xlu0 %2696
      %2698 = vrot.lane.b32.xlu0 %v2195, 48
      %v2699 = vpop.permute.xlu0 %2698
      %2700 = vrot.lane.b32.xlu0 %v2200, 48
      %v2701 = vpop.permute.xlu0 %2700
      %v2707 = vsel %vm908, %v2687, 0
      %v2710 = vsel %vm908, %v2688, 0
      %v2713 = vsel %vm908, %v2689, 0
      %v2716 = vsel %vm908, %v2690, 0
      %v2719 = vsel %vm908, %v2691, 0
      %v2721 = vsel %vm994, %v2701, 0
      %2723 = vmatprep.subr.mxu0 0.0
      %2724 = vmatpush1.msra.mxu0 0.0
      %2725 = vmatprep.subr.mxu0 0.0
      %2726 = vmatpush1.msra.mxu0 0.0
      %2727 = vmatprep.subr.mxu0 0.0
      %2728 = vmatpush1.msra.mxu0 0.0
      %2729 = vmatprep.subr.mxu0 0.0
      %2730 = vmatpush1.msra.mxu0 0.0
      %2731 = vmatprep.subr.mxu0 0.0
      %2732 = vmatpush1.msra.mxu0 0.0
      %2733 = vmatprep.subr.mxu0 0.0
      %2734 = vmatpush1.msra.mxu0 0.0
      %2735 = vmatprep.subr.mxu0 0.0
      %2736 = vmatpush1.msra.mxu0 0.0
      %2737 = vmatprep.subr.mxu0 0.0
      %2738 = vmatpush1.msra.mxu0 0.0
      %2739 = vmatprep.subr.mxu0 0.0
      %2740 = vmatpush1.msra.mxu0 0.0
      %2741 = vmatprep.subr.mxu0 0.0
      %2742 = vmatpush1.msra.mxu0 0.0
      %2743 = vmatprep.subr.mxu0 0.0
      %2744 = vmatpush1.msra.mxu0 0.0
      %2745 = vmatprep.subr.mxu0 0.0
      %2746 = vmatpush1.msra.mxu0 %v2721
      %2747 = vmatprep.subr.mxu0 0.0
      %2748 = vmatpush1.msra.mxu0 %v2699
      %2749 = vmatprep.subr.mxu0 0.0
      %2750 = vmatpush1.msra.mxu0 %v2697
      %2751 = vmatprep.subr.mxu0 0.0
      %2752 = vmatpush1.msra.mxu0 %v2695
      %2753 = vmatprep.subr.mxu0 0.0
      %2754 = vmatpush1.msra.mxu0 %v2693
      %2755 = vmatprep.subr.mxu0 0.0
      %2756 = vmatpush2.msra.mxu0 0.0
      %2757 = vmatprep.subr.mxu0 0.0
      %2758 = vmatpush2.msra.mxu0 0.0
      %2759 = vmatprep.subr.mxu0 0.0
      %2760 = vmatpush2.msra.mxu0 0.0
      %2761 = vmatprep.subr.mxu0 0.0
      %2762 = vmatpush2.msra.mxu0 0.0
      %2763 = vmatprep.subr.mxu0 0.0
      %2764 = vmatpush2.msra.mxu0 0.0
      %2765 = vmatprep.subr.mxu0 0.0
      %2766 = vmatpush2.msra.mxu0 0.0
      %2767 = vmatprep.subr.mxu0 0.0
      %2768 = vmatpush2.msra.mxu0 0.0
      %2769 = vmatprep.subr.mxu0 0.0
      %2770 = vmatpush2.msra.mxu0 0.0
      %2771 = vmatprep.subr.mxu0 0.0
      %2772 = vmatpush2.msra.mxu0 0.0
      %2773 = vmatprep.subr.mxu0 0.0
      %2774 = vmatpush2.msra.mxu0 0.0
      %2775 = vmatprep.subr.mxu0 0.0
      %2776 = vmatpush2.msra.mxu0 0.0
      %2777 = vmatprep.subr.mxu0 0.0
      %2778 = vmatpush2.msra.mxu0 0.0
      %2779 = vmatprep.subr.mxu0 0.0
      %2780 = vmatpush2.msra.mxu0 0.0
      %2781 = vmatprep.subr.mxu0 0.0
      %2782 = vmatpush2.msra.mxu0 0.0
      %2783 = vmatprep.subr.mxu0 0.0
      %2784 = vmatpush2.msra.mxu0 0.0
      %2785 = vmatprep.subr.mxu0 0.0
      %2786 = vmatpush2.msra.mxu0 0.0
      %2787 = vmatprep.mubr.f32.mxu0 0.0
      %2788 = vmatmul.mubr.f32.gmra.mxu0 %v2707
      %v2789 = vpop.f32.mrf.mxu0
      %v2790 = vadd.f32 0.0, %v2789
      %v2791 = vpop.f32.mrf.mxu0
      %2792 = vmatprep.mubr.f32.mxu0 0.0
      %2793 = vmatmul.mubr.f32.gmra.mxu0 %v2710
      %v2794 = vpop.f32.mrf.mxu0
      %v2795 = vadd.f32 0.0, %v2794
      %v2796 = vpop.f32.mrf.mxu0
      %2797 = vmatprep.mubr.f32.mxu0 0.0
      %2798 = vmatmul.mubr.f32.gmra.mxu0 %v2713
      %v2799 = vpop.f32.mrf.mxu0
      %v2800 = vadd.f32 0.0, %v2799
      %v2801 = vpop.f32.mrf.mxu0
      %2802 = vmatprep.mubr.f32.mxu0 0.0
      %2803 = vmatmul.mubr.f32.gmra.mxu0 %v2716
      %v2804 = vpop.f32.mrf.mxu0
      %v2805 = vadd.f32 0.0, %v2804
      %v2806 = vpop.f32.mrf.mxu0
      %2807 = vmatprep.mubr.f32.mxu0 0.0
      %2808 = vmatmul.mubr.f32.gmra.mxu0 %v2719
      %v2809 = vpop.f32.mrf.mxu0
      %v2810 = vadd.f32 0.0, %v2809
      %v2811 = vpop.f32.mrf.mxu0
      %2812 = vdwg.mxu0
      %s2813 = scalar_lea.vmem %s6, 48
      %v2814 = vld [vmem:[%s2813] sm:$0xff]
      %v2815 = vld [vmem:[%s2813 + $0x8] sm:$0xff]
      %v2817 = vsel %vm586, %v2790, 0
      %v2820 = vsel %vm586, %v2795, 0
      %v2823 = vsel %vm586, %v2800, 0
      %v2826 = vsel %vm586, %v2805, 0
      %v2829 = vsel %vm586, %v2810, 0
      %2831 = vmatprep.subr.mxu0 0.0
      %2832 = vmatpush1.msra.mxu0 0.0
      %2833 = vmatprep.subr.mxu0 0.0
      %2834 = vmatpush1.msra.mxu0 0.0
      %2835 = vmatprep.subr.mxu0 0.0
      %2836 = vmatpush1.msra.mxu0 0.0
      %2837 = vmatprep.subr.mxu0 0.0
      %2838 = vmatpush1.msra.mxu0 0.0
      %2839 = vmatprep.subr.mxu0 0.0
      %2840 = vmatpush1.msra.mxu0 0.0
      %2841 = vmatprep.subr.mxu0 0.0
      %2842 = vmatpush1.msra.mxu0 0.0
      %2843 = vmatprep.subr.mxu0 0.0
      %2844 = vmatpush1.msra.mxu0 0.0
      %2845 = vmatprep.subr.mxu0 0.0
      %2846 = vmatpush1.msra.mxu0 0.0
      %2847 = vmatprep.subr.mxu0 0.0
      %2848 = vmatpush1.msra.mxu0 0.0
      %2849 = vmatprep.subr.mxu0 0.0
      %2850 = vmatpush1.msra.mxu0 0.0
      %2851 = vmatprep.subr.mxu0 0.0
      %2852 = vmatpush1.msra.mxu0 0.0
      %2853 = vmatprep.subr.mxu0 0.0
      %2854 = vmatpush1.msra.mxu0 0.0
      %2855 = vmatprep.subr.mxu0 0.0
      %2856 = vmatpush1.msra.mxu0 0.0
      %2857 = vmatprep.subr.mxu0 0.0
      %2858 = vmatpush1.msra.mxu0 0.0
      %2859 = vmatprep.subr.mxu0 0.0
      %2860 = vmatpush1.msra.mxu0 %v2815
      %2861 = vmatprep.subr.mxu0 0.0
      %2862 = vmatpush1.msra.mxu0 %v2814
      %2863 = vmatprep.subr.mxu0 0.0
      %2864 = vmatpush2.msra.mxu0 0.0
      %2865 = vmatprep.subr.mxu0 0.0
      %2866 = vmatpush2.msra.mxu0 0.0
      %2867 = vmatprep.subr.mxu0 0.0
      %2868 = vmatpush2.msra.mxu0 0.0
      %2869 = vmatprep.subr.mxu0 0.0
      %2870 = vmatpush2.msra.mxu0 0.0
      %2871 = vmatprep.subr.mxu0 0.0
      %2872 = vmatpush2.msra.mxu0 0.0
      %2873 = vmatprep.subr.mxu0 0.0
      %2874 = vmatpush2.msra.mxu0 0.0
      %2875 = vmatprep.subr.mxu0 0.0
      %2876 = vmatpush2.msra.mxu0 0.0
      %2877 = vmatprep.subr.mxu0 0.0
      %2878 = vmatpush2.msra.mxu0 0.0
      %2879 = vmatprep.subr.mxu0 0.0
      %2880 = vmatpush2.msra.mxu0 0.0
      %2881 = vmatprep.subr.mxu0 0.0
      %2882 = vmatpush2.msra.mxu0 0.0
      %2883 = vmatprep.subr.mxu0 0.0
      %2884 = vmatpush2.msra.mxu0 0.0
      %2885 = vmatprep.subr.mxu0 0.0
      %2886 = vmatpush2.msra.mxu0 0.0
      %2887 = vmatprep.subr.mxu0 0.0
      %2888 = vmatpush2.msra.mxu0 0.0
      %2889 = vmatprep.subr.mxu0 0.0
      %2890 = vmatpush2.msra.mxu0 0.0
      %2891 = vmatprep.subr.mxu0 0.0
      %2892 = vmatpush2.msra.mxu0 0.0
      %2893 = vmatprep.subr.mxu0 0.0
      %2894 = vmatpush2.msra.mxu0 0.0
      %2895 = vmatprep.mubr.f32.mxu0 0.0
      %2896 = vmatmul.mubr.f32.gmra.mxu0 %v2817
      %v2897 = vpop.f32.mrf.mxu0
      %v2898 = vadd.f32 0.0, %v2897
      %v2899 = vpop.f32.mrf.mxu0
      %2900 = vmatprep.mubr.f32.mxu0 0.0
      %2901 = vmatmul.mubr.f32.gmra.mxu0 %v2820
      %v2902 = vpop.f32.mrf.mxu0
      %v2903 = vadd.f32 0.0, %v2902
      %v2904 = vpop.f32.mrf.mxu0
      %2905 = vmatprep.mubr.f32.mxu0 0.0
      %2906 = vmatmul.mubr.f32.gmra.mxu0 %v2823
      %v2907 = vpop.f32.mrf.mxu0
      %v2908 = vadd.f32 0.0, %v2907
      %v2909 = vpop.f32.mrf.mxu0
      %2910 = vmatprep.mubr.f32.mxu0 0.0
      %2911 = vmatmul.mubr.f32.gmra.mxu0 %v2826
      %v2912 = vpop.f32.mrf.mxu0
      %v2913 = vadd.f32 0.0, %v2912
      %v2914 = vpop.f32.mrf.mxu0
      %2915 = vmatprep.mubr.f32.mxu0 0.0
      %2916 = vmatmul.mubr.f32.gmra.mxu0 %v2829
      %v2917 = vpop.f32.mrf.mxu0
      %v2918 = vadd.f32 0.0, %v2917
      %v2919 = vpop.f32.mrf.mxu0
      %2920 = vdwg.mxu0
      %v2922 = vsel %vm586, %v2481, 0
      %v2925 = vsel %vm586, %v2486, 0
      %v2928 = vsel %vm586, %v2491, 0
      %v2931 = vsel %vm586, %v2496, 0
      %v2934 = vsel %vm586, %v2501, 0
      %2936 = vmatprep.subr.mxu0 0.0
      %2937 = vmatpush1.msra.mxu0 0.0
      %2938 = vmatprep.subr.mxu0 0.0
      %2939 = vmatpush1.msra.mxu0 0.0
      %2940 = vmatprep.subr.mxu0 0.0
      %2941 = vmatpush1.msra.mxu0 0.0
      %2942 = vmatprep.subr.mxu0 0.0
      %2943 = vmatpush1.msra.mxu0 0.0
      %2944 = vmatprep.subr.mxu0 0.0
      %2945 = vmatpush1.msra.mxu0 0.0
      %2946 = vmatprep.subr.mxu0 0.0
      %2947 = vmatpush1.msra.mxu0 0.0
      %2948 = vmatprep.subr.mxu0 0.0
      %2949 = vmatpush1.msra.mxu0 0.0
      %2950 = vmatprep.subr.mxu0 0.0
      %2951 = vmatpush1.msra.mxu0 0.0
      %2952 = vmatprep.subr.mxu0 0.0
      %2953 = vmatpush1.msra.mxu0 0.0
      %2954 = vmatprep.subr.mxu0 0.0
      %2955 = vmatpush1.msra.mxu0 0.0
      %2956 = vmatprep.subr.mxu0 0.0
      %2957 = vmatpush1.msra.mxu0 0.0
      %2958 = vmatprep.subr.mxu0 0.0
      %2959 = vmatpush1.msra.mxu0 0.0
      %2960 = vmatprep.subr.mxu0 0.0
      %2961 = vmatpush1.msra.mxu0 0.0
      %2962 = vmatprep.subr.mxu0 0.0
      %2963 = vmatpush1.msra.mxu0 0.0
      %2964 = vmatprep.subr.mxu0 0.0
      %2965 = vmatpush1.msra.mxu0 %v2506
      %2966 = vmatprep.subr.mxu0 0.0
      %2967 = vmatpush1.msra.mxu0 %v2505
      %2968 = vmatprep.subr.mxu0 0.0
      %2969 = vmatpush2.msra.mxu0 0.0
      %2970 = vmatprep.subr.mxu0 0.0
      %2971 = vmatpush2.msra.mxu0 0.0
      %2972 = vmatprep.subr.mxu0 0.0
      %2973 = vmatpush2.msra.mxu0 0.0
      %2974 = vmatprep.subr.mxu0 0.0
      %2975 = vmatpush2.msra.mxu0 0.0
      %2976 = vmatprep.subr.mxu0 0.0
      %2977 = vmatpush2.msra.mxu0 0.0
      %2978 = vmatprep.subr.mxu0 0.0
      %2979 = vmatpush2.msra.mxu0 0.0
      %2980 = vmatprep.subr.mxu0 0.0
      %2981 = vmatpush2.msra.mxu0 0.0
      %2982 = vmatprep.subr.mxu0 0.0
      %2983 = vmatpush2.msra.mxu0 0.0
      %2984 = vmatprep.subr.mxu0 0.0
      %2985 = vmatpush2.msra.mxu0 0.0
      %2986 = vmatprep.subr.mxu0 0.0
      %2987 = vmatpush2.msra.mxu0 0.0
      %2988 = vmatprep.subr.mxu0 0.0
      %2989 = vmatpush2.msra.mxu0 0.0
      %2990 = vmatprep.subr.mxu0 0.0
      %2991 = vmatpush2.msra.mxu0 0.0
      %2992 = vmatprep.subr.mxu0 0.0
      %2993 = vmatpush2.msra.mxu0 0.0
      %2994 = vmatprep.subr.mxu0 0.0
      %2995 = vmatpush2.msra.mxu0 0.0
      %2996 = vmatprep.subr.mxu0 0.0
      %2997 = vmatpush2.msra.mxu0 0.0
      %2998 = vmatprep.subr.mxu0 0.0
      %2999 = vmatpush2.msra.mxu0 0.0
      %3000 = vmatprep.mubr.f32.mxu0 0.0
      %3001 = vmatmul.mubr.f32.gmra.mxu0 %v2922
      %v3002 = vpop.f32.mrf.mxu0
      %v3003 = vadd.f32 %v2898, %v3002
      %v3004 = vpop.f32.mrf.mxu0
      %3005 = vmatprep.mubr.f32.mxu0 0.0
      %3006 = vmatmul.mubr.f32.gmra.mxu0 %v2925
      %v3007 = vpop.f32.mrf.mxu0
      %v3008 = vadd.f32 %v2903, %v3007
      %v3009 = vpop.f32.mrf.mxu0
      %3010 = vmatprep.mubr.f32.mxu0 0.0
      %3011 = vmatmul.mubr.f32.gmra.mxu0 %v2928
      %v3012 = vpop.f32.mrf.mxu0
      %v3013 = vadd.f32 %v2908, %v3012
      %v3014 = vpop.f32.mrf.mxu0
      %3015 = vmatprep.mubr.f32.mxu0 0.0
      %3016 = vmatmul.mubr.f32.gmra.mxu0 %v2931
      %v3017 = vpop.f32.mrf.mxu0
      %v3018 = vadd.f32 %v2913, %v3017
      %v3019 = vpop.f32.mrf.mxu0
      %3020 = vmatprep.mubr.f32.mxu0 0.0
      %3021 = vmatmul.mubr.f32.gmra.mxu0 %v2934
      %v3022 = vpop.f32.mrf.mxu0
      %v3023 = vadd.f32 %v2918, %v3022
      %v3024 = vpop.f32.mrf.mxu0
      %3025 = vdwg.mxu0
      %v3026 = vadd.f32 %v1999, %v3003
      %v3027 = vadd.f32 %v2000, %v3008
      %v3028 = vadd.f32 %v2001, %v3013
      %v3029 = vadd.f32 %v2002, %v3018
      %v3030 = vadd.f32 %v2003, %v3023
      %s3031 = scalar_lea.vmem %s7, 1
      %v3032 = vld [vmem:[%s3031] sm:$0x1]
      %v3034 = vlaneseq
      %v3035 = vshrl.u32 %v3034, 7
      %v3036 = vsub.s32 0, %v3035
      %v3037 = vrot.slane %v3032, %v3036
      %v3039 = vadd.f32 %v3026, %v3037
      %v3040 = vadd.f32 %v3027, %v3037
      %v3041 = vadd.f32 %v3028, %v3037
      %v3042 = vadd.f32 %v3029, %v3037
      %v3043 = vadd.f32 %v3030, %v3037
      %s3044 = scalar_lea.vmem %s8, 1
      %v3045 = vld [vmem:[%s3044] sm:$0x1]
      %s3046 = scalar_lea.vmem %s9, 1
      %v3047 = vld [vmem:[%s3046] sm:$0x1]
      %v3048 = vsel %vm586, %v3039, 0.0
      %3049 = vadd.xlane.f32.xlu0 %v3048
      %v3050 = vpop.xlane.xlu0 %3049
      %v3051 = vsel %vm586, %v3040, 0.0
      %3052 = vadd.xlane.f32.xlu0 %v3051
      %v3053 = vpop.xlane.xlu0 %3052
      %v3054 = vsel %vm586, %v3041, 0.0
      %3055 = vadd.xlane.f32.xlu0 %v3054
      %v3056 = vpop.xlane.xlu0 %3055
      %v3057 = vsel %vm586, %v3042, 0.0
      %3058 = vadd.xlane.f32.xlu0 %v3057
      %v3059 = vpop.xlane.xlu0 %3058
      %v3060 = vsel %vm599, %v3043, 0.0
      %3061 = vadd.xlane.f32.xlu0 %v3060
      %v3062 = vpop.xlane.xlu0 %3061
      %v3063 = vmul.f32 %v3050, %v603
      %v3064 = vmul.f32 %v3053, %v603
      %v3065 = vmul.f32 %v3056, %v603
      %v3066 = vmul.f32 %v3059, %v603
      %v3067 = vmul.f32 %v3062, %v603
      %v3068 = vsub.f32 %v3039, %v3063
      %v3069 = vsub.f32 %v3040, %v3064
      %v3070 = vsub.f32 %v3041, %v3065
      %v3071 = vsub.f32 %v3042, %v3066
      %v3072 = vsub.f32 %v3043, %v3067
      %v3073 = vmul.f32 %v3068, %v3068
      %v3074 = vmul.f32 %v3069, %v3069
      %v3075 = vmul.f32 %v3070, %v3070
      %v3076 = vmul.f32 %v3071, %v3071
      %v3077 = vmul.f32 %v3072, %v3072
      %v3078 = vsel %vm586, %v3073, 0.0
      %3079 = vadd.xlane.f32.xlu0 %v3078
      %v3080 = vpop.xlane.xlu0 %3079
      %v3081 = vsel %vm586, %v3074, 0.0
      %3082 = vadd.xlane.f32.xlu0 %v3081
      %v3083 = vpop.xlane.xlu0 %3082
      %v3084 = vsel %vm586, %v3075, 0.0
      %3085 = vadd.xlane.f32.xlu0 %v3084
      %v3086 = vpop.xlane.xlu0 %3085
      %v3087 = vsel %vm586, %v3076, 0.0
      %3088 = vadd.xlane.f32.xlu0 %v3087
      %v3089 = vpop.xlane.xlu0 %3088
      %v3090 = vsel %vm599, %v3077, 0.0
      %3091 = vadd.xlane.f32.xlu0 %v3090
      %v3092 = vpop.xlane.xlu0 %3091
      %v3093 = vmul.f32 %v3080, %v603
      %v3094 = vmul.f32 %v3083, %v603
      %v3095 = vmul.f32 %v3086, %v603
      %v3096 = vmul.f32 %v3089, %v603
      %v3097 = vmul.f32 %v3092, %v603
      %v3098 = vadd.f32 %v3093, 1e-05
      %v3099 = vadd.f32 %v3094, 1e-05
      %v3100 = vadd.f32 %v3095, 1e-05
      %v3101 = vadd.f32 %v3096, 1e-05
      %v3102 = vadd.f32 %v3097, 1e-05
      %v3103 = vrsqrt.pop %v3098
      %v3104 = vrsqrt.pop %v3099
      %v3105 = vrsqrt.pop %v3100
      %v3106 = vrsqrt.pop %v3101
      %v3107 = vrsqrt.pop %v3102
      %v3108 = vmul.f32 %v3068, %v3103
      %v3109 = vmul.f32 %v3069, %v3104
      %v3110 = vmul.f32 %v3070, %v3105
      %v3111 = vmul.f32 %v3071, %v3106
      %v3112 = vmul.f32 %v3072, %v3107
      %v3114 = vlaneseq
      %v3115 = vshrl.u32 %v3114, 7
      %v3116 = vsub.s32 0, %v3115
      %v3117 = vrot.slane %v3045, %v3116
      %v3119 = vmul.f32 %v3108, %v3117
      %v3120 = vmul.f32 %v3109, %v3117
      %v3121 = vmul.f32 %v3110, %v3117
      %v3122 = vmul.f32 %v3111, %v3117
      %v3123 = vmul.f32 %v3112, %v3117
      %v3125 = vlaneseq
      %v3126 = vshrl.u32 %v3125, 7
      %v3127 = vsub.s32 0, %v3126
      %v3128 = vrot.slane %v3047, %v3127
      %v3130 = vadd.f32 %v3119, %v3128
      %v3131 = vadd.f32 %v3120, %v3128
      %v3132 = vadd.f32 %v3121, %v3128
      %v3133 = vadd.f32 %v3122, %v3128
      %v3134 = vadd.f32 %v3123, %v3128
      %s3135 = scalar_lea.vmem %s10, 16
      %v3136 = vld [vmem:[%s3135] sm:$0xff]
      %v3137 = vld [vmem:[%s3135 + $0x8] sm:$0xff]
      %s3138 = scalar_lea.vmem %s11, 1
      %v3139 = vld [vmem:[%s3138] sm:$0x1]
      %v3141 = vlaneseq
      %v3142 = vshrl.u32 %v3141, 7
      %v3143 = vsub.s32 0, %v3142
      %v3144 = vrot.slane %v3139, %v3143
      %v3147 = vsel %vm586, %v3130, 0
      %v3150 = vsel %vm586, %v3131, 0
      %v3153 = vsel %vm586, %v3132, 0
      %v3156 = vsel %vm586, %v3133, 0
      %v3159 = vsel %vm586, %v3134, 0
      %3161 = vmatprep.subr.mxu0 0.0
      %3162 = vmatpush1.msra.mxu0 0.0
      %3163 = vmatprep.subr.mxu0 0.0
      %3164 = vmatpush1.msra.mxu0 0.0
      %3165 = vmatprep.subr.mxu0 0.0
      %3166 = vmatpush1.msra.mxu0 0.0
      %3167 = vmatprep.subr.mxu0 0.0
      %3168 = vmatpush1.msra.mxu0 0.0
      %3169 = vmatprep.subr.mxu0 0.0
      %3170 = vmatpush1.msra.mxu0 0.0
      %3171 = vmatprep.subr.mxu0 0.0
      %3172 = vmatpush1.msra.mxu0 0.0
      %3173 = vmatprep.subr.mxu0 0.0
      %3174 = vmatpush1.msra.mxu0 0.0
      %3175 = vmatprep.subr.mxu0 0.0
      %3176 = vmatpush1.msra.mxu0 0.0
      %3177 = vmatprep.subr.mxu0 0.0
      %3178 = vmatpush1.msra.mxu0 0.0
      %3179 = vmatprep.subr.mxu0 0.0
      %3180 = vmatpush1.msra.mxu0 0.0
      %3181 = vmatprep.subr.mxu0 0.0
      %3182 = vmatpush1.msra.mxu0 0.0
      %3183 = vmatprep.subr.mxu0 0.0
      %3184 = vmatpush1.msra.mxu0 0.0
      %3185 = vmatprep.subr.mxu0 0.0
      %3186 = vmatpush1.msra.mxu0 0.0
      %3187 = vmatprep.subr.mxu0 0.0
      %3188 = vmatpush1.msra.mxu0 0.0
      %3189 = vmatprep.subr.mxu0 0.0
      %3190 = vmatpush1.msra.mxu0 %v3137
      %3191 = vmatprep.subr.mxu0 0.0
      %3192 = vmatpush1.msra.mxu0 %v3136
      %3193 = vmatprep.subr.mxu0 0.0
      %3194 = vmatpush2.msra.mxu0 0.0
      %3195 = vmatprep.subr.mxu0 0.0
      %3196 = vmatpush2.msra.mxu0 0.0
      %3197 = vmatprep.subr.mxu0 0.0
      %3198 = vmatpush2.msra.mxu0 0.0
      %3199 = vmatprep.subr.mxu0 0.0
      %3200 = vmatpush2.msra.mxu0 0.0
      %3201 = vmatprep.subr.mxu0 0.0
      %3202 = vmatpush2.msra.mxu0 0.0
      %3203 = vmatprep.subr.mxu0 0.0
      %3204 = vmatpush2.msra.mxu0 0.0
      %3205 = vmatprep.subr.mxu0 0.0
      %3206 = vmatpush2.msra.mxu0 0.0
      %3207 = vmatprep.subr.mxu0 0.0
      %3208 = vmatpush2.msra.mxu0 0.0
      %3209 = vmatprep.subr.mxu0 0.0
      %3210 = vmatpush2.msra.mxu0 0.0
      %3211 = vmatprep.subr.mxu0 0.0
      %3212 = vmatpush2.msra.mxu0 0.0
      %3213 = vmatprep.subr.mxu0 0.0
      %3214 = vmatpush2.msra.mxu0 0.0
      %3215 = vmatprep.subr.mxu0 0.0
      %3216 = vmatpush2.msra.mxu0 0.0
      %3217 = vmatprep.subr.mxu0 0.0
      %3218 = vmatpush2.msra.mxu0 0.0
      %3219 = vmatprep.subr.mxu0 0.0
      %3220 = vmatpush2.msra.mxu0 0.0
      %3221 = vmatprep.subr.mxu0 0.0
      %3222 = vmatpush2.msra.mxu0 0.0
      %3223 = vmatprep.subr.mxu0 0.0
      %3224 = vmatpush2.msra.mxu0 0.0
      %3225 = vmatprep.mubr.f32.mxu0 0.0
      %3226 = vmatmul.mubr.f32.gmra.mxu0 %v3147
      %v3227 = vpop.f32.mrf.mxu0
      %v3228 = vadd.f32 %v3144, %v3227
      %v3229 = vpop.f32.mrf.mxu0
      %3230 = vmatprep.mubr.f32.mxu0 0.0
      %3231 = vmatmul.mubr.f32.gmra.mxu0 %v3150
      %v3232 = vpop.f32.mrf.mxu0
      %v3233 = vadd.f32 %v3144, %v3232
      %v3234 = vpop.f32.mrf.mxu0
      %3235 = vmatprep.mubr.f32.mxu0 0.0
      %3236 = vmatmul.mubr.f32.gmra.mxu0 %v3153
      %v3237 = vpop.f32.mrf.mxu0
      %v3238 = vadd.f32 %v3144, %v3237
      %v3239 = vpop.f32.mrf.mxu0
      %3240 = vmatprep.mubr.f32.mxu0 0.0
      %3241 = vmatmul.mubr.f32.gmra.mxu0 %v3156
      %v3242 = vpop.f32.mrf.mxu0
      %v3243 = vadd.f32 %v3144, %v3242
      %v3244 = vpop.f32.mrf.mxu0
      %3245 = vmatprep.mubr.f32.mxu0 0.0
      %3246 = vmatmul.mubr.f32.gmra.mxu0 %v3159
      %v3247 = vpop.f32.mrf.mxu0
      %v3248 = vadd.f32 %v3144, %v3247
      %v3249 = vpop.f32.mrf.mxu0
      %3250 = vdwg.mxu0
      %v3251 = vmul.f32 %v3228, 0.5
      %v3252 = vmul.f32 %v3233, 0.5
      %v3253 = vmul.f32 %v3238, 0.5
      %v3254 = vmul.f32 %v3243, 0.5
      %v3255 = vmul.f32 %v3248, 0.5
      %v3256 = vmul.f32 %v3228, 0.044715
      %v3257 = vmul.f32 %v3233, 0.044715
      %v3258 = vmul.f32 %v3238, 0.044715
      %v3259 = vmul.f32 %v3243, 0.044715
      %v3260 = vmul.f32 %v3248, 0.044715
      %v3261 = vmul.f32 %v3256, %v3228
      %v3262 = vmul.f32 %v3257, %v3233
      %v3263 = vmul.f32 %v3258, %v3238
      %v3264 = vmul.f32 %v3259, %v3243
      %v3265 = vmul.f32 %v3260, %v3248
      %v3266 = vmul.f32 %v3261, %v3228
      %v3267 = vmul.f32 %v3262, %v3233
      %v3268 = vmul.f32 %v3263, %v3238
      %v3269 = vmul.f32 %v3264, %v3243
      %v3270 = vmul.f32 %v3265, %v3248
      %v3271 = vadd.f32 %v3228, %v3266
      %v3272 = vadd.f32 %v3233, %v3267
      %v3273 = vadd.f32 %v3238, %v3268
      %v3274 = vadd.f32 %v3243, %v3269
      %v3275 = vadd.f32 %v3248, %v3270
      %v3276 = vmul.f32 %v3271, 0.7978846
      %v3277 = vmul.f32 %v3272, 0.7978846
      %v3278 = vmul.f32 %v3273, 0.7978846
      %v3279 = vmul.f32 %v3274, 0.7978846
      %v3280 = vmul.f32 %v3275, 0.7978846
      %v3281 = vtanh.pop %v3276
      %v3282 = vtanh.pop %v3277
      %v3283 = vtanh.pop %v3278
      %v3284 = vtanh.pop %v3279
      %v3285 = vtanh.pop %v3280
      %v3286 = vadd.f32 %v3281, 1.0
      %v3287 = vadd.f32 %v3282, 1.0
      %v3288 = vadd.f32 %v3283, 1.0
      %v3289 = vadd.f32 %v3284, 1.0
      %v3290 = vadd.f32 %v3285, 1.0
      %v3291 = vmul.f32 %v3251, %v3286
      %v3292 = vmul.f32 %v3252, %v3287
      %v3293 = vmul.f32 %v3253, %v3288
      %v3294 = vmul.f32 %v3254, %v3289
      %v3295 = vmul.f32 %v3255, %v3290
      %s3296 = scalar_lea.vmem %s12, 64
      %v3297 = vld [vmem:[%s3296] sm:$0xff]
      %v3298 = vld [vmem:[%s3296 + $0x8] sm:$0xff]
      %v3299 = vld [vmem:[%s3296 + $0x10] sm:$0xff]
      %v3300 = vld [vmem:[%s3296 + $0x18] sm:$0xff]
      %v3301 = vld [vmem:[%s3296 + $0x20] sm:$0xff]
      %v3302 = vld [vmem:[%s3296 + $0x28] sm:$0xff]
      %v3303 = vld [vmem:[%s3296 + $0x30] sm:$0xff]
      %v3304 = vld [vmem:[%s3296 + $0x38] sm:$0xff]
      %v3306 = vsel %vm1881, %v3291, 0
      %v3309 = vsel %vm1881, %v3292, 0
      %v3312 = vsel %vm1881, %v3293, 0
      %v3315 = vsel %vm1881, %v3294, 0
      %v3318 = vsel %vm1881, %v3295, 0
      %3320 = vmatprep.subr.mxu0 0.0
      %3321 = vmatpush1.msra.mxu0 0.0
      %3322 = vmatprep.subr.mxu0 0.0
      %3323 = vmatpush1.msra.mxu0 0.0
      %3324 = vmatprep.subr.mxu0 0.0
      %3325 = vmatpush1.msra.mxu0 0.0
      %3326 = vmatprep.subr.mxu0 0.0
      %3327 = vmatpush1.msra.mxu0 0.0
      %3328 = vmatprep.subr.mxu0 0.0
      %3329 = vmatpush1.msra.mxu0 0.0
      %3330 = vmatprep.subr.mxu0 0.0
      %3331 = vmatpush1.msra.mxu0 0.0
      %3332 = vmatprep.subr.mxu0 0.0
      %3333 = vmatpush1.msra.mxu0 0.0
      %3334 = vmatprep.subr.mxu0 0.0
      %3335 = vmatpush1.msra.mxu0 0.0
      %3336 = vmatprep.subr.mxu0 0.0
      %3337 = vmatpush1.msra.mxu0 %v3304
      %3338 = vmatprep.subr.mxu0 0.0
      %3339 = vmatpush1.msra.mxu0 %v3303
      %3340 = vmatprep.subr.mxu0 0.0
      %3341 = vmatpush1.msra.mxu0 %v3302
      %3342 = vmatprep.subr.mxu0 0.0
      %3343 = vmatpush1.msra.mxu0 %v3301
      %3344 = vmatprep.subr.mxu0 0.0
      %3345 = vmatpush1.msra.mxu0 %v3300
      %3346 = vmatprep.subr.mxu0 0.0
      %3347 = vmatpush1.msra.mxu0 %v3299
      %3348 = vmatprep.subr.mxu0 0.0
      %3349 = vmatpush1.msra.mxu0 %v3298
      %3350 = vmatprep.subr.mxu0 0.0
      %3351 = vmatpush1.msra.mxu0 %v3297
      %3352 = vmatprep.subr.mxu0 0.0
      %3353 = vmatpush2.msra.mxu0 0.0
      %3354 = vmatprep.subr.mxu0 0.0
      %3355 = vmatpush2.msra.mxu0 0.0
      %3356 = vmatprep.subr.mxu0 0.0
      %3357 = vmatpush2.msra.mxu0 0.0
      %3358 = vmatprep.subr.mxu0 0.0
      %3359 = vmatpush2.msra.mxu0 0.0
      %3360 = vmatprep.subr.mxu0 0.0
      %3361 = vmatpush2.msra.mxu0 0.0
      %3362 = vmatprep.subr.mxu0 0.0
      %3363 = vmatpush2.msra.mxu0 0.0
      %3364 = vmatprep.subr.mxu0 0.0
      %3365 = vmatpush2.msra.mxu0 0.0
      %3366 = vmatprep.subr.mxu0 0.0
      %3367 = vmatpush2.msra.mxu0 0.0
      %3368 = vmatprep.subr.mxu0 0.0
      %3369 = vmatpush2.msra.mxu0 0.0
      %3370 = vmatprep.subr.mxu0 0.0
      %3371 = vmatpush2.msra.mxu0 0.0
      %3372 = vmatprep.subr.mxu0 0.0
      %3373 = vmatpush2.msra.mxu0 0.0
      %3374 = vmatprep.subr.mxu0 0.0
      %3375 = vmatpush2.msra.mxu0 0.0
      %3376 = vmatprep.subr.mxu0 0.0
      %3377 = vmatpush2.msra.mxu0 0.0
      %3378 = vmatprep.subr.mxu0 0.0
      %3379 = vmatpush2.msra.mxu0 0.0
      %3380 = vmatprep.subr.mxu0 0.0
      %3381 = vmatpush2.msra.mxu0 0.0
      %3382 = vmatprep.subr.mxu0 0.0
      %3383 = vmatpush2.msra.mxu0 0.0
      %3384 = vmatprep.mubr.f32.mxu0 0.0
      %3385 = vmatmul.mubr.f32.gmra.mxu0 %v3306
      %v3386 = vpop.f32.mrf.mxu0
      %v3387 = vadd.f32 0.0, %v3386
      %v3388 = vpop.f32.mrf.mxu0
      %3389 = vmatprep.mubr.f32.mxu0 0.0
      %3390 = vmatmul.mubr.f32.gmra.mxu0 %v3309
      %v3391 = vpop.f32.mrf.mxu0
      %v3392 = vpop.f32.mrf.mxu0
      %3393 = vmatprep.mubr.f32.mxu0 0.0
      %3394 = vmatmul.mubr.f32.gmra.mxu0 %v3312
      %v3395 = vpop.f32.mrf.mxu0
      %v3396 = vpop.f32.mrf.mxu0
      %3397 = vmatprep.mubr.f32.mxu0 0.0
      %3398 = vmatmul.mubr.f32.gmra.mxu0 %v3315
      %v3399 = vpop.f32.mrf.mxu0
      %v3400 = vpop.f32.mrf.mxu0
      %3401 = vmatprep.mubr.f32.mxu0 0.0
      %3402 = vmatmul.mubr.f32.gmra.mxu0 %v3318
      %v3403 = vpop.f32.mrf.mxu0
      %v3404 = vpop.f32.mrf.mxu0
      %3405 = vdwg.mxu0
      %v3406 = vadd.f32 %v3039, %v3387
      %s3407 = scalar_lea.vmem %s13, 1
      %v3408 = vld [vmem:[%s3407] sm:$0x1]
      %v3410 = vlaneseq
      %v3411 = vshrl.u32 %v3410, 7
      %v3412 = vsub.s32 0, %v3411
      %v3413 = vrot.slane %v3408, %v3412
      %v3415 = vadd.f32 %v3406, %v3413
      %3416 = vst.msk [vmem:[%s463] sm:$0x1] %vm599, %v3415
      %p3417 = scmp.lt.s32.totalorder %s25, 1
      %s3418 = scalar_select %p3417, %s25, 1
      %s3419 = scalar_lea.vmem %s14, %s3418
      // Predicated region
      $region77: #{vit_forward.3} parent=75 // pred_check
        %p3420 = pneg %p342
      $region78: #{vit_forward.3} parent=75 // pred_check_branch
        %3422 = sbr.rel (%p3420) target = $region80
      $region79: #{vit_forward.3} parent=75 // pred_region
        _
      $region80: #{vit_forward.3} parent=75 // pred_fallthru
        _
    $region76: #{vit_forward.3} parent=5 // pred_fallthru
      _
    %p3423 = scmp.le.s32.totalorder 2, %s20
    // Predicated region
    $region81: #{vit_forward.3} parent=5 // pred_check
      %p3424 = pneg %p3423
    $region82: #{vit_forward.3} parent=5 // pred_check_branch
      %3426 = sbr.rel (%p3424) target = $region84
    $region83: #{vit_forward.3} parent=5 // pred_region
      %s3427 = ssub.s32 %s20, 2
      // Predicated region
      $region85: #{vit_forward.3} parent=83 // pred_check
        %p3428 = pneg %p348
      $region86: #{vit_forward.3} parent=83 // pred_check_branch
        %3430 = sbr.rel (%p3428) target = $region88
      $region87: #{vit_forward.3} parent=83 // pred_region
        %p3431 = scmp.lt.s32.totalorder %s26, 1
        %s3432 = scalar_select %p3431, %s26, 1
        %s3433 = scalar_lea.vmem %s14, %s3432
      $region88: #{vit_forward.3} parent=83 // pred_fallthru
        _
    $region84: #{vit_forward.3} parent=5 // pred_fallthru
      _
  $region6: #{vit_forward.3} parent=0 // loop_footer
    %s24 = sadd.s32 1, %s20
  $region7: #{vit_forward.3} parent=0 // loop_footer_branch
    %19 = sbr.rel target = $region3
  $region8: #{vit_forward.3} parent=0 // loop_exit
    _

</llo_original>
